<compile_context>
chip_gen: v7x
topology: tpu7x:2x2x1
jax: 0.10.0
libtpu: 0.0.40
codegen_flags: <defaults>
</compile_context>

<pallas_src>
import jax
import jax.numpy as jnp
import numpy as np
from jax import lax
from jax.experimental import pallas as pl
from jax.experimental.pallas import tpu as pltpu

_LEAKY_SLOPE = 0.1
_BN_EPS = 1e-5

# Spatial bookkeeping (input 54x30):
#   conv1 3x3 -> 52x28 ; pool(2,2) -> 26x14  (feat1 flat rows: r1 = y*14+x, 364 valid)
#   conv2 3x3 -> 24x12 ; pool(2,1) -> 12x12  (conv2 flat rows: r2 = y*14+x, garbage at x>=12)
_R1 = 26 * 14          # 364 valid feat1 rows
_R1P = 384             # padded feat1 rows (>= 352 + max shift 30)
_R2 = 352              # conv2 accumulation rows (>= 336 + pool shift 14)
_ROUT = 336            # 12 * 28 "wide" pooled rows written out (valid cols x < 12)


def _leaky_relu(x):
    return jnp.where(x > 0, x, _LEAKY_SLOPE * x)


def _round_up(n, m):
    return ((n + m - 1) // m) * m


def _pad_rows(x, rows):
    if x.shape[0] == rows:
        return x
    return jnp.pad(x, ((0, rows - x.shape[0]), (0, 0)))


# ---------------------------------------------------------------------------
# Fused conv stage: conv1 + BN + LeakyReLU + MaxPool(2,2) + conv2 + BN +
# LeakyReLU + MaxPool(2,1), one grid step per sample.  All intermediates stay
# in VMEM; the only HBM traffic is the packed conv1 patches in and the pooled
# feature map out.
# ---------------------------------------------------------------------------
def _conv_stage_kernel(p_ref, w1_ref, s1_ref, t1_ref, w2_ref, s2_ref, t2_ref,
                       o_ref, f_scr, a2_scr):
    # conv1: one lane-dense GEMM over 4x4/stride-2 patches; the (16,128) weight
    # holds the four 2x2-pool windows in lane blocks of 32 channels each.
    z = jnp.dot(p_ref[0], w1_ref[...], preferred_element_type=jnp.float32)  # (384,128)
    z = _leaky_relu(z * s1_ref[...] + t1_ref[...])                          # folded BN1
    # MaxPool(2,2): reduce the four window copies with XLU lane rolls + max.
    z = jnp.maximum(z, pltpu.roll(z, shift=64, axis=1))
    z = jnp.maximum(z, pltpu.roll(z, shift=32, axis=1))
    f_scr[...] = z[:, :32]                       # feat1, flat rows r = y*14 + x

    # conv2 as 9 row-shifted GEMMs against VMEM-resident feat1 (no im2col).
    acc = None
    for ky in range(3):
        for kx in range(3):
            d = ky * 14 + kx
            lhs = f_scr[d:d + _R2, :].astype(jnp.bfloat16)          # (352,32)
            term = jnp.dot(lhs, w2_ref[ky * 3 + kx],
                           preferred_element_type=jnp.float32)      # (352,16)
            acc = term if acc is None else acc + term
    a2_scr[...] = _leaky_relu(acc * s2_ref[...] + t2_ref[...])      # folded BN2

    # MaxPool(2,1) over y: rows r and r+14 of the flat conv2 map.
    pooled = jnp.maximum(a2_scr[0:_ROUT, :], a2_scr[14:14 + _ROUT, :])
    o_ref[0] = pooled.astype(o_ref.dtype)


def _conv_stage(img, q):
    """img: (B,1,54,30) f32 -> NHWC-flat features (B, 2304) bf16."""
    B = img.shape[0]
    x = img[:, 0]                                                   # (B,54,30)
    # 4x4 patches at stride 2 (column order py*4+px) cover all four 2x2-pool
    # windows of the 3x3 conv; one input stream, 16 lanes wide.
    cols = [x[:, py:py + 52:2, px:px + 28:2]
            for py in range(4) for px in range(4)]                  # each (B,26,14)
    pat = jnp.stack(cols, axis=-1).reshape(B, _R1, 16)
    pat = jnp.pad(pat, ((0, 0), (0, _R1P - _R1), (0, 0))).astype(jnp.bfloat16)

    out = pl.pallas_call(
        _conv_stage_kernel,
        out_shape=jax.ShapeDtypeStruct((B, _ROUT, 16), jnp.bfloat16),
        grid=(B,),
        in_specs=[
            pl.BlockSpec((1, _R1P, 16), lambda b: (b, 0, 0)),
            # Weights / BN params: constant index_map -> VMEM-resident.
            pl.BlockSpec((16, 128), lambda b: (0, 0)),
            pl.BlockSpec((1, 128), lambda b: (0, 0)),
            pl.BlockSpec((1, 128), lambda b: (0, 0)),
            pl.BlockSpec((9, 32, 16), lambda b: (0, 0, 0)),
            pl.BlockSpec((1, 16), lambda b: (0, 0)),
            pl.BlockSpec((1, 16), lambda b: (0, 0)),
        ],
        out_specs=pl.BlockSpec((1, _ROUT, 16), lambda b: (b, 0, 0)),
        scratch_shapes=[pltpu.VMEM((_R1P, 32), jnp.float32),
                        pltpu.VMEM((_R2, 16), jnp.float32)],
        compiler_params=pltpu.CompilerParams(dimension_semantics=("parallel",)),
    )(pat, q["conv1_w"], q["conv1_s"], q["conv1_t"],
      q["conv2_w"], q["conv2_s"], q["conv2_t"])

    # Valid pooled rows are r = 28*yo + xo with xo < 12; flatten NHWC.
    return out.reshape(B, 12, 28, 16)[:, :, :12, :].reshape(B, 16 * 12 * 12)


# ---------------------------------------------------------------------------
# Fused FC head: fc1+BN+act, fc2+BN+act (latent), fc3+sigmoid (out); one
# lane-dense (bt,128) packed output block: lanes [0,64) latent, lane 64 out.
# ---------------------------------------------------------------------------
def _fc_head_kernel(feat_ref, cond_ref, w1x_ref, w1c_ref, s1_ref, t1_ref,
                    w2_ref, s2_ref, t2_ref, w3_ref, b3_ref, out_ref):
    h = jnp.dot(feat_ref[...], w1x_ref[...], preferred_element_type=jnp.float32)
    h = h + jnp.dot(cond_ref[...], w1c_ref[...], preferred_element_type=jnp.float32)
    h = _leaky_relu(h * s1_ref[...] + t1_ref[...])                  # folded BN1d(128)
    l = jnp.dot(h.astype(jnp.bfloat16), w2_ref[...],
                preferred_element_type=jnp.float32)
    l = _leaky_relu(l * s2_ref[...] + t2_ref[...])                  # lanes [0,64): latent
    o = jnp.dot(l.astype(jnp.bfloat16), w3_ref[...],
                preferred_element_type=jnp.float32)
    o = 1.0 / (1.0 + jnp.exp(-(o + b3_ref[...])))                   # lane 64: sigmoid out
    lane = lax.broadcasted_iota(jnp.int32, l.shape, 1)
    out_ref[...] = jnp.where(lane < 64, l, o)


def _fc_head(flat, cond, q):
    B, F = flat.shape
    Dc = cond.shape[1]
    if B <= 256:
        bt = _round_up(B, 16)
        Bp = bt
    else:
        bt = 256
        Bp = _round_up(B, 256)
    flat_p = _pad_rows(flat, Bp)
    cond_p = _pad_rows(cond.astype(jnp.bfloat16), Bp)

    const = lambda s: pl.BlockSpec(s, lambda i: (0, 0))
    packed = pl.pallas_call(
        _fc_head_kernel,
        out_shape=jax.ShapeDtypeStruct((Bp, 128), jnp.float32),
        grid=(Bp // bt,),
        in_specs=[pl.BlockSpec((bt, F), lambda i: (i, 0)),
                  pl.BlockSpec((bt, Dc), lambda i: (i, 0)),
                  const(q["fc1_wx"].shape), const(q["fc1_wc"].shape),
                  const(q["fc1_s"].shape), const(q["fc1_t"].shape),
                  const(q["fc2_w"].shape), const(q["fc2_s"].shape),
                  const(q["fc2_t"].shape),
                  const(q["fc3_w"].shape), const(q["fc3_b"].shape)],
        out_specs=pl.BlockSpec((bt, 128), lambda i: (i, 0)),
        compiler_params=pltpu.CompilerParams(dimension_semantics=("parallel",)),
    )(flat_p, cond_p, q["fc1_wx"], q["fc1_wc"], q["fc1_s"], q["fc1_t"],
      q["fc2_w"], q["fc2_s"], q["fc2_t"], q["fc3_w"], q["fc3_b"])
    return packed[:B, 64:65], packed[:B, :64]


# ---------------------------------------------------------------------------
# Parameter preparation: BN folding + GEMM weight layouts (bf16 MXU operands).
# ---------------------------------------------------------------------------
def prepare_inference_params(p):
    def fold(bn, bias):
        gamma, beta, mean, var = bn
        scale = gamma / jnp.sqrt(var + _BN_EPS)
        shift = beta + scale * (bias - mean)
        return scale, shift

    q = {}
    # conv1: pack the four 2x2-pool windows of the 3x3 conv into one (16,128)
    # GEMM weight over 4x4 stride-2 patches.  Row index = py*4+px; lane block
    # k = 2*dy+dx holds the 32 channels of window (dy,dx).
    w1 = jnp.zeros((16, 128), jnp.float32)
    for dy in (0, 1):
        for dx in (0, 1):
            k = 2 * dy + dx
            for ky in range(3):
                for kx in range(3):
                    row = (dy + ky) * 4 + (dx + kx)
                    w1 = w1.at[row, k * 32:(k + 1) * 32].set(p["conv1_w"][:, 0, ky, kx])
    q["conv1_w"] = w1.astype(jnp.bfloat16)
    s1, t1 = fold(p["bn1"], p["conv1_b"])                           # (32,)
    q["conv1_s"] = jnp.tile(s1, 4).reshape(1, 128)
    q["conv1_t"] = jnp.tile(t1, 4).reshape(1, 128)

    # conv2: one (cin,cout) GEMM weight per (ky,kx) tap, stacked (9,32,16).
    q["conv2_w"] = jnp.transpose(p["conv2_w"], (2, 3, 1, 0)).reshape(9, 32, 16) \
                      .astype(jnp.bfloat16)
    s2, t2 = fold(p["bn2"], p["conv2_b"])
    q["conv2_s"] = s2.reshape(1, 16)
    q["conv2_t"] = t2.reshape(1, 16)

    # fc1 acts on concat([flat, cond]); fold the PyTorch (C,H,W) flatten order
    # into the weight rows so the kernel consumes NHWC-flat features directly.
    nf = 16 * 12 * 12
    wx = p["fc1_w"][:, :nf].T.reshape(16, 144, 128)                 # [c, pos, n]
    q["fc1_wx"] = jnp.transpose(wx, (1, 0, 2)).reshape(nf, 128).astype(jnp.bfloat16)
    q["fc1_wc"] = p["fc1_w"][:, nf:].T.astype(jnp.bfloat16)
    s3, t3 = fold(p["bn3"], p["fc1_b"])
    q["fc1_s"] = s3.reshape(1, 128)
    q["fc1_t"] = t3.reshape(1, 128)

    # fc2/fc3 padded to 128 lanes so the head writes one lane-dense block
    # ([latent(64) | out(lane 64) | pad]).
    s4, t4 = fold(p["bn4"], p["fc2_b"])
    q["fc2_w"] = jnp.zeros((128, 128), jnp.float32).at[:, :64].set(p["fc2_w"].T) \
                    .astype(jnp.bfloat16)
    q["fc2_s"] = jnp.zeros((1, 128), jnp.float32).at[0, :64].set(s4)
    q["fc2_t"] = jnp.zeros((1, 128), jnp.float32).at[0, :64].set(t4)
    q["fc3_w"] = jnp.zeros((128, 128), jnp.float32).at[:64, 64].set(p["fc3_w"][0]) \
                    .astype(jnp.bfloat16)
    q["fc3_b"] = jnp.zeros((1, 128), jnp.float32).at[0, 64].set(p["fc3_b"][0])
    return q


def discriminator_forward(img, cond, params):
    """img: (B,1,54,30) f32, cond: (B,cond_dim) f32 -> (out (B,1), latent (B,64))."""
    q = prepare_inference_params(params)
    flat = _conv_stage(img, q)                  # (B, 2304) bf16, NHWC-flat
    return _fc_head(flat, cond, q)


# ---------------------------------------------------------------------------
# Init (PyTorch layouts) and a pure-XLA reference for verification.
# ---------------------------------------------------------------------------
def init_params(key, cond_dim):
    def unif(k, shape, fan_in):
        b = 1.0 / float(np.sqrt(fan_in))
        return jax.random.uniform(k, shape, jnp.float32, -b, b)

    def bn_init(k, c):
        k1, k2, k3, k4 = jax.random.split(k, 4)
        gamma = jax.random.uniform(k1, (c,), jnp.float32, 0.5, 1.5)
        beta = 0.1 * jax.random.normal(k2, (c,), jnp.float32)
        mean = 0.1 * jax.random.normal(k3, (c,), jnp.float32)
        var = jax.random.uniform(k4, (c,), jnp.float32, 0.5, 1.5)
        return gamma, beta, mean, var

    nf = 16 * 12 * 12
    ks = jax.random.split(key, 14)
    return {
        "conv1_w": unif(ks[0], (32, 1, 3, 3), 9),
        "conv1_b": unif(ks[1], (32,), 9),
        "bn1": bn_init(ks[2], 32),
        "conv2_w": unif(ks[3], (16, 32, 3, 3), 32 * 9),
        "conv2_b": unif(ks[4], (16,), 32 * 9),
        "bn2": bn_init(ks[5], 16),
        "fc1_w": unif(ks[6], (128, nf + cond_dim), nf + cond_dim),
        "fc1_b": unif(ks[7], (128,), nf + cond_dim),
        "bn3": bn_init(ks[8], 128),
        "fc2_w": unif(ks[9], (64, 128), 128),
        "fc2_b": unif(ks[10], (64,), 128),
        "bn4": bn_init(ks[11], 64),
        "fc3_w": unif(ks[12], (1, 64), 64),
        "fc3_b": unif(ks[13], (1,), 64),
    }


def reference_forward(img, cond, p):
    """Pure-XLA (non-Pallas) eval-mode reference, high-precision matmuls."""
    prec = lax.Precision.HIGHEST

    def bn(x, bnp):
        gamma, beta, mean, var = bnp
        shp = (1, -1) + (1,) * (x.ndim - 2)
        return ((x - mean.reshape(shp)) / jnp.sqrt(var.reshape(shp) + _BN_EPS)
                * gamma.reshape(shp) + beta.reshape(shp))

    dn = ("NCHW", "OIHW", "NCHW")
    x = lax.conv_general_dilated(img, p["conv1_w"], (1, 1), "VALID",
                                 dimension_numbers=dn, precision=prec)
    x = x + p["conv1_b"].reshape(1, -1, 1, 1)
    x = _leaky_relu(bn(x, p["bn1"]))
    x = lax.reduce_window(x, -jnp.inf, lax.max, (1, 1, 2, 2), (1, 1, 2, 2), "VALID")
    x = lax.conv_general_dilated(x, p["conv2_w"], (1, 1), "VALID",
                                 dimension_numbers=dn, precision=prec)
    x = x + p["conv2_b"].reshape(1, -1, 1, 1)
    x = _leaky_relu(bn(x, p["bn2"]))
    x = lax.reduce_window(x, -jnp.inf, lax.max, (1, 1, 2, 1), (1, 1, 2, 1), "VALID")
    B = x.shape[0]
    x = x.reshape(B, -1)
    x = jnp.concatenate([x, cond], axis=1)
    x = _leaky_relu(bn(jnp.dot(x, p["fc1_w"].T, precision=prec) + p["fc1_b"], p["bn3"]))
    latent = _leaky_relu(bn(jnp.dot(x, p["fc2_w"].T, precision=prec) + p["fc2_b"],
                            p["bn4"]))
    out = jax.nn.sigmoid(jnp.dot(latent, p["fc3_w"].T, precision=prec) + p["fc3_b"])
    return out, latent


if __name__ == "__main__":
    key = jax.random.PRNGKey(0)
    B, cond_dim = 2, 16
    H, W = 54, 30   # conv/pool stack maps (54,30) -> 16x12x12, as fc1 requires.

    k_par, k_img, k_cond = jax.random.split(key, 3)
    params = init_params(k_par, cond_dim)
    img = jax.random.normal(k_img, (B, 1, H, W), jnp.float32)
    cond = jax.random.normal(k_cond, (B, cond_dim), jnp.float32)

    out, latent = jax.jit(discriminator_forward)(img, cond, params)
    jax.block_until_ready((out, latent))

    assert out.shape == (B, 1) and latent.shape == (B, 64)
    assert bool(jnp.all(jnp.isfinite(out))) and bool(jnp.all(jnp.isfinite(latent)))
    assert bool(jnp.all((out > 0.0) & (out < 1.0)))

    out_ref, latent_ref = reference_forward(img, cond, params)
    # bf16 MXU operands with f32 accumulation -> ~1% worst-case element error.
    np.testing.assert_allclose(np.asarray(out), np.asarray(out_ref),
                               rtol=2e-2, atol=2e-2)
    np.testing.assert_allclose(np.asarray(latent), np.asarray(latent_ref),
                               rtol=2e-2, atol=2e-2)

    print("KERNEL_OK")
</pallas_src>

<mosaic_0001>
module attributes {stable_mosaic.version = 11 : i64} {
  func.func @_conv_stage_kernel(%arg0: i32, %arg1: memref<1x384x16xbf16, #tpu.memory_space<vmem>>, %arg2: memref<16x128xbf16, #tpu.memory_space<vmem>>, %arg3: memref<1x128xf32, #tpu.memory_space<vmem>>, %arg4: memref<1x128xf32, #tpu.memory_space<vmem>>, %arg5: memref<9x32x16xbf16, #tpu.memory_space<vmem>>, %arg6: memref<1x16xf32, #tpu.memory_space<vmem>>, %arg7: memref<1x16xf32, #tpu.memory_space<vmem>>, %arg8: memref<1x336x16xbf16, #tpu.memory_space<vmem>>, %arg9: memref<384x32xf32, #tpu.memory_space<vmem>>, %arg10: memref<352x16xf32, #tpu.memory_space<vmem>>) attributes {dimension_semantics = [#tpu.dimension_semantics<parallel>], iteration_bounds = array<i64: 2>, scalar_prefetch = 0 : i64, scratch_operands = 2 : i64, tpu.core_type = #tpu.core_type<tc>, window_params = [{transform_indices = @transform_0, window_bounds = array<i64: 1, 384, 16>}, {pipeline_mode = #tpu.pipeline_mode<synchronous>, transform_indices = @transform_1, window_bounds = array<i64: 16, 128>}, {pipeline_mode = #tpu.pipeline_mode<synchronous>, transform_indices = @transform_2, window_bounds = array<i64: 1, 128>}, {pipeline_mode = #tpu.pipeline_mode<synchronous>, transform_indices = @transform_3, window_bounds = array<i64: 1, 128>}, {pipeline_mode = #tpu.pipeline_mode<synchronous>, transform_indices = @transform_4, window_bounds = array<i64: 9, 32, 16>}, {pipeline_mode = #tpu.pipeline_mode<synchronous>, transform_indices = @transform_5, window_bounds = array<i64: 1, 16>}, {pipeline_mode = #tpu.pipeline_mode<synchronous>, transform_indices = @transform_6, window_bounds = array<i64: 1, 16>}, {transform_indices = @transform_7, window_bounds = array<i64: 1, 336, 16>}]} {
    %c0 = arith.constant 0 : index
    %c0_0 = arith.constant 0 : index
    %c0_1 = arith.constant 0 : index
    %0 = vector.load %arg1[%c0, %c0_0, %c0_1] : memref<1x384x16xbf16, #tpu.memory_space<vmem>>, vector<1x384x16xbf16>
    %1 = vector.shape_cast %0 : vector<1x384x16xbf16> to vector<384x16xbf16>
    %c0_2 = arith.constant 0 : index
    %c0_3 = arith.constant 0 : index
    %2 = vector.load %arg2[%c0_2, %c0_3] : memref<16x128xbf16, #tpu.memory_space<vmem>>, vector<16x128xbf16>
    %cst = arith.constant dense<0.000000e+00> : vector<384x128xf32>
    %3 = tpu.matmul %1, %2, %cst {dimension_numbers = #tpu.dot_dimension_numbers<[1], [0], [0], [1], [0, 0, 1, 1], [], []>} : vector<384x16xbf16>, vector<16x128xbf16>, vector<384x128xf32> -> vector<384x128xf32>
    %c0_4 = arith.constant 0 : index
    %c0_5 = arith.constant 0 : index
    %4 = vector.load %arg3[%c0_4, %c0_5] : memref<1x128xf32, #tpu.memory_space<vmem>>, vector<1x128xf32>
    %5 = vector.broadcast %4 : vector<1x128xf32> to vector<384x128xf32>
    %6 = arith.mulf %3, %5 : vector<384x128xf32>
    %c0_6 = arith.constant 0 : index
    %c0_7 = arith.constant 0 : index
    %7 = vector.load %arg4[%c0_6, %c0_7] : memref<1x128xf32, #tpu.memory_space<vmem>>, vector<1x128xf32>
    %8 = vector.broadcast %7 : vector<1x128xf32> to vector<384x128xf32>
    %9 = arith.addf %6, %8 : vector<384x128xf32>
    %cst_8 = arith.constant 0.000000e+00 : f32
    %10 = vector.broadcast %cst_8 : f32 to vector<384x128xf32>
    %11 = arith.cmpf ogt, %9, %10 : vector<384x128xf32>
    %cst_9 = arith.constant 1.000000e-01 : f32
    %12 = vector.broadcast %cst_9 : f32 to vector<384x128xf32>
    %13 = arith.mulf %12, %9 : vector<384x128xf32>
    %14 = arith.select %11, %9, %13 : vector<384x128xi1>, vector<384x128xf32>
    %c64_i32 = arith.constant 64 : i32
    %15 = tpu.dynamic_rotate %14 by %c64_i32 dim 1 : vector<384x128xf32>, i32 -> vector<384x128xf32>
    %16 = arith.maximumf %14, %15 : vector<384x128xf32>
    %c32_i32 = arith.constant 32 : i32
    %17 = tpu.dynamic_rotate %16 by %c32_i32 dim 1 : vector<384x128xf32>, i32 -> vector<384x128xf32>
    %18 = arith.maximumf %16, %17 : vector<384x128xf32>
    %19 = vector.extract_strided_slice %18 {offsets = [0, 0], sizes = [384, 32], strides = [1, 1]} : vector<384x128xf32> to vector<384x32xf32>
    %c0_10 = arith.constant 0 : index
    %c0_11 = arith.constant 0 : index
    %20 = vector.load %arg9[%c0_10, %c0_11] : memref<384x32xf32, #tpu.memory_space<vmem>>, vector<384x32xf32>
    tpu.vector_store %arg9[%c0_10, %c0_11], %19 {strides = array<i32>} : memref<384x32xf32, #tpu.memory_space<vmem>>, vector<384x32xf32>,
    %c0_12 = arith.constant 0 : index
    %c0_13 = arith.constant 0 : index
    %21 = vector.load %arg9[%c0_12, %c0_13] : memref<384x32xf32, #tpu.memory_space<vmem>>, vector<352x32xf32>
    %22 = arith.truncf %21 : vector<352x32xf32> to vector<352x32xbf16>
    %c0_14 = arith.constant 0 : index
    %c0_15 = arith.constant 0 : index
    %c0_16 = arith.constant 0 : index
    %23 = vector.load %arg5[%c0_14, %c0_15, %c0_16] : memref<9x32x16xbf16, #tpu.memory_space<vmem>>, vector<1x32x16xbf16>
    %24 = vector.shape_cast %23 : vector<1x32x16xbf16> to vector<32x16xbf16>
    %cst_17 = arith.constant dense<0.000000e+00> : vector<352x16xf32>
    %25 = tpu.matmul %22, %24, %cst_17 {dimension_numbers = #tpu.dot_dimension_numbers<[1], [0], [0], [1], [0, 0, 1, 1], [], []>} : vector<352x32xbf16>, vector<32x16xbf16>, vector<352x16xf32> -> vector<352x16xf32>
    %c1 = arith.constant 1 : index
    %c0_18 = arith.constant 0 : index
    %26 = vector.load %arg9[%c1, %c0_18] : memref<384x32xf32, #tpu.memory_space<vmem>>, vector<352x32xf32>
    %27 = arith.truncf %26 : vector<352x32xf32> to vector<352x32xbf16>
    %c1_19 = arith.constant 1 : index
    %c0_20 = arith.constant 0 : index
    %c0_21 = arith.constant 0 : index
    %28 = vector.load %arg5[%c1_19, %c0_20, %c0_21] : memref<9x32x16xbf16, #tpu.memory_space<vmem>>, vector<1x32x16xbf16>
    %29 = vector.shape_cast %28 : vector<1x32x16xbf16> to vector<32x16xbf16>
    %cst_22 = arith.constant dense<0.000000e+00> : vector<352x16xf32>
    %30 = tpu.matmul %27, %29, %cst_22 {dimension_numbers = #tpu.dot_dimension_numbers<[1], [0], [0], [1], [0, 0, 1, 1], [], []>} : vector<352x32xbf16>, vector<32x16xbf16>, vector<352x16xf32> -> vector<352x16xf32>
    %31 = arith.addf %25, %30 : vector<352x16xf32>
    %c2 = arith.constant 2 : index
    %c0_23 = arith.constant 0 : index
    %32 = vector.load %arg9[%c2, %c0_23] : memref<384x32xf32, #tpu.memory_space<vmem>>, vector<352x32xf32>
    %33 = arith.truncf %32 : vector<352x32xf32> to vector<352x32xbf16>
    %c2_24 = arith.constant 2 : index
    %c0_25 = arith.constant 0 : index
    %c0_26 = arith.constant 0 : index
    %34 = vector.load %arg5[%c2_24, %c0_25, %c0_26] : memref<9x32x16xbf16, #tpu.memory_space<vmem>>, vector<1x32x16xbf16>
    %35 = vector.shape_cast %34 : vector<1x32x16xbf16> to vector<32x16xbf16>
    %cst_27 = arith.constant dense<0.000000e+00> : vector<352x16xf32>
    %36 = tpu.matmul %33, %35, %cst_27 {dimension_numbers = #tpu.dot_dimension_numbers<[1], [0], [0], [1], [0, 0, 1, 1], [], []>} : vector<352x32xbf16>, vector<32x16xbf16>, vector<352x16xf32> -> vector<352x16xf32>
    %37 = arith.addf %31, %36 : vector<352x16xf32>
    %c14 = arith.constant 14 : index
    %c0_28 = arith.constant 0 : index
    %38 = vector.load %arg9[%c14, %c0_28] : memref<384x32xf32, #tpu.memory_space<vmem>>, vector<352x32xf32>
    %39 = arith.truncf %38 : vector<352x32xf32> to vector<352x32xbf16>
    %c3 = arith.constant 3 : index
    %c0_29 = arith.constant 0 : index
    %c0_30 = arith.constant 0 : index
    %40 = vector.load %arg5[%c3, %c0_29, %c0_30] : memref<9x32x16xbf16, #tpu.memory_space<vmem>>, vector<1x32x16xbf16>
    %41 = vector.shape_cast %40 : vector<1x32x16xbf16> to vector<32x16xbf16>
    %cst_31 = arith.constant dense<0.000000e+00> : vector<352x16xf32>
    %42 = tpu.matmul %39, %41, %cst_31 {dimension_numbers = #tpu.dot_dimension_numbers<[1], [0], [0], [1], [0, 0, 1, 1], [], []>} : vector<352x32xbf16>, vector<32x16xbf16>, vector<352x16xf32> -> vector<352x16xf32>
    %43 = arith.addf %37, %42 : vector<352x16xf32>
    %c15 = arith.constant 15 : index
    %c0_32 = arith.constant 0 : index
    %44 = vector.load %arg9[%c15, %c0_32] : memref<384x32xf32, #tpu.memory_space<vmem>>, vector<352x32xf32>
    %45 = arith.truncf %44 : vector<352x32xf32> to vector<352x32xbf16>
    %c4 = arith.constant 4 : index
    %c0_33 = arith.constant 0 : index
    %c0_34 = arith.constant 0 : index
    %46 = vector.load %arg5[%c4, %c0_33, %c0_34] : memref<9x32x16xbf16, #tpu.memory_space<vmem>>, vector<1x32x16xbf16>
    %47 = vector.shape_cast %46 : vector<1x32x16xbf16> to vector<32x16xbf16>
    %cst_35 = arith.constant dense<0.000000e+00> : vector<352x16xf32>
    %48 = tpu.matmul %45, %47, %cst_35 {dimension_numbers = #tpu.dot_dimension_numbers<[1], [0], [0], [1], [0, 0, 1, 1], [], []>} : vector<352x32xbf16>, vector<32x16xbf16>, vector<352x16xf32> -> vector<352x16xf32>
    %49 = arith.addf %43, %48 : vector<352x16xf32>
    %c16 = arith.constant 16 : index
    %c0_36 = arith.constant 0 : index
    %50 = vector.load %arg9[%c16, %c0_36] : memref<384x32xf32, #tpu.memory_space<vmem>>, vector<352x32xf32>
    %51 = arith.truncf %50 : vector<352x32xf32> to vector<352x32xbf16>
    %c5 = arith.constant 5 : index
    %c0_37 = arith.constant 0 : index
    %c0_38 = arith.constant 0 : index
    %52 = vector.load %arg5[%c5, %c0_37, %c0_38] : memref<9x32x16xbf16, #tpu.memory_space<vmem>>, vector<1x32x16xbf16>
    %53 = vector.shape_cast %52 : vector<1x32x16xbf16> to vector<32x16xbf16>
    %cst_39 = arith.constant dense<0.000000e+00> : vector<352x16xf32>
    %54 = tpu.matmul %51, %53, %cst_39 {dimension_numbers = #tpu.dot_dimension_numbers<[1], [0], [0], [1], [0, 0, 1, 1], [], []>} : vector<352x32xbf16>, vector<32x16xbf16>, vector<352x16xf32> -> vector<352x16xf32>
    %55 = arith.addf %49, %54 : vector<352x16xf32>
    %c28 = arith.constant 28 : index
    %c0_40 = arith.constant 0 : index
    %56 = vector.load %arg9[%c28, %c0_40] : memref<384x32xf32, #tpu.memory_space<vmem>>, vector<352x32xf32>
    %57 = arith.truncf %56 : vector<352x32xf32> to vector<352x32xbf16>
    %c6 = arith.constant 6 : index
    %c0_41 = arith.constant 0 : index
    %c0_42 = arith.constant 0 : index
    %58 = vector.load %arg5[%c6, %c0_41, %c0_42] : memref<9x32x16xbf16, #tpu.memory_space<vmem>>, vector<1x32x16xbf16>
    %59 = vector.shape_cast %58 : vector<1x32x16xbf16> to vector<32x16xbf16>
    %cst_43 = arith.constant dense<0.000000e+00> : vector<352x16xf32>
    %60 = tpu.matmul %57, %59, %cst_43 {dimension_numbers = #tpu.dot_dimension_numbers<[1], [0], [0], [1], [0, 0, 1, 1], [], []>} : vector<352x32xbf16>, vector<32x16xbf16>, vector<352x16xf32> -> vector<352x16xf32>
    %61 = arith.addf %55, %60 : vector<352x16xf32>
    %c29 = arith.constant 29 : index
    %c0_44 = arith.constant 0 : index
    %62 = vector.load %arg9[%c29, %c0_44] : memref<384x32xf32, #tpu.memory_space<vmem>>, vector<352x32xf32>
    %63 = arith.truncf %62 : vector<352x32xf32> to vector<352x32xbf16>
    %c7 = arith.constant 7 : index
    %c0_45 = arith.constant 0 : index
    %c0_46 = arith.constant 0 : index
    %64 = vector.load %arg5[%c7, %c0_45, %c0_46] : memref<9x32x16xbf16, #tpu.memory_space<vmem>>, vector<1x32x16xbf16>
    %65 = vector.shape_cast %64 : vector<1x32x16xbf16> to vector<32x16xbf16>
    %cst_47 = arith.constant dense<0.000000e+00> : vector<352x16xf32>
    %66 = tpu.matmul %63, %65, %cst_47 {dimension_numbers = #tpu.dot_dimension_numbers<[1], [0], [0], [1], [0, 0, 1, 1], [], []>} : vector<352x32xbf16>, vector<32x16xbf16>, vector<352x16xf32> -> vector<352x16xf32>
    %67 = arith.addf %61, %66 : vector<352x16xf32>
    %c30 = arith.constant 30 : index
    %c0_48 = arith.constant 0 : index
    %68 = vector.load %arg9[%c30, %c0_48] : memref<384x32xf32, #tpu.memory_space<vmem>>, vector<352x32xf32>
    %69 = arith.truncf %68 : vector<352x32xf32> to vector<352x32xbf16>
    %c8 = arith.constant 8 : index
    %c0_49 = arith.constant 0 : index
    %c0_50 = arith.constant 0 : index
    %70 = vector.load %arg5[%c8, %c0_49, %c0_50] : memref<9x32x16xbf16, #tpu.memory_space<vmem>>, vector<1x32x16xbf16>
    %71 = vector.shape_cast %70 : vector<1x32x16xbf16> to vector<32x16xbf16>
    %cst_51 = arith.constant dense<0.000000e+00> : vector<352x16xf32>
    %72 = tpu.matmul %69, %71, %cst_51 {dimension_numbers = #tpu.dot_dimension_numbers<[1], [0], [0], [1], [0, 0, 1, 1], [], []>} : vector<352x32xbf16>, vector<32x16xbf16>, vector<352x16xf32> -> vector<352x16xf32>
    %73 = arith.addf %67, %72 : vector<352x16xf32>
    %c0_52 = arith.constant 0 : index
    %c0_53 = arith.constant 0 : index
    %74 = vector.load %arg6[%c0_52, %c0_53] : memref<1x16xf32, #tpu.memory_space<vmem>>, vector<1x16xf32>
    %75 = vector.broadcast %74 : vector<1x16xf32> to vector<352x16xf32>
    %76 = arith.mulf %73, %75 : vector<352x16xf32>
    %c0_54 = arith.constant 0 : index
    %c0_55 = arith.constant 0 : index
    %77 = vector.load %arg7[%c0_54, %c0_55] : memref<1x16xf32, #tpu.memory_space<vmem>>, vector<1x16xf32>
    %78 = vector.broadcast %77 : vector<1x16xf32> to vector<352x16xf32>
    %79 = arith.addf %76, %78 : vector<352x16xf32>
    %cst_56 = arith.constant 0.000000e+00 : f32
    %80 = vector.broadcast %cst_56 : f32 to vector<352x16xf32>
    %81 = arith.cmpf ogt, %79, %80 : vector<352x16xf32>
    %cst_57 = arith.constant 1.000000e-01 : f32
    %82 = vector.broadcast %cst_57 : f32 to vector<352x16xf32>
    %83 = arith.mulf %82, %79 : vector<352x16xf32>
    %84 = arith.select %81, %79, %83 : vector<352x16xi1>, vector<352x16xf32>
    %c0_58 = arith.constant 0 : index
    %c0_59 = arith.constant 0 : index
    %85 = vector.load %arg10[%c0_58, %c0_59] : memref<352x16xf32, #tpu.memory_space<vmem>>, vector<352x16xf32>
    tpu.vector_store %arg10[%c0_58, %c0_59], %84 {strides = array<i32>} : memref<352x16xf32, #tpu.memory_space<vmem>>, vector<352x16xf32>,
    %c0_60 = arith.constant 0 : index
    %c0_61 = arith.constant 0 : index
    %86 = vector.load %arg10[%c0_60, %c0_61] : memref<352x16xf32, #tpu.memory_space<vmem>>, vector<336x16xf32>
    %c14_62 = arith.constant 14 : index
    %c0_63 = arith.constant 0 : index
    %87 = vector.load %arg10[%c14_62, %c0_63] : memref<352x16xf32, #tpu.memory_space<vmem>>, vector<336x16xf32>
    %88 = arith.maximumf %86, %87 : vector<336x16xf32>
    %89 = arith.truncf %88 : vector<336x16xf32> to vector<336x16xbf16>
    %c0_64 = arith.constant 0 : index
    %c0_65 = arith.constant 0 : index
    %c0_66 = arith.constant 0 : index
    %90 = vector.load %arg8[%c0_64, %c0_65, %c0_66] : memref<1x336x16xbf16, #tpu.memory_space<vmem>>, vector<1x336x16xbf16>
    %91 = vector.shape_cast %90 : vector<1x336x16xbf16> to vector<336x16xbf16>
    %92 = vector.shape_cast %89 : vector<336x16xbf16> to vector<1x336x16xbf16>
    tpu.vector_store %arg8[%c0_64, %c0_65, %c0_66], %92 {strides = array<i32>} : memref<1x336x16xbf16, #tpu.memory_space<vmem>>, vector<1x336x16xbf16>,
    return
  }
  func.func @transform_0(%arg0: i32) -> (i32, i32, i32) {
    %c0_i32 = arith.constant 0 : i32
    %c0_i32_0 = arith.constant 0 : i32
    %c0_i32_1 = arith.constant 0 : i32
    return %arg0, %c0_i32, %c0_i32_0 : i32, i32, i32
  }
  func.func @transform_1(%arg0: i32) -> (i32, i32) {
    %c0_i32 = arith.constant 0 : i32
    %c0_i32_0 = arith.constant 0 : i32
    %c0_i32_1 = arith.constant 0 : i32
    return %c0_i32, %c0_i32_0 : i32, i32
  }
  func.func @transform_2(%arg0: i32) -> (i32, i32) {
    %c0_i32 = arith.constant 0 : i32
    %c0_i32_0 = arith.constant 0 : i32
    %c0_i32_1 = arith.constant 0 : i32
    return %c0_i32, %c0_i32_0 : i32, i32
  }
  func.func @transform_3(%arg0: i32) -> (i32, i32) {
    %c0_i32 = arith.constant 0 : i32
    %c0_i32_0 = arith.constant 0 : i32
    %c0_i32_1 = arith.constant 0 : i32
    return %c0_i32, %c0_i32_0 : i32, i32
  }
  func.func @transform_4(%arg0: i32) -> (i32, i32, i32) {
    %c0_i32 = arith.constant 0 : i32
    %c0_i32_0 = arith.constant 0 : i32
    %c0_i32_1 = arith.constant 0 : i32
    %c0_i32_2 = arith.constant 0 : i32
    return %c0_i32, %c0_i32_0, %c0_i32_1 : i32, i32, i32
  }
  func.func @transform_5(%arg0: i32) -> (i32, i32) {
    %c0_i32 = arith.constant 0 : i32
    %c0_i32_0 = arith.constant 0 : i32
    %c0_i32_1 = arith.constant 0 : i32
    return %c0_i32, %c0_i32_0 : i32, i32
  }
  func.func @transform_6(%arg0: i32) -> (i32, i32) {
    %c0_i32 = arith.constant 0 : i32
    %c0_i32_0 = arith.constant 0 : i32
    %c0_i32_1 = arith.constant 0 : i32
    return %c0_i32, %c0_i32_0 : i32, i32
  }
  func.func @transform_7(%arg0: i32) -> (i32, i32, i32) {
    %c0_i32 = arith.constant 0 : i32
    %c0_i32_0 = arith.constant 0 : i32
    %c0_i32_1 = arith.constant 0 : i32
    return %arg0, %c0_i32, %c0_i32_0 : i32, i32, i32
  }
}

module attributes {stable_mosaic.version = 11 : i64} {
  func.func @_fc_head_kernel(%arg0: i32, %arg1: memref<16x2304xbf16, #tpu.memory_space<vmem>>, %arg2: memref<16x16xbf16, #tpu.memory_space<vmem>>, %arg3: memref<2304x128xbf16, #tpu.memory_space<vmem>>, %arg4: memref<16x128xbf16, #tpu.memory_space<vmem>>, %arg5: memref<1x128xf32, #tpu.memory_space<vmem>>, %arg6: memref<1x128xf32, #tpu.memory_space<vmem>>, %arg7: memref<128x128xbf16, #tpu.memory_space<vmem>>, %arg8: memref<1x128xf32, #tpu.memory_space<vmem>>, %arg9: memref<1x128xf32, #tpu.memory_space<vmem>>, %arg10: memref<128x128xbf16, #tpu.memory_space<vmem>>, %arg11: memref<1x128xf32, #tpu.memory_space<vmem>>, %arg12: memref<16x128xf32, #tpu.memory_space<vmem>>) attributes {dimension_semantics = [#tpu.dimension_semantics<parallel>], iteration_bounds = array<i64: 1>, scalar_prefetch = 0 : i64, scratch_operands = 0 : i64, tpu.core_type = #tpu.core_type<tc>, window_params = [{transform_indices = @transform_0, window_bounds = array<i64: 16, 2304>}, {transform_indices = @transform_1, window_bounds = array<i64: 16, 16>}, {pipeline_mode = #tpu.pipeline_mode<synchronous>, transform_indices = @transform_2, window_bounds = array<i64: 2304, 128>}, {pipeline_mode = #tpu.pipeline_mode<synchronous>, transform_indices = @transform_3, window_bounds = array<i64: 16, 128>}, {pipeline_mode = #tpu.pipeline_mode<synchronous>, transform_indices = @transform_4, window_bounds = array<i64: 1, 128>}, {pipeline_mode = #tpu.pipeline_mode<synchronous>, transform_indices = @transform_5, window_bounds = array<i64: 1, 128>}, {pipeline_mode = #tpu.pipeline_mode<synchronous>, transform_indices = @transform_6, window_bounds = array<i64: 128, 128>}, {pipeline_mode = #tpu.pipeline_mode<synchronous>, transform_indices = @transform_7, window_bounds = array<i64: 1, 128>}, {pipeline_mode = #tpu.pipeline_mode<synchronous>, transform_indices = @transform_8, window_bounds = array<i64: 1, 128>}, {pipeline_mode = #tpu.pipeline_mode<synchronous>, transform_indices = @transform_9, window_bounds = array<i64: 128, 128>}, {pipeline_mode = #tpu.pipeline_mode<synchronous>, transform_indices = @transform_10, window_bounds = array<i64: 1, 128>}, {transform_indices = @transform_11, window_bounds = array<i64: 16, 128>}]} {
    %c0 = arith.constant 0 : index
    %c0_0 = arith.constant 0 : index
    %0 = vector.load %arg1[%c0, %c0_0] : memref<16x2304xbf16, #tpu.memory_space<vmem>>, vector<16x2304xbf16>
    %c0_1 = arith.constant 0 : index
    %c0_2 = arith.constant 0 : index
    %1 = vector.load %arg3[%c0_1, %c0_2] : memref<2304x128xbf16, #tpu.memory_space<vmem>>, vector<2304x128xbf16>
    %cst = arith.constant dense<0.000000e+00> : vector<16x128xf32>
    %2 = tpu.matmul %0, %1, %cst {dimension_numbers = #tpu.dot_dimension_numbers<[1], [0], [0], [1], [0, 0, 1, 1], [], []>} : vector<16x2304xbf16>, vector<2304x128xbf16>, vector<16x128xf32> -> vector<16x128xf32>
    %c0_3 = arith.constant 0 : index
    %c0_4 = arith.constant 0 : index
    %3 = vector.load %arg2[%c0_3, %c0_4] : memref<16x16xbf16, #tpu.memory_space<vmem>>, vector<16x16xbf16>
    %c0_5 = arith.constant 0 : index
    %c0_6 = arith.constant 0 : index
    %4 = vector.load %arg4[%c0_5, %c0_6] : memref<16x128xbf16, #tpu.memory_space<vmem>>, vector<16x128xbf16>
    %cst_7 = arith.constant dense<0.000000e+00> : vector<16x128xf32>
    %5 = tpu.matmul %3, %4, %cst_7 {dimension_numbers = #tpu.dot_dimension_numbers<[1], [0], [0], [1], [0, 0, 1, 1], [], []>} : vector<16x16xbf16>, vector<16x128xbf16>, vector<16x128xf32> -> vector<16x128xf32>
    %6 = arith.addf %2, %5 : vector<16x128xf32>
    %c0_8 = arith.constant 0 : index
    %c0_9 = arith.constant 0 : index
    %7 = vector.load %arg5[%c0_8, %c0_9] : memref<1x128xf32, #tpu.memory_space<vmem>>, vector<1x128xf32>
    %8 = vector.broadcast %7 : vector<1x128xf32> to vector<16x128xf32>
    %9 = arith.mulf %6, %8 : vector<16x128xf32>
    %c0_10 = arith.constant 0 : index
    %c0_11 = arith.constant 0 : index
    %10 = vector.load %arg6[%c0_10, %c0_11] : memref<1x128xf32, #tpu.memory_space<vmem>>, vector<1x128xf32>
    %11 = vector.broadcast %10 : vector<1x128xf32> to vector<16x128xf32>
    %12 = arith.addf %9, %11 : vector<16x128xf32>
    %cst_12 = arith.constant 0.000000e+00 : f32
    %13 = vector.broadcast %cst_12 : f32 to vector<16x128xf32>
    %14 = arith.cmpf ogt, %12, %13 : vector<16x128xf32>
    %cst_13 = arith.constant 1.000000e-01 : f32
    %15 = vector.broadcast %cst_13 : f32 to vector<16x128xf32>
    %16 = arith.mulf %15, %12 : vector<16x128xf32>
    %17 = arith.select %14, %12, %16 : vector<16x128xi1>, vector<16x128xf32>
    %18 = arith.truncf %17 : vector<16x128xf32> to vector<16x128xbf16>
    %c0_14 = arith.constant 0 : index
    %c0_15 = arith.constant 0 : index
    %19 = vector.load %arg7[%c0_14, %c0_15] : memref<128x128xbf16, #tpu.memory_space<vmem>>, vector<128x128xbf16>
    %cst_16 = arith.constant dense<0.000000e+00> : vector<16x128xf32>
    %20 = tpu.matmul %18, %19, %cst_16 {dimension_numbers = #tpu.dot_dimension_numbers<[1], [0], [0], [1], [0, 0, 1, 1], [], []>} : vector<16x128xbf16>, vector<128x128xbf16>, vector<16x128xf32> -> vector<16x128xf32>
    %c0_17 = arith.constant 0 : index
    %c0_18 = arith.constant 0 : index
    %21 = vector.load %arg8[%c0_17, %c0_18] : memref<1x128xf32, #tpu.memory_space<vmem>>, vector<1x128xf32>
    %22 = vector.broadcast %21 : vector<1x128xf32> to vector<16x128xf32>
    %23 = arith.mulf %20, %22 : vector<16x128xf32>
    %c0_19 = arith.constant 0 : index
    %c0_20 = arith.constant 0 : index
    %24 = vector.load %arg9[%c0_19, %c0_20] : memref<1x128xf32, #tpu.memory_space<vmem>>, vector<1x128xf32>
    %25 = vector.broadcast %24 : vector<1x128xf32> to vector<16x128xf32>
    %26 = arith.addf %23, %25 : vector<16x128xf32>
    %cst_21 = arith.constant 0.000000e+00 : f32
    %27 = vector.broadcast %cst_21 : f32 to vector<16x128xf32>
    %28 = arith.cmpf ogt, %26, %27 : vector<16x128xf32>
    %cst_22 = arith.constant 1.000000e-01 : f32
    %29 = vector.broadcast %cst_22 : f32 to vector<16x128xf32>
    %30 = arith.mulf %29, %26 : vector<16x128xf32>
    %31 = arith.select %28, %26, %30 : vector<16x128xi1>, vector<16x128xf32>
    %32 = arith.truncf %31 : vector<16x128xf32> to vector<16x128xbf16>
    %c0_23 = arith.constant 0 : index
    %c0_24 = arith.constant 0 : index
    %33 = vector.load %arg10[%c0_23, %c0_24] : memref<128x128xbf16, #tpu.memory_space<vmem>>, vector<128x128xbf16>
    %cst_25 = arith.constant dense<0.000000e+00> : vector<16x128xf32>
    %34 = tpu.matmul %32, %33, %cst_25 {dimension_numbers = #tpu.dot_dimension_numbers<[1], [0], [0], [1], [0, 0, 1, 1], [], []>} : vector<16x128xbf16>, vector<128x128xbf16>, vector<16x128xf32> -> vector<16x128xf32>
    %c0_26 = arith.constant 0 : index
    %c0_27 = arith.constant 0 : index
    %35 = vector.load %arg11[%c0_26, %c0_27] : memref<1x128xf32, #tpu.memory_space<vmem>>, vector<1x128xf32>
    %36 = vector.broadcast %35 : vector<1x128xf32> to vector<16x128xf32>
    %37 = arith.addf %34, %36 : vector<16x128xf32>
    %cst_28 = arith.constant 0.000000e+00 : f32
    %38 = vector.broadcast %cst_28 : f32 to vector<16x128xf32>
    %39 = arith.subf %38, %37 : vector<16x128xf32>
    %40 = math.exp %39 : vector<16x128xf32>
    %cst_29 = arith.constant 1.000000e+00 : f32
    %41 = vector.broadcast %cst_29 : f32 to vector<16x128xf32>
    %42 = arith.addf %41, %40 : vector<16x128xf32>
    %cst_30 = arith.constant 1.000000e+00 : f32
    %43 = vector.broadcast %cst_30 : f32 to vector<16x128xf32>
    %44 = arith.divf %43, %42 : vector<16x128xf32>
    %45 = tpu.iota {dimensions = array<i32: 1>} : vector<16x128xi32>
    %c64_i32 = arith.constant 64 : i32
    %46 = vector.broadcast %c64_i32 : i32 to vector<16x128xi32>
    %47 = arith.cmpi slt, %45, %46 : vector<16x128xi32>
    %48 = arith.select %47, %31, %44 : vector<16x128xi1>, vector<16x128xf32>
    %c0_31 = arith.constant 0 : index
    %c0_32 = arith.constant 0 : index
    %49 = vector.load %arg12[%c0_31, %c0_32] : memref<16x128xf32, #tpu.memory_space<vmem>>, vector<16x128xf32>
    tpu.vector_store %arg12[%c0_31, %c0_32], %48 {strides = array<i32>} : memref<16x128xf32, #tpu.memory_space<vmem>>, vector<16x128xf32>,
    return
  }
  func.func @transform_0(%arg0: i32) -> (i32, i32) {
    %c0_i32 = arith.constant 0 : i32
    %c0_i32_0 = arith.constant 0 : i32
    return %arg0, %c0_i32 : i32, i32
  }
  func.func @transform_1(%arg0: i32) -> (i32, i32) {
    %c0_i32 = arith.constant 0 : i32
    %c0_i32_0 = arith.constant 0 : i32
    return %arg0, %c0_i32 : i32, i32
  }
  func.func @transform_2(%arg0: i32) -> (i32, i32) {
    %c0_i32 = arith.constant 0 : i32
    %c0_i32_0 = arith.constant 0 : i32
    %c0_i32_1 = arith.constant 0 : i32
    return %c0_i32, %c0_i32_0 : i32, i32
  }
  func.func @transform_3(%arg0: i32) -> (i32, i32) {
    %c0_i32 = arith.constant 0 : i32
    %c0_i32_0 = arith.constant 0 : i32
    %c0_i32_1 = arith.constant 0 : i32
    return %c0_i32, %c0_i32_0 : i32, i32
  }
  func.func @transform_4(%arg0: i32) -> (i32, i32) {
    %c0_i32 = arith.constant 0 : i32
    %c0_i32_0 = arith.constant 0 : i32
    %c0_i32_1 = arith.constant 0 : i32
    return %c0_i32, %c0_i32_0 : i32, i32
  }
  func.func @transform_5(%arg0: i32) -> (i32, i32) {
    %c0_i32 = arith.constant 0 : i32
    %c0_i32_0 = arith.constant 0 : i32
    %c0_i32_1 = arith.constant 0 : i32
    return %c0_i32, %c0_i32_0 : i32, i32
  }
  func.func @transform_6(%arg0: i32) -> (i32, i32) {
    %c0_i32 = arith.constant 0 : i32
    %c0_i32_0 = arith.constant 0 : i32
    %c0_i32_1 = arith.constant 0 : i32
    return %c0_i32, %c0_i32_0 : i32, i32
  }
  func.func @transform_7(%arg0: i32) -> (i32, i32) {
    %c0_i32 = arith.constant 0 : i32
    %c0_i32_0 = arith.constant 0 : i32
    %c0_i32_1 = arith.constant 0 : i32
    return %c0_i32, %c0_i32_0 : i32, i32
  }
  func.func @transform_8(%arg0: i32) -> (i32, i32) {
    %c0_i32 = arith.constant 0 : i32
    %c0_i32_0 = arith.constant 0 : i32
    %c0_i32_1 = arith.constant 0 : i32
    return %c0_i32, %c0_i32_0 : i32, i32
  }
  func.func @transform_9(%arg0: i32) -> (i32, i32) {
    %c0_i32 = arith.constant 0 : i32
    %c0_i32_0 = arith.constant 0 : i32
    %c0_i32_1 = arith.constant 0 : i32
    return %c0_i32, %c0_i32_0 : i32, i32
  }
  func.func @transform_10(%arg0: i32) -> (i32, i32) {
    %c0_i32 = arith.constant 0 : i32
    %c0_i32_0 = arith.constant 0 : i32
    %c0_i32_1 = arith.constant 0 : i32
    return %c0_i32, %c0_i32_0 : i32, i32
  }
  func.func @transform_11(%arg0: i32) -> (i32, i32) {
    %c0_i32 = arith.constant 0 : i32
    %c0_i32_0 = arith.constant 0 : i32
    return %arg0, %c0_i32 : i32, i32
  }
}

</mosaic_0001>

<llo_original>
// kernel: tile.13
$region0: #{tile.13}
  #allocation0 [shape = 's32[1]{0}', space=sflag, size = 0x4, scoped, tag = 'scoped memory for tile.13']
  %s0 = inlined_call_operand.vmem [shape: f32[32], index: 0, kind: input, shape index: {}]
  %s1 = inlined_call_operand.vmem [shape: f32[4,32], index: 1, kind: output, shape index: {}]
  // Predicated region
  $region2: #{tile.13} parent=0 // pred_check
    _
  $region3: #{tile.13} parent=0 // pred_check_branch
    %3 = sbr.rel (0) target = $region5
  $region4: #{tile.13} parent=0 // pred_region
    _
  $region5: #{tile.13} parent=0 // pred_fallthru
    _
  %v4 = vld [vmem:[%s0] ss:$0 sm:$0xff]
  %5 = vst [vmem:[%s1] sm:$0xf] %v4

// kernel: tile.14
$region0: #{tile.14}
  %s0 = inlined_call_operand.vmem [shape: f32[4,32], index: 0, kind: input, shape index: {}]
  %s1 = inlined_call_operand.vmem [shape: f32[1,128], index: 1, kind: output, shape index: {}]
  $region1: #{tile.14} parent=0
    #allocation0 [shape = 'u8[4096]{0}', space=vmem, size = 0x1000, scoped, tag = 'scoped mem for output reshape']
    #allocation1 [shape = 'u8[4096]{0}', space=vmem, size = 0x1000, scoped, tag = 'scoped mem for input reshape']
    %s3 = sshllo.u32 0, 4
    %v4 = vld [vmem:[%s0] sm:%s3]
    %5 = vst [vmem:[#allocation1] sm:%s3] %v4
    %v6 = vld [vmem:[#allocation1] sm:$0x1]
    %vm7 = vcmask 261120
    %8 = vst.msk [vmem:[#allocation0] sm:$0x1] %vm7, %v6
    %s9 = scalar_lea.vmem [#allocation1], 3
    %v10 = vld [vmem:[%s9] sm:$0x1]
    %11 = vrot.lane.b32.xlu0 %v10, 96
    %v12 = vpop.permute.xlu0 %11
    %vm13 = vcmask 1048320
    %14 = vst.msk [vmem:[#allocation0] sm:$0x1] %vm13, %v12
    %s15 = scalar_lea.vmem [#allocation1], 2
    %v16 = vld [vmem:[%s15] sm:$0x1]
    %17 = vrot.lane.b32.xlu0 %v16, 64
    %v18 = vpop.permute.xlu0 %17
    %vm19 = vcmask 785920
    %20 = vst.msk [vmem:[#allocation0] sm:$0x1] %vm19, %v18
    %s21 = scalar_lea.vmem [#allocation1], 1
    %v22 = vld [vmem:[%s21] sm:$0x1]
    %23 = vrot.lane.b32.xlu0 %v22, 32
    %v24 = vpop.permute.xlu0 %23
    %vm25 = vcmask 523520
    %26 = vst.msk [vmem:[#allocation0] sm:$0x1] %vm25, %v24
    %s28 = sshllo.u32 0, 1
    %v30 = vld [vmem:[#allocation0] sm:%s28]
    %s31 = sshllo.u32 0, 1
    %32 = vst [vmem:[%s1] sm:%s31] %v30

// kernel: discriminator_forward.2
$region0: #{discriminator_forward.2}
  #allocation0 [shape = 'u32[]', space=smem, size = 0x4, offset = 0x4, fixed_abs, tag = 'smem constant byte address 0x4 - core index']
  #allocation1 [shape = 'u32[144,128]{1,0:T(1,128)}', space=vmem, size = 0x12000, scoped, tag = 'internal scratch']
  #allocation2 [shape = 'f32[384,32]{1,0:T(8,128)}', space=vmem, size = 0x30000, scoped, tag = 'scratch operand']
  #allocation3 [shape = 'f32[352,16]{1,0:T(8,128)}', space=vmem, size = 0x2c000, scoped, tag = 'scratch operand']
  %s0 = inlined_call_operand.vmem [shape: bf16[2,384,16], index: 0, kind: input, shape index: {}]
  %s1 = inlined_call_operand.vmem [shape: bf16[16,128], index: 1, kind: input, shape index: {}]
  %s2 = inlined_call_operand.vmem [shape: f32[1,128], index: 2, kind: input, shape index: {}]
  %s3 = inlined_call_operand.vmem [shape: f32[1,128], index: 3, kind: input, shape index: {}]
  %s4 = inlined_call_operand.vmem [shape: bf16[9,32,16], index: 4, kind: input, shape index: {}]
  %s5 = inlined_call_operand.vmem [shape: f32[1,16], index: 5, kind: input, shape index: {}]
  %s6 = inlined_call_operand.vmem [shape: f32[1,16], index: 6, kind: input, shape index: {}]
  %s7 = inlined_call_operand.vmem [shape: bf16[2,336,16], index: 7, kind: output, shape index: {}]
  %s8 = sld [smem:[#allocation0]]
  $region61: #{discriminator_forward.2} parent=0
    _
  %s10 = ssub.s32 1, %s8
  %s11 = scalar_select 0, %s10, %s8
  loop: start=0, step=1, limit=4
  $region2: #{discriminator_forward.2} parent=0 // loop_pre_header
    _
  $region3: #{discriminator_forward.2} parent=0 // loop_header
    %s13 = sphi 0, %s17
    %p14 = scmp.ge.s32.totalorder %s13, 4
    %s23 = sphi 0, %s25
    %s26 = sphi 0, %s23
    %s27 = sphi 0, %s26
    %s43 = sphi 0, %s27
    %s47 = sphi 0, %s47
    %s49 = sphi 0, %s47
    %s50 = sphi 0, %s49
    %s64 = sphi 0, %s50
    %s68 = sphi 0, %s68
    %s70 = sphi 0, %s68
    %s71 = sphi 0, %s70
    %s85 = sphi 0, %s71
    %s89 = sphi 0, %s89
    %s91 = sphi 0, %s89
    %s92 = sphi 0, %s91
    %s106 = sphi 0, %s92
    %s110 = sphi 0, %s110
    %s112 = sphi 0, %s110
    %s113 = sphi 0, %s112
    %s127 = sphi 0, %s113
    %s131 = sphi 0, %s131
    %s133 = sphi 0, %s131
    %s134 = sphi 0, %s133
    %s148 = sphi 0, %s134
    %s152 = sphi 0, %s152
    %s154 = sphi 0, %s152
    %s155 = sphi 0, %s154
    %s169 = sphi 0, %s155
    %s175 = sphi 0, %s177
    %s178 = sphi 0, %s175
    %s179 = sphi 0, %s178
    %s195 = sphi 0, %s179
  $region4: #{discriminator_forward.2} parent=0 // loop_header_branch
    %16 = sbr.rel (%p14) target = $region8
  $region5: #{discriminator_forward.2} parent=0 // loop_body
    %s18 = ssub.s32 %s13, 1
    %s19 = ssub.s32 %s13, 2
    %s20 = sadd.s32 %s13, 1
    %s21 = ssub.s32 %s13, %s20
    %p22 = scmp.eq.s32.totalorder %s21, 0
    %s24 = sadd.s32 %s23, 1
    %s25 = scalar_select %p22, %s23, %s24
    %p28 = pneg %p22
    %p29 = scmp.eq.s32.totalorder %s13, 1
    %p30 = por %p28, %p29
    %p31 = scmp.ne.s32.totalorder %s23, %s26
    %p32 = scmp.eq.s32.totalorder %s13, 0
    %p33 = por %p31, %p32
    %p34 = scmp.ne.s32.totalorder %s23, %s26
    %p35 = scmp.eq.s32.totalorder %s18, 1
    %p36 = por %p34, %p35
    %p37 = scmp.ne.s32.totalorder %s26, %s27
    %p38 = scmp.eq.s32.totalorder %s18, 0
    %p39 = por %p37, %p38
    %p40 = scmp.ne.s32.totalorder %s26, %s27
    %p41 = scmp.eq.s32.totalorder %s19, 1
    %p42 = por %p40, %p41
    %p44 = scmp.ne.s32.totalorder %s27, %s43
    %p45 = scmp.eq.s32.totalorder %s19, 0
    %p46 = por %p44, %p45
    %s48 = sadd.s32 %s47, 1
    %p51 = scmp.eq.s32.totalorder %s13, 1
    %p52 = scmp.ne.s32.totalorder %s47, %s49
    %p53 = scmp.eq.s32.totalorder %s13, 0
    %p54 = por %p52, %p53
    %p55 = scmp.ne.s32.totalorder %s47, %s49
    %p56 = scmp.eq.s32.totalorder %s18, 1
    %p57 = por %p55, %p56
    %p58 = scmp.ne.s32.totalorder %s49, %s50
    %p59 = scmp.eq.s32.totalorder %s18, 0
    %p60 = por %p58, %p59
    %p61 = scmp.ne.s32.totalorder %s49, %s50
    %p62 = scmp.eq.s32.totalorder %s19, 1
    %p63 = por %p61, %p62
    %p65 = scmp.ne.s32.totalorder %s50, %s64
    %p66 = scmp.eq.s32.totalorder %s19, 0
    %p67 = por %p65, %p66
    %s69 = sadd.s32 %s68, 1
    %p72 = scmp.eq.s32.totalorder %s13, 1
    %p73 = scmp.ne.s32.totalorder %s68, %s70
    %p74 = scmp.eq.s32.totalorder %s13, 0
    %p75 = por %p73, %p74
    %p76 = scmp.ne.s32.totalorder %s68, %s70
    %p77 = scmp.eq.s32.totalorder %s18, 1
    %p78 = por %p76, %p77
    %p79 = scmp.ne.s32.totalorder %s70, %s71
    %p80 = scmp.eq.s32.totalorder %s18, 0
    %p81 = por %p79, %p80
    %p82 = scmp.ne.s32.totalorder %s70, %s71
    %p83 = scmp.eq.s32.totalorder %s19, 1
    %p84 = por %p82, %p83
    %p86 = scmp.ne.s32.totalorder %s71, %s85
    %p87 = scmp.eq.s32.totalorder %s19, 0
    %p88 = por %p86, %p87
    %s90 = sadd.s32 %s89, 1
    %p93 = scmp.eq.s32.totalorder %s13, 1
    %p94 = scmp.ne.s32.totalorder %s89, %s91
    %p95 = scmp.eq.s32.totalorder %s13, 0
    %p96 = por %p94, %p95
    %p97 = scmp.ne.s32.totalorder %s89, %s91
    %p98 = scmp.eq.s32.totalorder %s18, 1
    %p99 = por %p97, %p98
    %p100 = scmp.ne.s32.totalorder %s91, %s92
    %p101 = scmp.eq.s32.totalorder %s18, 0
    %p102 = por %p100, %p101
    %p103 = scmp.ne.s32.totalorder %s91, %s92
    %p104 = scmp.eq.s32.totalorder %s19, 1
    %p105 = por %p103, %p104
    %p107 = scmp.ne.s32.totalorder %s92, %s106
    %p108 = scmp.eq.s32.totalorder %s19, 0
    %p109 = por %p107, %p108
    %s111 = sadd.s32 %s110, 1
    %p114 = scmp.eq.s32.totalorder %s13, 1
    %p115 = scmp.ne.s32.totalorder %s110, %s112
    %p116 = scmp.eq.s32.totalorder %s13, 0
    %p117 = por %p115, %p116
    %p118 = scmp.ne.s32.totalorder %s110, %s112
    %p119 = scmp.eq.s32.totalorder %s18, 1
    %p120 = por %p118, %p119
    %p121 = scmp.ne.s32.totalorder %s112, %s113
    %p122 = scmp.eq.s32.totalorder %s18, 0
    %p123 = por %p121, %p122
    %p124 = scmp.ne.s32.totalorder %s112, %s113
    %p125 = scmp.eq.s32.totalorder %s19, 1
    %p126 = por %p124, %p125
    %p128 = scmp.ne.s32.totalorder %s113, %s127
    %p129 = scmp.eq.s32.totalorder %s19, 0
    %p130 = por %p128, %p129
    %s132 = sadd.s32 %s131, 1
    %p135 = scmp.eq.s32.totalorder %s13, 1
    %p136 = scmp.ne.s32.totalorder %s131, %s133
    %p137 = scmp.eq.s32.totalorder %s13, 0
    %p138 = por %p136, %p137
    %p139 = scmp.ne.s32.totalorder %s131, %s133
    %p140 = scmp.eq.s32.totalorder %s18, 1
    %p141 = por %p139, %p140
    %p142 = scmp.ne.s32.totalorder %s133, %s134
    %p143 = scmp.eq.s32.totalorder %s18, 0
    %p144 = por %p142, %p143
    %p145 = scmp.ne.s32.totalorder %s133, %s134
    %p146 = scmp.eq.s32.totalorder %s19, 1
    %p147 = por %p145, %p146
    %p149 = scmp.ne.s32.totalorder %s134, %s148
    %p150 = scmp.eq.s32.totalorder %s19, 0
    %p151 = por %p149, %p150
    %s153 = sadd.s32 %s152, 1
    %p156 = scmp.eq.s32.totalorder %s13, 1
    %p157 = scmp.ne.s32.totalorder %s152, %s154
    %p158 = scmp.eq.s32.totalorder %s13, 0
    %p159 = por %p157, %p158
    %p160 = scmp.ne.s32.totalorder %s152, %s154
    %p161 = scmp.eq.s32.totalorder %s18, 1
    %p162 = por %p160, %p161
    %p163 = scmp.ne.s32.totalorder %s154, %s155
    %p164 = scmp.eq.s32.totalorder %s18, 0
    %p165 = por %p163, %p164
    %p166 = scmp.ne.s32.totalorder %s154, %s155
    %p167 = scmp.eq.s32.totalorder %s19, 1
    %p168 = por %p166, %p167
    %p170 = scmp.ne.s32.totalorder %s155, %s169
    %p171 = scmp.eq.s32.totalorder %s19, 0
    %p172 = por %p170, %p171
    %s173 = ssub.s32 %s13, %s20
    %p174 = scmp.eq.s32.totalorder %s173, 0
    %s176 = sadd.s32 %s175, 1
    %s177 = scalar_select %p174, %s175, %s176
    %p180 = pneg %p174
    %p181 = scmp.eq.s32.totalorder %s13, 1
    %p182 = por %p180, %p181
    %p183 = scmp.ne.s32.totalorder %s175, %s178
    %p184 = scmp.eq.s32.totalorder %s13, 0
    %p185 = por %p183, %p184
    %p186 = scmp.ne.s32.totalorder %s175, %s178
    %p187 = scmp.eq.s32.totalorder %s18, 1
    %p188 = por %p186, %p187
    %p189 = scmp.ne.s32.totalorder %s178, %s179
    %p190 = scmp.eq.s32.totalorder %s18, 0
    %p191 = por %p189, %p190
    %p192 = scmp.ne.s32.totalorder %s178, %s179
    %p193 = scmp.eq.s32.totalorder %s19, 1
    %p194 = por %p192, %p193
    %p196 = scmp.ne.s32.totalorder %s179, %s195
    %p197 = scmp.eq.s32.totalorder %s19, 0
    %p198 = por %p196, %p197
    %p199 = scmp.le.s32.totalorder 1, %s13
    %p200 = scmp.lt.s32.totalorder %s13, 3
    %p201 = pnand %p199, %p200
    %p202 = pneg %p201
    // Predicated region
    $region9: #{discriminator_forward.2} parent=5 // pred_check
      _
    $region10: #{discriminator_forward.2} parent=5 // pred_check_branch
      %204 = sbr.rel (%p201) target = $region12
    $region11: #{discriminator_forward.2} parent=5 // pred_region
      %s205 = ssub.s32 %s13, 1
      // Predicated region
      $region13: #{discriminator_forward.2} parent=11 // pred_check
        %p206 = pneg %p60
      $region14: #{discriminator_forward.2} parent=11 // pred_check_branch
        %208 = sbr.rel (%p206) target = $region16
      $region15: #{discriminator_forward.2} parent=11 // pred_region
        _
      $region16: #{discriminator_forward.2} parent=11 // pred_fallthru
        _
      // Predicated region
      $region17: #{discriminator_forward.2} parent=11 // pred_check
        %p209 = pneg %p81
      $region18: #{discriminator_forward.2} parent=11 // pred_check_branch
        %211 = sbr.rel (%p209) target = $region20
      $region19: #{discriminator_forward.2} parent=11 // pred_region
        _
      $region20: #{discriminator_forward.2} parent=11 // pred_fallthru
        _
      // Predicated region
      $region21: #{discriminator_forward.2} parent=11 // pred_check
        %p212 = pneg %p102
      $region22: #{discriminator_forward.2} parent=11 // pred_check_branch
        %214 = sbr.rel (%p212) target = $region24
      $region23: #{discriminator_forward.2} parent=11 // pred_region
        _
      $region24: #{discriminator_forward.2} parent=11 // pred_fallthru
        _
      // Predicated region
      $region25: #{discriminator_forward.2} parent=11 // pred_check
        %p215 = pneg %p123
      $region26: #{discriminator_forward.2} parent=11 // pred_check_branch
        %217 = sbr.rel (%p215) target = $region28
      $region27: #{discriminator_forward.2} parent=11 // pred_region
        _
      $region28: #{discriminator_forward.2} parent=11 // pred_fallthru
        _
      // Predicated region
      $region29: #{discriminator_forward.2} parent=11 // pred_check
        %p218 = pneg %p144
      $region30: #{discriminator_forward.2} parent=11 // pred_check_branch
        %220 = sbr.rel (%p218) target = $region32
      $region31: #{discriminator_forward.2} parent=11 // pred_region
        _
      $region32: #{discriminator_forward.2} parent=11 // pred_fallthru
        _
      // Predicated region
      $region33: #{discriminator_forward.2} parent=11 // pred_check
        %p221 = pneg %p165
      $region34: #{discriminator_forward.2} parent=11 // pred_check_branch
        %223 = sbr.rel (%p221) target = $region36
      $region35: #{discriminator_forward.2} parent=11 // pred_region
        _
      $region36: #{discriminator_forward.2} parent=11 // pred_fallthru
        _
    $region12: #{discriminator_forward.2} parent=5 // pred_fallthru
      _
    %p224 = scmp.lt.s32.totalorder %s13, 2
    // Predicated region
    $region37: #{discriminator_forward.2} parent=5 // pred_check
      %p225 = pneg %p224
    $region38: #{discriminator_forward.2} parent=5 // pred_check_branch
      %227 = sbr.rel (%p225) target = $region40
    $region39: #{discriminator_forward.2} parent=5 // pred_region
      // Predicated region
      $region41: #{discriminator_forward.2} parent=39 // pred_check
        %p228 = pneg %p33
      $region42: #{discriminator_forward.2} parent=39 // pred_check_branch
        %230 = sbr.rel (%p228) target = $region44
      $region43: #{discriminator_forward.2} parent=39 // pred_region
        %p231 = scmp.lt.s32.totalorder %s13, 1
        %s232 = scalar_select %p231, %s13, 1
        %s233 = smul.addr %s232, 48
        %s234 = smul.addr %s233, 4
        %s235 = scalar_lea.vmem %s0, %s234
      $region44: #{discriminator_forward.2} parent=39 // pred_fallthru
        _
    $region40: #{discriminator_forward.2} parent=5 // pred_fallthru
      _
    %p236 = scmp.le.s32.totalorder 1, %s13
    %p237 = scmp.lt.s32.totalorder %s13, 3
    %p238 = pnand %p236, %p237
    %p239 = pneg %p238
    // Predicated region
    $region45: #{discriminator_forward.2} parent=5 // pred_check
      _
    $region46: #{discriminator_forward.2} parent=5 // pred_check_branch
      %241 = sbr.rel (%p238) target = $region48
    $region47: #{discriminator_forward.2} parent=5 // pred_region
      %s242 = ssub.s32 %s13, 1
      %p243 = scmp.lt.s32.totalorder %s18, 1
      %s244 = scalar_select %p243, %s18, 1
      %s245 = smul.addr %s244, 48
      %s246 = smul.addr %s245, 4
      %s247 = scalar_lea.vmem %s0, %s246
      %p248 = pneg %p39
      %p249 = pneg %p36
      %p250 = pneg %p60
      %p251 = pneg %p57
      %p252 = pneg %p81
      %p253 = pneg %p78
      %p254 = pneg %p102
      %p255 = pneg %p99
      %p256 = pneg %p123
      %p257 = pneg %p120
      %p258 = pneg %p144
      %p259 = pneg %p141
      %p260 = pneg %p165
      %p261 = pneg %p162
      %p262 = pneg %p191
      %p263 = pneg %p188
      %p264 = scmp.lt.s32.totalorder %s18, 1
      %s265 = scalar_select %p264, %s18, 1
      %s266 = smul.addr %s265, 42
      %s267 = smul.addr %s266, 4
      %s268 = scalar_lea.vmem %s7, %s267
      %p269 = scmp.lt.s32.totalorder %s18, 1
      %s270 = scalar_select %p269, %s18, 1
      %s271 = smul.addr %s270, 48
      %s272 = smul.addr %s271, 4
      %s273 = scalar_lea.vmem %s0, %s272
      %p274 = scmp.lt.s32.totalorder %s18, 1
      %s275 = scalar_select %p274, %s18, 1
      %s276 = smul.addr %s275, 42
      %s277 = smul.addr %s276, 4
      %s278 = scalar_lea.vmem %s7, %s277
      %v280 = vld [vmem:[%s273] sm:$0xf]
      %v281 = vld [vmem:[%s273 + $0x4] sm:$0xf]
      %v282 = vld [vmem:[%s273 + $0x8] sm:$0xf]
      %v283 = vld [vmem:[%s273 + $0xc] sm:$0xf]
      %v284 = vld [vmem:[%s273 + $0x10] sm:$0xf]
      %v285 = vld [vmem:[%s273 + $0x14] sm:$0xf]
      %v286 = vld [vmem:[%s273 + $0x18] sm:$0xf]
      %v287 = vld [vmem:[%s273 + $0x1c] sm:$0xf]
      %v288 = vld [vmem:[%s273 + $0x20] sm:$0xf]
      %v289 = vld [vmem:[%s273 + $0x24] sm:$0xf]
      %v290 = vld [vmem:[%s273 + $0x28] sm:$0xf]
      %v291 = vld [vmem:[%s273 + $0x2c] sm:$0xf]
      %v292 = vld [vmem:[%s273 + $0x30] sm:$0xf]
      %v293 = vld [vmem:[%s273 + $0x34] sm:$0xf]
      %v294 = vld [vmem:[%s273 + $0x38] sm:$0xf]
      %v295 = vld [vmem:[%s273 + $0x3c] sm:$0xf]
      %v296 = vld [vmem:[%s273 + $0x40] sm:$0xf]
      %v297 = vld [vmem:[%s273 + $0x44] sm:$0xf]
      %v298 = vld [vmem:[%s273 + $0x48] sm:$0xf]
      %v299 = vld [vmem:[%s273 + $0x4c] sm:$0xf]
      %v300 = vld [vmem:[%s273 + $0x50] sm:$0xf]
      %v301 = vld [vmem:[%s273 + $0x54] sm:$0xf]
      %v302 = vld [vmem:[%s273 + $0x58] sm:$0xf]
      %v303 = vld [vmem:[%s273 + $0x5c] sm:$0xf]
      %v304 = vld [vmem:[%s273 + $0x60] sm:$0xf]
      %v305 = vld [vmem:[%s273 + $0x64] sm:$0xf]
      %v306 = vld [vmem:[%s273 + $0x68] sm:$0xf]
      %v307 = vld [vmem:[%s273 + $0x6c] sm:$0xf]
      %v308 = vld [vmem:[%s273 + $0x70] sm:$0xf]
      %v309 = vld [vmem:[%s273 + $0x74] sm:$0xf]
      %v310 = vld [vmem:[%s273 + $0x78] sm:$0xf]
      %v311 = vld [vmem:[%s273 + $0x7c] sm:$0xf]
      %v312 = vld [vmem:[%s273 + $0x80] sm:$0xf]
      %v313 = vld [vmem:[%s273 + $0x84] sm:$0xf]
      %v314 = vld [vmem:[%s273 + $0x88] sm:$0xf]
      %v315 = vld [vmem:[%s273 + $0x8c] sm:$0xf]
      %v316 = vld [vmem:[%s273 + $0x90] sm:$0xf]
      %v317 = vld [vmem:[%s273 + $0x94] sm:$0xf]
      %v318 = vld [vmem:[%s273 + $0x98] sm:$0xf]
      %v319 = vld [vmem:[%s273 + $0x9c] sm:$0xf]
      %v320 = vld [vmem:[%s273 + $0xa0] sm:$0xf]
      %v321 = vld [vmem:[%s273 + $0xa4] sm:$0xf]
      %v322 = vld [vmem:[%s273 + $0xa8] sm:$0xf]
      %v323 = vld [vmem:[%s273 + $0xac] sm:$0xf]
      %v324 = vld [vmem:[%s273 + $0xb0] sm:$0xf]
      %v325 = vld [vmem:[%s273 + $0xb4] sm:$0xf]
      %v326 = vld [vmem:[%s273 + $0xb8] sm:$0xf]
      %v327 = vld [vmem:[%s273 + $0xbc] sm:$0xf]
      %v328 = vld [vmem:[%s1] sm:$0xf]
      %v329 = vld [vmem:[%s1 + $0x4] sm:$0xf]
      %v378 = vunpack.c.l.b16 %v280
      %v379 = vunpack.c.l.b16 %v281
      %v380 = vunpack.c.l.b16 %v282
      %v381 = vunpack.c.l.b16 %v283
      %v382 = vunpack.c.l.b16 %v284
      %v383 = vunpack.c.l.b16 %v285
      %v384 = vunpack.c.l.b16 %v286
      %v385 = vunpack.c.l.b16 %v287
      %v386 = vunpack.c.l.b16 %v288
      %v387 = vunpack.c.l.b16 %v289
      %v388 = vunpack.c.l.b16 %v290
      %v389 = vunpack.c.l.b16 %v291
      %v390 = vunpack.c.l.b16 %v292
      %v391 = vunpack.c.l.b16 %v293
      %v392 = vunpack.c.l.b16 %v294
      %v393 = vunpack.c.l.b16 %v295
      %v394 = vunpack.c.l.b16 %v296
      %v395 = vunpack.c.l.b16 %v297
      %v396 = vunpack.c.l.b16 %v298
      %v397 = vunpack.c.l.b16 %v299
      %v398 = vunpack.c.l.b16 %v300
      %v399 = vunpack.c.l.b16 %v301
      %v400 = vunpack.c.l.b16 %v302
      %v401 = vunpack.c.l.b16 %v303
      %v402 = vunpack.c.l.b16 %v304
      %v403 = vunpack.c.l.b16 %v305
      %v404 = vunpack.c.l.b16 %v306
      %v405 = vunpack.c.l.b16 %v307
      %v406 = vunpack.c.l.b16 %v308
      %v407 = vunpack.c.l.b16 %v309
      %v408 = vunpack.c.l.b16 %v310
      %v409 = vunpack.c.l.b16 %v311
      %v410 = vunpack.c.l.b16 %v312
      %v411 = vunpack.c.l.b16 %v313
      %v412 = vunpack.c.l.b16 %v314
      %v413 = vunpack.c.l.b16 %v315
      %v414 = vunpack.c.l.b16 %v316
      %v415 = vunpack.c.l.b16 %v317
      %v416 = vunpack.c.l.b16 %v318
      %v417 = vunpack.c.l.b16 %v319
      %v418 = vunpack.c.l.b16 %v320
      %v419 = vunpack.c.l.b16 %v321
      %v420 = vunpack.c.l.b16 %v322
      %v421 = vunpack.c.l.b16 %v323
      %v422 = vunpack.c.l.b16 %v324
      %v423 = vunpack.c.l.b16 %v325
      %v424 = vunpack.c.l.b16 %v326
      %v425 = vunpack.c.l.b16 %v327
      %v426 = vpack.c.b16 %v379, %v378
      %v427 = vpack.c.b16 %v381, %v380
      %v428 = vpack.c.b16 %v383, %v382
      %v429 = vpack.c.b16 %v385, %v384
      %v430 = vpack.c.b16 %v387, %v386
      %v431 = vpack.c.b16 %v389, %v388
      %v432 = vpack.c.b16 %v391, %v390
      %v433 = vpack.c.b16 %v393, %v392
      %v434 = vpack.c.b16 %v395, %v394
      %v435 = vpack.c.b16 %v397, %v396
      %v436 = vpack.c.b16 %v399, %v398
      %v437 = vpack.c.b16 %v401, %v400
      %v438 = vpack.c.b16 %v403, %v402
      %v439 = vpack.c.b16 %v405, %v404
      %v440 = vpack.c.b16 %v407, %v406
      %v441 = vpack.c.b16 %v409, %v408
      %v442 = vpack.c.b16 %v411, %v410
      %v443 = vpack.c.b16 %v413, %v412
      %v444 = vpack.c.b16 %v415, %v414
      %v445 = vpack.c.b16 %v417, %v416
      %v446 = vpack.c.b16 %v419, %v418
      %v447 = vpack.c.b16 %v421, %v420
      %v448 = vpack.c.b16 %v423, %v422
      %v449 = vpack.c.b16 %v425, %v424
      %v452 = vunpack.c.l.b16 %v328
      %v453 = vunpack.c.l.b16 %v329
      %v454 = vpack.c.b16 %v453, %v452
      %vm456 = vcmask 130048
      %v458 = vsel %vm456, %v426, 0
      %v461 = vsel %vm456, %v427, 0
      %v464 = vsel %vm456, %v428, 0
      %v467 = vsel %vm456, %v429, 0
      %v470 = vsel %vm456, %v430, 0
      %v473 = vsel %vm456, %v431, 0
      %v476 = vsel %vm456, %v432, 0
      %v479 = vsel %vm456, %v433, 0
      %v482 = vsel %vm456, %v434, 0
      %v485 = vsel %vm456, %v435, 0
      %v488 = vsel %vm456, %v436, 0
      %v491 = vsel %vm456, %v437, 0
      %v494 = vsel %vm456, %v438, 0
      %v497 = vsel %vm456, %v439, 0
      %v500 = vsel %vm456, %v440, 0
      %v503 = vsel %vm456, %v441, 0
      %v506 = vsel %vm456, %v442, 0
      %v509 = vsel %vm456, %v443, 0
      %v512 = vsel %vm456, %v444, 0
      %v515 = vsel %vm456, %v445, 0
      %v518 = vsel %vm456, %v446, 0
      %v521 = vsel %vm456, %v447, 0
      %v524 = vsel %vm456, %v448, 0
      %v527 = vsel %vm456, %v449, 0
      %529 = vmatprep.subr.bf16.mxu0 0
      %530 = vmatpush1.bf16.msra.mxu0 %v454
      %531 = vmatprep.subr.bf16.mxu0 0
      %532 = vmatpush1.bf16.msra.mxu0 0
      %533 = vmatprep.subr.bf16.mxu0 0
      %534 = vmatpush1.bf16.msra.mxu0 0
      %535 = vmatprep.subr.bf16.mxu0 0
      %536 = vmatpush1.bf16.msra.mxu0 0
      %537 = vmatprep.subr.bf16.mxu0 0
      %538 = vmatpush1.bf16.msra.mxu0 0
      %539 = vmatprep.subr.bf16.mxu0 0
      %540 = vmatpush1.bf16.msra.mxu0 0
      %541 = vmatprep.subr.bf16.mxu0 0
      %542 = vmatpush1.bf16.msra.mxu0 0
      %543 = vmatprep.subr.bf16.mxu0 0
      %544 = vmatpush1.bf16.msra.mxu0 0
      %545 = vmatprep.subr.bf16.mxu0 0
      %546 = vmatpush1.bf16.msra.mxu0 0
      %547 = vmatprep.subr.bf16.mxu0 0
      %548 = vmatpush1.bf16.msra.mxu0 0
      %549 = vmatprep.subr.bf16.mxu0 0
      %550 = vmatpush1.bf16.msra.mxu0 0
      %551 = vmatprep.subr.bf16.mxu0 0
      %552 = vmatpush1.bf16.msra.mxu0 0
      %553 = vmatprep.subr.bf16.mxu0 0
      %554 = vmatpush1.bf16.msra.mxu0 0
      %555 = vmatprep.subr.bf16.mxu0 0
      %556 = vmatpush1.bf16.msra.mxu0 0
      %557 = vmatprep.subr.bf16.mxu0 0
      %558 = vmatpush1.bf16.msra.mxu0 0
      %559 = vmatprep.subr.bf16.mxu0 0
      %560 = vmatpush1.bf16.msra.mxu0 0
      %561 = vmatprep.mubr.bf16.mxu0 0
      %562 = vmatmul.mubr.bf16.gmra.mrb[0].mxu0 %v458
      %v563 = vpop.f32.mrb[0].mxu0
      %v564 = vadd.f32 0.0, %v563
      %v565 = vpop.f32.mrb[0].mxu0
      %v566 = vpop.f32.mrb[0].mxu0
      %v567 = vadd.f32 0.0, %v566
      %v568 = vpop.f32.mrb[0].mxu0
      %569 = vmatprep.mubr.bf16.mxu0 0
      %570 = vmatmul.mubr.bf16.gmra.mrb[0].mxu0 %v461
      %v571 = vpop.f32.mrb[0].mxu0
      %v572 = vadd.f32 0.0, %v571
      %v573 = vpop.f32.mrb[0].mxu0
      %v574 = vpop.f32.mrb[0].mxu0
      %v575 = vadd.f32 0.0, %v574
      %v576 = vpop.f32.mrb[0].mxu0
      %577 = vmatprep.mubr.bf16.mxu0 0
      %578 = vmatmul.mubr.bf16.gmra.mrb[0].mxu0 %v464
      %v579 = vpop.f32.mrb[0].mxu0
      %v580 = vadd.f32 0.0, %v579
      %v581 = vpop.f32.mrb[0].mxu0
      %v582 = vpop.f32.mrb[0].mxu0
      %v583 = vadd.f32 0.0, %v582
      %v584 = vpop.f32.mrb[0].mxu0
      %585 = vmatprep.mubr.bf16.mxu0 0
      %586 = vmatmul.mubr.bf16.gmra.mrb[0].mxu0 %v467
      %v587 = vpop.f32.mrb[0].mxu0
      %v588 = vadd.f32 0.0, %v587
      %v589 = vpop.f32.mrb[0].mxu0
      %v590 = vpop.f32.mrb[0].mxu0
      %v591 = vadd.f32 0.0, %v590
      %v592 = vpop.f32.mrb[0].mxu0
      %593 = vmatprep.mubr.bf16.mxu0 0
      %594 = vmatmul.mubr.bf16.gmra.mrb[0].mxu0 %v470
      %v595 = vpop.f32.mrb[0].mxu0
      %v596 = vadd.f32 0.0, %v595
      %v597 = vpop.f32.mrb[0].mxu0
      %v598 = vpop.f32.mrb[0].mxu0
      %v599 = vadd.f32 0.0, %v598
      %v600 = vpop.f32.mrb[0].mxu0
      %601 = vmatprep.mubr.bf16.mxu0 0
      %602 = vmatmul.mubr.bf16.gmra.mrb[0].mxu0 %v473
      %v603 = vpop.f32.mrb[0].mxu0
      %v604 = vadd.f32 0.0, %v603
      %v605 = vpop.f32.mrb[0].mxu0
      %v606 = vpop.f32.mrb[0].mxu0
      %v607 = vadd.f32 0.0, %v606
      %v608 = vpop.f32.mrb[0].mxu0
      %609 = vmatprep.mubr.bf16.mxu0 0
      %610 = vmatmul.mubr.bf16.gmra.mrb[0].mxu0 %v476
      %v611 = vpop.f32.mrb[0].mxu0
      %v612 = vadd.f32 0.0, %v611
      %v613 = vpop.f32.mrb[0].mxu0
      %v614 = vpop.f32.mrb[0].mxu0
      %v615 = vadd.f32 0.0, %v614
      %v616 = vpop.f32.mrb[0].mxu0
      %617 = vmatprep.mubr.bf16.mxu0 0
      %618 = vmatmul.mubr.bf16.gmra.mrb[0].mxu0 %v479
      %v619 = vpop.f32.mrb[0].mxu0
      %v620 = vadd.f32 0.0, %v619
      %v621 = vpop.f32.mrb[0].mxu0
      %v622 = vpop.f32.mrb[0].mxu0
      %v623 = vadd.f32 0.0, %v622
      %v624 = vpop.f32.mrb[0].mxu0
      %625 = vmatprep.mubr.bf16.mxu0 0
      %626 = vmatmul.mubr.bf16.gmra.mrb[0].mxu0 %v482
      %v627 = vpop.f32.mrb[0].mxu0
      %v628 = vadd.f32 0.0, %v627
      %v629 = vpop.f32.mrb[0].mxu0
      %v630 = vpop.f32.mrb[0].mxu0
      %v631 = vadd.f32 0.0, %v630
      %v632 = vpop.f32.mrb[0].mxu0
      %633 = vmatprep.mubr.bf16.mxu0 0
      %634 = vmatmul.mubr.bf16.gmra.mrb[0].mxu0 %v485
      %v635 = vpop.f32.mrb[0].mxu0
      %v636 = vadd.f32 0.0, %v635
      %v637 = vpop.f32.mrb[0].mxu0
      %v638 = vpop.f32.mrb[0].mxu0
      %v639 = vadd.f32 0.0, %v638
      %v640 = vpop.f32.mrb[0].mxu0
      %641 = vmatprep.mubr.bf16.mxu0 0
      %642 = vmatmul.mubr.bf16.gmra.mrb[0].mxu0 %v488
      %v643 = vpop.f32.mrb[0].mxu0
      %v644 = vadd.f32 0.0, %v643
      %v645 = vpop.f32.mrb[0].mxu0
      %v646 = vpop.f32.mrb[0].mxu0
      %v647 = vadd.f32 0.0, %v646
      %v648 = vpop.f32.mrb[0].mxu0
      %649 = vmatprep.mubr.bf16.mxu0 0
      %650 = vmatmul.mubr.bf16.gmra.mrb[0].mxu0 %v491
      %v651 = vpop.f32.mrb[0].mxu0
      %v652 = vadd.f32 0.0, %v651
      %v653 = vpop.f32.mrb[0].mxu0
      %v654 = vpop.f32.mrb[0].mxu0
      %v655 = vadd.f32 0.0, %v654
      %v656 = vpop.f32.mrb[0].mxu0
      %657 = vmatprep.mubr.bf16.mxu0 0
      %658 = vmatmul.mubr.bf16.gmra.mrb[0].mxu0 %v494
      %v659 = vpop.f32.mrb[0].mxu0
      %v660 = vadd.f32 0.0, %v659
      %v661 = vpop.f32.mrb[0].mxu0
      %v662 = vpop.f32.mrb[0].mxu0
      %v663 = vadd.f32 0.0, %v662
      %v664 = vpop.f32.mrb[0].mxu0
      %665 = vmatprep.mubr.bf16.mxu0 0
      %666 = vmatmul.mubr.bf16.gmra.mrb[0].mxu0 %v497
      %v667 = vpop.f32.mrb[0].mxu0
      %v668 = vadd.f32 0.0, %v667
      %v669 = vpop.f32.mrb[0].mxu0
      %v670 = vpop.f32.mrb[0].mxu0
      %v671 = vadd.f32 0.0, %v670
      %v672 = vpop.f32.mrb[0].mxu0
      %673 = vmatprep.mubr.bf16.mxu0 0
      %674 = vmatmul.mubr.bf16.gmra.mrb[0].mxu0 %v500
      %v675 = vpop.f32.mrb[0].mxu0
      %v676 = vadd.f32 0.0, %v675
      %v677 = vpop.f32.mrb[0].mxu0
      %v678 = vpop.f32.mrb[0].mxu0
      %v679 = vadd.f32 0.0, %v678
      %v680 = vpop.f32.mrb[0].mxu0
      %681 = vmatprep.mubr.bf16.mxu0 0
      %682 = vmatmul.mubr.bf16.gmra.mrb[0].mxu0 %v503
      %v683 = vpop.f32.mrb[0].mxu0
      %v684 = vadd.f32 0.0, %v683
      %v685 = vpop.f32.mrb[0].mxu0
      %v686 = vpop.f32.mrb[0].mxu0
      %v687 = vadd.f32 0.0, %v686
      %v688 = vpop.f32.mrb[0].mxu0
      %689 = vmatprep.mubr.bf16.mxu0 0
      %690 = vmatmul.mubr.bf16.gmra.mrb[0].mxu0 %v506
      %v691 = vpop.f32.mrb[0].mxu0
      %v692 = vadd.f32 0.0, %v691
      %v693 = vpop.f32.mrb[0].mxu0
      %v694 = vpop.f32.mrb[0].mxu0
      %v695 = vadd.f32 0.0, %v694
      %v696 = vpop.f32.mrb[0].mxu0
      %697 = vmatprep.mubr.bf16.mxu0 0
      %698 = vmatmul.mubr.bf16.gmra.mrb[0].mxu0 %v509
      %v699 = vpop.f32.mrb[0].mxu0
      %v700 = vadd.f32 0.0, %v699
      %v701 = vpop.f32.mrb[0].mxu0
      %v702 = vpop.f32.mrb[0].mxu0
      %v703 = vadd.f32 0.0, %v702
      %v704 = vpop.f32.mrb[0].mxu0
      %705 = vmatprep.mubr.bf16.mxu0 0
      %706 = vmatmul.mubr.bf16.gmra.mrb[0].mxu0 %v512
      %v707 = vpop.f32.mrb[0].mxu0
      %v708 = vadd.f32 0.0, %v707
      %v709 = vpop.f32.mrb[0].mxu0
      %v710 = vpop.f32.mrb[0].mxu0
      %v711 = vadd.f32 0.0, %v710
      %v712 = vpop.f32.mrb[0].mxu0
      %713 = vmatprep.mubr.bf16.mxu0 0
      %714 = vmatmul.mubr.bf16.gmra.mrb[0].mxu0 %v515
      %v715 = vpop.f32.mrb[0].mxu0
      %v716 = vadd.f32 0.0, %v715
      %v717 = vpop.f32.mrb[0].mxu0
      %v718 = vpop.f32.mrb[0].mxu0
      %v719 = vadd.f32 0.0, %v718
      %v720 = vpop.f32.mrb[0].mxu0
      %721 = vmatprep.mubr.bf16.mxu0 0
      %722 = vmatmul.mubr.bf16.gmra.mrb[0].mxu0 %v518
      %v723 = vpop.f32.mrb[0].mxu0
      %v724 = vadd.f32 0.0, %v723
      %v725 = vpop.f32.mrb[0].mxu0
      %v726 = vpop.f32.mrb[0].mxu0
      %v727 = vadd.f32 0.0, %v726
      %v728 = vpop.f32.mrb[0].mxu0
      %729 = vmatprep.mubr.bf16.mxu0 0
      %730 = vmatmul.mubr.bf16.gmra.mrb[0].mxu0 %v521
      %v731 = vpop.f32.mrb[0].mxu0
      %v732 = vadd.f32 0.0, %v731
      %v733 = vpop.f32.mrb[0].mxu0
      %v734 = vpop.f32.mrb[0].mxu0
      %v735 = vadd.f32 0.0, %v734
      %v736 = vpop.f32.mrb[0].mxu0
      %737 = vmatprep.mubr.bf16.mxu0 0
      %738 = vmatmul.mubr.bf16.gmra.mrb[0].mxu0 %v524
      %v739 = vpop.f32.mrb[0].mxu0
      %v740 = vadd.f32 0.0, %v739
      %v741 = vpop.f32.mrb[0].mxu0
      %v742 = vpop.f32.mrb[0].mxu0
      %v743 = vadd.f32 0.0, %v742
      %v744 = vpop.f32.mrb[0].mxu0
      %745 = vmatprep.mubr.bf16.mxu0 0
      %746 = vmatmul.mubr.bf16.gmra.mrb[0].mxu0 %v527
      %v747 = vpop.f32.mrb[0].mxu0
      %v748 = vadd.f32 0.0, %v747
      %v749 = vpop.f32.mrb[0].mxu0
      %v750 = vpop.f32.mrb[0].mxu0
      %v751 = vadd.f32 0.0, %v750
      %v752 = vpop.f32.mrb[0].mxu0
      %753 = vdwg.mxu0
      %v754 = vld [vmem:[%s2] sm:$0x1]
      %v756 = vlaneseq
      %v757 = vshrl.u32 %v756, 7
      %v758 = vsub.s32 0, %v757
      %v759 = vrot.slane %v754, %v758
      %v761 = vmul.f32 %v564, %v759
      %v762 = vmul.f32 %v567, %v759
      %v763 = vmul.f32 %v572, %v759
      %v764 = vmul.f32 %v575, %v759
      %v765 = vmul.f32 %v580, %v759
      %v766 = vmul.f32 %v583, %v759
      %v767 = vmul.f32 %v588, %v759
      %v768 = vmul.f32 %v591, %v759
      %v769 = vmul.f32 %v596, %v759
      %v770 = vmul.f32 %v599, %v759
      %v771 = vmul.f32 %v604, %v759
      %v772 = vmul.f32 %v607, %v759
      %v773 = vmul.f32 %v612, %v759
      %v774 = vmul.f32 %v615, %v759
      %v775 = vmul.f32 %v620, %v759
      %v776 = vmul.f32 %v623, %v759
      %v777 = vmul.f32 %v628, %v759
      %v778 = vmul.f32 %v631, %v759
      %v779 = vmul.f32 %v636, %v759
      %v780 = vmul.f32 %v639, %v759
      %v781 = vmul.f32 %v644, %v759
      %v782 = vmul.f32 %v647, %v759
      %v783 = vmul.f32 %v652, %v759
      %v784 = vmul.f32 %v655, %v759
      %v785 = vmul.f32 %v660, %v759
      %v786 = vmul.f32 %v663, %v759
      %v787 = vmul.f32 %v668, %v759
      %v788 = vmul.f32 %v671, %v759
      %v789 = vmul.f32 %v676, %v759
      %v790 = vmul.f32 %v679, %v759
      %v791 = vmul.f32 %v684, %v759
      %v792 = vmul.f32 %v687, %v759
      %v793 = vmul.f32 %v692, %v759
      %v794 = vmul.f32 %v695, %v759
      %v795 = vmul.f32 %v700, %v759
      %v796 = vmul.f32 %v703, %v759
      %v797 = vmul.f32 %v708, %v759
      %v798 = vmul.f32 %v711, %v759
      %v799 = vmul.f32 %v716, %v759
      %v800 = vmul.f32 %v719, %v759
      %v801 = vmul.f32 %v724, %v759
      %v802 = vmul.f32 %v727, %v759
      %v803 = vmul.f32 %v732, %v759
      %v804 = vmul.f32 %v735, %v759
      %v805 = vmul.f32 %v740, %v759
      %v806 = vmul.f32 %v743, %v759
      %v807 = vmul.f32 %v748, %v759
      %v808 = vmul.f32 %v751, %v759
      %v809 = vld [vmem:[%s3] sm:$0x1]
      %v811 = vlaneseq
      %v812 = vshrl.u32 %v811, 7
      %v813 = vsub.s32 0, %v812
      %v814 = vrot.slane %v809, %v813
      %v816 = vadd.f32 %v761, %v814
      %v817 = vadd.f32 %v762, %v814
      %v818 = vadd.f32 %v763, %v814
      %v819 = vadd.f32 %v764, %v814
      %v820 = vadd.f32 %v765, %v814
      %v821 = vadd.f32 %v766, %v814
      %v822 = vadd.f32 %v767, %v814
      %v823 = vadd.f32 %v768, %v814
      %v824 = vadd.f32 %v769, %v814
      %v825 = vadd.f32 %v770, %v814
      %v826 = vadd.f32 %v771, %v814
      %v827 = vadd.f32 %v772, %v814
      %v828 = vadd.f32 %v773, %v814
      %v829 = vadd.f32 %v774, %v814
      %v830 = vadd.f32 %v775, %v814
      %v831 = vadd.f32 %v776, %v814
      %v832 = vadd.f32 %v777, %v814
      %v833 = vadd.f32 %v778, %v814
      %v834 = vadd.f32 %v779, %v814
      %v835 = vadd.f32 %v780, %v814
      %v836 = vadd.f32 %v781, %v814
      %v837 = vadd.f32 %v782, %v814
      %v838 = vadd.f32 %v783, %v814
      %v839 = vadd.f32 %v784, %v814
      %v840 = vadd.f32 %v785, %v814
      %v841 = vadd.f32 %v786, %v814
      %v842 = vadd.f32 %v787, %v814
      %v843 = vadd.f32 %v788, %v814
      %v844 = vadd.f32 %v789, %v814
      %v845 = vadd.f32 %v790, %v814
      %v846 = vadd.f32 %v791, %v814
      %v847 = vadd.f32 %v792, %v814
      %v848 = vadd.f32 %v793, %v814
      %v849 = vadd.f32 %v794, %v814
      %v850 = vadd.f32 %v795, %v814
      %v851 = vadd.f32 %v796, %v814
      %v852 = vadd.f32 %v797, %v814
      %v853 = vadd.f32 %v798, %v814
      %v854 = vadd.f32 %v799, %v814
      %v855 = vadd.f32 %v800, %v814
      %v856 = vadd.f32 %v801, %v814
      %v857 = vadd.f32 %v802, %v814
      %v858 = vadd.f32 %v803, %v814
      %v859 = vadd.f32 %v804, %v814
      %v860 = vadd.f32 %v805, %v814
      %v861 = vadd.f32 %v806, %v814
      %v862 = vadd.f32 %v807, %v814
      %v863 = vadd.f32 %v808, %v814
      %vm864 = vcmp.gt.f32.partialorder %v816, 0.0
      %vm865 = vcmp.gt.f32.partialorder %v817, 0.0
      %vm866 = vcmp.gt.f32.partialorder %v818, 0.0
      %vm867 = vcmp.gt.f32.partialorder %v819, 0.0
      %vm868 = vcmp.gt.f32.partialorder %v820, 0.0
      %vm869 = vcmp.gt.f32.partialorder %v821, 0.0
      %vm870 = vcmp.gt.f32.partialorder %v822, 0.0
      %vm871 = vcmp.gt.f32.partialorder %v823, 0.0
      %vm872 = vcmp.gt.f32.partialorder %v824, 0.0
      %vm873 = vcmp.gt.f32.partialorder %v825, 0.0
      %vm874 = vcmp.gt.f32.partialorder %v826, 0.0
      %vm875 = vcmp.gt.f32.partialorder %v827, 0.0
      %vm876 = vcmp.gt.f32.partialorder %v828, 0.0
      %vm877 = vcmp.gt.f32.partialorder %v829, 0.0
      %vm878 = vcmp.gt.f32.partialorder %v830, 0.0
      %vm879 = vcmp.gt.f32.partialorder %v831, 0.0
      %vm880 = vcmp.gt.f32.partialorder %v832, 0.0
      %vm881 = vcmp.gt.f32.partialorder %v833, 0.0
      %vm882 = vcmp.gt.f32.partialorder %v834, 0.0
      %vm883 = vcmp.gt.f32.partialorder %v835, 0.0
      %vm884 = vcmp.gt.f32.partialorder %v836, 0.0
      %vm885 = vcmp.gt.f32.partialorder %v837, 0.0
      %vm886 = vcmp.gt.f32.partialorder %v838, 0.0
      %vm887 = vcmp.gt.f32.partialorder %v839, 0.0
      %vm888 = vcmp.gt.f32.partialorder %v840, 0.0
      %vm889 = vcmp.gt.f32.partialorder %v841, 0.0
      %vm890 = vcmp.gt.f32.partialorder %v842, 0.0
      %vm891 = vcmp.gt.f32.partialorder %v843, 0.0
      %vm892 = vcmp.gt.f32.partialorder %v844, 0.0
      %vm893 = vcmp.gt.f32.partialorder %v845, 0.0
      %vm894 = vcmp.gt.f32.partialorder %v846, 0.0
      %vm895 = vcmp.gt.f32.partialorder %v847, 0.0
      %vm896 = vcmp.gt.f32.partialorder %v848, 0.0
      %vm897 = vcmp.gt.f32.partialorder %v849, 0.0
      %vm898 = vcmp.gt.f32.partialorder %v850, 0.0
      %vm899 = vcmp.gt.f32.partialorder %v851, 0.0
      %vm900 = vcmp.gt.f32.partialorder %v852, 0.0
      %vm901 = vcmp.gt.f32.partialorder %v853, 0.0
      %vm902 = vcmp.gt.f32.partialorder %v854, 0.0
      %vm903 = vcmp.gt.f32.partialorder %v855, 0.0
      %vm904 = vcmp.gt.f32.partialorder %v856, 0.0
      %vm905 = vcmp.gt.f32.partialorder %v857, 0.0
      %vm906 = vcmp.gt.f32.partialorder %v858, 0.0
      %vm907 = vcmp.gt.f32.partialorder %v859, 0.0
      %vm908 = vcmp.gt.f32.partialorder %v860, 0.0
      %vm909 = vcmp.gt.f32.partialorder %v861, 0.0
      %vm910 = vcmp.gt.f32.partialorder %v862, 0.0
      %vm911 = vcmp.gt.f32.partialorder %v863, 0.0
      %v912 = vmul.f32 %v816, 0.1
      %v913 = vmul.f32 %v817, 0.1
      %v914 = vmul.f32 %v818, 0.1
      %v915 = vmul.f32 %v819, 0.1
      %v916 = vmul.f32 %v820, 0.1
      %v917 = vmul.f32 %v821, 0.1
      %v918 = vmul.f32 %v822, 0.1
      %v919 = vmul.f32 %v823, 0.1
      %v920 = vmul.f32 %v824, 0.1
      %v921 = vmul.f32 %v825, 0.1
      %v922 = vmul.f32 %v826, 0.1
      %v923 = vmul.f32 %v827, 0.1
      %v924 = vmul.f32 %v828, 0.1
      %v925 = vmul.f32 %v829, 0.1
      %v926 = vmul.f32 %v830, 0.1
      %v927 = vmul.f32 %v831, 0.1
      %v928 = vmul.f32 %v832, 0.1
      %v929 = vmul.f32 %v833, 0.1
      %v930 = vmul.f32 %v834, 0.1
      %v931 = vmul.f32 %v835, 0.1
      %v932 = vmul.f32 %v836, 0.1
      %v933 = vmul.f32 %v837, 0.1
      %v934 = vmul.f32 %v838, 0.1
      %v935 = vmul.f32 %v839, 0.1
      %v936 = vmul.f32 %v840, 0.1
      %v937 = vmul.f32 %v841, 0.1
      %v938 = vmul.f32 %v842, 0.1
      %v939 = vmul.f32 %v843, 0.1
      %v940 = vmul.f32 %v844, 0.1
      %v941 = vmul.f32 %v845, 0.1
      %v942 = vmul.f32 %v846, 0.1
      %v943 = vmul.f32 %v847, 0.1
      %v944 = vmul.f32 %v848, 0.1
      %v945 = vmul.f32 %v849, 0.1
      %v946 = vmul.f32 %v850, 0.1
      %v947 = vmul.f32 %v851, 0.1
      %v948 = vmul.f32 %v852, 0.1
      %v949 = vmul.f32 %v853, 0.1
      %v950 = vmul.f32 %v854, 0.1
      %v951 = vmul.f32 %v855, 0.1
      %v952 = vmul.f32 %v856, 0.1
      %v953 = vmul.f32 %v857, 0.1
      %v954 = vmul.f32 %v858, 0.1
      %v955 = vmul.f32 %v859, 0.1
      %v956 = vmul.f32 %v860, 0.1
      %v957 = vmul.f32 %v861, 0.1
      %v958 = vmul.f32 %v862, 0.1
      %v959 = vmul.f32 %v863, 0.1
      %v960 = vsel %vm864, %v816, %v912
      %v961 = vsel %vm865, %v817, %v913
      %v962 = vsel %vm866, %v818, %v914
      %v963 = vsel %vm867, %v819, %v915
      %v964 = vsel %vm868, %v820, %v916
      %v965 = vsel %vm869, %v821, %v917
      %v966 = vsel %vm870, %v822, %v918
      %v967 = vsel %vm871, %v823, %v919
      %v968 = vsel %vm872, %v824, %v920
      %v969 = vsel %vm873, %v825, %v921
      %v970 = vsel %vm874, %v826, %v922
      %v971 = vsel %vm875, %v827, %v923
      %v972 = vsel %vm876, %v828, %v924
      %v973 = vsel %vm877, %v829, %v925
      %v974 = vsel %vm878, %v830, %v926
      %v975 = vsel %vm879, %v831, %v927
      %v976 = vsel %vm880, %v832, %v928
      %v977 = vsel %vm881, %v833, %v929
      %v978 = vsel %vm882, %v834, %v930
      %v979 = vsel %vm883, %v835, %v931
      %v980 = vsel %vm884, %v836, %v932
      %v981 = vsel %vm885, %v837, %v933
      %v982 = vsel %vm886, %v838, %v934
      %v983 = vsel %vm887, %v839, %v935
      %v984 = vsel %vm888, %v840, %v936
      %v985 = vsel %vm889, %v841, %v937
      %v986 = vsel %vm890, %v842, %v938
      %v987 = vsel %vm891, %v843, %v939
      %v988 = vsel %vm892, %v844, %v940
      %v989 = vsel %vm893, %v845, %v941
      %v990 = vsel %vm894, %v846, %v942
      %v991 = vsel %vm895, %v847, %v943
      %v992 = vsel %vm896, %v848, %v944
      %v993 = vsel %vm897, %v849, %v945
      %v994 = vsel %vm898, %v850, %v946
      %v995 = vsel %vm899, %v851, %v947
      %v996 = vsel %vm900, %v852, %v948
      %v997 = vsel %vm901, %v853, %v949
      %v998 = vsel %vm902, %v854, %v950
      %v999 = vsel %vm903, %v855, %v951
      %v1000 = vsel %vm904, %v856, %v952
      %v1001 = vsel %vm905, %v857, %v953
      %v1002 = vsel %vm906, %v858, %v954
      %v1003 = vsel %vm907, %v859, %v955
      %v1004 = vsel %vm908, %v860, %v956
      %v1005 = vsel %vm909, %v861, %v957
      %v1006 = vsel %vm910, %v862, %v958
      %v1007 = vsel %vm911, %v863, %v959
      %1008 = vrot.lane.b32.xlu0 %v960, 64
      %v1009 = vpop.permute.xlu0 %1008
      %1010 = vrot.lane.b32.xlu0 %v961, 64
      %v1011 = vpop.permute.xlu0 %1010
      %1012 = vrot.lane.b32.xlu0 %v962, 64
      %v1013 = vpop.permute.xlu0 %1012
      %1014 = vrot.lane.b32.xlu0 %v963, 64
      %v1015 = vpop.permute.xlu0 %1014
      %1016 = vrot.lane.b32.xlu0 %v964, 64
      %v1017 = vpop.permute.xlu0 %1016
      %1018 = vrot.lane.b32.xlu0 %v965, 64
      %v1019 = vpop.permute.xlu0 %1018
      %1020 = vrot.lane.b32.xlu0 %v966, 64
      %v1021 = vpop.permute.xlu0 %1020
      %1022 = vrot.lane.b32.xlu0 %v967, 64
      %v1023 = vpop.permute.xlu0 %1022
      %1024 = vrot.lane.b32.xlu0 %v968, 64
      %v1025 = vpop.permute.xlu0 %1024
      %1026 = vrot.lane.b32.xlu0 %v969, 64
      %v1027 = vpop.permute.xlu0 %1026
      %1028 = vrot.lane.b32.xlu0 %v970, 64
      %v1029 = vpop.permute.xlu0 %1028
      %1030 = vrot.lane.b32.xlu0 %v971, 64
      %v1031 = vpop.permute.xlu0 %1030
      %1032 = vrot.lane.b32.xlu0 %v972, 64
      %v1033 = vpop.permute.xlu0 %1032
      %1034 = vrot.lane.b32.xlu0 %v973, 64
      %v1035 = vpop.permute.xlu0 %1034
      %1036 = vrot.lane.b32.xlu0 %v974, 64
      %v1037 = vpop.permute.xlu0 %1036
      %1038 = vrot.lane.b32.xlu0 %v975, 64
      %v1039 = vpop.permute.xlu0 %1038
      %1040 = vrot.lane.b32.xlu0 %v976, 64
      %v1041 = vpop.permute.xlu0 %1040
      %1042 = vrot.lane.b32.xlu0 %v977, 64
      %v1043 = vpop.permute.xlu0 %1042
      %1044 = vrot.lane.b32.xlu0 %v978, 64
      %v1045 = vpop.permute.xlu0 %1044
      %1046 = vrot.lane.b32.xlu0 %v979, 64
      %v1047 = vpop.permute.xlu0 %1046
      %1048 = vrot.lane.b32.xlu0 %v980, 64
      %v1049 = vpop.permute.xlu0 %1048
      %1050 = vrot.lane.b32.xlu0 %v981, 64
      %v1051 = vpop.permute.xlu0 %1050
      %1052 = vrot.lane.b32.xlu0 %v982, 64
      %v1053 = vpop.permute.xlu0 %1052
      %1054 = vrot.lane.b32.xlu0 %v983, 64
      %v1055 = vpop.permute.xlu0 %1054
      %1056 = vrot.lane.b32.xlu0 %v984, 64
      %v1057 = vpop.permute.xlu0 %1056
      %1058 = vrot.lane.b32.xlu0 %v985, 64
      %v1059 = vpop.permute.xlu0 %1058
      %1060 = vrot.lane.b32.xlu0 %v986, 64
      %v1061 = vpop.permute.xlu0 %1060
      %1062 = vrot.lane.b32.xlu0 %v987, 64
      %v1063 = vpop.permute.xlu0 %1062
      %1064 = vrot.lane.b32.xlu0 %v988, 64
      %v1065 = vpop.permute.xlu0 %1064
      %1066 = vrot.lane.b32.xlu0 %v989, 64
      %v1067 = vpop.permute.xlu0 %1066
      %1068 = vrot.lane.b32.xlu0 %v990, 64
      %v1069 = vpop.permute.xlu0 %1068
      %1070 = vrot.lane.b32.xlu0 %v991, 64
      %v1071 = vpop.permute.xlu0 %1070
      %1072 = vrot.lane.b32.xlu0 %v992, 64
      %v1073 = vpop.permute.xlu0 %1072
      %1074 = vrot.lane.b32.xlu0 %v993, 64
      %v1075 = vpop.permute.xlu0 %1074
      %1076 = vrot.lane.b32.xlu0 %v994, 64
      %v1077 = vpop.permute.xlu0 %1076
      %1078 = vrot.lane.b32.xlu0 %v995, 64
      %v1079 = vpop.permute.xlu0 %1078
      %1080 = vrot.lane.b32.xlu0 %v996, 64
      %v1081 = vpop.permute.xlu0 %1080
      %1082 = vrot.lane.b32.xlu0 %v997, 64
      %v1083 = vpop.permute.xlu0 %1082
      %1084 = vrot.lane.b32.xlu0 %v998, 64
      %v1085 = vpop.permute.xlu0 %1084
      %1086 = vrot.lane.b32.xlu0 %v999, 64
      %v1087 = vpop.permute.xlu0 %1086
      %1088 = vrot.lane.b32.xlu0 %v1000, 64
      %v1089 = vpop.permute.xlu0 %1088
      %1090 = vrot.lane.b32.xlu0 %v1001, 64
      %v1091 = vpop.permute.xlu0 %1090
      %1092 = vrot.lane.b32.xlu0 %v1002, 64
      %v1093 = vpop.permute.xlu0 %1092
      %1094 = vrot.lane.b32.xlu0 %v1003, 64
      %v1095 = vpop.permute.xlu0 %1094
      %1096 = vrot.lane.b32.xlu0 %v1004, 64
      %v1097 = vpop.permute.xlu0 %1096
      %1098 = vrot.lane.b32.xlu0 %v1005, 64
      %v1099 = vpop.permute.xlu0 %1098
      %1100 = vrot.lane.b32.xlu0 %v1006, 64
      %v1101 = vpop.permute.xlu0 %1100
      %1102 = vrot.lane.b32.xlu0 %v1007, 64
      %v1103 = vpop.permute.xlu0 %1102
      %v1104 = vmax.f32 %v960, %v1009
      %v1105 = vmax.f32 %v961, %v1011
      %v1106 = vmax.f32 %v962, %v1013
      %v1107 = vmax.f32 %v963, %v1015
      %v1108 = vmax.f32 %v964, %v1017
      %v1109 = vmax.f32 %v965, %v1019
      %v1110 = vmax.f32 %v966, %v1021
      %v1111 = vmax.f32 %v967, %v1023
      %v1112 = vmax.f32 %v968, %v1025
      %v1113 = vmax.f32 %v969, %v1027
      %v1114 = vmax.f32 %v970, %v1029
      %v1115 = vmax.f32 %v971, %v1031
      %v1116 = vmax.f32 %v972, %v1033
      %v1117 = vmax.f32 %v973, %v1035
      %v1118 = vmax.f32 %v974, %v1037
      %v1119 = vmax.f32 %v975, %v1039
      %v1120 = vmax.f32 %v976, %v1041
      %v1121 = vmax.f32 %v977, %v1043
      %v1122 = vmax.f32 %v978, %v1045
      %v1123 = vmax.f32 %v979, %v1047
      %v1124 = vmax.f32 %v980, %v1049
      %v1125 = vmax.f32 %v981, %v1051
      %v1126 = vmax.f32 %v982, %v1053
      %v1127 = vmax.f32 %v983, %v1055
      %v1128 = vmax.f32 %v984, %v1057
      %v1129 = vmax.f32 %v985, %v1059
      %v1130 = vmax.f32 %v986, %v1061
      %v1131 = vmax.f32 %v987, %v1063
      %v1132 = vmax.f32 %v988, %v1065
      %v1133 = vmax.f32 %v989, %v1067
      %v1134 = vmax.f32 %v990, %v1069
      %v1135 = vmax.f32 %v991, %v1071
      %v1136 = vmax.f32 %v992, %v1073
      %v1137 = vmax.f32 %v993, %v1075
      %v1138 = vmax.f32 %v994, %v1077
      %v1139 = vmax.f32 %v995, %v1079
      %v1140 = vmax.f32 %v996, %v1081
      %v1141 = vmax.f32 %v997, %v1083
      %v1142 = vmax.f32 %v998, %v1085
      %v1143 = vmax.f32 %v999, %v1087
      %v1144 = vmax.f32 %v1000, %v1089
      %v1145 = vmax.f32 %v1001, %v1091
      %v1146 = vmax.f32 %v1002, %v1093
      %v1147 = vmax.f32 %v1003, %v1095
      %v1148 = vmax.f32 %v1004, %v1097
      %v1149 = vmax.f32 %v1005, %v1099
      %v1150 = vmax.f32 %v1006, %v1101
      %v1151 = vmax.f32 %v1007, %v1103
      %1152 = vrot.lane.b32.xlu0 %v1104, 32
      %v1153 = vpop.permute.xlu0 %1152
      %1154 = vrot.lane.b32.xlu0 %v1105, 32
      %v1155 = vpop.permute.xlu0 %1154
      %1156 = vrot.lane.b32.xlu0 %v1106, 32
      %v1157 = vpop.permute.xlu0 %1156
      %1158 = vrot.lane.b32.xlu0 %v1107, 32
      %v1159 = vpop.permute.xlu0 %1158
      %1160 = vrot.lane.b32.xlu0 %v1108, 32
      %v1161 = vpop.permute.xlu0 %1160
      %1162 = vrot.lane.b32.xlu0 %v1109, 32
      %v1163 = vpop.permute.xlu0 %1162
      %1164 = vrot.lane.b32.xlu0 %v1110, 32
      %v1165 = vpop.permute.xlu0 %1164
      %1166 = vrot.lane.b32.xlu0 %v1111, 32
      %v1167 = vpop.permute.xlu0 %1166
      %1168 = vrot.lane.b32.xlu0 %v1112, 32
      %v1169 = vpop.permute.xlu0 %1168
      %1170 = vrot.lane.b32.xlu0 %v1113, 32
      %v1171 = vpop.permute.xlu0 %1170
      %1172 = vrot.lane.b32.xlu0 %v1114, 32
      %v1173 = vpop.permute.xlu0 %1172
      %1174 = vrot.lane.b32.xlu0 %v1115, 32
      %v1175 = vpop.permute.xlu0 %1174
      %1176 = vrot.lane.b32.xlu0 %v1116, 32
      %v1177 = vpop.permute.xlu0 %1176
      %1178 = vrot.lane.b32.xlu0 %v1117, 32
      %v1179 = vpop.permute.xlu0 %1178
      %1180 = vrot.lane.b32.xlu0 %v1118, 32
      %v1181 = vpop.permute.xlu0 %1180
      %1182 = vrot.lane.b32.xlu0 %v1119, 32
      %v1183 = vpop.permute.xlu0 %1182
      %1184 = vrot.lane.b32.xlu0 %v1120, 32
      %v1185 = vpop.permute.xlu0 %1184
      %1186 = vrot.lane.b32.xlu0 %v1121, 32
      %v1187 = vpop.permute.xlu0 %1186
      %1188 = vrot.lane.b32.xlu0 %v1122, 32
      %v1189 = vpop.permute.xlu0 %1188
      %1190 = vrot.lane.b32.xlu0 %v1123, 32
      %v1191 = vpop.permute.xlu0 %1190
      %1192 = vrot.lane.b32.xlu0 %v1124, 32
      %v1193 = vpop.permute.xlu0 %1192
      %1194 = vrot.lane.b32.xlu0 %v1125, 32
      %v1195 = vpop.permute.xlu0 %1194
      %1196 = vrot.lane.b32.xlu0 %v1126, 32
      %v1197 = vpop.permute.xlu0 %1196
      %1198 = vrot.lane.b32.xlu0 %v1127, 32
      %v1199 = vpop.permute.xlu0 %1198
      %1200 = vrot.lane.b32.xlu0 %v1128, 32
      %v1201 = vpop.permute.xlu0 %1200
      %1202 = vrot.lane.b32.xlu0 %v1129, 32
      %v1203 = vpop.permute.xlu0 %1202
      %1204 = vrot.lane.b32.xlu0 %v1130, 32
      %v1205 = vpop.permute.xlu0 %1204
      %1206 = vrot.lane.b32.xlu0 %v1131, 32
      %v1207 = vpop.permute.xlu0 %1206
      %1208 = vrot.lane.b32.xlu0 %v1132, 32
      %v1209 = vpop.permute.xlu0 %1208
      %1210 = vrot.lane.b32.xlu0 %v1133, 32
      %v1211 = vpop.permute.xlu0 %1210
      %1212 = vrot.lane.b32.xlu0 %v1134, 32
      %v1213 = vpop.permute.xlu0 %1212
      %1214 = vrot.lane.b32.xlu0 %v1135, 32
      %v1215 = vpop.permute.xlu0 %1214
      %1216 = vrot.lane.b32.xlu0 %v1136, 32
      %v1217 = vpop.permute.xlu0 %1216
      %1218 = vrot.lane.b32.xlu0 %v1137, 32
      %v1219 = vpop.permute.xlu0 %1218
      %1220 = vrot.lane.b32.xlu0 %v1138, 32
      %v1221 = vpop.permute.xlu0 %1220
      %1222 = vrot.lane.b32.xlu0 %v1139, 32
      %v1223 = vpop.permute.xlu0 %1222
      %1224 = vrot.lane.b32.xlu0 %v1140, 32
      %v1225 = vpop.permute.xlu0 %1224
      %1226 = vrot.lane.b32.xlu0 %v1141, 32
      %v1227 = vpop.permute.xlu0 %1226
      %1228 = vrot.lane.b32.xlu0 %v1142, 32
      %v1229 = vpop.permute.xlu0 %1228
      %1230 = vrot.lane.b32.xlu0 %v1143, 32
      %v1231 = vpop.permute.xlu0 %1230
      %1232 = vrot.lane.b32.xlu0 %v1144, 32
      %v1233 = vpop.permute.xlu0 %1232
      %1234 = vrot.lane.b32.xlu0 %v1145, 32
      %v1235 = vpop.permute.xlu0 %1234
      %1236 = vrot.lane.b32.xlu0 %v1146, 32
      %v1237 = vpop.permute.xlu0 %1236
      %1238 = vrot.lane.b32.xlu0 %v1147, 32
      %v1239 = vpop.permute.xlu0 %1238
      %1240 = vrot.lane.b32.xlu0 %v1148, 32
      %v1241 = vpop.permute.xlu0 %1240
      %1242 = vrot.lane.b32.xlu0 %v1149, 32
      %v1243 = vpop.permute.xlu0 %1242
      %1244 = vrot.lane.b32.xlu0 %v1150, 32
      %v1245 = vpop.permute.xlu0 %1244
      %1246 = vrot.lane.b32.xlu0 %v1151, 32
      %v1247 = vpop.permute.xlu0 %1246
      %v1248 = vmax.f32 %v1104, %v1153
      %v1249 = vmax.f32 %v1105, %v1155
      %v1250 = vmax.f32 %v1106, %v1157
      %v1251 = vmax.f32 %v1107, %v1159
      %v1252 = vmax.f32 %v1108, %v1161
      %v1253 = vmax.f32 %v1109, %v1163
      %v1254 = vmax.f32 %v1110, %v1165
      %v1255 = vmax.f32 %v1111, %v1167
      %v1256 = vmax.f32 %v1112, %v1169
      %v1257 = vmax.f32 %v1113, %v1171
      %v1258 = vmax.f32 %v1114, %v1173
      %v1259 = vmax.f32 %v1115, %v1175
      %v1260 = vmax.f32 %v1116, %v1177
      %v1261 = vmax.f32 %v1117, %v1179
      %v1262 = vmax.f32 %v1118, %v1181
      %v1263 = vmax.f32 %v1119, %v1183
      %v1264 = vmax.f32 %v1120, %v1185
      %v1265 = vmax.f32 %v1121, %v1187
      %v1266 = vmax.f32 %v1122, %v1189
      %v1267 = vmax.f32 %v1123, %v1191
      %v1268 = vmax.f32 %v1124, %v1193
      %v1269 = vmax.f32 %v1125, %v1195
      %v1270 = vmax.f32 %v1126, %v1197
      %v1271 = vmax.f32 %v1127, %v1199
      %v1272 = vmax.f32 %v1128, %v1201
      %v1273 = vmax.f32 %v1129, %v1203
      %v1274 = vmax.f32 %v1130, %v1205
      %v1275 = vmax.f32 %v1131, %v1207
      %v1276 = vmax.f32 %v1132, %v1209
      %v1277 = vmax.f32 %v1133, %v1211
      %v1278 = vmax.f32 %v1134, %v1213
      %v1279 = vmax.f32 %v1135, %v1215
      %v1280 = vmax.f32 %v1136, %v1217
      %v1281 = vmax.f32 %v1137, %v1219
      %v1282 = vmax.f32 %v1138, %v1221
      %v1283 = vmax.f32 %v1139, %v1223
      %v1284 = vmax.f32 %v1140, %v1225
      %v1285 = vmax.f32 %v1141, %v1227
      %v1286 = vmax.f32 %v1142, %v1229
      %v1287 = vmax.f32 %v1143, %v1231
      %v1288 = vmax.f32 %v1144, %v1233
      %v1289 = vmax.f32 %v1145, %v1235
      %v1290 = vmax.f32 %v1146, %v1237
      %v1291 = vmax.f32 %v1147, %v1239
      %v1292 = vmax.f32 %v1148, %v1241
      %v1293 = vmax.f32 %v1149, %v1243
      %v1294 = vmax.f32 %v1150, %v1245
      %v1295 = vmax.f32 %v1151, %v1247
      %vm1296 = vcmask 261120
      %1297 = vst.msk [vmem:[#allocation2] sm:$0xff] %vm1296, %v1248
      %1298 = vst.msk [vmem:[#allocation2 + $0x8] sm:$0xff] %vm1296, %v1249
      %1299 = vst.msk [vmem:[#allocation2 + $0x10] sm:$0xff] %vm1296, %v1250
      %1300 = vst.msk [vmem:[#allocation2 + $0x18] sm:$0xff] %vm1296, %v1251
      %1301 = vst.msk [vmem:[#allocation2 + $0x20] sm:$0xff] %vm1296, %v1252
      %1302 = vst.msk [vmem:[#allocation2 + $0x28] sm:$0xff] %vm1296, %v1253
      %1303 = vst.msk [vmem:[#allocation2 + $0x30] sm:$0xff] %vm1296, %v1254
      %1304 = vst.msk [vmem:[#allocation2 + $0x38] sm:$0xff] %vm1296, %v1255
      %1305 = vst.msk [vmem:[#allocation2 + $0x40] sm:$0xff] %vm1296, %v1256
      %1306 = vst.msk [vmem:[#allocation2 + $0x48] sm:$0xff] %vm1296, %v1257
      %1307 = vst.msk [vmem:[#allocation2 + $0x50] sm:$0xff] %vm1296, %v1258
      %1308 = vst.msk [vmem:[#allocation2 + $0x58] sm:$0xff] %vm1296, %v1259
      %1309 = vst.msk [vmem:[#allocation2 + $0x60] sm:$0xff] %vm1296, %v1260
      %1310 = vst.msk [vmem:[#allocation2 + $0x68] sm:$0xff] %vm1296, %v1261
      %1311 = vst.msk [vmem:[#allocation2 + $0x70] sm:$0xff] %vm1296, %v1262
      %1312 = vst.msk [vmem:[#allocation2 + $0x78] sm:$0xff] %vm1296, %v1263
      %1313 = vst.msk [vmem:[#allocation2 + $0x80] sm:$0xff] %vm1296, %v1264
      %1314 = vst.msk [vmem:[#allocation2 + $0x88] sm:$0xff] %vm1296, %v1265
      %1315 = vst.msk [vmem:[#allocation2 + $0x90] sm:$0xff] %vm1296, %v1266
      %1316 = vst.msk [vmem:[#allocation2 + $0x98] sm:$0xff] %vm1296, %v1267
      %1317 = vst.msk [vmem:[#allocation2 + $0xa0] sm:$0xff] %vm1296, %v1268
      %1318 = vst.msk [vmem:[#allocation2 + $0xa8] sm:$0xff] %vm1296, %v1269
      %1319 = vst.msk [vmem:[#allocation2 + $0xb0] sm:$0xff] %vm1296, %v1270
      %1320 = vst.msk [vmem:[#allocation2 + $0xb8] sm:$0xff] %vm1296, %v1271
      %1321 = vst.msk [vmem:[#allocation2 + $0xc0] sm:$0xff] %vm1296, %v1272
      %1322 = vst.msk [vmem:[#allocation2 + $0xc8] sm:$0xff] %vm1296, %v1273
      %1323 = vst.msk [vmem:[#allocation2 + $0xd0] sm:$0xff] %vm1296, %v1274
      %1324 = vst.msk [vmem:[#allocation2 + $0xd8] sm:$0xff] %vm1296, %v1275
      %1325 = vst.msk [vmem:[#allocation2 + $0xe0] sm:$0xff] %vm1296, %v1276
      %1326 = vst.msk [vmem:[#allocation2 + $0xe8] sm:$0xff] %vm1296, %v1277
      %1327 = vst.msk [vmem:[#allocation2 + $0xf0] sm:$0xff] %vm1296, %v1278
      %1328 = vst.msk [vmem:[#allocation2 + $0xf8] sm:$0xff] %vm1296, %v1279
      %1329 = vst.msk [vmem:[#allocation2 + $0x100] sm:$0xff] %vm1296, %v1280
      %1330 = vst.msk [vmem:[#allocation2 + $0x108] sm:$0xff] %vm1296, %v1281
      %1331 = vst.msk [vmem:[#allocation2 + $0x110] sm:$0xff] %vm1296, %v1282
      %1332 = vst.msk [vmem:[#allocation2 + $0x118] sm:$0xff] %vm1296, %v1283
      %1333 = vst.msk [vmem:[#allocation2 + $0x120] sm:$0xff] %vm1296, %v1284
      %1334 = vst.msk [vmem:[#allocation2 + $0x128] sm:$0xff] %vm1296, %v1285
      %1335 = vst.msk [vmem:[#allocation2 + $0x130] sm:$0xff] %vm1296, %v1286
      %1336 = vst.msk [vmem:[#allocation2 + $0x138] sm:$0xff] %vm1296, %v1287
      %1337 = vst.msk [vmem:[#allocation2 + $0x140] sm:$0xff] %vm1296, %v1288
      %1338 = vst.msk [vmem:[#allocation2 + $0x148] sm:$0xff] %vm1296, %v1289
      %1339 = vst.msk [vmem:[#allocation2 + $0x150] sm:$0xff] %vm1296, %v1290
      %1340 = vst.msk [vmem:[#allocation2 + $0x158] sm:$0xff] %vm1296, %v1291
      %1341 = vst.msk [vmem:[#allocation2 + $0x160] sm:$0xff] %vm1296, %v1292
      %1342 = vst.msk [vmem:[#allocation2 + $0x168] sm:$0xff] %vm1296, %v1293
      %1343 = vst.msk [vmem:[#allocation2 + $0x170] sm:$0xff] %vm1296, %v1294
      %1344 = vst.msk [vmem:[#allocation2 + $0x178] sm:$0xff] %vm1296, %v1295
      %v1345 = vld [vmem:[#allocation2] sm:$0xff]
      %v1346 = vld [vmem:[#allocation2 + $0x8] sm:$0xff]
      %v1347 = vld [vmem:[#allocation2 + $0x10] sm:$0xff]
      %v1348 = vld [vmem:[#allocation2 + $0x18] sm:$0xff]
      %v1349 = vld [vmem:[#allocation2 + $0x20] sm:$0xff]
      %v1350 = vld [vmem:[#allocation2 + $0x28] sm:$0xff]
      %v1351 = vld [vmem:[#allocation2 + $0x30] sm:$0xff]
      %v1352 = vld [vmem:[#allocation2 + $0x38] sm:$0xff]
      %v1353 = vld [vmem:[#allocation2 + $0x40] sm:$0xff]
      %v1354 = vld [vmem:[#allocation2 + $0x48] sm:$0xff]
      %v1355 = vld [vmem:[#allocation2 + $0x50] sm:$0xff]
      %v1356 = vld [vmem:[#allocation2 + $0x58] sm:$0xff]
      %v1357 = vld [vmem:[#allocation2 + $0x60] sm:$0xff]
      %v1358 = vld [vmem:[#allocation2 + $0x68] sm:$0xff]
      %v1359 = vld [vmem:[#allocation2 + $0x70] sm:$0xff]
      %v1360 = vld [vmem:[#allocation2 + $0x78] sm:$0xff]
      %v1361 = vld [vmem:[#allocation2 + $0x80] sm:$0xff]
      %v1362 = vld [vmem:[#allocation2 + $0x88] sm:$0xff]
      %v1363 = vld [vmem:[#allocation2 + $0x90] sm:$0xff]
      %v1364 = vld [vmem:[#allocation2 + $0x98] sm:$0xff]
      %v1365 = vld [vmem:[#allocation2 + $0xa0] sm:$0xff]
      %v1366 = vld [vmem:[#allocation2 + $0xa8] sm:$0xff]
      %v1367 = vld [vmem:[#allocation2 + $0xb0] sm:$0xff]
      %v1368 = vld [vmem:[#allocation2 + $0xb8] sm:$0xff]
      %v1369 = vld [vmem:[#allocation2 + $0xc0] sm:$0xff]
      %v1370 = vld [vmem:[#allocation2 + $0xc8] sm:$0xff]
      %v1371 = vld [vmem:[#allocation2 + $0xd0] sm:$0xff]
      %v1372 = vld [vmem:[#allocation2 + $0xd8] sm:$0xff]
      %v1373 = vld [vmem:[#allocation2 + $0xe0] sm:$0xff]
      %v1374 = vld [vmem:[#allocation2 + $0xe8] sm:$0xff]
      %v1375 = vld [vmem:[#allocation2 + $0xf0] sm:$0xff]
      %v1376 = vld [vmem:[#allocation2 + $0xf8] sm:$0xff]
      %v1377 = vld [vmem:[#allocation2 + $0x100] sm:$0xff]
      %v1378 = vld [vmem:[#allocation2 + $0x108] sm:$0xff]
      %v1379 = vld [vmem:[#allocation2 + $0x110] sm:$0xff]
      %v1380 = vld [vmem:[#allocation2 + $0x118] sm:$0xff]
      %v1381 = vld [vmem:[#allocation2 + $0x120] sm:$0xff]
      %v1382 = vld [vmem:[#allocation2 + $0x128] sm:$0xff]
      %v1383 = vld [vmem:[#allocation2 + $0x130] sm:$0xff]
      %v1384 = vld [vmem:[#allocation2 + $0x138] sm:$0xff]
      %v1385 = vld [vmem:[#allocation2 + $0x140] sm:$0xff]
      %v1386 = vld [vmem:[#allocation2 + $0x148] sm:$0xff]
      %v1387 = vld [vmem:[#allocation2 + $0x150] sm:$0xff]
      %v1388 = vld [vmem:[#allocation2 + $0x158] sm:$0xff]
      %v1389 = vpack.c.bf16 %v1346, %v1345
      %v1390 = vpack.c.bf16 %v1348, %v1347
      %v1391 = vpack.c.bf16 %v1350, %v1349
      %v1392 = vpack.c.bf16 %v1352, %v1351
      %v1393 = vpack.c.bf16 %v1354, %v1353
      %v1394 = vpack.c.bf16 %v1356, %v1355
      %v1395 = vpack.c.bf16 %v1358, %v1357
      %v1396 = vpack.c.bf16 %v1360, %v1359
      %v1397 = vpack.c.bf16 %v1362, %v1361
      %v1398 = vpack.c.bf16 %v1364, %v1363
      %v1399 = vpack.c.bf16 %v1366, %v1365
      %v1400 = vpack.c.bf16 %v1368, %v1367
      %v1401 = vpack.c.bf16 %v1370, %v1369
      %v1402 = vpack.c.bf16 %v1372, %v1371
      %v1403 = vpack.c.bf16 %v1374, %v1373
      %v1404 = vpack.c.bf16 %v1376, %v1375
      %v1405 = vpack.c.bf16 %v1378, %v1377
      %v1406 = vpack.c.bf16 %v1380, %v1379
      %v1407 = vpack.c.bf16 %v1382, %v1381
      %v1408 = vpack.c.bf16 %v1384, %v1383
      %v1409 = vpack.c.bf16 %v1386, %v1385
      %v1410 = vpack.c.bf16 %v1388, %v1387
      %v1411 = vld [vmem:[%s4] sm:$0xf]
      %v1412 = vld [vmem:[%s4 + $0x4] sm:$0xf]
      %v1413 = vld [vmem:[%s4 + $0x8] sm:$0xf]
      %v1414 = vld [vmem:[%s4 + $0xc] sm:$0xf]
      %v1415 = vld [vmem:[#allocation2 + $0x1] sm:$0xff]
      %v1416 = vld [vmem:[#allocation2 + $0x9] sm:$0xff]
      %v1417 = vld [vmem:[#allocation2 + $0x11] sm:$0xff]
      %v1418 = vld [vmem:[#allocation2 + $0x19] sm:$0xff]
      %v1419 = vld [vmem:[#allocation2 + $0x21] sm:$0xff]
      %v1420 = vld [vmem:[#allocation2 + $0x29] sm:$0xff]
      %v1421 = vld [vmem:[#allocation2 + $0x31] sm:$0xff]
      %v1422 = vld [vmem:[#allocation2 + $0x39] sm:$0xff]
      %v1423 = vld [vmem:[#allocation2 + $0x41] sm:$0xff]
      %v1424 = vld [vmem:[#allocation2 + $0x49] sm:$0xff]
      %v1425 = vld [vmem:[#allocation2 + $0x51] sm:$0xff]
      %v1426 = vld [vmem:[#allocation2 + $0x59] sm:$0xff]
      %v1427 = vld [vmem:[#allocation2 + $0x61] sm:$0xff]
      %v1428 = vld [vmem:[#allocation2 + $0x69] sm:$0xff]
      %v1429 = vld [vmem:[#allocation2 + $0x71] sm:$0xff]
      %v1430 = vld [vmem:[#allocation2 + $0x79] sm:$0xff]
      %v1431 = vld [vmem:[#allocation2 + $0x81] sm:$0xff]
      %v1432 = vld [vmem:[#allocation2 + $0x89] sm:$0xff]
      %v1433 = vld [vmem:[#allocation2 + $0x91] sm:$0xff]
      %v1434 = vld [vmem:[#allocation2 + $0x99] sm:$0xff]
      %v1435 = vld [vmem:[#allocation2 + $0xa1] sm:$0xff]
      %v1436 = vld [vmem:[#allocation2 + $0xa9] sm:$0xff]
      %v1437 = vld [vmem:[#allocation2 + $0xb1] sm:$0xff]
      %v1438 = vld [vmem:[#allocation2 + $0xb9] sm:$0xff]
      %v1439 = vld [vmem:[#allocation2 + $0xc1] sm:$0xff]
      %v1440 = vld [vmem:[#allocation2 + $0xc9] sm:$0xff]
      %v1441 = vld [vmem:[#allocation2 + $0xd1] sm:$0xff]
      %v1442 = vld [vmem:[#allocation2 + $0xd9] sm:$0xff]
      %v1443 = vld [vmem:[#allocation2 + $0xe1] sm:$0xff]
      %v1444 = vld [vmem:[#allocation2 + $0xe9] sm:$0xff]
      %v1445 = vld [vmem:[#allocation2 + $0xf1] sm:$0xff]
      %v1446 = vld [vmem:[#allocation2 + $0xf9] sm:$0xff]
      %v1447 = vld [vmem:[#allocation2 + $0x101] sm:$0xff]
      %v1448 = vld [vmem:[#allocation2 + $0x109] sm:$0xff]
      %v1449 = vld [vmem:[#allocation2 + $0x111] sm:$0xff]
      %v1450 = vld [vmem:[#allocation2 + $0x119] sm:$0xff]
      %v1451 = vld [vmem:[#allocation2 + $0x121] sm:$0xff]
      %v1452 = vld [vmem:[#allocation2 + $0x129] sm:$0xff]
      %v1453 = vld [vmem:[#allocation2 + $0x131] sm:$0xff]
      %v1454 = vld [vmem:[#allocation2 + $0x139] sm:$0xff]
      %v1455 = vld [vmem:[#allocation2 + $0x141] sm:$0xff]
      %v1456 = vld [vmem:[#allocation2 + $0x149] sm:$0xff]
      %v1457 = vld [vmem:[#allocation2 + $0x151] sm:$0xff]
      %v1458 = vld [vmem:[#allocation2 + $0x159] sm:$0xff]
      %v1459 = vpack.c.bf16 %v1416, %v1415
      %v1460 = vpack.c.bf16 %v1418, %v1417
      %v1461 = vpack.c.bf16 %v1420, %v1419
      %v1462 = vpack.c.bf16 %v1422, %v1421
      %v1463 = vpack.c.bf16 %v1424, %v1423
      %v1464 = vpack.c.bf16 %v1426, %v1425
      %v1465 = vpack.c.bf16 %v1428, %v1427
      %v1466 = vpack.c.bf16 %v1430, %v1429
      %v1467 = vpack.c.bf16 %v1432, %v1431
      %v1468 = vpack.c.bf16 %v1434, %v1433
      %v1469 = vpack.c.bf16 %v1436, %v1435
      %v1470 = vpack.c.bf16 %v1438, %v1437
      %v1471 = vpack.c.bf16 %v1440, %v1439
      %v1472 = vpack.c.bf16 %v1442, %v1441
      %v1473 = vpack.c.bf16 %v1444, %v1443
      %v1474 = vpack.c.bf16 %v1446, %v1445
      %v1475 = vpack.c.bf16 %v1448, %v1447
      %v1476 = vpack.c.bf16 %v1450, %v1449
      %v1477 = vpack.c.bf16 %v1452, %v1451
      %v1478 = vpack.c.bf16 %v1454, %v1453
      %v1479 = vpack.c.bf16 %v1456, %v1455
      %v1480 = vpack.c.bf16 %v1458, %v1457
      %s1481 = scalar_lea.vmem %s4, 16
      %v1482 = vld [vmem:[%s1481] sm:$0xf]
      %v1483 = vld [vmem:[%s1481 + $0x4] sm:$0xf]
      %v1484 = vld [vmem:[%s1481 + $0x8] sm:$0xf]
      %v1485 = vld [vmem:[%s1481 + $0xc] sm:$0xf]
      %v1490 = vunpack.c.l.b16 %v1482
      %v1491 = vunpack.c.l.b16 %v1483
      %v1492 = vunpack.c.l.b16 %v1484
      %v1493 = vunpack.c.l.b16 %v1485
      %v1494 = vpack.c.b16 %v1491, %v1490
      %v1495 = vpack.c.b16 %v1493, %v1492
      %v1499 = vsel %vm1296, %v1459, 0
      %v1502 = vsel %vm1296, %v1460, 0
      %v1505 = vsel %vm1296, %v1461, 0
      %v1508 = vsel %vm1296, %v1462, 0
      %v1511 = vsel %vm1296, %v1463, 0
      %v1514 = vsel %vm1296, %v1464, 0
      %v1517 = vsel %vm1296, %v1465, 0
      %v1520 = vsel %vm1296, %v1466, 0
      %v1523 = vsel %vm1296, %v1467, 0
      %v1526 = vsel %vm1296, %v1468, 0
      %v1529 = vsel %vm1296, %v1469, 0
      %v1532 = vsel %vm1296, %v1470, 0
      %v1535 = vsel %vm1296, %v1471, 0
      %v1538 = vsel %vm1296, %v1472, 0
      %v1541 = vsel %vm1296, %v1473, 0
      %v1544 = vsel %vm1296, %v1474, 0
      %v1547 = vsel %vm1296, %v1475, 0
      %v1550 = vsel %vm1296, %v1476, 0
      %v1553 = vsel %vm1296, %v1477, 0
      %v1556 = vsel %vm1296, %v1478, 0
      %v1559 = vsel %vm1296, %v1479, 0
      %v1562 = vsel %vm1296, %v1480, 0
      %1564 = vmatprep.subr.bf16.mxu0 0
      %1565 = vmatpush1.bf16.msra.mxu0 %v1494
      %1566 = vmatprep.subr.bf16.mxu0 0
      %1567 = vmatpush1.bf16.msra.mxu0 %v1495
      %1568 = vmatprep.subr.bf16.mxu0 0
      %1569 = vmatpush1.bf16.msra.mxu0 0
      %1570 = vmatprep.subr.bf16.mxu0 0
      %1571 = vmatpush1.bf16.msra.mxu0 0
      %1572 = vmatprep.subr.bf16.mxu0 0
      %1573 = vmatpush1.bf16.msra.mxu0 0
      %1574 = vmatprep.subr.bf16.mxu0 0
      %1575 = vmatpush1.bf16.msra.mxu0 0
      %1576 = vmatprep.subr.bf16.mxu0 0
      %1577 = vmatpush1.bf16.msra.mxu0 0
      %1578 = vmatprep.subr.bf16.mxu0 0
      %1579 = vmatpush1.bf16.msra.mxu0 0
      %1580 = vmatprep.subr.bf16.mxu0 0
      %1581 = vmatpush1.bf16.msra.mxu0 0
      %1582 = vmatprep.subr.bf16.mxu0 0
      %1583 = vmatpush1.bf16.msra.mxu0 0
      %1584 = vmatprep.subr.bf16.mxu0 0
      %1585 = vmatpush1.bf16.msra.mxu0 0
      %1586 = vmatprep.subr.bf16.mxu0 0
      %1587 = vmatpush1.bf16.msra.mxu0 0
      %1588 = vmatprep.subr.bf16.mxu0 0
      %1589 = vmatpush1.bf16.msra.mxu0 0
      %1590 = vmatprep.subr.bf16.mxu0 0
      %1591 = vmatpush1.bf16.msra.mxu0 0
      %1592 = vmatprep.subr.bf16.mxu0 0
      %1593 = vmatpush1.bf16.msra.mxu0 0
      %1594 = vmatprep.subr.bf16.mxu0 0
      %1595 = vmatpush1.bf16.msra.mxu0 0
      %1596 = vmatprep.mubr.bf16.mxu0 0
      %1597 = vmatmul.mubr.bf16.gmra.mrb[0].mxu0 %v1499
      %v1598 = vpop.f32.mrb[0].mxu0
      %v1599 = vadd.f32 0.0, %v1598
      %v1600 = vpop.f32.mrb[0].mxu0
      %v1601 = vpop.f32.mrb[0].mxu0
      %v1602 = vadd.f32 0.0, %v1601
      %v1603 = vpop.f32.mrb[0].mxu0
      %1604 = vmatprep.mubr.bf16.mxu0 0
      %1605 = vmatmul.mubr.bf16.gmra.mrb[0].mxu0 %v1502
      %v1606 = vpop.f32.mrb[0].mxu0
      %v1607 = vadd.f32 0.0, %v1606
      %v1608 = vpop.f32.mrb[0].mxu0
      %v1609 = vpop.f32.mrb[0].mxu0
      %v1610 = vadd.f32 0.0, %v1609
      %v1611 = vpop.f32.mrb[0].mxu0
      %1612 = vmatprep.mubr.bf16.mxu0 0
      %1613 = vmatmul.mubr.bf16.gmra.mrb[0].mxu0 %v1505
      %v1614 = vpop.f32.mrb[0].mxu0
      %v1615 = vadd.f32 0.0, %v1614
      %v1616 = vpop.f32.mrb[0].mxu0
      %v1617 = vpop.f32.mrb[0].mxu0
      %v1618 = vadd.f32 0.0, %v1617
      %v1619 = vpop.f32.mrb[0].mxu0
      %1620 = vmatprep.mubr.bf16.mxu0 0
      %1621 = vmatmul.mubr.bf16.gmra.mrb[0].mxu0 %v1508
      %v1622 = vpop.f32.mrb[0].mxu0
      %v1623 = vadd.f32 0.0, %v1622
      %v1624 = vpop.f32.mrb[0].mxu0
      %v1625 = vpop.f32.mrb[0].mxu0
      %v1626 = vadd.f32 0.0, %v1625
      %v1627 = vpop.f32.mrb[0].mxu0
      %1628 = vmatprep.mubr.bf16.mxu0 0
      %1629 = vmatmul.mubr.bf16.gmra.mrb[0].mxu0 %v1511
      %v1630 = vpop.f32.mrb[0].mxu0
      %v1631 = vadd.f32 0.0, %v1630
      %v1632 = vpop.f32.mrb[0].mxu0
      %v1633 = vpop.f32.mrb[0].mxu0
      %v1634 = vadd.f32 0.0, %v1633
      %v1635 = vpop.f32.mrb[0].mxu0
      %1636 = vmatprep.mubr.bf16.mxu0 0
      %1637 = vmatmul.mubr.bf16.gmra.mrb[0].mxu0 %v1514
      %v1638 = vpop.f32.mrb[0].mxu0
      %v1639 = vadd.f32 0.0, %v1638
      %v1640 = vpop.f32.mrb[0].mxu0
      %v1641 = vpop.f32.mrb[0].mxu0
      %v1642 = vadd.f32 0.0, %v1641
      %v1643 = vpop.f32.mrb[0].mxu0
      %1644 = vmatprep.mubr.bf16.mxu0 0
      %1645 = vmatmul.mubr.bf16.gmra.mrb[0].mxu0 %v1517
      %v1646 = vpop.f32.mrb[0].mxu0
      %v1647 = vadd.f32 0.0, %v1646
      %v1648 = vpop.f32.mrb[0].mxu0
      %v1649 = vpop.f32.mrb[0].mxu0
      %v1650 = vadd.f32 0.0, %v1649
      %v1651 = vpop.f32.mrb[0].mxu0
      %1652 = vmatprep.mubr.bf16.mxu0 0
      %1653 = vmatmul.mubr.bf16.gmra.mrb[0].mxu0 %v1520
      %v1654 = vpop.f32.mrb[0].mxu0
      %v1655 = vadd.f32 0.0, %v1654
      %v1656 = vpop.f32.mrb[0].mxu0
      %v1657 = vpop.f32.mrb[0].mxu0
      %v1658 = vadd.f32 0.0, %v1657
      %v1659 = vpop.f32.mrb[0].mxu0
      %1660 = vmatprep.mubr.bf16.mxu0 0
      %1661 = vmatmul.mubr.bf16.gmra.mrb[0].mxu0 %v1523
      %v1662 = vpop.f32.mrb[0].mxu0
      %v1663 = vadd.f32 0.0, %v1662
      %v1664 = vpop.f32.mrb[0].mxu0
      %v1665 = vpop.f32.mrb[0].mxu0
      %v1666 = vadd.f32 0.0, %v1665
      %v1667 = vpop.f32.mrb[0].mxu0
      %1668 = vmatprep.mubr.bf16.mxu0 0
      %1669 = vmatmul.mubr.bf16.gmra.mrb[0].mxu0 %v1526
      %v1670 = vpop.f32.mrb[0].mxu0
      %v1671 = vadd.f32 0.0, %v1670
      %v1672 = vpop.f32.mrb[0].mxu0
      %v1673 = vpop.f32.mrb[0].mxu0
      %v1674 = vadd.f32 0.0, %v1673
      %v1675 = vpop.f32.mrb[0].mxu0
      %1676 = vmatprep.mubr.bf16.mxu0 0
      %1677 = vmatmul.mubr.bf16.gmra.mrb[0].mxu0 %v1529
      %v1678 = vpop.f32.mrb[0].mxu0
      %v1679 = vadd.f32 0.0, %v1678
      %v1680 = vpop.f32.mrb[0].mxu0
      %v1681 = vpop.f32.mrb[0].mxu0
      %v1682 = vadd.f32 0.0, %v1681
      %v1683 = vpop.f32.mrb[0].mxu0
      %1684 = vmatprep.mubr.bf16.mxu0 0
      %1685 = vmatmul.mubr.bf16.gmra.mrb[0].mxu0 %v1532
      %v1686 = vpop.f32.mrb[0].mxu0
      %v1687 = vadd.f32 0.0, %v1686
      %v1688 = vpop.f32.mrb[0].mxu0
      %v1689 = vpop.f32.mrb[0].mxu0
      %v1690 = vadd.f32 0.0, %v1689
      %v1691 = vpop.f32.mrb[0].mxu0
      %1692 = vmatprep.mubr.bf16.mxu0 0
      %1693 = vmatmul.mubr.bf16.gmra.mrb[0].mxu0 %v1535
      %v1694 = vpop.f32.mrb[0].mxu0
      %v1695 = vadd.f32 0.0, %v1694
      %v1696 = vpop.f32.mrb[0].mxu0
      %v1697 = vpop.f32.mrb[0].mxu0
      %v1698 = vadd.f32 0.0, %v1697
      %v1699 = vpop.f32.mrb[0].mxu0
      %1700 = vmatprep.mubr.bf16.mxu0 0
      %1701 = vmatmul.mubr.bf16.gmra.mrb[0].mxu0 %v1538
      %v1702 = vpop.f32.mrb[0].mxu0
      %v1703 = vadd.f32 0.0, %v1702
      %v1704 = vpop.f32.mrb[0].mxu0
      %v1705 = vpop.f32.mrb[0].mxu0
      %v1706 = vadd.f32 0.0, %v1705
      %v1707 = vpop.f32.mrb[0].mxu0
      %1708 = vmatprep.mubr.bf16.mxu0 0
      %1709 = vmatmul.mubr.bf16.gmra.mrb[0].mxu0 %v1541
      %v1710 = vpop.f32.mrb[0].mxu0
      %v1711 = vadd.f32 0.0, %v1710
      %v1712 = vpop.f32.mrb[0].mxu0
      %v1713 = vpop.f32.mrb[0].mxu0
      %v1714 = vadd.f32 0.0, %v1713
      %v1715 = vpop.f32.mrb[0].mxu0
      %1716 = vmatprep.mubr.bf16.mxu0 0
      %1717 = vmatmul.mubr.bf16.gmra.mrb[0].mxu0 %v1544
      %v1718 = vpop.f32.mrb[0].mxu0
      %v1719 = vadd.f32 0.0, %v1718
      %v1720 = vpop.f32.mrb[0].mxu0
      %v1721 = vpop.f32.mrb[0].mxu0
      %v1722 = vadd.f32 0.0, %v1721
      %v1723 = vpop.f32.mrb[0].mxu0
      %1724 = vmatprep.mubr.bf16.mxu0 0
      %1725 = vmatmul.mubr.bf16.gmra.mrb[0].mxu0 %v1547
      %v1726 = vpop.f32.mrb[0].mxu0
      %v1727 = vadd.f32 0.0, %v1726
      %v1728 = vpop.f32.mrb[0].mxu0
      %v1729 = vpop.f32.mrb[0].mxu0
      %v1730 = vadd.f32 0.0, %v1729
      %v1731 = vpop.f32.mrb[0].mxu0
      %1732 = vmatprep.mubr.bf16.mxu0 0
      %1733 = vmatmul.mubr.bf16.gmra.mrb[0].mxu0 %v1550
      %v1734 = vpop.f32.mrb[0].mxu0
      %v1735 = vadd.f32 0.0, %v1734
      %v1736 = vpop.f32.mrb[0].mxu0
      %v1737 = vpop.f32.mrb[0].mxu0
      %v1738 = vadd.f32 0.0, %v1737
      %v1739 = vpop.f32.mrb[0].mxu0
      %1740 = vmatprep.mubr.bf16.mxu0 0
      %1741 = vmatmul.mubr.bf16.gmra.mrb[0].mxu0 %v1553
      %v1742 = vpop.f32.mrb[0].mxu0
      %v1743 = vadd.f32 0.0, %v1742
      %v1744 = vpop.f32.mrb[0].mxu0
      %v1745 = vpop.f32.mrb[0].mxu0
      %v1746 = vadd.f32 0.0, %v1745
      %v1747 = vpop.f32.mrb[0].mxu0
      %1748 = vmatprep.mubr.bf16.mxu0 0
      %1749 = vmatmul.mubr.bf16.gmra.mrb[0].mxu0 %v1556
      %v1750 = vpop.f32.mrb[0].mxu0
      %v1751 = vadd.f32 0.0, %v1750
      %v1752 = vpop.f32.mrb[0].mxu0
      %v1753 = vpop.f32.mrb[0].mxu0
      %v1754 = vadd.f32 0.0, %v1753
      %v1755 = vpop.f32.mrb[0].mxu0
      %1756 = vmatprep.mubr.bf16.mxu0 0
      %1757 = vmatmul.mubr.bf16.gmra.mrb[0].mxu0 %v1559
      %v1758 = vpop.f32.mrb[0].mxu0
      %v1759 = vadd.f32 0.0, %v1758
      %v1760 = vpop.f32.mrb[0].mxu0
      %v1761 = vpop.f32.mrb[0].mxu0
      %v1762 = vadd.f32 0.0, %v1761
      %v1763 = vpop.f32.mrb[0].mxu0
      %1764 = vmatprep.mubr.bf16.mxu0 0
      %1765 = vmatmul.mubr.bf16.gmra.mrb[0].mxu0 %v1562
      %v1766 = vpop.f32.mrb[0].mxu0
      %v1767 = vadd.f32 0.0, %v1766
      %v1768 = vpop.f32.mrb[0].mxu0
      %v1769 = vpop.f32.mrb[0].mxu0
      %v1770 = vadd.f32 0.0, %v1769
      %v1771 = vpop.f32.mrb[0].mxu0
      %1772 = vdwg.mxu0
      %v1777 = vunpack.c.l.b16 %v1411
      %v1778 = vunpack.c.l.b16 %v1412
      %v1779 = vunpack.c.l.b16 %v1413
      %v1780 = vunpack.c.l.b16 %v1414
      %v1781 = vpack.c.b16 %v1778, %v1777
      %v1782 = vpack.c.b16 %v1780, %v1779
      %v1786 = vsel %vm1296, %v1389, 0
      %v1789 = vsel %vm1296, %v1390, 0
      %v1792 = vsel %vm1296, %v1391, 0
      %v1795 = vsel %vm1296, %v1392, 0
      %v1798 = vsel %vm1296, %v1393, 0
      %v1801 = vsel %vm1296, %v1394, 0
      %v1804 = vsel %vm1296, %v1395, 0
      %v1807 = vsel %vm1296, %v1396, 0
      %v1810 = vsel %vm1296, %v1397, 0
      %v1813 = vsel %vm1296, %v1398, 0
      %v1816 = vsel %vm1296, %v1399, 0
      %v1819 = vsel %vm1296, %v1400, 0
      %v1822 = vsel %vm1296, %v1401, 0
      %v1825 = vsel %vm1296, %v1402, 0
      %v1828 = vsel %vm1296, %v1403, 0
      %v1831 = vsel %vm1296, %v1404, 0
      %v1834 = vsel %vm1296, %v1405, 0
      %v1837 = vsel %vm1296, %v1406, 0
      %v1840 = vsel %vm1296, %v1407, 0
      %v1843 = vsel %vm1296, %v1408, 0
      %v1846 = vsel %vm1296, %v1409, 0
      %v1849 = vsel %vm1296, %v1410, 0
      %1851 = vmatprep.subr.bf16.mxu0 0
      %1852 = vmatpush1.bf16.msra.mxu0 %v1781
      %1853 = vmatprep.subr.bf16.mxu0 0
      %1854 = vmatpush1.bf16.msra.mxu0 %v1782
      %1855 = vmatprep.subr.bf16.mxu0 0
      %1856 = vmatpush1.bf16.msra.mxu0 0
      %1857 = vmatprep.subr.bf16.mxu0 0
      %1858 = vmatpush1.bf16.msra.mxu0 0
      %1859 = vmatprep.subr.bf16.mxu0 0
      %1860 = vmatpush1.bf16.msra.mxu0 0
      %1861 = vmatprep.subr.bf16.mxu0 0
      %1862 = vmatpush1.bf16.msra.mxu0 0
      %1863 = vmatprep.subr.bf16.mxu0 0
      %1864 = vmatpush1.bf16.msra.mxu0 0
      %1865 = vmatprep.subr.bf16.mxu0 0
      %1866 = vmatpush1.bf16.msra.mxu0 0
      %1867 = vmatprep.subr.bf16.mxu0 0
      %1868 = vmatpush1.bf16.msra.mxu0 0
      %1869 = vmatprep.subr.bf16.mxu0 0
      %1870 = vmatpush1.bf16.msra.mxu0 0
      %1871 = vmatprep.subr.bf16.mxu0 0
      %1872 = vmatpush1.bf16.msra.mxu0 0
      %1873 = vmatprep.subr.bf16.mxu0 0
      %1874 = vmatpush1.bf16.msra.mxu0 0
      %1875 = vmatprep.subr.bf16.mxu0 0
      %1876 = vmatpush1.bf16.msra.mxu0 0
      %1877 = vmatprep.subr.bf16.mxu0 0
      %1878 = vmatpush1.bf16.msra.mxu0 0
      %1879 = vmatprep.subr.bf16.mxu0 0
      %1880 = vmatpush1.bf16.msra.mxu0 0
      %1881 = vmatprep.subr.bf16.mxu0 0
      %1882 = vmatpush1.bf16.msra.mxu0 0
      %1883 = vmatprep.mubr.bf16.mxu0 0
      %1884 = vmatmul.mubr.bf16.gmra.mrb[0].mxu0 %v1786
      %v1885 = vpop.f32.mrb[0].mxu0
      %v1886 = vadd.f32 %v1599, %v1885
      %v1887 = vpop.f32.mrb[0].mxu0
      %v1888 = vpop.f32.mrb[0].mxu0
      %v1889 = vadd.f32 %v1602, %v1888
      %v1890 = vpop.f32.mrb[0].mxu0
      %1891 = vmatprep.mubr.bf16.mxu0 0
      %1892 = vmatmul.mubr.bf16.gmra.mrb[0].mxu0 %v1789
      %v1893 = vpop.f32.mrb[0].mxu0
      %v1894 = vadd.f32 %v1607, %v1893
      %v1895 = vpop.f32.mrb[0].mxu0
      %v1896 = vpop.f32.mrb[0].mxu0
      %v1897 = vadd.f32 %v1610, %v1896
      %v1898 = vpop.f32.mrb[0].mxu0
      %1899 = vmatprep.mubr.bf16.mxu0 0
      %1900 = vmatmul.mubr.bf16.gmra.mrb[0].mxu0 %v1792
      %v1901 = vpop.f32.mrb[0].mxu0
      %v1902 = vadd.f32 %v1615, %v1901
      %v1903 = vpop.f32.mrb[0].mxu0
      %v1904 = vpop.f32.mrb[0].mxu0
      %v1905 = vadd.f32 %v1618, %v1904
      %v1906 = vpop.f32.mrb[0].mxu0
      %1907 = vmatprep.mubr.bf16.mxu0 0
      %1908 = vmatmul.mubr.bf16.gmra.mrb[0].mxu0 %v1795
      %v1909 = vpop.f32.mrb[0].mxu0
      %v1910 = vadd.f32 %v1623, %v1909
      %v1911 = vpop.f32.mrb[0].mxu0
      %v1912 = vpop.f32.mrb[0].mxu0
      %v1913 = vadd.f32 %v1626, %v1912
      %v1914 = vpop.f32.mrb[0].mxu0
      %1915 = vmatprep.mubr.bf16.mxu0 0
      %1916 = vmatmul.mubr.bf16.gmra.mrb[0].mxu0 %v1798
      %v1917 = vpop.f32.mrb[0].mxu0
      %v1918 = vadd.f32 %v1631, %v1917
      %v1919 = vpop.f32.mrb[0].mxu0
      %v1920 = vpop.f32.mrb[0].mxu0
      %v1921 = vadd.f32 %v1634, %v1920
      %v1922 = vpop.f32.mrb[0].mxu0
      %1923 = vmatprep.mubr.bf16.mxu0 0
      %1924 = vmatmul.mubr.bf16.gmra.mrb[0].mxu0 %v1801
      %v1925 = vpop.f32.mrb[0].mxu0
      %v1926 = vadd.f32 %v1639, %v1925
      %v1927 = vpop.f32.mrb[0].mxu0
      %v1928 = vpop.f32.mrb[0].mxu0
      %v1929 = vadd.f32 %v1642, %v1928
      %v1930 = vpop.f32.mrb[0].mxu0
      %1931 = vmatprep.mubr.bf16.mxu0 0
      %1932 = vmatmul.mubr.bf16.gmra.mrb[0].mxu0 %v1804
      %v1933 = vpop.f32.mrb[0].mxu0
      %v1934 = vadd.f32 %v1647, %v1933
      %v1935 = vpop.f32.mrb[0].mxu0
      %v1936 = vpop.f32.mrb[0].mxu0
      %v1937 = vadd.f32 %v1650, %v1936
      %v1938 = vpop.f32.mrb[0].mxu0
      %1939 = vmatprep.mubr.bf16.mxu0 0
      %1940 = vmatmul.mubr.bf16.gmra.mrb[0].mxu0 %v1807
      %v1941 = vpop.f32.mrb[0].mxu0
      %v1942 = vadd.f32 %v1655, %v1941
      %v1943 = vpop.f32.mrb[0].mxu0
      %v1944 = vpop.f32.mrb[0].mxu0
      %v1945 = vadd.f32 %v1658, %v1944
      %v1946 = vpop.f32.mrb[0].mxu0
      %1947 = vmatprep.mubr.bf16.mxu0 0
      %1948 = vmatmul.mubr.bf16.gmra.mrb[0].mxu0 %v1810
      %v1949 = vpop.f32.mrb[0].mxu0
      %v1950 = vadd.f32 %v1663, %v1949
      %v1951 = vpop.f32.mrb[0].mxu0
      %v1952 = vpop.f32.mrb[0].mxu0
      %v1953 = vadd.f32 %v1666, %v1952
      %v1954 = vpop.f32.mrb[0].mxu0
      %1955 = vmatprep.mubr.bf16.mxu0 0
      %1956 = vmatmul.mubr.bf16.gmra.mrb[0].mxu0 %v1813
      %v1957 = vpop.f32.mrb[0].mxu0
      %v1958 = vadd.f32 %v1671, %v1957
      %v1959 = vpop.f32.mrb[0].mxu0
      %v1960 = vpop.f32.mrb[0].mxu0
      %v1961 = vadd.f32 %v1674, %v1960
      %v1962 = vpop.f32.mrb[0].mxu0
      %1963 = vmatprep.mubr.bf16.mxu0 0
      %1964 = vmatmul.mubr.bf16.gmra.mrb[0].mxu0 %v1816
      %v1965 = vpop.f32.mrb[0].mxu0
      %v1966 = vadd.f32 %v1679, %v1965
      %v1967 = vpop.f32.mrb[0].mxu0
      %v1968 = vpop.f32.mrb[0].mxu0
      %v1969 = vadd.f32 %v1682, %v1968
      %v1970 = vpop.f32.mrb[0].mxu0
      %1971 = vmatprep.mubr.bf16.mxu0 0
      %1972 = vmatmul.mubr.bf16.gmra.mrb[0].mxu0 %v1819
      %v1973 = vpop.f32.mrb[0].mxu0
      %v1974 = vadd.f32 %v1687, %v1973
      %v1975 = vpop.f32.mrb[0].mxu0
      %v1976 = vpop.f32.mrb[0].mxu0
      %v1977 = vadd.f32 %v1690, %v1976
      %v1978 = vpop.f32.mrb[0].mxu0
      %1979 = vmatprep.mubr.bf16.mxu0 0
      %1980 = vmatmul.mubr.bf16.gmra.mrb[0].mxu0 %v1822
      %v1981 = vpop.f32.mrb[0].mxu0
      %v1982 = vadd.f32 %v1695, %v1981
      %v1983 = vpop.f32.mrb[0].mxu0
      %v1984 = vpop.f32.mrb[0].mxu0
      %v1985 = vadd.f32 %v1698, %v1984
      %v1986 = vpop.f32.mrb[0].mxu0
      %1987 = vmatprep.mubr.bf16.mxu0 0
      %1988 = vmatmul.mubr.bf16.gmra.mrb[0].mxu0 %v1825
      %v1989 = vpop.f32.mrb[0].mxu0
      %v1990 = vadd.f32 %v1703, %v1989
      %v1991 = vpop.f32.mrb[0].mxu0
      %v1992 = vpop.f32.mrb[0].mxu0
      %v1993 = vadd.f32 %v1706, %v1992
      %v1994 = vpop.f32.mrb[0].mxu0
      %1995 = vmatprep.mubr.bf16.mxu0 0
      %1996 = vmatmul.mubr.bf16.gmra.mrb[0].mxu0 %v1828
      %v1997 = vpop.f32.mrb[0].mxu0
      %v1998 = vadd.f32 %v1711, %v1997
      %v1999 = vpop.f32.mrb[0].mxu0
      %v2000 = vpop.f32.mrb[0].mxu0
      %v2001 = vadd.f32 %v1714, %v2000
      %v2002 = vpop.f32.mrb[0].mxu0
      %2003 = vmatprep.mubr.bf16.mxu0 0
      %2004 = vmatmul.mubr.bf16.gmra.mrb[0].mxu0 %v1831
      %v2005 = vpop.f32.mrb[0].mxu0
      %v2006 = vadd.f32 %v1719, %v2005
      %v2007 = vpop.f32.mrb[0].mxu0
      %v2008 = vpop.f32.mrb[0].mxu0
      %v2009 = vadd.f32 %v1722, %v2008
      %v2010 = vpop.f32.mrb[0].mxu0
      %2011 = vmatprep.mubr.bf16.mxu0 0
      %2012 = vmatmul.mubr.bf16.gmra.mrb[0].mxu0 %v1834
      %v2013 = vpop.f32.mrb[0].mxu0
      %v2014 = vadd.f32 %v1727, %v2013
      %v2015 = vpop.f32.mrb[0].mxu0
      %v2016 = vpop.f32.mrb[0].mxu0
      %v2017 = vadd.f32 %v1730, %v2016
      %v2018 = vpop.f32.mrb[0].mxu0
      %2019 = vmatprep.mubr.bf16.mxu0 0
      %2020 = vmatmul.mubr.bf16.gmra.mrb[0].mxu0 %v1837
      %v2021 = vpop.f32.mrb[0].mxu0
      %v2022 = vadd.f32 %v1735, %v2021
      %v2023 = vpop.f32.mrb[0].mxu0
      %v2024 = vpop.f32.mrb[0].mxu0
      %v2025 = vadd.f32 %v1738, %v2024
      %v2026 = vpop.f32.mrb[0].mxu0
      %2027 = vmatprep.mubr.bf16.mxu0 0
      %2028 = vmatmul.mubr.bf16.gmra.mrb[0].mxu0 %v1840
      %v2029 = vpop.f32.mrb[0].mxu0
      %v2030 = vadd.f32 %v1743, %v2029
      %v2031 = vpop.f32.mrb[0].mxu0
      %v2032 = vpop.f32.mrb[0].mxu0
      %v2033 = vadd.f32 %v1746, %v2032
      %v2034 = vpop.f32.mrb[0].mxu0
      %2035 = vmatprep.mubr.bf16.mxu0 0
      %2036 = vmatmul.mubr.bf16.gmra.mrb[0].mxu0 %v1843
      %v2037 = vpop.f32.mrb[0].mxu0
      %v2038 = vadd.f32 %v1751, %v2037
      %v2039 = vpop.f32.mrb[0].mxu0
      %v2040 = vpop.f32.mrb[0].mxu0
      %v2041 = vadd.f32 %v1754, %v2040
      %v2042 = vpop.f32.mrb[0].mxu0
      %2043 = vmatprep.mubr.bf16.mxu0 0
      %2044 = vmatmul.mubr.bf16.gmra.mrb[0].mxu0 %v1846
      %v2045 = vpop.f32.mrb[0].mxu0
      %v2046 = vadd.f32 %v1759, %v2045
      %v2047 = vpop.f32.mrb[0].mxu0
      %v2048 = vpop.f32.mrb[0].mxu0
      %v2049 = vadd.f32 %v1762, %v2048
      %v2050 = vpop.f32.mrb[0].mxu0
      %2051 = vmatprep.mubr.bf16.mxu0 0
      %2052 = vmatmul.mubr.bf16.gmra.mrb[0].mxu0 %v1849
      %v2053 = vpop.f32.mrb[0].mxu0
      %v2054 = vadd.f32 %v1767, %v2053
      %v2055 = vpop.f32.mrb[0].mxu0
      %v2056 = vpop.f32.mrb[0].mxu0
      %v2057 = vadd.f32 %v1770, %v2056
      %v2058 = vpop.f32.mrb[0].mxu0
      %2059 = vdwg.mxu0
      %v2060 = vld [vmem:[#allocation2 + $0x2] sm:$0xff]
      %v2061 = vld [vmem:[#allocation2 + $0xa] sm:$0xff]
      %v2062 = vld [vmem:[#allocation2 + $0x12] sm:$0xff]
      %v2063 = vld [vmem:[#allocation2 + $0x1a] sm:$0xff]
      %v2064 = vld [vmem:[#allocation2 + $0x22] sm:$0xff]
      %v2065 = vld [vmem:[#allocation2 + $0x2a] sm:$0xff]
      %v2066 = vld [vmem:[#allocation2 + $0x32] sm:$0xff]
      %v2067 = vld [vmem:[#allocation2 + $0x3a] sm:$0xff]
      %v2068 = vld [vmem:[#allocation2 + $0x42] sm:$0xff]
      %v2069 = vld [vmem:[#allocation2 + $0x4a] sm:$0xff]
      %v2070 = vld [vmem:[#allocation2 + $0x52] sm:$0xff]
      %v2071 = vld [vmem:[#allocation2 + $0x5a] sm:$0xff]
      %v2072 = vld [vmem:[#allocation2 + $0x62] sm:$0xff]
      %v2073 = vld [vmem:[#allocation2 + $0x6a] sm:$0xff]
      %v2074 = vld [vmem:[#allocation2 + $0x72] sm:$0xff]
      %v2075 = vld [vmem:[#allocation2 + $0x7a] sm:$0xff]
      %v2076 = vld [vmem:[#allocation2 + $0x82] sm:$0xff]
      %v2077 = vld [vmem:[#allocation2 + $0x8a] sm:$0xff]
      %v2078 = vld [vmem:[#allocation2 + $0x92] sm:$0xff]
      %v2079 = vld [vmem:[#allocation2 + $0x9a] sm:$0xff]
      %v2080 = vld [vmem:[#allocation2 + $0xa2] sm:$0xff]
      %v2081 = vld [vmem:[#allocation2 + $0xaa] sm:$0xff]
      %v2082 = vld [vmem:[#allocation2 + $0xb2] sm:$0xff]
      %v2083 = vld [vmem:[#allocation2 + $0xba] sm:$0xff]
      %v2084 = vld [vmem:[#allocation2 + $0xc2] sm:$0xff]
      %v2085 = vld [vmem:[#allocation2 + $0xca] sm:$0xff]
      %v2086 = vld [vmem:[#allocation2 + $0xd2] sm:$0xff]
      %v2087 = vld [vmem:[#allocation2 + $0xda] sm:$0xff]
      %v2088 = vld [vmem:[#allocation2 + $0xe2] sm:$0xff]
      %v2089 = vld [vmem:[#allocation2 + $0xea] sm:$0xff]
      %v2090 = vld [vmem:[#allocation2 + $0xf2] sm:$0xff]
      %v2091 = vld [vmem:[#allocation2 + $0xfa] sm:$0xff]
      %v2092 = vld [vmem:[#allocation2 + $0x102] sm:$0xff]
      %v2093 = vld [vmem:[#allocation2 + $0x10a] sm:$0xff]
      %v2094 = vld [vmem:[#allocation2 + $0x112] sm:$0xff]
      %v2095 = vld [vmem:[#allocation2 + $0x11a] sm:$0xff]
      %v2096 = vld [vmem:[#allocation2 + $0x122] sm:$0xff]
      %v2097 = vld [vmem:[#allocation2 + $0x12a] sm:$0xff]
      %v2098 = vld [vmem:[#allocation2 + $0x132] sm:$0xff]
      %v2099 = vld [vmem:[#allocation2 + $0x13a] sm:$0xff]
      %v2100 = vld [vmem:[#allocation2 + $0x142] sm:$0xff]
      %v2101 = vld [vmem:[#allocation2 + $0x14a] sm:$0xff]
      %v2102 = vld [vmem:[#allocation2 + $0x152] sm:$0xff]
      %v2103 = vld [vmem:[#allocation2 + $0x15a] sm:$0xff]
      %v2104 = vpack.c.bf16 %v2061, %v2060
      %v2105 = vpack.c.bf16 %v2063, %v2062
      %v2106 = vpack.c.bf16 %v2065, %v2064
      %v2107 = vpack.c.bf16 %v2067, %v2066
      %v2108 = vpack.c.bf16 %v2069, %v2068
      %v2109 = vpack.c.bf16 %v2071, %v2070
      %v2110 = vpack.c.bf16 %v2073, %v2072
      %v2111 = vpack.c.bf16 %v2075, %v2074
      %v2112 = vpack.c.bf16 %v2077, %v2076
      %v2113 = vpack.c.bf16 %v2079, %v2078
      %v2114 = vpack.c.bf16 %v2081, %v2080
      %v2115 = vpack.c.bf16 %v2083, %v2082
      %v2116 = vpack.c.bf16 %v2085, %v2084
      %v2117 = vpack.c.bf16 %v2087, %v2086
      %v2118 = vpack.c.bf16 %v2089, %v2088
      %v2119 = vpack.c.bf16 %v2091, %v2090
      %v2120 = vpack.c.bf16 %v2093, %v2092
      %v2121 = vpack.c.bf16 %v2095, %v2094
      %v2122 = vpack.c.bf16 %v2097, %v2096
      %v2123 = vpack.c.bf16 %v2099, %v2098
      %v2124 = vpack.c.bf16 %v2101, %v2100
      %v2125 = vpack.c.bf16 %v2103, %v2102
      %s2126 = scalar_lea.vmem %s4, 32
      %v2127 = vld [vmem:[%s2126] sm:$0xf]
      %v2128 = vld [vmem:[%s2126 + $0x4] sm:$0xf]
      %v2129 = vld [vmem:[%s2126 + $0x8] sm:$0xf]
      %v2130 = vld [vmem:[%s2126 + $0xc] sm:$0xf]
      %v2135 = vunpack.c.l.b16 %v2127
      %v2136 = vunpack.c.l.b16 %v2128
      %v2137 = vunpack.c.l.b16 %v2129
      %v2138 = vunpack.c.l.b16 %v2130
      %v2139 = vpack.c.b16 %v2136, %v2135
      %v2140 = vpack.c.b16 %v2138, %v2137
      %v2144 = vsel %vm1296, %v2104, 0
      %v2147 = vsel %vm1296, %v2105, 0
      %v2150 = vsel %vm1296, %v2106, 0
      %v2153 = vsel %vm1296, %v2107, 0
      %v2156 = vsel %vm1296, %v2108, 0
      %v2159 = vsel %vm1296, %v2109, 0
      %v2162 = vsel %vm1296, %v2110, 0
      %v2165 = vsel %vm1296, %v2111, 0
      %v2168 = vsel %vm1296, %v2112, 0
      %v2171 = vsel %vm1296, %v2113, 0
      %v2174 = vsel %vm1296, %v2114, 0
      %v2177 = vsel %vm1296, %v2115, 0
      %v2180 = vsel %vm1296, %v2116, 0
      %v2183 = vsel %vm1296, %v2117, 0
      %v2186 = vsel %vm1296, %v2118, 0
      %v2189 = vsel %vm1296, %v2119, 0
      %v2192 = vsel %vm1296, %v2120, 0
      %v2195 = vsel %vm1296, %v2121, 0
      %v2198 = vsel %vm1296, %v2122, 0
      %v2201 = vsel %vm1296, %v2123, 0
      %v2204 = vsel %vm1296, %v2124, 0
      %v2207 = vsel %vm1296, %v2125, 0
      %2209 = vmatprep.subr.bf16.mxu0 0
      %2210 = vmatpush1.bf16.msra.mxu0 %v2139
      %2211 = vmatprep.subr.bf16.mxu0 0
      %2212 = vmatpush1.bf16.msra.mxu0 %v2140
      %2213 = vmatprep.subr.bf16.mxu0 0
      %2214 = vmatpush1.bf16.msra.mxu0 0
      %2215 = vmatprep.subr.bf16.mxu0 0
      %2216 = vmatpush1.bf16.msra.mxu0 0
      %2217 = vmatprep.subr.bf16.mxu0 0
      %2218 = vmatpush1.bf16.msra.mxu0 0
      %2219 = vmatprep.subr.bf16.mxu0 0
      %2220 = vmatpush1.bf16.msra.mxu0 0
      %2221 = vmatprep.subr.bf16.mxu0 0
      %2222 = vmatpush1.bf16.msra.mxu0 0
      %2223 = vmatprep.subr.bf16.mxu0 0
      %2224 = vmatpush1.bf16.msra.mxu0 0
      %2225 = vmatprep.subr.bf16.mxu0 0
      %2226 = vmatpush1.bf16.msra.mxu0 0
      %2227 = vmatprep.subr.bf16.mxu0 0
      %2228 = vmatpush1.bf16.msra.mxu0 0
      %2229 = vmatprep.subr.bf16.mxu0 0
      %2230 = vmatpush1.bf16.msra.mxu0 0
      %2231 = vmatprep.subr.bf16.mxu0 0
      %2232 = vmatpush1.bf16.msra.mxu0 0
      %2233 = vmatprep.subr.bf16.mxu0 0
      %2234 = vmatpush1.bf16.msra.mxu0 0
      %2235 = vmatprep.subr.bf16.mxu0 0
      %2236 = vmatpush1.bf16.msra.mxu0 0
      %2237 = vmatprep.subr.bf16.mxu0 0
      %2238 = vmatpush1.bf16.msra.mxu0 0
      %2239 = vmatprep.subr.bf16.mxu0 0
      %2240 = vmatpush1.bf16.msra.mxu0 0
      %2241 = vmatprep.mubr.bf16.mxu0 0
      %2242 = vmatmul.mubr.bf16.gmra.mrb[0].mxu0 %v2144
      %v2243 = vpop.f32.mrb[0].mxu0
      %v2244 = vadd.f32 0.0, %v2243
      %v2245 = vpop.f32.mrb[0].mxu0
      %v2246 = vpop.f32.mrb[0].mxu0
      %v2247 = vadd.f32 0.0, %v2246
      %v2248 = vpop.f32.mrb[0].mxu0
      %2249 = vmatprep.mubr.bf16.mxu0 0
      %2250 = vmatmul.mubr.bf16.gmra.mrb[0].mxu0 %v2147
      %v2251 = vpop.f32.mrb[0].mxu0
      %v2252 = vadd.f32 0.0, %v2251
      %v2253 = vpop.f32.mrb[0].mxu0
      %v2254 = vpop.f32.mrb[0].mxu0
      %v2255 = vadd.f32 0.0, %v2254
      %v2256 = vpop.f32.mrb[0].mxu0
      %2257 = vmatprep.mubr.bf16.mxu0 0
      %2258 = vmatmul.mubr.bf16.gmra.mrb[0].mxu0 %v2150
      %v2259 = vpop.f32.mrb[0].mxu0
      %v2260 = vadd.f32 0.0, %v2259
      %v2261 = vpop.f32.mrb[0].mxu0
      %v2262 = vpop.f32.mrb[0].mxu0
      %v2263 = vadd.f32 0.0, %v2262
      %v2264 = vpop.f32.mrb[0].mxu0
      %2265 = vmatprep.mubr.bf16.mxu0 0
      %2266 = vmatmul.mubr.bf16.gmra.mrb[0].mxu0 %v2153
      %v2267 = vpop.f32.mrb[0].mxu0
      %v2268 = vadd.f32 0.0, %v2267
      %v2269 = vpop.f32.mrb[0].mxu0
      %v2270 = vpop.f32.mrb[0].mxu0
      %v2271 = vadd.f32 0.0, %v2270
      %v2272 = vpop.f32.mrb[0].mxu0
      %2273 = vmatprep.mubr.bf16.mxu0 0
      %2274 = vmatmul.mubr.bf16.gmra.mrb[0].mxu0 %v2156
      %v2275 = vpop.f32.mrb[0].mxu0
      %v2276 = vadd.f32 0.0, %v2275
      %v2277 = vpop.f32.mrb[0].mxu0
      %v2278 = vpop.f32.mrb[0].mxu0
      %v2279 = vadd.f32 0.0, %v2278
      %v2280 = vpop.f32.mrb[0].mxu0
      %2281 = vmatprep.mubr.bf16.mxu0 0
      %2282 = vmatmul.mubr.bf16.gmra.mrb[0].mxu0 %v2159
      %v2283 = vpop.f32.mrb[0].mxu0
      %v2284 = vadd.f32 0.0, %v2283
      %v2285 = vpop.f32.mrb[0].mxu0
      %v2286 = vpop.f32.mrb[0].mxu0
      %v2287 = vadd.f32 0.0, %v2286
      %v2288 = vpop.f32.mrb[0].mxu0
      %2289 = vmatprep.mubr.bf16.mxu0 0
      %2290 = vmatmul.mubr.bf16.gmra.mrb[0].mxu0 %v2162
      %v2291 = vpop.f32.mrb[0].mxu0
      %v2292 = vadd.f32 0.0, %v2291
      %v2293 = vpop.f32.mrb[0].mxu0
      %v2294 = vpop.f32.mrb[0].mxu0
      %v2295 = vadd.f32 0.0, %v2294
      %v2296 = vpop.f32.mrb[0].mxu0
      %2297 = vmatprep.mubr.bf16.mxu0 0
      %2298 = vmatmul.mubr.bf16.gmra.mrb[0].mxu0 %v2165
      %v2299 = vpop.f32.mrb[0].mxu0
      %v2300 = vadd.f32 0.0, %v2299
      %v2301 = vpop.f32.mrb[0].mxu0
      %v2302 = vpop.f32.mrb[0].mxu0
      %v2303 = vadd.f32 0.0, %v2302
      %v2304 = vpop.f32.mrb[0].mxu0
      %2305 = vmatprep.mubr.bf16.mxu0 0
      %2306 = vmatmul.mubr.bf16.gmra.mrb[0].mxu0 %v2168
      %v2307 = vpop.f32.mrb[0].mxu0
      %v2308 = vadd.f32 0.0, %v2307
      %v2309 = vpop.f32.mrb[0].mxu0
      %v2310 = vpop.f32.mrb[0].mxu0
      %v2311 = vadd.f32 0.0, %v2310
      %v2312 = vpop.f32.mrb[0].mxu0
      %2313 = vmatprep.mubr.bf16.mxu0 0
      %2314 = vmatmul.mubr.bf16.gmra.mrb[0].mxu0 %v2171
      %v2315 = vpop.f32.mrb[0].mxu0
      %v2316 = vadd.f32 0.0, %v2315
      %v2317 = vpop.f32.mrb[0].mxu0
      %v2318 = vpop.f32.mrb[0].mxu0
      %v2319 = vadd.f32 0.0, %v2318
      %v2320 = vpop.f32.mrb[0].mxu0
      %2321 = vmatprep.mubr.bf16.mxu0 0
      %2322 = vmatmul.mubr.bf16.gmra.mrb[0].mxu0 %v2174
      %v2323 = vpop.f32.mrb[0].mxu0
      %v2324 = vadd.f32 0.0, %v2323
      %v2325 = vpop.f32.mrb[0].mxu0
      %v2326 = vpop.f32.mrb[0].mxu0
      %v2327 = vadd.f32 0.0, %v2326
      %v2328 = vpop.f32.mrb[0].mxu0
      %2329 = vmatprep.mubr.bf16.mxu0 0
      %2330 = vmatmul.mubr.bf16.gmra.mrb[0].mxu0 %v2177
      %v2331 = vpop.f32.mrb[0].mxu0
      %v2332 = vadd.f32 0.0, %v2331
      %v2333 = vpop.f32.mrb[0].mxu0
      %v2334 = vpop.f32.mrb[0].mxu0
      %v2335 = vadd.f32 0.0, %v2334
      %v2336 = vpop.f32.mrb[0].mxu0
      %2337 = vmatprep.mubr.bf16.mxu0 0
      %2338 = vmatmul.mubr.bf16.gmra.mrb[0].mxu0 %v2180
      %v2339 = vpop.f32.mrb[0].mxu0
      %v2340 = vadd.f32 0.0, %v2339
      %v2341 = vpop.f32.mrb[0].mxu0
      %v2342 = vpop.f32.mrb[0].mxu0
      %v2343 = vadd.f32 0.0, %v2342
      %v2344 = vpop.f32.mrb[0].mxu0
      %2345 = vmatprep.mubr.bf16.mxu0 0
      %2346 = vmatmul.mubr.bf16.gmra.mrb[0].mxu0 %v2183
      %v2347 = vpop.f32.mrb[0].mxu0
      %v2348 = vadd.f32 0.0, %v2347
      %v2349 = vpop.f32.mrb[0].mxu0
      %v2350 = vpop.f32.mrb[0].mxu0
      %v2351 = vadd.f32 0.0, %v2350
      %v2352 = vpop.f32.mrb[0].mxu0
      %2353 = vmatprep.mubr.bf16.mxu0 0
      %2354 = vmatmul.mubr.bf16.gmra.mrb[0].mxu0 %v2186
      %v2355 = vpop.f32.mrb[0].mxu0
      %v2356 = vadd.f32 0.0, %v2355
      %v2357 = vpop.f32.mrb[0].mxu0
      %v2358 = vpop.f32.mrb[0].mxu0
      %v2359 = vadd.f32 0.0, %v2358
      %v2360 = vpop.f32.mrb[0].mxu0
      %2361 = vmatprep.mubr.bf16.mxu0 0
      %2362 = vmatmul.mubr.bf16.gmra.mrb[0].mxu0 %v2189
      %v2363 = vpop.f32.mrb[0].mxu0
      %v2364 = vadd.f32 0.0, %v2363
      %v2365 = vpop.f32.mrb[0].mxu0
      %v2366 = vpop.f32.mrb[0].mxu0
      %v2367 = vadd.f32 0.0, %v2366
      %v2368 = vpop.f32.mrb[0].mxu0
      %2369 = vmatprep.mubr.bf16.mxu0 0
      %2370 = vmatmul.mubr.bf16.gmra.mrb[0].mxu0 %v2192
      %v2371 = vpop.f32.mrb[0].mxu0
      %v2372 = vadd.f32 0.0, %v2371
      %v2373 = vpop.f32.mrb[0].mxu0
      %v2374 = vpop.f32.mrb[0].mxu0
      %v2375 = vadd.f32 0.0, %v2374
      %v2376 = vpop.f32.mrb[0].mxu0
      %2377 = vmatprep.mubr.bf16.mxu0 0
      %2378 = vmatmul.mubr.bf16.gmra.mrb[0].mxu0 %v2195
      %v2379 = vpop.f32.mrb[0].mxu0
      %v2380 = vadd.f32 0.0, %v2379
      %v2381 = vpop.f32.mrb[0].mxu0
      %v2382 = vpop.f32.mrb[0].mxu0
      %v2383 = vadd.f32 0.0, %v2382
      %v2384 = vpop.f32.mrb[0].mxu0
      %2385 = vmatprep.mubr.bf16.mxu0 0
      %2386 = vmatmul.mubr.bf16.gmra.mrb[0].mxu0 %v2198
      %v2387 = vpop.f32.mrb[0].mxu0
      %v2388 = vadd.f32 0.0, %v2387
      %v2389 = vpop.f32.mrb[0].mxu0
      %v2390 = vpop.f32.mrb[0].mxu0
      %v2391 = vadd.f32 0.0, %v2390
      %v2392 = vpop.f32.mrb[0].mxu0
      %2393 = vmatprep.mubr.bf16.mxu0 0
      %2394 = vmatmul.mubr.bf16.gmra.mrb[0].mxu0 %v2201
      %v2395 = vpop.f32.mrb[0].mxu0
      %v2396 = vadd.f32 0.0, %v2395
      %v2397 = vpop.f32.mrb[0].mxu0
      %v2398 = vpop.f32.mrb[0].mxu0
      %v2399 = vadd.f32 0.0, %v2398
      %v2400 = vpop.f32.mrb[0].mxu0
      %2401 = vmatprep.mubr.bf16.mxu0 0
      %2402 = vmatmul.mubr.bf16.gmra.mrb[0].mxu0 %v2204
      %v2403 = vpop.f32.mrb[0].mxu0
      %v2404 = vadd.f32 0.0, %v2403
      %v2405 = vpop.f32.mrb[0].mxu0
      %v2406 = vpop.f32.mrb[0].mxu0
      %v2407 = vadd.f32 0.0, %v2406
      %v2408 = vpop.f32.mrb[0].mxu0
      %2409 = vmatprep.mubr.bf16.mxu0 0
      %2410 = vmatmul.mubr.bf16.gmra.mrb[0].mxu0 %v2207
      %v2411 = vpop.f32.mrb[0].mxu0
      %v2412 = vadd.f32 0.0, %v2411
      %v2413 = vpop.f32.mrb[0].mxu0
      %v2414 = vpop.f32.mrb[0].mxu0
      %v2415 = vadd.f32 0.0, %v2414
      %v2416 = vpop.f32.mrb[0].mxu0
      %2417 = vdwg.mxu0
      %v2418 = vadd.f32 %v1886, %v2244
      %v2419 = vadd.f32 %v1889, %v2247
      %v2420 = vadd.f32 %v1894, %v2252
      %v2421 = vadd.f32 %v1897, %v2255
      %v2422 = vadd.f32 %v1902, %v2260
      %v2423 = vadd.f32 %v1905, %v2263
      %v2424 = vadd.f32 %v1910, %v2268
      %v2425 = vadd.f32 %v1913, %v2271
      %v2426 = vadd.f32 %v1918, %v2276
      %v2427 = vadd.f32 %v1921, %v2279
      %v2428 = vadd.f32 %v1926, %v2284
      %v2429 = vadd.f32 %v1929, %v2287
      %v2430 = vadd.f32 %v1934, %v2292
      %v2431 = vadd.f32 %v1937, %v2295
      %v2432 = vadd.f32 %v1942, %v2300
      %v2433 = vadd.f32 %v1945, %v2303
      %v2434 = vadd.f32 %v1950, %v2308
      %v2435 = vadd.f32 %v1953, %v2311
      %v2436 = vadd.f32 %v1958, %v2316
      %v2437 = vadd.f32 %v1961, %v2319
      %v2438 = vadd.f32 %v1966, %v2324
      %v2439 = vadd.f32 %v1969, %v2327
      %v2440 = vadd.f32 %v1974, %v2332
      %v2441 = vadd.f32 %v1977, %v2335
      %v2442 = vadd.f32 %v1982, %v2340
      %v2443 = vadd.f32 %v1985, %v2343
      %v2444 = vadd.f32 %v1990, %v2348
      %v2445 = vadd.f32 %v1993, %v2351
      %v2446 = vadd.f32 %v1998, %v2356
      %v2447 = vadd.f32 %v2001, %v2359
      %v2448 = vadd.f32 %v2006, %v2364
      %v2449 = vadd.f32 %v2009, %v2367
      %v2450 = vadd.f32 %v2014, %v2372
      %v2451 = vadd.f32 %v2017, %v2375
      %v2452 = vadd.f32 %v2022, %v2380
      %v2453 = vadd.f32 %v2025, %v2383
      %v2454 = vadd.f32 %v2030, %v2388
      %v2455 = vadd.f32 %v2033, %v2391
      %v2456 = vadd.f32 %v2038, %v2396
      %v2457 = vadd.f32 %v2041, %v2399
      %v2458 = vadd.f32 %v2046, %v2404
      %v2459 = vadd.f32 %v2049, %v2407
      %v2460 = vadd.f32 %v2054, %v2412
      %v2461 = vadd.f32 %v2057, %v2415
      %v2462 = vld [vmem:[#allocation2 + $0xe] sm:$0xff]
      %v2463 = vld [vmem:[#allocation2 + $0x16] sm:$0xff]
      %v2464 = vld [vmem:[#allocation2 + $0x1e] sm:$0xff]
      %v2465 = vld [vmem:[#allocation2 + $0x26] sm:$0xff]
      %v2466 = vld [vmem:[#allocation2 + $0x2e] sm:$0xff]
      %v2467 = vld [vmem:[#allocation2 + $0x36] sm:$0xff]
      %v2468 = vld [vmem:[#allocation2 + $0x3e] sm:$0xff]
      %v2469 = vld [vmem:[#allocation2 + $0x46] sm:$0xff]
      %v2470 = vld [vmem:[#allocation2 + $0x4e] sm:$0xff]
      %v2471 = vld [vmem:[#allocation2 + $0x56] sm:$0xff]
      %v2472 = vld [vmem:[#allocation2 + $0x5e] sm:$0xff]
      %v2473 = vld [vmem:[#allocation2 + $0x66] sm:$0xff]
      %v2474 = vld [vmem:[#allocation2 + $0x6e] sm:$0xff]
      %v2475 = vld [vmem:[#allocation2 + $0x76] sm:$0xff]
      %v2476 = vld [vmem:[#allocation2 + $0x7e] sm:$0xff]
      %v2477 = vld [vmem:[#allocation2 + $0x86] sm:$0xff]
      %v2478 = vld [vmem:[#allocation2 + $0x8e] sm:$0xff]
      %v2479 = vld [vmem:[#allocation2 + $0x96] sm:$0xff]
      %v2480 = vld [vmem:[#allocation2 + $0x9e] sm:$0xff]
      %v2481 = vld [vmem:[#allocation2 + $0xa6] sm:$0xff]
      %v2482 = vld [vmem:[#allocation2 + $0xae] sm:$0xff]
      %v2483 = vld [vmem:[#allocation2 + $0xb6] sm:$0xff]
      %v2484 = vld [vmem:[#allocation2 + $0xbe] sm:$0xff]
      %v2485 = vld [vmem:[#allocation2 + $0xc6] sm:$0xff]
      %v2486 = vld [vmem:[#allocation2 + $0xce] sm:$0xff]
      %v2487 = vld [vmem:[#allocation2 + $0xd6] sm:$0xff]
      %v2488 = vld [vmem:[#allocation2 + $0xde] sm:$0xff]
      %v2489 = vld [vmem:[#allocation2 + $0xe6] sm:$0xff]
      %v2490 = vld [vmem:[#allocation2 + $0xee] sm:$0xff]
      %v2491 = vld [vmem:[#allocation2 + $0xf6] sm:$0xff]
      %v2492 = vld [vmem:[#allocation2 + $0xfe] sm:$0xff]
      %v2493 = vld [vmem:[#allocation2 + $0x106] sm:$0xff]
      %v2494 = vld [vmem:[#allocation2 + $0x10e] sm:$0xff]
      %v2495 = vld [vmem:[#allocation2 + $0x116] sm:$0xff]
      %v2496 = vld [vmem:[#allocation2 + $0x11e] sm:$0xff]
      %v2497 = vld [vmem:[#allocation2 + $0x126] sm:$0xff]
      %v2498 = vld [vmem:[#allocation2 + $0x12e] sm:$0xff]
      %v2499 = vld [vmem:[#allocation2 + $0x136] sm:$0xff]
      %v2500 = vld [vmem:[#allocation2 + $0x13e] sm:$0xff]
      %v2501 = vld [vmem:[#allocation2 + $0x146] sm:$0xff]
      %v2502 = vld [vmem:[#allocation2 + $0x14e] sm:$0xff]
      %v2503 = vld [vmem:[#allocation2 + $0x156] sm:$0xff]
      %v2504 = vld [vmem:[#allocation2 + $0x15e] sm:$0xff]
      %v2505 = vld [vmem:[#allocation2 + $0x166] sm:$0xff]
      %v2506 = vpack.c.bf16 %v2463, %v2462
      %v2507 = vpack.c.bf16 %v2465, %v2464
      %v2508 = vpack.c.bf16 %v2467, %v2466
      %v2509 = vpack.c.bf16 %v2469, %v2468
      %v2510 = vpack.c.bf16 %v2471, %v2470
      %v2511 = vpack.c.bf16 %v2473, %v2472
      %v2512 = vpack.c.bf16 %v2475, %v2474
      %v2513 = vpack.c.bf16 %v2477, %v2476
      %v2514 = vpack.c.bf16 %v2479, %v2478
      %v2515 = vpack.c.bf16 %v2481, %v2480
      %v2516 = vpack.c.bf16 %v2483, %v2482
      %v2517 = vpack.c.bf16 %v2485, %v2484
      %v2518 = vpack.c.bf16 %v2487, %v2486
      %v2519 = vpack.c.bf16 %v2489, %v2488
      %v2520 = vpack.c.bf16 %v2491, %v2490
      %v2521 = vpack.c.bf16 %v2493, %v2492
      %v2522 = vpack.c.bf16 %v2495, %v2494
      %v2523 = vpack.c.bf16 %v2497, %v2496
      %v2524 = vpack.c.bf16 %v2499, %v2498
      %v2525 = vpack.c.bf16 %v2501, %v2500
      %v2526 = vpack.c.bf16 %v2503, %v2502
      %v2527 = vpack.c.bf16 %v2505, %v2504
      %s2528 = scalar_lea.vmem %s4, 48
      %v2529 = vld [vmem:[%s2528] sm:$0xf]
      %v2530 = vld [vmem:[%s2528 + $0x4] sm:$0xf]
      %v2531 = vld [vmem:[%s2528 + $0x8] sm:$0xf]
      %v2532 = vld [vmem:[%s2528 + $0xc] sm:$0xf]
      %v2537 = vunpack.c.l.b16 %v2529
      %v2538 = vunpack.c.l.b16 %v2530
      %v2539 = vunpack.c.l.b16 %v2531
      %v2540 = vunpack.c.l.b16 %v2532
      %v2541 = vpack.c.b16 %v2538, %v2537
      %v2542 = vpack.c.b16 %v2540, %v2539
      %v2546 = vsel %vm1296, %v2506, 0
      %v2549 = vsel %vm1296, %v2507, 0
      %v2552 = vsel %vm1296, %v2508, 0
      %v2555 = vsel %vm1296, %v2509, 0
      %v2558 = vsel %vm1296, %v2510, 0
      %v2561 = vsel %vm1296, %v2511, 0
      %v2564 = vsel %vm1296, %v2512, 0
      %v2567 = vsel %vm1296, %v2513, 0
      %v2570 = vsel %vm1296, %v2514, 0
      %v2573 = vsel %vm1296, %v2515, 0
      %v2576 = vsel %vm1296, %v2516, 0
      %v2579 = vsel %vm1296, %v2517, 0
      %v2582 = vsel %vm1296, %v2518, 0
      %v2585 = vsel %vm1296, %v2519, 0
      %v2588 = vsel %vm1296, %v2520, 0
      %v2591 = vsel %vm1296, %v2521, 0
      %v2594 = vsel %vm1296, %v2522, 0
      %v2597 = vsel %vm1296, %v2523, 0
      %v2600 = vsel %vm1296, %v2524, 0
      %v2603 = vsel %vm1296, %v2525, 0
      %v2606 = vsel %vm1296, %v2526, 0
      %v2609 = vsel %vm1296, %v2527, 0
      %2611 = vmatprep.subr.bf16.mxu0 0
      %2612 = vmatpush1.bf16.msra.mxu0 %v2541
      %2613 = vmatprep.subr.bf16.mxu0 0
      %2614 = vmatpush1.bf16.msra.mxu0 %v2542
      %2615 = vmatprep.subr.bf16.mxu0 0
      %2616 = vmatpush1.bf16.msra.mxu0 0
      %2617 = vmatprep.subr.bf16.mxu0 0
      %2618 = vmatpush1.bf16.msra.mxu0 0
      %2619 = vmatprep.subr.bf16.mxu0 0
      %2620 = vmatpush1.bf16.msra.mxu0 0
      %2621 = vmatprep.subr.bf16.mxu0 0
      %2622 = vmatpush1.bf16.msra.mxu0 0
      %2623 = vmatprep.subr.bf16.mxu0 0
      %2624 = vmatpush1.bf16.msra.mxu0 0
      %2625 = vmatprep.subr.bf16.mxu0 0
      %2626 = vmatpush1.bf16.msra.mxu0 0
      %2627 = vmatprep.subr.bf16.mxu0 0
      %2628 = vmatpush1.bf16.msra.mxu0 0
      %2629 = vmatprep.subr.bf16.mxu0 0
      %2630 = vmatpush1.bf16.msra.mxu0 0
      %2631 = vmatprep.subr.bf16.mxu0 0
      %2632 = vmatpush1.bf16.msra.mxu0 0
      %2633 = vmatprep.subr.bf16.mxu0 0
      %2634 = vmatpush1.bf16.msra.mxu0 0
      %2635 = vmatprep.subr.bf16.mxu0 0
      %2636 = vmatpush1.bf16.msra.mxu0 0
      %2637 = vmatprep.subr.bf16.mxu0 0
      %2638 = vmatpush1.bf16.msra.mxu0 0
      %2639 = vmatprep.subr.bf16.mxu0 0
      %2640 = vmatpush1.bf16.msra.mxu0 0
      %2641 = vmatprep.subr.bf16.mxu0 0
      %2642 = vmatpush1.bf16.msra.mxu0 0
      %2643 = vmatprep.mubr.bf16.mxu0 0
      %2644 = vmatmul.mubr.bf16.gmra.mrb[0].mxu0 %v2546
      %v2645 = vpop.f32.mrb[0].mxu0
      %v2646 = vadd.f32 0.0, %v2645
      %v2647 = vpop.f32.mrb[0].mxu0
      %v2648 = vpop.f32.mrb[0].mxu0
      %v2649 = vadd.f32 0.0, %v2648
      %v2650 = vpop.f32.mrb[0].mxu0
      %2651 = vmatprep.mubr.bf16.mxu0 0
      %2652 = vmatmul.mubr.bf16.gmra.mrb[0].mxu0 %v2549
      %v2653 = vpop.f32.mrb[0].mxu0
      %v2654 = vadd.f32 0.0, %v2653
      %v2655 = vpop.f32.mrb[0].mxu0
      %v2656 = vpop.f32.mrb[0].mxu0
      %v2657 = vadd.f32 0.0, %v2656
      %v2658 = vpop.f32.mrb[0].mxu0
      %2659 = vmatprep.mubr.bf16.mxu0 0
      %2660 = vmatmul.mubr.bf16.gmra.mrb[0].mxu0 %v2552
      %v2661 = vpop.f32.mrb[0].mxu0
      %v2662 = vadd.f32 0.0, %v2661
      %v2663 = vpop.f32.mrb[0].mxu0
      %v2664 = vpop.f32.mrb[0].mxu0
      %v2665 = vadd.f32 0.0, %v2664
      %v2666 = vpop.f32.mrb[0].mxu0
      %2667 = vmatprep.mubr.bf16.mxu0 0
      %2668 = vmatmul.mubr.bf16.gmra.mrb[0].mxu0 %v2555
      %v2669 = vpop.f32.mrb[0].mxu0
      %v2670 = vadd.f32 0.0, %v2669
      %v2671 = vpop.f32.mrb[0].mxu0
      %v2672 = vpop.f32.mrb[0].mxu0
      %v2673 = vadd.f32 0.0, %v2672
      %v2674 = vpop.f32.mrb[0].mxu0
      %2675 = vmatprep.mubr.bf16.mxu0 0
      %2676 = vmatmul.mubr.bf16.gmra.mrb[0].mxu0 %v2558
      %v2677 = vpop.f32.mrb[0].mxu0
      %v2678 = vadd.f32 0.0, %v2677
      %v2679 = vpop.f32.mrb[0].mxu0
      %v2680 = vpop.f32.mrb[0].mxu0
      %v2681 = vadd.f32 0.0, %v2680
      %v2682 = vpop.f32.mrb[0].mxu0
      %2683 = vmatprep.mubr.bf16.mxu0 0
      %2684 = vmatmul.mubr.bf16.gmra.mrb[0].mxu0 %v2561
      %v2685 = vpop.f32.mrb[0].mxu0
      %v2686 = vadd.f32 0.0, %v2685
      %v2687 = vpop.f32.mrb[0].mxu0
      %v2688 = vpop.f32.mrb[0].mxu0
      %v2689 = vadd.f32 0.0, %v2688
      %v2690 = vpop.f32.mrb[0].mxu0
      %2691 = vmatprep.mubr.bf16.mxu0 0
      %2692 = vmatmul.mubr.bf16.gmra.mrb[0].mxu0 %v2564
      %v2693 = vpop.f32.mrb[0].mxu0
      %v2694 = vadd.f32 0.0, %v2693
      %v2695 = vpop.f32.mrb[0].mxu0
      %v2696 = vpop.f32.mrb[0].mxu0
      %v2697 = vadd.f32 0.0, %v2696
      %v2698 = vpop.f32.mrb[0].mxu0
      %2699 = vmatprep.mubr.bf16.mxu0 0
      %2700 = vmatmul.mubr.bf16.gmra.mrb[0].mxu0 %v2567
      %v2701 = vpop.f32.mrb[0].mxu0
      %v2702 = vadd.f32 0.0, %v2701
      %v2703 = vpop.f32.mrb[0].mxu0
      %v2704 = vpop.f32.mrb[0].mxu0
      %v2705 = vadd.f32 0.0, %v2704
      %v2706 = vpop.f32.mrb[0].mxu0
      %2707 = vmatprep.mubr.bf16.mxu0 0
      %2708 = vmatmul.mubr.bf16.gmra.mrb[0].mxu0 %v2570
      %v2709 = vpop.f32.mrb[0].mxu0
      %v2710 = vadd.f32 0.0, %v2709
      %v2711 = vpop.f32.mrb[0].mxu0
      %v2712 = vpop.f32.mrb[0].mxu0
      %v2713 = vadd.f32 0.0, %v2712
      %v2714 = vpop.f32.mrb[0].mxu0
      %2715 = vmatprep.mubr.bf16.mxu0 0
      %2716 = vmatmul.mubr.bf16.gmra.mrb[0].mxu0 %v2573
      %v2717 = vpop.f32.mrb[0].mxu0
      %v2718 = vadd.f32 0.0, %v2717
      %v2719 = vpop.f32.mrb[0].mxu0
      %v2720 = vpop.f32.mrb[0].mxu0
      %v2721 = vadd.f32 0.0, %v2720
      %v2722 = vpop.f32.mrb[0].mxu0
      %2723 = vmatprep.mubr.bf16.mxu0 0
      %2724 = vmatmul.mubr.bf16.gmra.mrb[0].mxu0 %v2576
      %v2725 = vpop.f32.mrb[0].mxu0
      %v2726 = vadd.f32 0.0, %v2725
      %v2727 = vpop.f32.mrb[0].mxu0
      %v2728 = vpop.f32.mrb[0].mxu0
      %v2729 = vadd.f32 0.0, %v2728
      %v2730 = vpop.f32.mrb[0].mxu0
      %2731 = vmatprep.mubr.bf16.mxu0 0
      %2732 = vmatmul.mubr.bf16.gmra.mrb[0].mxu0 %v2579
      %v2733 = vpop.f32.mrb[0].mxu0
      %v2734 = vadd.f32 0.0, %v2733
      %v2735 = vpop.f32.mrb[0].mxu0
      %v2736 = vpop.f32.mrb[0].mxu0
      %v2737 = vadd.f32 0.0, %v2736
      %v2738 = vpop.f32.mrb[0].mxu0
      %2739 = vmatprep.mubr.bf16.mxu0 0
      %2740 = vmatmul.mubr.bf16.gmra.mrb[0].mxu0 %v2582
      %v2741 = vpop.f32.mrb[0].mxu0
      %v2742 = vadd.f32 0.0, %v2741
      %v2743 = vpop.f32.mrb[0].mxu0
      %v2744 = vpop.f32.mrb[0].mxu0
      %v2745 = vadd.f32 0.0, %v2744
      %v2746 = vpop.f32.mrb[0].mxu0
      %2747 = vmatprep.mubr.bf16.mxu0 0
      %2748 = vmatmul.mubr.bf16.gmra.mrb[0].mxu0 %v2585
      %v2749 = vpop.f32.mrb[0].mxu0
      %v2750 = vadd.f32 0.0, %v2749
      %v2751 = vpop.f32.mrb[0].mxu0
      %v2752 = vpop.f32.mrb[0].mxu0
      %v2753 = vadd.f32 0.0, %v2752
      %v2754 = vpop.f32.mrb[0].mxu0
      %2755 = vmatprep.mubr.bf16.mxu0 0
      %2756 = vmatmul.mubr.bf16.gmra.mrb[0].mxu0 %v2588
      %v2757 = vpop.f32.mrb[0].mxu0
      %v2758 = vadd.f32 0.0, %v2757
      %v2759 = vpop.f32.mrb[0].mxu0
      %v2760 = vpop.f32.mrb[0].mxu0
      %v2761 = vadd.f32 0.0, %v2760
      %v2762 = vpop.f32.mrb[0].mxu0
      %2763 = vmatprep.mubr.bf16.mxu0 0
      %2764 = vmatmul.mubr.bf16.gmra.mrb[0].mxu0 %v2591
      %v2765 = vpop.f32.mrb[0].mxu0
      %v2766 = vadd.f32 0.0, %v2765
      %v2767 = vpop.f32.mrb[0].mxu0
      %v2768 = vpop.f32.mrb[0].mxu0
      %v2769 = vadd.f32 0.0, %v2768
      %v2770 = vpop.f32.mrb[0].mxu0
      %2771 = vmatprep.mubr.bf16.mxu0 0
      %2772 = vmatmul.mubr.bf16.gmra.mrb[0].mxu0 %v2594
      %v2773 = vpop.f32.mrb[0].mxu0
      %v2774 = vadd.f32 0.0, %v2773
      %v2775 = vpop.f32.mrb[0].mxu0
      %v2776 = vpop.f32.mrb[0].mxu0
      %v2777 = vadd.f32 0.0, %v2776
      %v2778 = vpop.f32.mrb[0].mxu0
      %2779 = vmatprep.mubr.bf16.mxu0 0
      %2780 = vmatmul.mubr.bf16.gmra.mrb[0].mxu0 %v2597
      %v2781 = vpop.f32.mrb[0].mxu0
      %v2782 = vadd.f32 0.0, %v2781
      %v2783 = vpop.f32.mrb[0].mxu0
      %v2784 = vpop.f32.mrb[0].mxu0
      %v2785 = vadd.f32 0.0, %v2784
      %v2786 = vpop.f32.mrb[0].mxu0
      %2787 = vmatprep.mubr.bf16.mxu0 0
      %2788 = vmatmul.mubr.bf16.gmra.mrb[0].mxu0 %v2600
      %v2789 = vpop.f32.mrb[0].mxu0
      %v2790 = vadd.f32 0.0, %v2789
      %v2791 = vpop.f32.mrb[0].mxu0
      %v2792 = vpop.f32.mrb[0].mxu0
      %v2793 = vadd.f32 0.0, %v2792
      %v2794 = vpop.f32.mrb[0].mxu0
      %2795 = vmatprep.mubr.bf16.mxu0 0
      %2796 = vmatmul.mubr.bf16.gmra.mrb[0].mxu0 %v2603
      %v2797 = vpop.f32.mrb[0].mxu0
      %v2798 = vadd.f32 0.0, %v2797
      %v2799 = vpop.f32.mrb[0].mxu0
      %v2800 = vpop.f32.mrb[0].mxu0
      %v2801 = vadd.f32 0.0, %v2800
      %v2802 = vpop.f32.mrb[0].mxu0
      %2803 = vmatprep.mubr.bf16.mxu0 0
      %2804 = vmatmul.mubr.bf16.gmra.mrb[0].mxu0 %v2606
      %v2805 = vpop.f32.mrb[0].mxu0
      %v2806 = vadd.f32 0.0, %v2805
      %v2807 = vpop.f32.mrb[0].mxu0
      %v2808 = vpop.f32.mrb[0].mxu0
      %v2809 = vadd.f32 0.0, %v2808
      %v2810 = vpop.f32.mrb[0].mxu0
      %2811 = vmatprep.mubr.bf16.mxu0 0
      %2812 = vmatmul.mubr.bf16.gmra.mrb[0].mxu0 %v2609
      %v2813 = vpop.f32.mrb[0].mxu0
      %v2814 = vadd.f32 0.0, %v2813
      %v2815 = vpop.f32.mrb[0].mxu0
      %v2816 = vpop.f32.mrb[0].mxu0
      %v2817 = vadd.f32 0.0, %v2816
      %v2818 = vpop.f32.mrb[0].mxu0
      %2819 = vdwg.mxu0
      %v2820 = vadd.f32 %v2418, %v2646
      %v2821 = vadd.f32 %v2419, %v2649
      %v2822 = vadd.f32 %v2420, %v2654
      %v2823 = vadd.f32 %v2421, %v2657
      %v2824 = vadd.f32 %v2422, %v2662
      %v2825 = vadd.f32 %v2423, %v2665
      %v2826 = vadd.f32 %v2424, %v2670
      %v2827 = vadd.f32 %v2425, %v2673
      %v2828 = vadd.f32 %v2426, %v2678
      %v2829 = vadd.f32 %v2427, %v2681
      %v2830 = vadd.f32 %v2428, %v2686
      %v2831 = vadd.f32 %v2429, %v2689
      %v2832 = vadd.f32 %v2430, %v2694
      %v2833 = vadd.f32 %v2431, %v2697
      %v2834 = vadd.f32 %v2432, %v2702
      %v2835 = vadd.f32 %v2433, %v2705
      %v2836 = vadd.f32 %v2434, %v2710
      %v2837 = vadd.f32 %v2435, %v2713
      %v2838 = vadd.f32 %v2436, %v2718
      %v2839 = vadd.f32 %v2437, %v2721
      %v2840 = vadd.f32 %v2438, %v2726
      %v2841 = vadd.f32 %v2439, %v2729
      %v2842 = vadd.f32 %v2440, %v2734
      %v2843 = vadd.f32 %v2441, %v2737
      %v2844 = vadd.f32 %v2442, %v2742
      %v2845 = vadd.f32 %v2443, %v2745
      %v2846 = vadd.f32 %v2444, %v2750
      %v2847 = vadd.f32 %v2445, %v2753
      %v2848 = vadd.f32 %v2446, %v2758
      %v2849 = vadd.f32 %v2447, %v2761
      %v2850 = vadd.f32 %v2448, %v2766
      %v2851 = vadd.f32 %v2449, %v2769
      %v2852 = vadd.f32 %v2450, %v2774
      %v2853 = vadd.f32 %v2451, %v2777
      %v2854 = vadd.f32 %v2452, %v2782
      %v2855 = vadd.f32 %v2453, %v2785
      %v2856 = vadd.f32 %v2454, %v2790
      %v2857 = vadd.f32 %v2455, %v2793
      %v2858 = vadd.f32 %v2456, %v2798
      %v2859 = vadd.f32 %v2457, %v2801
      %v2860 = vadd.f32 %v2458, %v2806
      %v2861 = vadd.f32 %v2459, %v2809
      %v2862 = vadd.f32 %v2460, %v2814
      %v2863 = vadd.f32 %v2461, %v2817
      %v2864 = vld [vmem:[#allocation2 + $0xf] sm:$0xff]
      %v2865 = vld [vmem:[#allocation2 + $0x17] sm:$0xff]
      %v2866 = vld [vmem:[#allocation2 + $0x1f] sm:$0xff]
      %v2867 = vld [vmem:[#allocation2 + $0x27] sm:$0xff]
      %v2868 = vld [vmem:[#allocation2 + $0x2f] sm:$0xff]
      %v2869 = vld [vmem:[#allocation2 + $0x37] sm:$0xff]
      %v2870 = vld [vmem:[#allocation2 + $0x3f] sm:$0xff]
      %v2871 = vld [vmem:[#allocation2 + $0x47] sm:$0xff]
      %v2872 = vld [vmem:[#allocation2 + $0x4f] sm:$0xff]
      %v2873 = vld [vmem:[#allocation2 + $0x57] sm:$0xff]
      %v2874 = vld [vmem:[#allocation2 + $0x5f] sm:$0xff]
      %v2875 = vld [vmem:[#allocation2 + $0x67] sm:$0xff]
      %v2876 = vld [vmem:[#allocation2 + $0x6f] sm:$0xff]
      %v2877 = vld [vmem:[#allocation2 + $0x77] sm:$0xff]
      %v2878 = vld [vmem:[#allocation2 + $0x7f] sm:$0xff]
      %v2879 = vld [vmem:[#allocation2 + $0x87] sm:$0xff]
      %v2880 = vld [vmem:[#allocation2 + $0x8f] sm:$0xff]
      %v2881 = vld [vmem:[#allocation2 + $0x97] sm:$0xff]
      %v2882 = vld [vmem:[#allocation2 + $0x9f] sm:$0xff]
      %v2883 = vld [vmem:[#allocation2 + $0xa7] sm:$0xff]
      %v2884 = vld [vmem:[#allocation2 + $0xaf] sm:$0xff]
      %v2885 = vld [vmem:[#allocation2 + $0xb7] sm:$0xff]
      %v2886 = vld [vmem:[#allocation2 + $0xbf] sm:$0xff]
      %v2887 = vld [vmem:[#allocation2 + $0xc7] sm:$0xff]
      %v2888 = vld [vmem:[#allocation2 + $0xcf] sm:$0xff]
      %v2889 = vld [vmem:[#allocation2 + $0xd7] sm:$0xff]
      %v2890 = vld [vmem:[#allocation2 + $0xdf] sm:$0xff]
      %v2891 = vld [vmem:[#allocation2 + $0xe7] sm:$0xff]
      %v2892 = vld [vmem:[#allocation2 + $0xef] sm:$0xff]
      %v2893 = vld [vmem:[#allocation2 + $0xf7] sm:$0xff]
      %v2894 = vld [vmem:[#allocation2 + $0xff] sm:$0xff]
      %v2895 = vld [vmem:[#allocation2 + $0x107] sm:$0xff]
      %v2896 = vld [vmem:[#allocation2 + $0x10f] sm:$0xff]
      %v2897 = vld [vmem:[#allocation2 + $0x117] sm:$0xff]
      %v2898 = vld [vmem:[#allocation2 + $0x11f] sm:$0xff]
      %v2899 = vld [vmem:[#allocation2 + $0x127] sm:$0xff]
      %v2900 = vld [vmem:[#allocation2 + $0x12f] sm:$0xff]
      %v2901 = vld [vmem:[#allocation2 + $0x137] sm:$0xff]
      %v2902 = vld [vmem:[#allocation2 + $0x13f] sm:$0xff]
      %v2903 = vld [vmem:[#allocation2 + $0x147] sm:$0xff]
      %v2904 = vld [vmem:[#allocation2 + $0x14f] sm:$0xff]
      %v2905 = vld [vmem:[#allocation2 + $0x157] sm:$0xff]
      %v2906 = vld [vmem:[#allocation2 + $0x15f] sm:$0xff]
      %v2907 = vld [vmem:[#allocation2 + $0x167] sm:$0xff]
      %v2908 = vpack.c.bf16 %v2865, %v2864
      %v2909 = vpack.c.bf16 %v2867, %v2866
      %v2910 = vpack.c.bf16 %v2869, %v2868
      %v2911 = vpack.c.bf16 %v2871, %v2870
      %v2912 = vpack.c.bf16 %v2873, %v2872
      %v2913 = vpack.c.bf16 %v2875, %v2874
      %v2914 = vpack.c.bf16 %v2877, %v2876
      %v2915 = vpack.c.bf16 %v2879, %v2878
      %v2916 = vpack.c.bf16 %v2881, %v2880
      %v2917 = vpack.c.bf16 %v2883, %v2882
      %v2918 = vpack.c.bf16 %v2885, %v2884
      %v2919 = vpack.c.bf16 %v2887, %v2886
      %v2920 = vpack.c.bf16 %v2889, %v2888
      %v2921 = vpack.c.bf16 %v2891, %v2890
      %v2922 = vpack.c.bf16 %v2893, %v2892
      %v2923 = vpack.c.bf16 %v2895, %v2894
      %v2924 = vpack.c.bf16 %v2897, %v2896
      %v2925 = vpack.c.bf16 %v2899, %v2898
      %v2926 = vpack.c.bf16 %v2901, %v2900
      %v2927 = vpack.c.bf16 %v2903, %v2902
      %v2928 = vpack.c.bf16 %v2905, %v2904
      %v2929 = vpack.c.bf16 %v2907, %v2906
      %s2930 = scalar_lea.vmem %s4, 64
      %v2931 = vld [vmem:[%s2930] sm:$0xf]
      %v2932 = vld [vmem:[%s2930 + $0x4] sm:$0xf]
      %v2933 = vld [vmem:[%s2930 + $0x8] sm:$0xf]
      %v2934 = vld [vmem:[%s2930 + $0xc] sm:$0xf]
      %v2939 = vunpack.c.l.b16 %v2931
      %v2940 = vunpack.c.l.b16 %v2932
      %v2941 = vunpack.c.l.b16 %v2933
      %v2942 = vunpack.c.l.b16 %v2934
      %v2943 = vpack.c.b16 %v2940, %v2939
      %v2944 = vpack.c.b16 %v2942, %v2941
      %v2948 = vsel %vm1296, %v2908, 0
      %v2951 = vsel %vm1296, %v2909, 0
      %v2954 = vsel %vm1296, %v2910, 0
      %v2957 = vsel %vm1296, %v2911, 0
      %v2960 = vsel %vm1296, %v2912, 0
      %v2963 = vsel %vm1296, %v2913, 0
      %v2966 = vsel %vm1296, %v2914, 0
      %v2969 = vsel %vm1296, %v2915, 0
      %v2972 = vsel %vm1296, %v2916, 0
      %v2975 = vsel %vm1296, %v2917, 0
      %v2978 = vsel %vm1296, %v2918, 0
      %v2981 = vsel %vm1296, %v2919, 0
      %v2984 = vsel %vm1296, %v2920, 0
      %v2987 = vsel %vm1296, %v2921, 0
      %v2990 = vsel %vm1296, %v2922, 0
      %v2993 = vsel %vm1296, %v2923, 0
      %v2996 = vsel %vm1296, %v2924, 0
      %v2999 = vsel %vm1296, %v2925, 0
      %v3002 = vsel %vm1296, %v2926, 0
      %v3005 = vsel %vm1296, %v2927, 0
      %v3008 = vsel %vm1296, %v2928, 0
      %v3011 = vsel %vm1296, %v2929, 0
      %3013 = vmatprep.subr.bf16.mxu0 0
      %3014 = vmatpush1.bf16.msra.mxu0 %v2943
      %3015 = vmatprep.subr.bf16.mxu0 0
      %3016 = vmatpush1.bf16.msra.mxu0 %v2944
      %3017 = vmatprep.subr.bf16.mxu0 0
      %3018 = vmatpush1.bf16.msra.mxu0 0
      %3019 = vmatprep.subr.bf16.mxu0 0
      %3020 = vmatpush1.bf16.msra.mxu0 0
      %3021 = vmatprep.subr.bf16.mxu0 0
      %3022 = vmatpush1.bf16.msra.mxu0 0
      %3023 = vmatprep.subr.bf16.mxu0 0
      %3024 = vmatpush1.bf16.msra.mxu0 0
      %3025 = vmatprep.subr.bf16.mxu0 0
      %3026 = vmatpush1.bf16.msra.mxu0 0
      %3027 = vmatprep.subr.bf16.mxu0 0
      %3028 = vmatpush1.bf16.msra.mxu0 0
      %3029 = vmatprep.subr.bf16.mxu0 0
      %3030 = vmatpush1.bf16.msra.mxu0 0
      %3031 = vmatprep.subr.bf16.mxu0 0
      %3032 = vmatpush1.bf16.msra.mxu0 0
      %3033 = vmatprep.subr.bf16.mxu0 0
      %3034 = vmatpush1.bf16.msra.mxu0 0
      %3035 = vmatprep.subr.bf16.mxu0 0
      %3036 = vmatpush1.bf16.msra.mxu0 0
      %3037 = vmatprep.subr.bf16.mxu0 0
      %3038 = vmatpush1.bf16.msra.mxu0 0
      %3039 = vmatprep.subr.bf16.mxu0 0
      %3040 = vmatpush1.bf16.msra.mxu0 0
      %3041 = vmatprep.subr.bf16.mxu0 0
      %3042 = vmatpush1.bf16.msra.mxu0 0
      %3043 = vmatprep.subr.bf16.mxu0 0
      %3044 = vmatpush1.bf16.msra.mxu0 0
      %3045 = vmatprep.mubr.bf16.mxu0 0
      %3046 = vmatmul.mubr.bf16.gmra.mrb[0].mxu0 %v2948
      %v3047 = vpop.f32.mrb[0].mxu0
      %v3048 = vadd.f32 0.0, %v3047
      %v3049 = vpop.f32.mrb[0].mxu0
      %v3050 = vpop.f32.mrb[0].mxu0
      %v3051 = vadd.f32 0.0, %v3050
      %v3052 = vpop.f32.mrb[0].mxu0
      %3053 = vmatprep.mubr.bf16.mxu0 0
      %3054 = vmatmul.mubr.bf16.gmra.mrb[0].mxu0 %v2951
      %v3055 = vpop.f32.mrb[0].mxu0
      %v3056 = vadd.f32 0.0, %v3055
      %v3057 = vpop.f32.mrb[0].mxu0
      %v3058 = vpop.f32.mrb[0].mxu0
      %v3059 = vadd.f32 0.0, %v3058
      %v3060 = vpop.f32.mrb[0].mxu0
      %3061 = vmatprep.mubr.bf16.mxu0 0
      %3062 = vmatmul.mubr.bf16.gmra.mrb[0].mxu0 %v2954
      %v3063 = vpop.f32.mrb[0].mxu0
      %v3064 = vadd.f32 0.0, %v3063
      %v3065 = vpop.f32.mrb[0].mxu0
      %v3066 = vpop.f32.mrb[0].mxu0
      %v3067 = vadd.f32 0.0, %v3066
      %v3068 = vpop.f32.mrb[0].mxu0
      %3069 = vmatprep.mubr.bf16.mxu0 0
      %3070 = vmatmul.mubr.bf16.gmra.mrb[0].mxu0 %v2957
      %v3071 = vpop.f32.mrb[0].mxu0
      %v3072 = vadd.f32 0.0, %v3071
      %v3073 = vpop.f32.mrb[0].mxu0
      %v3074 = vpop.f32.mrb[0].mxu0
      %v3075 = vadd.f32 0.0, %v3074
      %v3076 = vpop.f32.mrb[0].mxu0
      %3077 = vmatprep.mubr.bf16.mxu0 0
      %3078 = vmatmul.mubr.bf16.gmra.mrb[0].mxu0 %v2960
      %v3079 = vpop.f32.mrb[0].mxu0
      %v3080 = vadd.f32 0.0, %v3079
      %v3081 = vpop.f32.mrb[0].mxu0
      %v3082 = vpop.f32.mrb[0].mxu0
      %v3083 = vadd.f32 0.0, %v3082
      %v3084 = vpop.f32.mrb[0].mxu0
      %3085 = vmatprep.mubr.bf16.mxu0 0
      %3086 = vmatmul.mubr.bf16.gmra.mrb[0].mxu0 %v2963
      %v3087 = vpop.f32.mrb[0].mxu0
      %v3088 = vadd.f32 0.0, %v3087
      %v3089 = vpop.f32.mrb[0].mxu0
      %v3090 = vpop.f32.mrb[0].mxu0
      %v3091 = vadd.f32 0.0, %v3090
      %v3092 = vpop.f32.mrb[0].mxu0
      %3093 = vmatprep.mubr.bf16.mxu0 0
      %3094 = vmatmul.mubr.bf16.gmra.mrb[0].mxu0 %v2966
      %v3095 = vpop.f32.mrb[0].mxu0
      %v3096 = vadd.f32 0.0, %v3095
      %v3097 = vpop.f32.mrb[0].mxu0
      %v3098 = vpop.f32.mrb[0].mxu0
      %v3099 = vadd.f32 0.0, %v3098
      %v3100 = vpop.f32.mrb[0].mxu0
      %3101 = vmatprep.mubr.bf16.mxu0 0
      %3102 = vmatmul.mubr.bf16.gmra.mrb[0].mxu0 %v2969
      %v3103 = vpop.f32.mrb[0].mxu0
      %v3104 = vadd.f32 0.0, %v3103
      %v3105 = vpop.f32.mrb[0].mxu0
      %v3106 = vpop.f32.mrb[0].mxu0
      %v3107 = vadd.f32 0.0, %v3106
      %v3108 = vpop.f32.mrb[0].mxu0
      %3109 = vmatprep.mubr.bf16.mxu0 0
      %3110 = vmatmul.mubr.bf16.gmra.mrb[0].mxu0 %v2972
      %v3111 = vpop.f32.mrb[0].mxu0
      %v3112 = vadd.f32 0.0, %v3111
      %v3113 = vpop.f32.mrb[0].mxu0
      %v3114 = vpop.f32.mrb[0].mxu0
      %v3115 = vadd.f32 0.0, %v3114
      %v3116 = vpop.f32.mrb[0].mxu0
      %3117 = vmatprep.mubr.bf16.mxu0 0
      %3118 = vmatmul.mubr.bf16.gmra.mrb[0].mxu0 %v2975
      %v3119 = vpop.f32.mrb[0].mxu0
      %v3120 = vadd.f32 0.0, %v3119
      %v3121 = vpop.f32.mrb[0].mxu0
      %v3122 = vpop.f32.mrb[0].mxu0
      %v3123 = vadd.f32 0.0, %v3122
      %v3124 = vpop.f32.mrb[0].mxu0
      %3125 = vmatprep.mubr.bf16.mxu0 0
      %3126 = vmatmul.mubr.bf16.gmra.mrb[0].mxu0 %v2978
      %v3127 = vpop.f32.mrb[0].mxu0
      %v3128 = vadd.f32 0.0, %v3127
      %v3129 = vpop.f32.mrb[0].mxu0
      %v3130 = vpop.f32.mrb[0].mxu0
      %v3131 = vadd.f32 0.0, %v3130
      %v3132 = vpop.f32.mrb[0].mxu0
      %3133 = vmatprep.mubr.bf16.mxu0 0
      %3134 = vmatmul.mubr.bf16.gmra.mrb[0].mxu0 %v2981
      %v3135 = vpop.f32.mrb[0].mxu0
      %v3136 = vadd.f32 0.0, %v3135
      %v3137 = vpop.f32.mrb[0].mxu0
      %v3138 = vpop.f32.mrb[0].mxu0
      %v3139 = vadd.f32 0.0, %v3138
      %v3140 = vpop.f32.mrb[0].mxu0
      %3141 = vmatprep.mubr.bf16.mxu0 0
      %3142 = vmatmul.mubr.bf16.gmra.mrb[0].mxu0 %v2984
      %v3143 = vpop.f32.mrb[0].mxu0
      %v3144 = vadd.f32 0.0, %v3143
      %v3145 = vpop.f32.mrb[0].mxu0
      %v3146 = vpop.f32.mrb[0].mxu0
      %v3147 = vadd.f32 0.0, %v3146
      %v3148 = vpop.f32.mrb[0].mxu0
      %3149 = vmatprep.mubr.bf16.mxu0 0
      %3150 = vmatmul.mubr.bf16.gmra.mrb[0].mxu0 %v2987
      %v3151 = vpop.f32.mrb[0].mxu0
      %v3152 = vadd.f32 0.0, %v3151
      %v3153 = vpop.f32.mrb[0].mxu0
      %v3154 = vpop.f32.mrb[0].mxu0
      %v3155 = vadd.f32 0.0, %v3154
      %v3156 = vpop.f32.mrb[0].mxu0
      %3157 = vmatprep.mubr.bf16.mxu0 0
      %3158 = vmatmul.mubr.bf16.gmra.mrb[0].mxu0 %v2990
      %v3159 = vpop.f32.mrb[0].mxu0
      %v3160 = vadd.f32 0.0, %v3159
      %v3161 = vpop.f32.mrb[0].mxu0
      %v3162 = vpop.f32.mrb[0].mxu0
      %v3163 = vadd.f32 0.0, %v3162
      %v3164 = vpop.f32.mrb[0].mxu0
      %3165 = vmatprep.mubr.bf16.mxu0 0
      %3166 = vmatmul.mubr.bf16.gmra.mrb[0].mxu0 %v2993
      %v3167 = vpop.f32.mrb[0].mxu0
      %v3168 = vadd.f32 0.0, %v3167
      %v3169 = vpop.f32.mrb[0].mxu0
      %v3170 = vpop.f32.mrb[0].mxu0
      %v3171 = vadd.f32 0.0, %v3170
      %v3172 = vpop.f32.mrb[0].mxu0
      %3173 = vmatprep.mubr.bf16.mxu0 0
      %3174 = vmatmul.mubr.bf16.gmra.mrb[0].mxu0 %v2996
      %v3175 = vpop.f32.mrb[0].mxu0
      %v3176 = vadd.f32 0.0, %v3175
      %v3177 = vpop.f32.mrb[0].mxu0
      %v3178 = vpop.f32.mrb[0].mxu0
      %v3179 = vadd.f32 0.0, %v3178
      %v3180 = vpop.f32.mrb[0].mxu0
      %3181 = vmatprep.mubr.bf16.mxu0 0
      %3182 = vmatmul.mubr.bf16.gmra.mrb[0].mxu0 %v2999
      %v3183 = vpop.f32.mrb[0].mxu0
      %v3184 = vadd.f32 0.0, %v3183
      %v3185 = vpop.f32.mrb[0].mxu0
      %v3186 = vpop.f32.mrb[0].mxu0
      %v3187 = vadd.f32 0.0, %v3186
      %v3188 = vpop.f32.mrb[0].mxu0
      %3189 = vmatprep.mubr.bf16.mxu0 0
      %3190 = vmatmul.mubr.bf16.gmra.mrb[0].mxu0 %v3002
      %v3191 = vpop.f32.mrb[0].mxu0
      %v3192 = vadd.f32 0.0, %v3191
      %v3193 = vpop.f32.mrb[0].mxu0
      %v3194 = vpop.f32.mrb[0].mxu0
      %v3195 = vadd.f32 0.0, %v3194
      %v3196 = vpop.f32.mrb[0].mxu0
      %3197 = vmatprep.mubr.bf16.mxu0 0
      %3198 = vmatmul.mubr.bf16.gmra.mrb[0].mxu0 %v3005
      %v3199 = vpop.f32.mrb[0].mxu0
      %v3200 = vadd.f32 0.0, %v3199
      %v3201 = vpop.f32.mrb[0].mxu0
      %v3202 = vpop.f32.mrb[0].mxu0
      %v3203 = vadd.f32 0.0, %v3202
      %v3204 = vpop.f32.mrb[0].mxu0
      %3205 = vmatprep.mubr.bf16.mxu0 0
      %3206 = vmatmul.mubr.bf16.gmra.mrb[0].mxu0 %v3008
      %v3207 = vpop.f32.mrb[0].mxu0
      %v3208 = vadd.f32 0.0, %v3207
      %v3209 = vpop.f32.mrb[0].mxu0
      %v3210 = vpop.f32.mrb[0].mxu0
      %v3211 = vadd.f32 0.0, %v3210
      %v3212 = vpop.f32.mrb[0].mxu0
      %3213 = vmatprep.mubr.bf16.mxu0 0
      %3214 = vmatmul.mubr.bf16.gmra.mrb[0].mxu0 %v3011
      %v3215 = vpop.f32.mrb[0].mxu0
      %v3216 = vadd.f32 0.0, %v3215
      %v3217 = vpop.f32.mrb[0].mxu0
      %v3218 = vpop.f32.mrb[0].mxu0
      %v3219 = vadd.f32 0.0, %v3218
      %v3220 = vpop.f32.mrb[0].mxu0
      %3221 = vdwg.mxu0
      %v3222 = vadd.f32 %v2820, %v3048
      %v3223 = vadd.f32 %v2821, %v3051
      %v3224 = vadd.f32 %v2822, %v3056
      %v3225 = vadd.f32 %v2823, %v3059
      %v3226 = vadd.f32 %v2824, %v3064
      %v3227 = vadd.f32 %v2825, %v3067
      %v3228 = vadd.f32 %v2826, %v3072
      %v3229 = vadd.f32 %v2827, %v3075
      %v3230 = vadd.f32 %v2828, %v3080
      %v3231 = vadd.f32 %v2829, %v3083
      %v3232 = vadd.f32 %v2830, %v3088
      %v3233 = vadd.f32 %v2831, %v3091
      %v3234 = vadd.f32 %v2832, %v3096
      %v3235 = vadd.f32 %v2833, %v3099
      %v3236 = vadd.f32 %v2834, %v3104
      %v3237 = vadd.f32 %v2835, %v3107
      %v3238 = vadd.f32 %v2836, %v3112
      %v3239 = vadd.f32 %v2837, %v3115
      %v3240 = vadd.f32 %v2838, %v3120
      %v3241 = vadd.f32 %v2839, %v3123
      %v3242 = vadd.f32 %v2840, %v3128
      %v3243 = vadd.f32 %v2841, %v3131
      %v3244 = vadd.f32 %v2842, %v3136
      %v3245 = vadd.f32 %v2843, %v3139
      %v3246 = vadd.f32 %v2844, %v3144
      %v3247 = vadd.f32 %v2845, %v3147
      %v3248 = vadd.f32 %v2846, %v3152
      %v3249 = vadd.f32 %v2847, %v3155
      %v3250 = vadd.f32 %v2848, %v3160
      %v3251 = vadd.f32 %v2849, %v3163
      %v3252 = vadd.f32 %v2850, %v3168
      %v3253 = vadd.f32 %v2851, %v3171
      %v3254 = vadd.f32 %v2852, %v3176
      %v3255 = vadd.f32 %v2853, %v3179
      %v3256 = vadd.f32 %v2854, %v3184
      %v3257 = vadd.f32 %v2855, %v3187
      %v3258 = vadd.f32 %v2856, %v3192
      %v3259 = vadd.f32 %v2857, %v3195
      %v3260 = vadd.f32 %v2858, %v3200
      %v3261 = vadd.f32 %v2859, %v3203
      %v3262 = vadd.f32 %v2860, %v3208
      %v3263 = vadd.f32 %v2861, %v3211
      %v3264 = vadd.f32 %v2862, %v3216
      %v3265 = vadd.f32 %v2863, %v3219
      %v3266 = vld [vmem:[#allocation2 + $0x10] sm:$0xff]
      %v3267 = vld [vmem:[#allocation2 + $0x18] sm:$0xff]
      %v3268 = vld [vmem:[#allocation2 + $0x20] sm:$0xff]
      %v3269 = vld [vmem:[#allocation2 + $0x28] sm:$0xff]
      %v3270 = vld [vmem:[#allocation2 + $0x30] sm:$0xff]
      %v3271 = vld [vmem:[#allocation2 + $0x38] sm:$0xff]
      %v3272 = vld [vmem:[#allocation2 + $0x40] sm:$0xff]
      %v3273 = vld [vmem:[#allocation2 + $0x48] sm:$0xff]
      %v3274 = vld [vmem:[#allocation2 + $0x50] sm:$0xff]
      %v3275 = vld [vmem:[#allocation2 + $0x58] sm:$0xff]
      %v3276 = vld [vmem:[#allocation2 + $0x60] sm:$0xff]
      %v3277 = vld [vmem:[#allocation2 + $0x68] sm:$0xff]
      %v3278 = vld [vmem:[#allocation2 + $0x70] sm:$0xff]
      %v3279 = vld [vmem:[#allocation2 + $0x78] sm:$0xff]
      %v3280 = vld [vmem:[#allocation2 + $0x80] sm:$0xff]
      %v3281 = vld [vmem:[#allocation2 + $0x88] sm:$0xff]
      %v3282 = vld [vmem:[#allocation2 + $0x90] sm:$0xff]
      %v3283 = vld [vmem:[#allocation2 + $0x98] sm:$0xff]
      %v3284 = vld [vmem:[#allocation2 + $0xa0] sm:$0xff]
      %v3285 = vld [vmem:[#allocation2 + $0xa8] sm:$0xff]
      %v3286 = vld [vmem:[#allocation2 + $0xb0] sm:$0xff]
      %v3287 = vld [vmem:[#allocation2 + $0xb8] sm:$0xff]
      %v3288 = vld [vmem:[#allocation2 + $0xc0] sm:$0xff]
      %v3289 = vld [vmem:[#allocation2 + $0xc8] sm:$0xff]
      %v3290 = vld [vmem:[#allocation2 + $0xd0] sm:$0xff]
      %v3291 = vld [vmem:[#allocation2 + $0xd8] sm:$0xff]
      %v3292 = vld [vmem:[#allocation2 + $0xe0] sm:$0xff]
      %v3293 = vld [vmem:[#allocation2 + $0xe8] sm:$0xff]
      %v3294 = vld [vmem:[#allocation2 + $0xf0] sm:$0xff]
      %v3295 = vld [vmem:[#allocation2 + $0xf8] sm:$0xff]
      %v3296 = vld [vmem:[#allocation2 + $0x100] sm:$0xff]
      %v3297 = vld [vmem:[#allocation2 + $0x108] sm:$0xff]
      %v3298 = vld [vmem:[#allocation2 + $0x110] sm:$0xff]
      %v3299 = vld [vmem:[#allocation2 + $0x118] sm:$0xff]
      %v3300 = vld [vmem:[#allocation2 + $0x120] sm:$0xff]
      %v3301 = vld [vmem:[#allocation2 + $0x128] sm:$0xff]
      %v3302 = vld [vmem:[#allocation2 + $0x130] sm:$0xff]
      %v3303 = vld [vmem:[#allocation2 + $0x138] sm:$0xff]
      %v3304 = vld [vmem:[#allocation2 + $0x140] sm:$0xff]
      %v3305 = vld [vmem:[#allocation2 + $0x148] sm:$0xff]
      %v3306 = vld [vmem:[#allocation2 + $0x150] sm:$0xff]
      %v3307 = vld [vmem:[#allocation2 + $0x158] sm:$0xff]
      %v3308 = vld [vmem:[#allocation2 + $0x160] sm:$0xff]
      %v3309 = vld [vmem:[#allocation2 + $0x168] sm:$0xff]
      %v3310 = vpack.c.bf16 %v3267, %v3266
      %v3311 = vpack.c.bf16 %v3269, %v3268
      %v3312 = vpack.c.bf16 %v3271, %v3270
      %v3313 = vpack.c.bf16 %v3273, %v3272
      %v3314 = vpack.c.bf16 %v3275, %v3274
      %v3315 = vpack.c.bf16 %v3277, %v3276
      %v3316 = vpack.c.bf16 %v3279, %v3278
      %v3317 = vpack.c.bf16 %v3281, %v3280
      %v3318 = vpack.c.bf16 %v3283, %v3282
      %v3319 = vpack.c.bf16 %v3285, %v3284
      %v3320 = vpack.c.bf16 %v3287, %v3286
      %v3321 = vpack.c.bf16 %v3289, %v3288
      %v3322 = vpack.c.bf16 %v3291, %v3290
      %v3323 = vpack.c.bf16 %v3293, %v3292
      %v3324 = vpack.c.bf16 %v3295, %v3294
      %v3325 = vpack.c.bf16 %v3297, %v3296
      %v3326 = vpack.c.bf16 %v3299, %v3298
      %v3327 = vpack.c.bf16 %v3301, %v3300
      %v3328 = vpack.c.bf16 %v3303, %v3302
      %v3329 = vpack.c.bf16 %v3305, %v3304
      %v3330 = vpack.c.bf16 %v3307, %v3306
      %v3331 = vpack.c.bf16 %v3309, %v3308
      %s3332 = scalar_lea.vmem %s4, 80
      %v3333 = vld [vmem:[%s3332] sm:$0xf]
      %v3334 = vld [vmem:[%s3332 + $0x4] sm:$0xf]
      %v3335 = vld [vmem:[%s3332 + $0x8] sm:$0xf]
      %v3336 = vld [vmem:[%s3332 + $0xc] sm:$0xf]
      %v3341 = vunpack.c.l.b16 %v3333
      %v3342 = vunpack.c.l.b16 %v3334
      %v3343 = vunpack.c.l.b16 %v3335
      %v3344 = vunpack.c.l.b16 %v3336
      %v3345 = vpack.c.b16 %v3342, %v3341
      %v3346 = vpack.c.b16 %v3344, %v3343
      %v3350 = vsel %vm1296, %v3310, 0
      %v3353 = vsel %vm1296, %v3311, 0
      %v3356 = vsel %vm1296, %v3312, 0
      %v3359 = vsel %vm1296, %v3313, 0
      %v3362 = vsel %vm1296, %v3314, 0
      %v3365 = vsel %vm1296, %v3315, 0
      %v3368 = vsel %vm1296, %v3316, 0
      %v3371 = vsel %vm1296, %v3317, 0
      %v3374 = vsel %vm1296, %v3318, 0
      %v3377 = vsel %vm1296, %v3319, 0
      %v3380 = vsel %vm1296, %v3320, 0
      %v3383 = vsel %vm1296, %v3321, 0
      %v3386 = vsel %vm1296, %v3322, 0
      %v3389 = vsel %vm1296, %v3323, 0
      %v3392 = vsel %vm1296, %v3324, 0
      %v3395 = vsel %vm1296, %v3325, 0
      %v3398 = vsel %vm1296, %v3326, 0
      %v3401 = vsel %vm1296, %v3327, 0
      %v3404 = vsel %vm1296, %v3328, 0
      %v3407 = vsel %vm1296, %v3329, 0
      %v3410 = vsel %vm1296, %v3330, 0
      %v3413 = vsel %vm1296, %v3331, 0
      %3415 = vmatprep.subr.bf16.mxu0 0
      %3416 = vmatpush1.bf16.msra.mxu0 %v3345
      %3417 = vmatprep.subr.bf16.mxu0 0
      %3418 = vmatpush1.bf16.msra.mxu0 %v3346
      %3419 = vmatprep.subr.bf16.mxu0 0
      %3420 = vmatpush1.bf16.msra.mxu0 0
      %3421 = vmatprep.subr.bf16.mxu0 0
      %3422 = vmatpush1.bf16.msra.mxu0 0
      %3423 = vmatprep.subr.bf16.mxu0 0
      %3424 = vmatpush1.bf16.msra.mxu0 0
      %3425 = vmatprep.subr.bf16.mxu0 0
      %3426 = vmatpush1.bf16.msra.mxu0 0
      %3427 = vmatprep.subr.bf16.mxu0 0
      %3428 = vmatpush1.bf16.msra.mxu0 0
      %3429 = vmatprep.subr.bf16.mxu0 0
      %3430 = vmatpush1.bf16.msra.mxu0 0
      %3431 = vmatprep.subr.bf16.mxu0 0
      %3432 = vmatpush1.bf16.msra.mxu0 0
      %3433 = vmatprep.subr.bf16.mxu0 0
      %3434 = vmatpush1.bf16.msra.mxu0 0
      %3435 = vmatprep.subr.bf16.mxu0 0
      %3436 = vmatpush1.bf16.msra.mxu0 0
      %3437 = vmatprep.subr.bf16.mxu0 0
      %3438 = vmatpush1.bf16.msra.mxu0 0
      %3439 = vmatprep.subr.bf16.mxu0 0
      %3440 = vmatpush1.bf16.msra.mxu0 0
      %3441 = vmatprep.subr.bf16.mxu0 0
      %3442 = vmatpush1.bf16.msra.mxu0 0
      %3443 = vmatprep.subr.bf16.mxu0 0
      %3444 = vmatpush1.bf16.msra.mxu0 0
      %3445 = vmatprep.subr.bf16.mxu0 0
      %3446 = vmatpush1.bf16.msra.mxu0 0
      %3447 = vmatprep.mubr.bf16.mxu0 0
      %3448 = vmatmul.mubr.bf16.gmra.mrb[0].mxu0 %v3350
      %v3449 = vpop.f32.mrb[0].mxu0
      %v3450 = vadd.f32 0.0, %v3449
      %v3451 = vpop.f32.mrb[0].mxu0
      %v3452 = vpop.f32.mrb[0].mxu0
      %v3453 = vadd.f32 0.0, %v3452
      %v3454 = vpop.f32.mrb[0].mxu0
      %3455 = vmatprep.mubr.bf16.mxu0 0
      %3456 = vmatmul.mubr.bf16.gmra.mrb[0].mxu0 %v3353
      %v3457 = vpop.f32.mrb[0].mxu0
      %v3458 = vadd.f32 0.0, %v3457
      %v3459 = vpop.f32.mrb[0].mxu0
      %v3460 = vpop.f32.mrb[0].mxu0
      %v3461 = vadd.f32 0.0, %v3460
      %v3462 = vpop.f32.mrb[0].mxu0
      %3463 = vmatprep.mubr.bf16.mxu0 0
      %3464 = vmatmul.mubr.bf16.gmra.mrb[0].mxu0 %v3356
      %v3465 = vpop.f32.mrb[0].mxu0
      %v3466 = vadd.f32 0.0, %v3465
      %v3467 = vpop.f32.mrb[0].mxu0
      %v3468 = vpop.f32.mrb[0].mxu0
      %v3469 = vadd.f32 0.0, %v3468
      %v3470 = vpop.f32.mrb[0].mxu0
      %3471 = vmatprep.mubr.bf16.mxu0 0
      %3472 = vmatmul.mubr.bf16.gmra.mrb[0].mxu0 %v3359
      %v3473 = vpop.f32.mrb[0].mxu0
      %v3474 = vadd.f32 0.0, %v3473
      %v3475 = vpop.f32.mrb[0].mxu0
      %v3476 = vpop.f32.mrb[0].mxu0
      %v3477 = vadd.f32 0.0, %v3476
      %v3478 = vpop.f32.mrb[0].mxu0
      %3479 = vmatprep.mubr.bf16.mxu0 0
      %3480 = vmatmul.mubr.bf16.gmra.mrb[0].mxu0 %v3362
      %v3481 = vpop.f32.mrb[0].mxu0
      %v3482 = vadd.f32 0.0, %v3481
      %v3483 = vpop.f32.mrb[0].mxu0
      %v3484 = vpop.f32.mrb[0].mxu0
      %v3485 = vadd.f32 0.0, %v3484
      %v3486 = vpop.f32.mrb[0].mxu0
      %3487 = vmatprep.mubr.bf16.mxu0 0
      %3488 = vmatmul.mubr.bf16.gmra.mrb[0].mxu0 %v3365
      %v3489 = vpop.f32.mrb[0].mxu0
      %v3490 = vadd.f32 0.0, %v3489
      %v3491 = vpop.f32.mrb[0].mxu0
      %v3492 = vpop.f32.mrb[0].mxu0
      %v3493 = vadd.f32 0.0, %v3492
      %v3494 = vpop.f32.mrb[0].mxu0
      %3495 = vmatprep.mubr.bf16.mxu0 0
      %3496 = vmatmul.mubr.bf16.gmra.mrb[0].mxu0 %v3368
      %v3497 = vpop.f32.mrb[0].mxu0
      %v3498 = vadd.f32 0.0, %v3497
      %v3499 = vpop.f32.mrb[0].mxu0
      %v3500 = vpop.f32.mrb[0].mxu0
      %v3501 = vadd.f32 0.0, %v3500
      %v3502 = vpop.f32.mrb[0].mxu0
      %3503 = vmatprep.mubr.bf16.mxu0 0
      %3504 = vmatmul.mubr.bf16.gmra.mrb[0].mxu0 %v3371
      %v3505 = vpop.f32.mrb[0].mxu0
      %v3506 = vadd.f32 0.0, %v3505
      %v3507 = vpop.f32.mrb[0].mxu0
      %v3508 = vpop.f32.mrb[0].mxu0
      %v3509 = vadd.f32 0.0, %v3508
      %v3510 = vpop.f32.mrb[0].mxu0
      %3511 = vmatprep.mubr.bf16.mxu0 0
      %3512 = vmatmul.mubr.bf16.gmra.mrb[0].mxu0 %v3374
      %v3513 = vpop.f32.mrb[0].mxu0
      %v3514 = vadd.f32 0.0, %v3513
      %v3515 = vpop.f32.mrb[0].mxu0
      %v3516 = vpop.f32.mrb[0].mxu0
      %v3517 = vadd.f32 0.0, %v3516
      %v3518 = vpop.f32.mrb[0].mxu0
      %3519 = vmatprep.mubr.bf16.mxu0 0
      %3520 = vmatmul.mubr.bf16.gmra.mrb[0].mxu0 %v3377
      %v3521 = vpop.f32.mrb[0].mxu0
      %v3522 = vadd.f32 0.0, %v3521
      %v3523 = vpop.f32.mrb[0].mxu0
      %v3524 = vpop.f32.mrb[0].mxu0
      %v3525 = vadd.f32 0.0, %v3524
      %v3526 = vpop.f32.mrb[0].mxu0
      %3527 = vmatprep.mubr.bf16.mxu0 0
      %3528 = vmatmul.mubr.bf16.gmra.mrb[0].mxu0 %v3380
      %v3529 = vpop.f32.mrb[0].mxu0
      %v3530 = vadd.f32 0.0, %v3529
      %v3531 = vpop.f32.mrb[0].mxu0
      %v3532 = vpop.f32.mrb[0].mxu0
      %v3533 = vadd.f32 0.0, %v3532
      %v3534 = vpop.f32.mrb[0].mxu0
      %3535 = vmatprep.mubr.bf16.mxu0 0
      %3536 = vmatmul.mubr.bf16.gmra.mrb[0].mxu0 %v3383
      %v3537 = vpop.f32.mrb[0].mxu0
      %v3538 = vadd.f32 0.0, %v3537
      %v3539 = vpop.f32.mrb[0].mxu0
      %v3540 = vpop.f32.mrb[0].mxu0
      %v3541 = vadd.f32 0.0, %v3540
      %v3542 = vpop.f32.mrb[0].mxu0
      %3543 = vmatprep.mubr.bf16.mxu0 0
      %3544 = vmatmul.mubr.bf16.gmra.mrb[0].mxu0 %v3386
      %v3545 = vpop.f32.mrb[0].mxu0
      %v3546 = vadd.f32 0.0, %v3545
      %v3547 = vpop.f32.mrb[0].mxu0
      %v3548 = vpop.f32.mrb[0].mxu0
      %v3549 = vadd.f32 0.0, %v3548
      %v3550 = vpop.f32.mrb[0].mxu0
      %3551 = vmatprep.mubr.bf16.mxu0 0
      %3552 = vmatmul.mubr.bf16.gmra.mrb[0].mxu0 %v3389
      %v3553 = vpop.f32.mrb[0].mxu0
      %v3554 = vadd.f32 0.0, %v3553
      %v3555 = vpop.f32.mrb[0].mxu0
      %v3556 = vpop.f32.mrb[0].mxu0
      %v3557 = vadd.f32 0.0, %v3556
      %v3558 = vpop.f32.mrb[0].mxu0
      %3559 = vmatprep.mubr.bf16.mxu0 0
      %3560 = vmatmul.mubr.bf16.gmra.mrb[0].mxu0 %v3392
      %v3561 = vpop.f32.mrb[0].mxu0
      %v3562 = vadd.f32 0.0, %v3561
      %v3563 = vpop.f32.mrb[0].mxu0
      %v3564 = vpop.f32.mrb[0].mxu0
      %v3565 = vadd.f32 0.0, %v3564
      %v3566 = vpop.f32.mrb[0].mxu0
      %3567 = vmatprep.mubr.bf16.mxu0 0
      %3568 = vmatmul.mubr.bf16.gmra.mrb[0].mxu0 %v3395
      %v3569 = vpop.f32.mrb[0].mxu0
      %v3570 = vadd.f32 0.0, %v3569
      %v3571 = vpop.f32.mrb[0].mxu0
      %v3572 = vpop.f32.mrb[0].mxu0
      %v3573 = vadd.f32 0.0, %v3572
      %v3574 = vpop.f32.mrb[0].mxu0
      %3575 = vmatprep.mubr.bf16.mxu0 0
      %3576 = vmatmul.mubr.bf16.gmra.mrb[0].mxu0 %v3398
      %v3577 = vpop.f32.mrb[0].mxu0
      %v3578 = vadd.f32 0.0, %v3577
      %v3579 = vpop.f32.mrb[0].mxu0
      %v3580 = vpop.f32.mrb[0].mxu0
      %v3581 = vadd.f32 0.0, %v3580
      %v3582 = vpop.f32.mrb[0].mxu0
      %3583 = vmatprep.mubr.bf16.mxu0 0
      %3584 = vmatmul.mubr.bf16.gmra.mrb[0].mxu0 %v3401
      %v3585 = vpop.f32.mrb[0].mxu0
      %v3586 = vadd.f32 0.0, %v3585
      %v3587 = vpop.f32.mrb[0].mxu0
      %v3588 = vpop.f32.mrb[0].mxu0
      %v3589 = vadd.f32 0.0, %v3588
      %v3590 = vpop.f32.mrb[0].mxu0
      %3591 = vmatprep.mubr.bf16.mxu0 0
      %3592 = vmatmul.mubr.bf16.gmra.mrb[0].mxu0 %v3404
      %v3593 = vpop.f32.mrb[0].mxu0
      %v3594 = vadd.f32 0.0, %v3593
      %v3595 = vpop.f32.mrb[0].mxu0
      %v3596 = vpop.f32.mrb[0].mxu0
      %v3597 = vadd.f32 0.0, %v3596
      %v3598 = vpop.f32.mrb[0].mxu0
      %3599 = vmatprep.mubr.bf16.mxu0 0
      %3600 = vmatmul.mubr.bf16.gmra.mrb[0].mxu0 %v3407
      %v3601 = vpop.f32.mrb[0].mxu0
      %v3602 = vadd.f32 0.0, %v3601
      %v3603 = vpop.f32.mrb[0].mxu0
      %v3604 = vpop.f32.mrb[0].mxu0
      %v3605 = vadd.f32 0.0, %v3604
      %v3606 = vpop.f32.mrb[0].mxu0
      %3607 = vmatprep.mubr.bf16.mxu0 0
      %3608 = vmatmul.mubr.bf16.gmra.mrb[0].mxu0 %v3410
      %v3609 = vpop.f32.mrb[0].mxu0
      %v3610 = vadd.f32 0.0, %v3609
      %v3611 = vpop.f32.mrb[0].mxu0
      %v3612 = vpop.f32.mrb[0].mxu0
      %v3613 = vadd.f32 0.0, %v3612
      %v3614 = vpop.f32.mrb[0].mxu0
      %3615 = vmatprep.mubr.bf16.mxu0 0
      %3616 = vmatmul.mubr.bf16.gmra.mrb[0].mxu0 %v3413
      %v3617 = vpop.f32.mrb[0].mxu0
      %v3618 = vadd.f32 0.0, %v3617
      %v3619 = vpop.f32.mrb[0].mxu0
      %v3620 = vpop.f32.mrb[0].mxu0
      %v3621 = vadd.f32 0.0, %v3620
      %v3622 = vpop.f32.mrb[0].mxu0
      %3623 = vdwg.mxu0
      %v3624 = vadd.f32 %v3222, %v3450
      %v3625 = vadd.f32 %v3223, %v3453
      %v3626 = vadd.f32 %v3224, %v3458
      %v3627 = vadd.f32 %v3225, %v3461
      %v3628 = vadd.f32 %v3226, %v3466
      %v3629 = vadd.f32 %v3227, %v3469
      %v3630 = vadd.f32 %v3228, %v3474
      %v3631 = vadd.f32 %v3229, %v3477
      %v3632 = vadd.f32 %v3230, %v3482
      %v3633 = vadd.f32 %v3231, %v3485
      %v3634 = vadd.f32 %v3232, %v3490
      %v3635 = vadd.f32 %v3233, %v3493
      %v3636 = vadd.f32 %v3234, %v3498
      %v3637 = vadd.f32 %v3235, %v3501
      %v3638 = vadd.f32 %v3236, %v3506
      %v3639 = vadd.f32 %v3237, %v3509
      %v3640 = vadd.f32 %v3238, %v3514
      %v3641 = vadd.f32 %v3239, %v3517
      %v3642 = vadd.f32 %v3240, %v3522
      %v3643 = vadd.f32 %v3241, %v3525
      %v3644 = vadd.f32 %v3242, %v3530
      %v3645 = vadd.f32 %v3243, %v3533
      %v3646 = vadd.f32 %v3244, %v3538
      %v3647 = vadd.f32 %v3245, %v3541
      %v3648 = vadd.f32 %v3246, %v3546
      %v3649 = vadd.f32 %v3247, %v3549
      %v3650 = vadd.f32 %v3248, %v3554
      %v3651 = vadd.f32 %v3249, %v3557
      %v3652 = vadd.f32 %v3250, %v3562
      %v3653 = vadd.f32 %v3251, %v3565
      %v3654 = vadd.f32 %v3252, %v3570
      %v3655 = vadd.f32 %v3253, %v3573
      %v3656 = vadd.f32 %v3254, %v3578
      %v3657 = vadd.f32 %v3255, %v3581
      %v3658 = vadd.f32 %v3256, %v3586
      %v3659 = vadd.f32 %v3257, %v3589
      %v3660 = vadd.f32 %v3258, %v3594
      %v3661 = vadd.f32 %v3259, %v3597
      %v3662 = vadd.f32 %v3260, %v3602
      %v3663 = vadd.f32 %v3261, %v3605
      %v3664 = vadd.f32 %v3262, %v3610
      %v3665 = vadd.f32 %v3263, %v3613
      %v3666 = vadd.f32 %v3264, %v3618
      %v3667 = vadd.f32 %v3265, %v3621
      %v3668 = vld [vmem:[#allocation2 + $0x1c] sm:$0xff]
      %v3669 = vld [vmem:[#allocation2 + $0x24] sm:$0xff]
      %v3670 = vld [vmem:[#allocation2 + $0x2c] sm:$0xff]
      %v3671 = vld [vmem:[#allocation2 + $0x34] sm:$0xff]
      %v3672 = vld [vmem:[#allocation2 + $0x3c] sm:$0xff]
      %v3673 = vld [vmem:[#allocation2 + $0x44] sm:$0xff]
      %v3674 = vld [vmem:[#allocation2 + $0x4c] sm:$0xff]
      %v3675 = vld [vmem:[#allocation2 + $0x54] sm:$0xff]
      %v3676 = vld [vmem:[#allocation2 + $0x5c] sm:$0xff]
      %v3677 = vld [vmem:[#allocation2 + $0x64] sm:$0xff]
      %v3678 = vld [vmem:[#allocation2 + $0x6c] sm:$0xff]
      %v3679 = vld [vmem:[#allocation2 + $0x74] sm:$0xff]
      %v3680 = vld [vmem:[#allocation2 + $0x7c] sm:$0xff]
      %v3681 = vld [vmem:[#allocation2 + $0x84] sm:$0xff]
      %v3682 = vld [vmem:[#allocation2 + $0x8c] sm:$0xff]
      %v3683 = vld [vmem:[#allocation2 + $0x94] sm:$0xff]
      %v3684 = vld [vmem:[#allocation2 + $0x9c] sm:$0xff]
      %v3685 = vld [vmem:[#allocation2 + $0xa4] sm:$0xff]
      %v3686 = vld [vmem:[#allocation2 + $0xac] sm:$0xff]
      %v3687 = vld [vmem:[#allocation2 + $0xb4] sm:$0xff]
      %v3688 = vld [vmem:[#allocation2 + $0xbc] sm:$0xff]
      %v3689 = vld [vmem:[#allocation2 + $0xc4] sm:$0xff]
      %v3690 = vld [vmem:[#allocation2 + $0xcc] sm:$0xff]
      %v3691 = vld [vmem:[#allocation2 + $0xd4] sm:$0xff]
      %v3692 = vld [vmem:[#allocation2 + $0xdc] sm:$0xff]
      %v3693 = vld [vmem:[#allocation2 + $0xe4] sm:$0xff]
      %v3694 = vld [vmem:[#allocation2 + $0xec] sm:$0xff]
      %v3695 = vld [vmem:[#allocation2 + $0xf4] sm:$0xff]
      %v3696 = vld [vmem:[#allocation2 + $0xfc] sm:$0xff]
      %v3697 = vld [vmem:[#allocation2 + $0x104] sm:$0xff]
      %v3698 = vld [vmem:[#allocation2 + $0x10c] sm:$0xff]
      %v3699 = vld [vmem:[#allocation2 + $0x114] sm:$0xff]
      %v3700 = vld [vmem:[#allocation2 + $0x11c] sm:$0xff]
      %v3701 = vld [vmem:[#allocation2 + $0x124] sm:$0xff]
      %v3702 = vld [vmem:[#allocation2 + $0x12c] sm:$0xff]
      %v3703 = vld [vmem:[#allocation2 + $0x134] sm:$0xff]
      %v3704 = vld [vmem:[#allocation2 + $0x13c] sm:$0xff]
      %v3705 = vld [vmem:[#allocation2 + $0x144] sm:$0xff]
      %v3706 = vld [vmem:[#allocation2 + $0x14c] sm:$0xff]
      %v3707 = vld [vmem:[#allocation2 + $0x154] sm:$0xff]
      %v3708 = vld [vmem:[#allocation2 + $0x15c] sm:$0xff]
      %v3709 = vld [vmem:[#allocation2 + $0x164] sm:$0xff]
      %v3710 = vld [vmem:[#allocation2 + $0x16c] sm:$0xff]
      %v3711 = vld [vmem:[#allocation2 + $0x174] sm:$0xff]
      %v3712 = vpack.c.bf16 %v3669, %v3668
      %v3713 = vpack.c.bf16 %v3671, %v3670
      %v3714 = vpack.c.bf16 %v3673, %v3672
      %v3715 = vpack.c.bf16 %v3675, %v3674
      %v3716 = vpack.c.bf16 %v3677, %v3676
      %v3717 = vpack.c.bf16 %v3679, %v3678
      %v3718 = vpack.c.bf16 %v3681, %v3680
      %v3719 = vpack.c.bf16 %v3683, %v3682
      %v3720 = vpack.c.bf16 %v3685, %v3684
      %v3721 = vpack.c.bf16 %v3687, %v3686
      %v3722 = vpack.c.bf16 %v3689, %v3688
      %v3723 = vpack.c.bf16 %v3691, %v3690
      %v3724 = vpack.c.bf16 %v3693, %v3692
      %v3725 = vpack.c.bf16 %v3695, %v3694
      %v3726 = vpack.c.bf16 %v3697, %v3696
      %v3727 = vpack.c.bf16 %v3699, %v3698
      %v3728 = vpack.c.bf16 %v3701, %v3700
      %v3729 = vpack.c.bf16 %v3703, %v3702
      %v3730 = vpack.c.bf16 %v3705, %v3704
      %v3731 = vpack.c.bf16 %v3707, %v3706
      %v3732 = vpack.c.bf16 %v3709, %v3708
      %v3733 = vpack.c.bf16 %v3711, %v3710
      %s3734 = scalar_lea.vmem %s4, 96
      %v3735 = vld [vmem:[%s3734] sm:$0xf]
      %v3736 = vld [vmem:[%s3734 + $0x4] sm:$0xf]
      %v3737 = vld [vmem:[%s3734 + $0x8] sm:$0xf]
      %v3738 = vld [vmem:[%s3734 + $0xc] sm:$0xf]
      %v3743 = vunpack.c.l.b16 %v3735
      %v3744 = vunpack.c.l.b16 %v3736
      %v3745 = vunpack.c.l.b16 %v3737
      %v3746 = vunpack.c.l.b16 %v3738
      %v3747 = vpack.c.b16 %v3744, %v3743
      %v3748 = vpack.c.b16 %v3746, %v3745
      %v3752 = vsel %vm1296, %v3712, 0
      %v3755 = vsel %vm1296, %v3713, 0
      %v3758 = vsel %vm1296, %v3714, 0
      %v3761 = vsel %vm1296, %v3715, 0
      %v3764 = vsel %vm1296, %v3716, 0
      %v3767 = vsel %vm1296, %v3717, 0
      %v3770 = vsel %vm1296, %v3718, 0
      %v3773 = vsel %vm1296, %v3719, 0
      %v3776 = vsel %vm1296, %v3720, 0
      %v3779 = vsel %vm1296, %v3721, 0
      %v3782 = vsel %vm1296, %v3722, 0
      %v3785 = vsel %vm1296, %v3723, 0
      %v3788 = vsel %vm1296, %v3724, 0
      %v3791 = vsel %vm1296, %v3725, 0
      %v3794 = vsel %vm1296, %v3726, 0
      %v3797 = vsel %vm1296, %v3727, 0
      %v3800 = vsel %vm1296, %v3728, 0
      %v3803 = vsel %vm1296, %v3729, 0
      %v3806 = vsel %vm1296, %v3730, 0
      %v3809 = vsel %vm1296, %v3731, 0
      %v3812 = vsel %vm1296, %v3732, 0
      %v3815 = vsel %vm1296, %v3733, 0
      %3817 = vmatprep.subr.bf16.mxu0 0
      %3818 = vmatpush1.bf16.msra.mxu0 %v3747
      %3819 = vmatprep.subr.bf16.mxu0 0
      %3820 = vmatpush1.bf16.msra.mxu0 %v3748
      %3821 = vmatprep.subr.bf16.mxu0 0
      %3822 = vmatpush1.bf16.msra.mxu0 0
      %3823 = vmatprep.subr.bf16.mxu0 0
      %3824 = vmatpush1.bf16.msra.mxu0 0
      %3825 = vmatprep.subr.bf16.mxu0 0
      %3826 = vmatpush1.bf16.msra.mxu0 0
      %3827 = vmatprep.subr.bf16.mxu0 0
      %3828 = vmatpush1.bf16.msra.mxu0 0
      %3829 = vmatprep.subr.bf16.mxu0 0
      %3830 = vmatpush1.bf16.msra.mxu0 0
      %3831 = vmatprep.subr.bf16.mxu0 0
      %3832 = vmatpush1.bf16.msra.mxu0 0
      %3833 = vmatprep.subr.bf16.mxu0 0
      %3834 = vmatpush1.bf16.msra.mxu0 0
      %3835 = vmatprep.subr.bf16.mxu0 0
      %3836 = vmatpush1.bf16.msra.mxu0 0
      %3837 = vmatprep.subr.bf16.mxu0 0
      %3838 = vmatpush1.bf16.msra.mxu0 0
      %3839 = vmatprep.subr.bf16.mxu0 0
      %3840 = vmatpush1.bf16.msra.mxu0 0
      %3841 = vmatprep.subr.bf16.mxu0 0
      %3842 = vmatpush1.bf16.msra.mxu0 0
      %3843 = vmatprep.subr.bf16.mxu0 0
      %3844 = vmatpush1.bf16.msra.mxu0 0
      %3845 = vmatprep.subr.bf16.mxu0 0
      %3846 = vmatpush1.bf16.msra.mxu0 0
      %3847 = vmatprep.subr.bf16.mxu0 0
      %3848 = vmatpush1.bf16.msra.mxu0 0
      %3849 = vmatprep.mubr.bf16.mxu0 0
      %3850 = vmatmul.mubr.bf16.gmra.mrb[0].mxu0 %v3752
      %v3851 = vpop.f32.mrb[0].mxu0
      %v3852 = vadd.f32 0.0, %v3851
      %v3853 = vpop.f32.mrb[0].mxu0
      %v3854 = vpop.f32.mrb[0].mxu0
      %v3855 = vadd.f32 0.0, %v3854
      %v3856 = vpop.f32.mrb[0].mxu0
      %3857 = vmatprep.mubr.bf16.mxu0 0
      %3858 = vmatmul.mubr.bf16.gmra.mrb[0].mxu0 %v3755
      %v3859 = vpop.f32.mrb[0].mxu0
      %v3860 = vadd.f32 0.0, %v3859
      %v3861 = vpop.f32.mrb[0].mxu0
      %v3862 = vpop.f32.mrb[0].mxu0
      %v3863 = vadd.f32 0.0, %v3862
      %v3864 = vpop.f32.mrb[0].mxu0
      %3865 = vmatprep.mubr.bf16.mxu0 0
      %3866 = vmatmul.mubr.bf16.gmra.mrb[0].mxu0 %v3758
      %v3867 = vpop.f32.mrb[0].mxu0
      %v3868 = vadd.f32 0.0, %v3867
      %v3869 = vpop.f32.mrb[0].mxu0
      %v3870 = vpop.f32.mrb[0].mxu0
      %v3871 = vadd.f32 0.0, %v3870
      %v3872 = vpop.f32.mrb[0].mxu0
      %3873 = vmatprep.mubr.bf16.mxu0 0
      %3874 = vmatmul.mubr.bf16.gmra.mrb[0].mxu0 %v3761
      %v3875 = vpop.f32.mrb[0].mxu0
      %v3876 = vadd.f32 0.0, %v3875
      %v3877 = vpop.f32.mrb[0].mxu0
      %v3878 = vpop.f32.mrb[0].mxu0
      %v3879 = vadd.f32 0.0, %v3878
      %v3880 = vpop.f32.mrb[0].mxu0
      %3881 = vmatprep.mubr.bf16.mxu0 0
      %3882 = vmatmul.mubr.bf16.gmra.mrb[0].mxu0 %v3764
      %v3883 = vpop.f32.mrb[0].mxu0
      %v3884 = vadd.f32 0.0, %v3883
      %v3885 = vpop.f32.mrb[0].mxu0
      %v3886 = vpop.f32.mrb[0].mxu0
      %v3887 = vadd.f32 0.0, %v3886
      %v3888 = vpop.f32.mrb[0].mxu0
      %3889 = vmatprep.mubr.bf16.mxu0 0
      %3890 = vmatmul.mubr.bf16.gmra.mrb[0].mxu0 %v3767
      %v3891 = vpop.f32.mrb[0].mxu0
      %v3892 = vadd.f32 0.0, %v3891
      %v3893 = vpop.f32.mrb[0].mxu0
      %v3894 = vpop.f32.mrb[0].mxu0
      %v3895 = vadd.f32 0.0, %v3894
      %v3896 = vpop.f32.mrb[0].mxu0
      %3897 = vmatprep.mubr.bf16.mxu0 0
      %3898 = vmatmul.mubr.bf16.gmra.mrb[0].mxu0 %v3770
      %v3899 = vpop.f32.mrb[0].mxu0
      %v3900 = vadd.f32 0.0, %v3899
      %v3901 = vpop.f32.mrb[0].mxu0
      %v3902 = vpop.f32.mrb[0].mxu0
      %v3903 = vadd.f32 0.0, %v3902
      %v3904 = vpop.f32.mrb[0].mxu0
      %3905 = vmatprep.mubr.bf16.mxu0 0
      %3906 = vmatmul.mubr.bf16.gmra.mrb[0].mxu0 %v3773
      %v3907 = vpop.f32.mrb[0].mxu0
      %v3908 = vadd.f32 0.0, %v3907
      %v3909 = vpop.f32.mrb[0].mxu0
      %v3910 = vpop.f32.mrb[0].mxu0
      %v3911 = vadd.f32 0.0, %v3910
      %v3912 = vpop.f32.mrb[0].mxu0
      %3913 = vmatprep.mubr.bf16.mxu0 0
      %3914 = vmatmul.mubr.bf16.gmra.mrb[0].mxu0 %v3776
      %v3915 = vpop.f32.mrb[0].mxu0
      %v3916 = vadd.f32 0.0, %v3915
      %v3917 = vpop.f32.mrb[0].mxu0
      %v3918 = vpop.f32.mrb[0].mxu0
      %v3919 = vadd.f32 0.0, %v3918
      %v3920 = vpop.f32.mrb[0].mxu0
      %3921 = vmatprep.mubr.bf16.mxu0 0
      %3922 = vmatmul.mubr.bf16.gmra.mrb[0].mxu0 %v3779
      %v3923 = vpop.f32.mrb[0].mxu0
      %v3924 = vadd.f32 0.0, %v3923
      %v3925 = vpop.f32.mrb[0].mxu0
      %v3926 = vpop.f32.mrb[0].mxu0
      %v3927 = vadd.f32 0.0, %v3926
      %v3928 = vpop.f32.mrb[0].mxu0
      %3929 = vmatprep.mubr.bf16.mxu0 0
      %3930 = vmatmul.mubr.bf16.gmra.mrb[0].mxu0 %v3782
      %v3931 = vpop.f32.mrb[0].mxu0
      %v3932 = vadd.f32 0.0, %v3931
      %v3933 = vpop.f32.mrb[0].mxu0
      %v3934 = vpop.f32.mrb[0].mxu0
      %v3935 = vadd.f32 0.0, %v3934
      %v3936 = vpop.f32.mrb[0].mxu0
      %3937 = vmatprep.mubr.bf16.mxu0 0
      %3938 = vmatmul.mubr.bf16.gmra.mrb[0].mxu0 %v3785
      %v3939 = vpop.f32.mrb[0].mxu0
      %v3940 = vadd.f32 0.0, %v3939
      %v3941 = vpop.f32.mrb[0].mxu0
      %v3942 = vpop.f32.mrb[0].mxu0
      %v3943 = vadd.f32 0.0, %v3942
      %v3944 = vpop.f32.mrb[0].mxu0
      %3945 = vmatprep.mubr.bf16.mxu0 0
      %3946 = vmatmul.mubr.bf16.gmra.mrb[0].mxu0 %v3788
      %v3947 = vpop.f32.mrb[0].mxu0
      %v3948 = vadd.f32 0.0, %v3947
      %v3949 = vpop.f32.mrb[0].mxu0
      %v3950 = vpop.f32.mrb[0].mxu0
      %v3951 = vadd.f32 0.0, %v3950
      %v3952 = vpop.f32.mrb[0].mxu0
      %3953 = vmatprep.mubr.bf16.mxu0 0
      %3954 = vmatmul.mubr.bf16.gmra.mrb[0].mxu0 %v3791
      %v3955 = vpop.f32.mrb[0].mxu0
      %v3956 = vadd.f32 0.0, %v3955
      %v3957 = vpop.f32.mrb[0].mxu0
      %v3958 = vpop.f32.mrb[0].mxu0
      %v3959 = vadd.f32 0.0, %v3958
      %v3960 = vpop.f32.mrb[0].mxu0
      %3961 = vmatprep.mubr.bf16.mxu0 0
      %3962 = vmatmul.mubr.bf16.gmra.mrb[0].mxu0 %v3794
      %v3963 = vpop.f32.mrb[0].mxu0
      %v3964 = vadd.f32 0.0, %v3963
      %v3965 = vpop.f32.mrb[0].mxu0
      %v3966 = vpop.f32.mrb[0].mxu0
      %v3967 = vadd.f32 0.0, %v3966
      %v3968 = vpop.f32.mrb[0].mxu0
      %3969 = vmatprep.mubr.bf16.mxu0 0
      %3970 = vmatmul.mubr.bf16.gmra.mrb[0].mxu0 %v3797
      %v3971 = vpop.f32.mrb[0].mxu0
      %v3972 = vadd.f32 0.0, %v3971
      %v3973 = vpop.f32.mrb[0].mxu0
      %v3974 = vpop.f32.mrb[0].mxu0
      %v3975 = vadd.f32 0.0, %v3974
      %v3976 = vpop.f32.mrb[0].mxu0
      %3977 = vmatprep.mubr.bf16.mxu0 0
      %3978 = vmatmul.mubr.bf16.gmra.mrb[0].mxu0 %v3800
      %v3979 = vpop.f32.mrb[0].mxu0
      %v3980 = vadd.f32 0.0, %v3979
      %v3981 = vpop.f32.mrb[0].mxu0
      %v3982 = vpop.f32.mrb[0].mxu0
      %v3983 = vadd.f32 0.0, %v3982
      %v3984 = vpop.f32.mrb[0].mxu0
      %3985 = vmatprep.mubr.bf16.mxu0 0
      %3986 = vmatmul.mubr.bf16.gmra.mrb[0].mxu0 %v3803
      %v3987 = vpop.f32.mrb[0].mxu0
      %v3988 = vadd.f32 0.0, %v3987
      %v3989 = vpop.f32.mrb[0].mxu0
      %v3990 = vpop.f32.mrb[0].mxu0
      %v3991 = vadd.f32 0.0, %v3990
      %v3992 = vpop.f32.mrb[0].mxu0
      %3993 = vmatprep.mubr.bf16.mxu0 0
      %3994 = vmatmul.mubr.bf16.gmra.mrb[0].mxu0 %v3806
      %v3995 = vpop.f32.mrb[0].mxu0
      %v3996 = vadd.f32 0.0, %v3995
      %v3997 = vpop.f32.mrb[0].mxu0
      %v3998 = vpop.f32.mrb[0].mxu0
      %v3999 = vadd.f32 0.0, %v3998
      %v4000 = vpop.f32.mrb[0].mxu0
      %4001 = vmatprep.mubr.bf16.mxu0 0
      %4002 = vmatmul.mubr.bf16.gmra.mrb[0].mxu0 %v3809
      %v4003 = vpop.f32.mrb[0].mxu0
      %v4004 = vadd.f32 0.0, %v4003
      %v4005 = vpop.f32.mrb[0].mxu0
      %v4006 = vpop.f32.mrb[0].mxu0
      %v4007 = vadd.f32 0.0, %v4006
      %v4008 = vpop.f32.mrb[0].mxu0
      %4009 = vmatprep.mubr.bf16.mxu0 0
      %4010 = vmatmul.mubr.bf16.gmra.mrb[0].mxu0 %v3812
      %v4011 = vpop.f32.mrb[0].mxu0
      %v4012 = vadd.f32 0.0, %v4011
      %v4013 = vpop.f32.mrb[0].mxu0
      %v4014 = vpop.f32.mrb[0].mxu0
      %v4015 = vadd.f32 0.0, %v4014
      %v4016 = vpop.f32.mrb[0].mxu0
      %4017 = vmatprep.mubr.bf16.mxu0 0
      %4018 = vmatmul.mubr.bf16.gmra.mrb[0].mxu0 %v3815
      %v4019 = vpop.f32.mrb[0].mxu0
      %v4020 = vadd.f32 0.0, %v4019
      %v4021 = vpop.f32.mrb[0].mxu0
      %v4022 = vpop.f32.mrb[0].mxu0
      %v4023 = vadd.f32 0.0, %v4022
      %v4024 = vpop.f32.mrb[0].mxu0
      %4025 = vdwg.mxu0
      %v4026 = vadd.f32 %v3624, %v3852
      %v4027 = vadd.f32 %v3625, %v3855
      %v4028 = vadd.f32 %v3626, %v3860
      %v4029 = vadd.f32 %v3627, %v3863
      %v4030 = vadd.f32 %v3628, %v3868
      %v4031 = vadd.f32 %v3629, %v3871
      %v4032 = vadd.f32 %v3630, %v3876
      %v4033 = vadd.f32 %v3631, %v3879
      %v4034 = vadd.f32 %v3632, %v3884
      %v4035 = vadd.f32 %v3633, %v3887
      %v4036 = vadd.f32 %v3634, %v3892
      %v4037 = vadd.f32 %v3635, %v3895
      %v4038 = vadd.f32 %v3636, %v3900
      %v4039 = vadd.f32 %v3637, %v3903
      %v4040 = vadd.f32 %v3638, %v3908
      %v4041 = vadd.f32 %v3639, %v3911
      %v4042 = vadd.f32 %v3640, %v3916
      %v4043 = vadd.f32 %v3641, %v3919
      %v4044 = vadd.f32 %v3642, %v3924
      %v4045 = vadd.f32 %v3643, %v3927
      %v4046 = vadd.f32 %v3644, %v3932
      %v4047 = vadd.f32 %v3645, %v3935
      %v4048 = vadd.f32 %v3646, %v3940
      %v4049 = vadd.f32 %v3647, %v3943
      %v4050 = vadd.f32 %v3648, %v3948
      %v4051 = vadd.f32 %v3649, %v3951
      %v4052 = vadd.f32 %v3650, %v3956
      %v4053 = vadd.f32 %v3651, %v3959
      %v4054 = vadd.f32 %v3652, %v3964
      %v4055 = vadd.f32 %v3653, %v3967
      %v4056 = vadd.f32 %v3654, %v3972
      %v4057 = vadd.f32 %v3655, %v3975
      %v4058 = vadd.f32 %v3656, %v3980
      %v4059 = vadd.f32 %v3657, %v3983
      %v4060 = vadd.f32 %v3658, %v3988
      %v4061 = vadd.f32 %v3659, %v3991
      %v4062 = vadd.f32 %v3660, %v3996
      %v4063 = vadd.f32 %v3661, %v3999
      %v4064 = vadd.f32 %v3662, %v4004
      %v4065 = vadd.f32 %v3663, %v4007
      %v4066 = vadd.f32 %v3664, %v4012
      %v4067 = vadd.f32 %v3665, %v4015
      %v4068 = vadd.f32 %v3666, %v4020
      %v4069 = vadd.f32 %v3667, %v4023
      %v4070 = vld [vmem:[#allocation2 + $0x1d] sm:$0xff]
      %v4071 = vld [vmem:[#allocation2 + $0x25] sm:$0xff]
      %v4072 = vld [vmem:[#allocation2 + $0x2d] sm:$0xff]
      %v4073 = vld [vmem:[#allocation2 + $0x35] sm:$0xff]
      %v4074 = vld [vmem:[#allocation2 + $0x3d] sm:$0xff]
      %v4075 = vld [vmem:[#allocation2 + $0x45] sm:$0xff]
      %v4076 = vld [vmem:[#allocation2 + $0x4d] sm:$0xff]
      %v4077 = vld [vmem:[#allocation2 + $0x55] sm:$0xff]
      %v4078 = vld [vmem:[#allocation2 + $0x5d] sm:$0xff]
      %v4079 = vld [vmem:[#allocation2 + $0x65] sm:$0xff]
      %v4080 = vld [vmem:[#allocation2 + $0x6d] sm:$0xff]
      %v4081 = vld [vmem:[#allocation2 + $0x75] sm:$0xff]
      %v4082 = vld [vmem:[#allocation2 + $0x7d] sm:$0xff]
      %v4083 = vld [vmem:[#allocation2 + $0x85] sm:$0xff]
      %v4084 = vld [vmem:[#allocation2 + $0x8d] sm:$0xff]
      %v4085 = vld [vmem:[#allocation2 + $0x95] sm:$0xff]
      %v4086 = vld [vmem:[#allocation2 + $0x9d] sm:$0xff]
      %v4087 = vld [vmem:[#allocation2 + $0xa5] sm:$0xff]
      %v4088 = vld [vmem:[#allocation2 + $0xad] sm:$0xff]
      %v4089 = vld [vmem:[#allocation2 + $0xb5] sm:$0xff]
      %v4090 = vld [vmem:[#allocation2 + $0xbd] sm:$0xff]
      %v4091 = vld [vmem:[#allocation2 + $0xc5] sm:$0xff]
      %v4092 = vld [vmem:[#allocation2 + $0xcd] sm:$0xff]
      %v4093 = vld [vmem:[#allocation2 + $0xd5] sm:$0xff]
      %v4094 = vld [vmem:[#allocation2 + $0xdd] sm:$0xff]
      %v4095 = vld [vmem:[#allocation2 + $0xe5] sm:$0xff]
      %v4096 = vld [vmem:[#allocation2 + $0xed] sm:$0xff]
      %v4097 = vld [vmem:[#allocation2 + $0xf5] sm:$0xff]
      %v4098 = vld [vmem:[#allocation2 + $0xfd] sm:$0xff]
      %v4099 = vld [vmem:[#allocation2 + $0x105] sm:$0xff]
      %v4100 = vld [vmem:[#allocation2 + $0x10d] sm:$0xff]
      %v4101 = vld [vmem:[#allocation2 + $0x115] sm:$0xff]
      %v4102 = vld [vmem:[#allocation2 + $0x11d] sm:$0xff]
      %v4103 = vld [vmem:[#allocation2 + $0x125] sm:$0xff]
      %v4104 = vld [vmem:[#allocation2 + $0x12d] sm:$0xff]
      %v4105 = vld [vmem:[#allocation2 + $0x135] sm:$0xff]
      %v4106 = vld [vmem:[#allocation2 + $0x13d] sm:$0xff]
      %v4107 = vld [vmem:[#allocation2 + $0x145] sm:$0xff]
      %v4108 = vld [vmem:[#allocation2 + $0x14d] sm:$0xff]
      %v4109 = vld [vmem:[#allocation2 + $0x155] sm:$0xff]
      %v4110 = vld [vmem:[#allocation2 + $0x15d] sm:$0xff]
      %v4111 = vld [vmem:[#allocation2 + $0x165] sm:$0xff]
      %v4112 = vld [vmem:[#allocation2 + $0x16d] sm:$0xff]
      %v4113 = vld [vmem:[#allocation2 + $0x175] sm:$0xff]
      %v4114 = vpack.c.bf16 %v4071, %v4070
      %v4115 = vpack.c.bf16 %v4073, %v4072
      %v4116 = vpack.c.bf16 %v4075, %v4074
      %v4117 = vpack.c.bf16 %v4077, %v4076
      %v4118 = vpack.c.bf16 %v4079, %v4078
      %v4119 = vpack.c.bf16 %v4081, %v4080
      %v4120 = vpack.c.bf16 %v4083, %v4082
      %v4121 = vpack.c.bf16 %v4085, %v4084
      %v4122 = vpack.c.bf16 %v4087, %v4086
      %v4123 = vpack.c.bf16 %v4089, %v4088
      %v4124 = vpack.c.bf16 %v4091, %v4090
      %v4125 = vpack.c.bf16 %v4093, %v4092
      %v4126 = vpack.c.bf16 %v4095, %v4094
      %v4127 = vpack.c.bf16 %v4097, %v4096
      %v4128 = vpack.c.bf16 %v4099, %v4098
      %v4129 = vpack.c.bf16 %v4101, %v4100
      %v4130 = vpack.c.bf16 %v4103, %v4102
      %v4131 = vpack.c.bf16 %v4105, %v4104
      %v4132 = vpack.c.bf16 %v4107, %v4106
      %v4133 = vpack.c.bf16 %v4109, %v4108
      %v4134 = vpack.c.bf16 %v4111, %v4110
      %v4135 = vpack.c.bf16 %v4113, %v4112
      %s4136 = scalar_lea.vmem %s4, 112
      %v4137 = vld [vmem:[%s4136] sm:$0xf]
      %v4138 = vld [vmem:[%s4136 + $0x4] sm:$0xf]
      %v4139 = vld [vmem:[%s4136 + $0x8] sm:$0xf]
      %v4140 = vld [vmem:[%s4136 + $0xc] sm:$0xf]
      %v4145 = vunpack.c.l.b16 %v4137
      %v4146 = vunpack.c.l.b16 %v4138
      %v4147 = vunpack.c.l.b16 %v4139
      %v4148 = vunpack.c.l.b16 %v4140
      %v4149 = vpack.c.b16 %v4146, %v4145
      %v4150 = vpack.c.b16 %v4148, %v4147
      %v4154 = vsel %vm1296, %v4114, 0
      %v4157 = vsel %vm1296, %v4115, 0
      %v4160 = vsel %vm1296, %v4116, 0
      %v4163 = vsel %vm1296, %v4117, 0
      %v4166 = vsel %vm1296, %v4118, 0
      %v4169 = vsel %vm1296, %v4119, 0
      %v4172 = vsel %vm1296, %v4120, 0
      %v4175 = vsel %vm1296, %v4121, 0
      %v4178 = vsel %vm1296, %v4122, 0
      %v4181 = vsel %vm1296, %v4123, 0
      %v4184 = vsel %vm1296, %v4124, 0
      %v4187 = vsel %vm1296, %v4125, 0
      %v4190 = vsel %vm1296, %v4126, 0
      %v4193 = vsel %vm1296, %v4127, 0
      %v4196 = vsel %vm1296, %v4128, 0
      %v4199 = vsel %vm1296, %v4129, 0
      %v4202 = vsel %vm1296, %v4130, 0
      %v4205 = vsel %vm1296, %v4131, 0
      %v4208 = vsel %vm1296, %v4132, 0
      %v4211 = vsel %vm1296, %v4133, 0
      %v4214 = vsel %vm1296, %v4134, 0
      %v4217 = vsel %vm1296, %v4135, 0
      %4219 = vmatprep.subr.bf16.mxu0 0
      %4220 = vmatpush1.bf16.msra.mxu0 %v4149
      %4221 = vmatprep.subr.bf16.mxu0 0
      %4222 = vmatpush1.bf16.msra.mxu0 %v4150
      %4223 = vmatprep.subr.bf16.mxu0 0
      %4224 = vmatpush1.bf16.msra.mxu0 0
      %4225 = vmatprep.subr.bf16.mxu0 0
      %4226 = vmatpush1.bf16.msra.mxu0 0
      %4227 = vmatprep.subr.bf16.mxu0 0
      %4228 = vmatpush1.bf16.msra.mxu0 0
      %4229 = vmatprep.subr.bf16.mxu0 0
      %4230 = vmatpush1.bf16.msra.mxu0 0
      %4231 = vmatprep.subr.bf16.mxu0 0
      %4232 = vmatpush1.bf16.msra.mxu0 0
      %4233 = vmatprep.subr.bf16.mxu0 0
      %4234 = vmatpush1.bf16.msra.mxu0 0
      %4235 = vmatprep.subr.bf16.mxu0 0
      %4236 = vmatpush1.bf16.msra.mxu0 0
      %4237 = vmatprep.subr.bf16.mxu0 0
      %4238 = vmatpush1.bf16.msra.mxu0 0
      %4239 = vmatprep.subr.bf16.mxu0 0
      %4240 = vmatpush1.bf16.msra.mxu0 0
      %4241 = vmatprep.subr.bf16.mxu0 0
      %4242 = vmatpush1.bf16.msra.mxu0 0
      %4243 = vmatprep.subr.bf16.mxu0 0
      %4244 = vmatpush1.bf16.msra.mxu0 0
      %4245 = vmatprep.subr.bf16.mxu0 0
      %4246 = vmatpush1.bf16.msra.mxu0 0
      %4247 = vmatprep.subr.bf16.mxu0 0
      %4248 = vmatpush1.bf16.msra.mxu0 0
      %4249 = vmatprep.subr.bf16.mxu0 0
      %4250 = vmatpush1.bf16.msra.mxu0 0
      %4251 = vmatprep.mubr.bf16.mxu0 0
      %4252 = vmatmul.mubr.bf16.gmra.mrb[0].mxu0 %v4154
      %v4253 = vpop.f32.mrb[0].mxu0
      %v4254 = vadd.f32 0.0, %v4253
      %v4255 = vpop.f32.mrb[0].mxu0
      %v4256 = vpop.f32.mrb[0].mxu0
      %v4257 = vadd.f32 0.0, %v4256
      %v4258 = vpop.f32.mrb[0].mxu0
      %4259 = vmatprep.mubr.bf16.mxu0 0
      %4260 = vmatmul.mubr.bf16.gmra.mrb[0].mxu0 %v4157
      %v4261 = vpop.f32.mrb[0].mxu0
      %v4262 = vadd.f32 0.0, %v4261
      %v4263 = vpop.f32.mrb[0].mxu0
      %v4264 = vpop.f32.mrb[0].mxu0
      %v4265 = vadd.f32 0.0, %v4264
      %v4266 = vpop.f32.mrb[0].mxu0
      %4267 = vmatprep.mubr.bf16.mxu0 0
      %4268 = vmatmul.mubr.bf16.gmra.mrb[0].mxu0 %v4160
      %v4269 = vpop.f32.mrb[0].mxu0
      %v4270 = vadd.f32 0.0, %v4269
      %v4271 = vpop.f32.mrb[0].mxu0
      %v4272 = vpop.f32.mrb[0].mxu0
      %v4273 = vadd.f32 0.0, %v4272
      %v4274 = vpop.f32.mrb[0].mxu0
      %4275 = vmatprep.mubr.bf16.mxu0 0
      %4276 = vmatmul.mubr.bf16.gmra.mrb[0].mxu0 %v4163
      %v4277 = vpop.f32.mrb[0].mxu0
      %v4278 = vadd.f32 0.0, %v4277
      %v4279 = vpop.f32.mrb[0].mxu0
      %v4280 = vpop.f32.mrb[0].mxu0
      %v4281 = vadd.f32 0.0, %v4280
      %v4282 = vpop.f32.mrb[0].mxu0
      %4283 = vmatprep.mubr.bf16.mxu0 0
      %4284 = vmatmul.mubr.bf16.gmra.mrb[0].mxu0 %v4166
      %v4285 = vpop.f32.mrb[0].mxu0
      %v4286 = vadd.f32 0.0, %v4285
      %v4287 = vpop.f32.mrb[0].mxu0
      %v4288 = vpop.f32.mrb[0].mxu0
      %v4289 = vadd.f32 0.0, %v4288
      %v4290 = vpop.f32.mrb[0].mxu0
      %4291 = vmatprep.mubr.bf16.mxu0 0
      %4292 = vmatmul.mubr.bf16.gmra.mrb[0].mxu0 %v4169
      %v4293 = vpop.f32.mrb[0].mxu0
      %v4294 = vadd.f32 0.0, %v4293
      %v4295 = vpop.f32.mrb[0].mxu0
      %v4296 = vpop.f32.mrb[0].mxu0
      %v4297 = vadd.f32 0.0, %v4296
      %v4298 = vpop.f32.mrb[0].mxu0
      %4299 = vmatprep.mubr.bf16.mxu0 0
      %4300 = vmatmul.mubr.bf16.gmra.mrb[0].mxu0 %v4172
      %v4301 = vpop.f32.mrb[0].mxu0
      %v4302 = vadd.f32 0.0, %v4301
      %v4303 = vpop.f32.mrb[0].mxu0
      %v4304 = vpop.f32.mrb[0].mxu0
      %v4305 = vadd.f32 0.0, %v4304
      %v4306 = vpop.f32.mrb[0].mxu0
      %4307 = vmatprep.mubr.bf16.mxu0 0
      %4308 = vmatmul.mubr.bf16.gmra.mrb[0].mxu0 %v4175
      %v4309 = vpop.f32.mrb[0].mxu0
      %v4310 = vadd.f32 0.0, %v4309
      %v4311 = vpop.f32.mrb[0].mxu0
      %v4312 = vpop.f32.mrb[0].mxu0
      %v4313 = vadd.f32 0.0, %v4312
      %v4314 = vpop.f32.mrb[0].mxu0
      %4315 = vmatprep.mubr.bf16.mxu0 0
      %4316 = vmatmul.mubr.bf16.gmra.mrb[0].mxu0 %v4178
      %v4317 = vpop.f32.mrb[0].mxu0
      %v4318 = vadd.f32 0.0, %v4317
      %v4319 = vpop.f32.mrb[0].mxu0
      %v4320 = vpop.f32.mrb[0].mxu0
      %v4321 = vadd.f32 0.0, %v4320
      %v4322 = vpop.f32.mrb[0].mxu0
      %4323 = vmatprep.mubr.bf16.mxu0 0
      %4324 = vmatmul.mubr.bf16.gmra.mrb[0].mxu0 %v4181
      %v4325 = vpop.f32.mrb[0].mxu0
      %v4326 = vadd.f32 0.0, %v4325
      %v4327 = vpop.f32.mrb[0].mxu0
      %v4328 = vpop.f32.mrb[0].mxu0
      %v4329 = vadd.f32 0.0, %v4328
      %v4330 = vpop.f32.mrb[0].mxu0
      %4331 = vmatprep.mubr.bf16.mxu0 0
      %4332 = vmatmul.mubr.bf16.gmra.mrb[0].mxu0 %v4184
      %v4333 = vpop.f32.mrb[0].mxu0
      %v4334 = vadd.f32 0.0, %v4333
      %v4335 = vpop.f32.mrb[0].mxu0
      %v4336 = vpop.f32.mrb[0].mxu0
      %v4337 = vadd.f32 0.0, %v4336
      %v4338 = vpop.f32.mrb[0].mxu0
      %4339 = vmatprep.mubr.bf16.mxu0 0
      %4340 = vmatmul.mubr.bf16.gmra.mrb[0].mxu0 %v4187
      %v4341 = vpop.f32.mrb[0].mxu0
      %v4342 = vadd.f32 0.0, %v4341
      %v4343 = vpop.f32.mrb[0].mxu0
      %v4344 = vpop.f32.mrb[0].mxu0
      %v4345 = vadd.f32 0.0, %v4344
      %v4346 = vpop.f32.mrb[0].mxu0
      %4347 = vmatprep.mubr.bf16.mxu0 0
      %4348 = vmatmul.mubr.bf16.gmra.mrb[0].mxu0 %v4190
      %v4349 = vpop.f32.mrb[0].mxu0
      %v4350 = vadd.f32 0.0, %v4349
      %v4351 = vpop.f32.mrb[0].mxu0
      %v4352 = vpop.f32.mrb[0].mxu0
      %v4353 = vadd.f32 0.0, %v4352
      %v4354 = vpop.f32.mrb[0].mxu0
      %4355 = vmatprep.mubr.bf16.mxu0 0
      %4356 = vmatmul.mubr.bf16.gmra.mrb[0].mxu0 %v4193
      %v4357 = vpop.f32.mrb[0].mxu0
      %v4358 = vadd.f32 0.0, %v4357
      %v4359 = vpop.f32.mrb[0].mxu0
      %v4360 = vpop.f32.mrb[0].mxu0
      %v4361 = vadd.f32 0.0, %v4360
      %v4362 = vpop.f32.mrb[0].mxu0
      %4363 = vmatprep.mubr.bf16.mxu0 0
      %4364 = vmatmul.mubr.bf16.gmra.mrb[0].mxu0 %v4196
      %v4365 = vpop.f32.mrb[0].mxu0
      %v4366 = vadd.f32 0.0, %v4365
      %v4367 = vpop.f32.mrb[0].mxu0
      %v4368 = vpop.f32.mrb[0].mxu0
      %v4369 = vadd.f32 0.0, %v4368
      %v4370 = vpop.f32.mrb[0].mxu0
      %4371 = vmatprep.mubr.bf16.mxu0 0
      %4372 = vmatmul.mubr.bf16.gmra.mrb[0].mxu0 %v4199
      %v4373 = vpop.f32.mrb[0].mxu0
      %v4374 = vadd.f32 0.0, %v4373
      %v4375 = vpop.f32.mrb[0].mxu0
      %v4376 = vpop.f32.mrb[0].mxu0
      %v4377 = vadd.f32 0.0, %v4376
      %v4378 = vpop.f32.mrb[0].mxu0
      %4379 = vmatprep.mubr.bf16.mxu0 0
      %4380 = vmatmul.mubr.bf16.gmra.mrb[0].mxu0 %v4202
      %v4381 = vpop.f32.mrb[0].mxu0
      %v4382 = vadd.f32 0.0, %v4381
      %v4383 = vpop.f32.mrb[0].mxu0
      %v4384 = vpop.f32.mrb[0].mxu0
      %v4385 = vadd.f32 0.0, %v4384
      %v4386 = vpop.f32.mrb[0].mxu0
      %4387 = vmatprep.mubr.bf16.mxu0 0
      %4388 = vmatmul.mubr.bf16.gmra.mrb[0].mxu0 %v4205
      %v4389 = vpop.f32.mrb[0].mxu0
      %v4390 = vadd.f32 0.0, %v4389
      %v4391 = vpop.f32.mrb[0].mxu0
      %v4392 = vpop.f32.mrb[0].mxu0
      %v4393 = vadd.f32 0.0, %v4392
      %v4394 = vpop.f32.mrb[0].mxu0
      %4395 = vmatprep.mubr.bf16.mxu0 0
      %4396 = vmatmul.mubr.bf16.gmra.mrb[0].mxu0 %v4208
      %v4397 = vpop.f32.mrb[0].mxu0
      %v4398 = vadd.f32 0.0, %v4397
      %v4399 = vpop.f32.mrb[0].mxu0
      %v4400 = vpop.f32.mrb[0].mxu0
      %v4401 = vadd.f32 0.0, %v4400
      %v4402 = vpop.f32.mrb[0].mxu0
      %4403 = vmatprep.mubr.bf16.mxu0 0
      %4404 = vmatmul.mubr.bf16.gmra.mrb[0].mxu0 %v4211
      %v4405 = vpop.f32.mrb[0].mxu0
      %v4406 = vadd.f32 0.0, %v4405
      %v4407 = vpop.f32.mrb[0].mxu0
      %v4408 = vpop.f32.mrb[0].mxu0
      %v4409 = vadd.f32 0.0, %v4408
      %v4410 = vpop.f32.mrb[0].mxu0
      %4411 = vmatprep.mubr.bf16.mxu0 0
      %4412 = vmatmul.mubr.bf16.gmra.mrb[0].mxu0 %v4214
      %v4413 = vpop.f32.mrb[0].mxu0
      %v4414 = vadd.f32 0.0, %v4413
      %v4415 = vpop.f32.mrb[0].mxu0
      %v4416 = vpop.f32.mrb[0].mxu0
      %v4417 = vadd.f32 0.0, %v4416
      %v4418 = vpop.f32.mrb[0].mxu0
      %4419 = vmatprep.mubr.bf16.mxu0 0
      %4420 = vmatmul.mubr.bf16.gmra.mrb[0].mxu0 %v4217
      %v4421 = vpop.f32.mrb[0].mxu0
      %v4422 = vadd.f32 0.0, %v4421
      %v4423 = vpop.f32.mrb[0].mxu0
      %v4424 = vpop.f32.mrb[0].mxu0
      %v4425 = vadd.f32 0.0, %v4424
      %v4426 = vpop.f32.mrb[0].mxu0
      %4427 = vdwg.mxu0
      %v4428 = vadd.f32 %v4026, %v4254
      %v4429 = vadd.f32 %v4027, %v4257
      %v4430 = vadd.f32 %v4028, %v4262
      %v4431 = vadd.f32 %v4029, %v4265
      %v4432 = vadd.f32 %v4030, %v4270
      %v4433 = vadd.f32 %v4031, %v4273
      %v4434 = vadd.f32 %v4032, %v4278
      %v4435 = vadd.f32 %v4033, %v4281
      %v4436 = vadd.f32 %v4034, %v4286
      %v4437 = vadd.f32 %v4035, %v4289
      %v4438 = vadd.f32 %v4036, %v4294
      %v4439 = vadd.f32 %v4037, %v4297
      %v4440 = vadd.f32 %v4038, %v4302
      %v4441 = vadd.f32 %v4039, %v4305
      %v4442 = vadd.f32 %v4040, %v4310
      %v4443 = vadd.f32 %v4041, %v4313
      %v4444 = vadd.f32 %v4042, %v4318
      %v4445 = vadd.f32 %v4043, %v4321
      %v4446 = vadd.f32 %v4044, %v4326
      %v4447 = vadd.f32 %v4045, %v4329
      %v4448 = vadd.f32 %v4046, %v4334
      %v4449 = vadd.f32 %v4047, %v4337
      %v4450 = vadd.f32 %v4048, %v4342
      %v4451 = vadd.f32 %v4049, %v4345
      %v4452 = vadd.f32 %v4050, %v4350
      %v4453 = vadd.f32 %v4051, %v4353
      %v4454 = vadd.f32 %v4052, %v4358
      %v4455 = vadd.f32 %v4053, %v4361
      %v4456 = vadd.f32 %v4054, %v4366
      %v4457 = vadd.f32 %v4055, %v4369
      %v4458 = vadd.f32 %v4056, %v4374
      %v4459 = vadd.f32 %v4057, %v4377
      %v4460 = vadd.f32 %v4058, %v4382
      %v4461 = vadd.f32 %v4059, %v4385
      %v4462 = vadd.f32 %v4060, %v4390
      %v4463 = vadd.f32 %v4061, %v4393
      %v4464 = vadd.f32 %v4062, %v4398
      %v4465 = vadd.f32 %v4063, %v4401
      %v4466 = vadd.f32 %v4064, %v4406
      %v4467 = vadd.f32 %v4065, %v4409
      %v4468 = vadd.f32 %v4066, %v4414
      %v4469 = vadd.f32 %v4067, %v4417
      %v4470 = vadd.f32 %v4068, %v4422
      %v4471 = vadd.f32 %v4069, %v4425
      %v4472 = vld [vmem:[#allocation2 + $0x1e] sm:$0xff]
      %v4473 = vld [vmem:[#allocation2 + $0x26] sm:$0xff]
      %v4474 = vld [vmem:[#allocation2 + $0x2e] sm:$0xff]
      %v4475 = vld [vmem:[#allocation2 + $0x36] sm:$0xff]
      %v4476 = vld [vmem:[#allocation2 + $0x3e] sm:$0xff]
      %v4477 = vld [vmem:[#allocation2 + $0x46] sm:$0xff]
      %v4478 = vld [vmem:[#allocation2 + $0x4e] sm:$0xff]
      %v4479 = vld [vmem:[#allocation2 + $0x56] sm:$0xff]
      %v4480 = vld [vmem:[#allocation2 + $0x5e] sm:$0xff]
      %v4481 = vld [vmem:[#allocation2 + $0x66] sm:$0xff]
      %v4482 = vld [vmem:[#allocation2 + $0x6e] sm:$0xff]
      %v4483 = vld [vmem:[#allocation2 + $0x76] sm:$0xff]
      %v4484 = vld [vmem:[#allocation2 + $0x7e] sm:$0xff]
      %v4485 = vld [vmem:[#allocation2 + $0x86] sm:$0xff]
      %v4486 = vld [vmem:[#allocation2 + $0x8e] sm:$0xff]
      %v4487 = vld [vmem:[#allocation2 + $0x96] sm:$0xff]
      %v4488 = vld [vmem:[#allocation2 + $0x9e] sm:$0xff]
      %v4489 = vld [vmem:[#allocation2 + $0xa6] sm:$0xff]
      %v4490 = vld [vmem:[#allocation2 + $0xae] sm:$0xff]
      %v4491 = vld [vmem:[#allocation2 + $0xb6] sm:$0xff]
      %v4492 = vld [vmem:[#allocation2 + $0xbe] sm:$0xff]
      %v4493 = vld [vmem:[#allocation2 + $0xc6] sm:$0xff]
      %v4494 = vld [vmem:[#allocation2 + $0xce] sm:$0xff]
      %v4495 = vld [vmem:[#allocation2 + $0xd6] sm:$0xff]
      %v4496 = vld [vmem:[#allocation2 + $0xde] sm:$0xff]
      %v4497 = vld [vmem:[#allocation2 + $0xe6] sm:$0xff]
      %v4498 = vld [vmem:[#allocation2 + $0xee] sm:$0xff]
      %v4499 = vld [vmem:[#allocation2 + $0xf6] sm:$0xff]
      %v4500 = vld [vmem:[#allocation2 + $0xfe] sm:$0xff]
      %v4501 = vld [vmem:[#allocation2 + $0x106] sm:$0xff]
      %v4502 = vld [vmem:[#allocation2 + $0x10e] sm:$0xff]
      %v4503 = vld [vmem:[#allocation2 + $0x116] sm:$0xff]
      %v4504 = vld [vmem:[#allocation2 + $0x11e] sm:$0xff]
      %v4505 = vld [vmem:[#allocation2 + $0x126] sm:$0xff]
      %v4506 = vld [vmem:[#allocation2 + $0x12e] sm:$0xff]
      %v4507 = vld [vmem:[#allocation2 + $0x136] sm:$0xff]
      %v4508 = vld [vmem:[#allocation2 + $0x13e] sm:$0xff]
      %v4509 = vld [vmem:[#allocation2 + $0x146] sm:$0xff]
      %v4510 = vld [vmem:[#allocation2 + $0x14e] sm:$0xff]
      %v4511 = vld [vmem:[#allocation2 + $0x156] sm:$0xff]
      %v4512 = vld [vmem:[#allocation2 + $0x15e] sm:$0xff]
      %v4513 = vld [vmem:[#allocation2 + $0x166] sm:$0xff]
      %v4514 = vld [vmem:[#allocation2 + $0x16e] sm:$0xff]
      %v4515 = vld [vmem:[#allocation2 + $0x176] sm:$0xff]
      %v4516 = vpack.c.bf16 %v4473, %v4472
      %v4517 = vpack.c.bf16 %v4475, %v4474
      %v4518 = vpack.c.bf16 %v4477, %v4476
      %v4519 = vpack.c.bf16 %v4479, %v4478
      %v4520 = vpack.c.bf16 %v4481, %v4480
      %v4521 = vpack.c.bf16 %v4483, %v4482
      %v4522 = vpack.c.bf16 %v4485, %v4484
      %v4523 = vpack.c.bf16 %v4487, %v4486
      %v4524 = vpack.c.bf16 %v4489, %v4488
      %v4525 = vpack.c.bf16 %v4491, %v4490
      %v4526 = vpack.c.bf16 %v4493, %v4492
      %v4527 = vpack.c.bf16 %v4495, %v4494
      %v4528 = vpack.c.bf16 %v4497, %v4496
      %v4529 = vpack.c.bf16 %v4499, %v4498
      %v4530 = vpack.c.bf16 %v4501, %v4500
      %v4531 = vpack.c.bf16 %v4503, %v4502
      %v4532 = vpack.c.bf16 %v4505, %v4504
      %v4533 = vpack.c.bf16 %v4507, %v4506
      %v4534 = vpack.c.bf16 %v4509, %v4508
      %v4535 = vpack.c.bf16 %v4511, %v4510
      %v4536 = vpack.c.bf16 %v4513, %v4512
      %v4537 = vpack.c.bf16 %v4515, %v4514
      %s4538 = scalar_lea.vmem %s4, 128
      %v4539 = vld [vmem:[%s4538] sm:$0xf]
      %v4540 = vld [vmem:[%s4538 + $0x4] sm:$0xf]
      %v4541 = vld [vmem:[%s4538 + $0x8] sm:$0xf]
      %v4542 = vld [vmem:[%s4538 + $0xc] sm:$0xf]
      %v4547 = vunpack.c.l.b16 %v4539
      %v4548 = vunpack.c.l.b16 %v4540
      %v4549 = vunpack.c.l.b16 %v4541
      %v4550 = vunpack.c.l.b16 %v4542
      %v4551 = vpack.c.b16 %v4548, %v4547
      %v4552 = vpack.c.b16 %v4550, %v4549
      %v4556 = vsel %vm1296, %v4516, 0
      %v4559 = vsel %vm1296, %v4517, 0
      %v4562 = vsel %vm1296, %v4518, 0
      %v4565 = vsel %vm1296, %v4519, 0
      %v4568 = vsel %vm1296, %v4520, 0
      %v4571 = vsel %vm1296, %v4521, 0
      %v4574 = vsel %vm1296, %v4522, 0
      %v4577 = vsel %vm1296, %v4523, 0
      %v4580 = vsel %vm1296, %v4524, 0
      %v4583 = vsel %vm1296, %v4525, 0
      %v4586 = vsel %vm1296, %v4526, 0
      %v4589 = vsel %vm1296, %v4527, 0
      %v4592 = vsel %vm1296, %v4528, 0
      %v4595 = vsel %vm1296, %v4529, 0
      %v4598 = vsel %vm1296, %v4530, 0
      %v4601 = vsel %vm1296, %v4531, 0
      %v4604 = vsel %vm1296, %v4532, 0
      %v4607 = vsel %vm1296, %v4533, 0
      %v4610 = vsel %vm1296, %v4534, 0
      %v4613 = vsel %vm1296, %v4535, 0
      %v4616 = vsel %vm1296, %v4536, 0
      %v4619 = vsel %vm1296, %v4537, 0
      %4621 = vmatprep.subr.bf16.mxu0 0
      %4622 = vmatpush1.bf16.msra.mxu0 %v4551
      %4623 = vmatprep.subr.bf16.mxu0 0
      %4624 = vmatpush1.bf16.msra.mxu0 %v4552
      %4625 = vmatprep.subr.bf16.mxu0 0
      %4626 = vmatpush1.bf16.msra.mxu0 0
      %4627 = vmatprep.subr.bf16.mxu0 0
      %4628 = vmatpush1.bf16.msra.mxu0 0
      %4629 = vmatprep.subr.bf16.mxu0 0
      %4630 = vmatpush1.bf16.msra.mxu0 0
      %4631 = vmatprep.subr.bf16.mxu0 0
      %4632 = vmatpush1.bf16.msra.mxu0 0
      %4633 = vmatprep.subr.bf16.mxu0 0
      %4634 = vmatpush1.bf16.msra.mxu0 0
      %4635 = vmatprep.subr.bf16.mxu0 0
      %4636 = vmatpush1.bf16.msra.mxu0 0
      %4637 = vmatprep.subr.bf16.mxu0 0
      %4638 = vmatpush1.bf16.msra.mxu0 0
      %4639 = vmatprep.subr.bf16.mxu0 0
      %4640 = vmatpush1.bf16.msra.mxu0 0
      %4641 = vmatprep.subr.bf16.mxu0 0
      %4642 = vmatpush1.bf16.msra.mxu0 0
      %4643 = vmatprep.subr.bf16.mxu0 0
      %4644 = vmatpush1.bf16.msra.mxu0 0
      %4645 = vmatprep.subr.bf16.mxu0 0
      %4646 = vmatpush1.bf16.msra.mxu0 0
      %4647 = vmatprep.subr.bf16.mxu0 0
      %4648 = vmatpush1.bf16.msra.mxu0 0
      %4649 = vmatprep.subr.bf16.mxu0 0
      %4650 = vmatpush1.bf16.msra.mxu0 0
      %4651 = vmatprep.subr.bf16.mxu0 0
      %4652 = vmatpush1.bf16.msra.mxu0 0
      %4653 = vmatprep.mubr.bf16.mxu0 0
      %4654 = vmatmul.mubr.bf16.gmra.mrb[0].mxu0 %v4556
      %v4655 = vpop.f32.mrb[0].mxu0
      %v4656 = vadd.f32 0.0, %v4655
      %v4657 = vpop.f32.mrb[0].mxu0
      %v4658 = vpop.f32.mrb[0].mxu0
      %v4659 = vadd.f32 0.0, %v4658
      %v4660 = vpop.f32.mrb[0].mxu0
      %4661 = vmatprep.mubr.bf16.mxu0 0
      %4662 = vmatmul.mubr.bf16.gmra.mrb[0].mxu0 %v4559
      %v4663 = vpop.f32.mrb[0].mxu0
      %v4664 = vadd.f32 0.0, %v4663
      %v4665 = vpop.f32.mrb[0].mxu0
      %v4666 = vpop.f32.mrb[0].mxu0
      %v4667 = vadd.f32 0.0, %v4666
      %v4668 = vpop.f32.mrb[0].mxu0
      %4669 = vmatprep.mubr.bf16.mxu0 0
      %4670 = vmatmul.mubr.bf16.gmra.mrb[0].mxu0 %v4562
      %v4671 = vpop.f32.mrb[0].mxu0
      %v4672 = vadd.f32 0.0, %v4671
      %v4673 = vpop.f32.mrb[0].mxu0
      %v4674 = vpop.f32.mrb[0].mxu0
      %v4675 = vadd.f32 0.0, %v4674
      %v4676 = vpop.f32.mrb[0].mxu0
      %4677 = vmatprep.mubr.bf16.mxu0 0
      %4678 = vmatmul.mubr.bf16.gmra.mrb[0].mxu0 %v4565
      %v4679 = vpop.f32.mrb[0].mxu0
      %v4680 = vadd.f32 0.0, %v4679
      %v4681 = vpop.f32.mrb[0].mxu0
      %v4682 = vpop.f32.mrb[0].mxu0
      %v4683 = vadd.f32 0.0, %v4682
      %v4684 = vpop.f32.mrb[0].mxu0
      %4685 = vmatprep.mubr.bf16.mxu0 0
      %4686 = vmatmul.mubr.bf16.gmra.mrb[0].mxu0 %v4568
      %v4687 = vpop.f32.mrb[0].mxu0
      %v4688 = vadd.f32 0.0, %v4687
      %v4689 = vpop.f32.mrb[0].mxu0
      %v4690 = vpop.f32.mrb[0].mxu0
      %v4691 = vadd.f32 0.0, %v4690
      %v4692 = vpop.f32.mrb[0].mxu0
      %4693 = vmatprep.mubr.bf16.mxu0 0
      %4694 = vmatmul.mubr.bf16.gmra.mrb[0].mxu0 %v4571
      %v4695 = vpop.f32.mrb[0].mxu0
      %v4696 = vadd.f32 0.0, %v4695
      %v4697 = vpop.f32.mrb[0].mxu0
      %v4698 = vpop.f32.mrb[0].mxu0
      %v4699 = vadd.f32 0.0, %v4698
      %v4700 = vpop.f32.mrb[0].mxu0
      %4701 = vmatprep.mubr.bf16.mxu0 0
      %4702 = vmatmul.mubr.bf16.gmra.mrb[0].mxu0 %v4574
      %v4703 = vpop.f32.mrb[0].mxu0
      %v4704 = vadd.f32 0.0, %v4703
      %v4705 = vpop.f32.mrb[0].mxu0
      %v4706 = vpop.f32.mrb[0].mxu0
      %v4707 = vadd.f32 0.0, %v4706
      %v4708 = vpop.f32.mrb[0].mxu0
      %4709 = vmatprep.mubr.bf16.mxu0 0
      %4710 = vmatmul.mubr.bf16.gmra.mrb[0].mxu0 %v4577
      %v4711 = vpop.f32.mrb[0].mxu0
      %v4712 = vadd.f32 0.0, %v4711
      %v4713 = vpop.f32.mrb[0].mxu0
      %v4714 = vpop.f32.mrb[0].mxu0
      %v4715 = vadd.f32 0.0, %v4714
      %v4716 = vpop.f32.mrb[0].mxu0
      %4717 = vmatprep.mubr.bf16.mxu0 0
      %4718 = vmatmul.mubr.bf16.gmra.mrb[0].mxu0 %v4580
      %v4719 = vpop.f32.mrb[0].mxu0
      %v4720 = vadd.f32 0.0, %v4719
      %v4721 = vpop.f32.mrb[0].mxu0
      %v4722 = vpop.f32.mrb[0].mxu0
      %v4723 = vadd.f32 0.0, %v4722
      %v4724 = vpop.f32.mrb[0].mxu0
      %4725 = vmatprep.mubr.bf16.mxu0 0
      %4726 = vmatmul.mubr.bf16.gmra.mrb[0].mxu0 %v4583
      %v4727 = vpop.f32.mrb[0].mxu0
      %v4728 = vadd.f32 0.0, %v4727
      %v4729 = vpop.f32.mrb[0].mxu0
      %v4730 = vpop.f32.mrb[0].mxu0
      %v4731 = vadd.f32 0.0, %v4730
      %v4732 = vpop.f32.mrb[0].mxu0
      %4733 = vmatprep.mubr.bf16.mxu0 0
      %4734 = vmatmul.mubr.bf16.gmra.mrb[0].mxu0 %v4586
      %v4735 = vpop.f32.mrb[0].mxu0
      %v4736 = vadd.f32 0.0, %v4735
      %v4737 = vpop.f32.mrb[0].mxu0
      %v4738 = vpop.f32.mrb[0].mxu0
      %v4739 = vadd.f32 0.0, %v4738
      %v4740 = vpop.f32.mrb[0].mxu0
      %4741 = vmatprep.mubr.bf16.mxu0 0
      %4742 = vmatmul.mubr.bf16.gmra.mrb[0].mxu0 %v4589
      %v4743 = vpop.f32.mrb[0].mxu0
      %v4744 = vadd.f32 0.0, %v4743
      %v4745 = vpop.f32.mrb[0].mxu0
      %v4746 = vpop.f32.mrb[0].mxu0
      %v4747 = vadd.f32 0.0, %v4746
      %v4748 = vpop.f32.mrb[0].mxu0
      %4749 = vmatprep.mubr.bf16.mxu0 0
      %4750 = vmatmul.mubr.bf16.gmra.mrb[0].mxu0 %v4592
      %v4751 = vpop.f32.mrb[0].mxu0
      %v4752 = vadd.f32 0.0, %v4751
      %v4753 = vpop.f32.mrb[0].mxu0
      %v4754 = vpop.f32.mrb[0].mxu0
      %v4755 = vadd.f32 0.0, %v4754
      %v4756 = vpop.f32.mrb[0].mxu0
      %4757 = vmatprep.mubr.bf16.mxu0 0
      %4758 = vmatmul.mubr.bf16.gmra.mrb[0].mxu0 %v4595
      %v4759 = vpop.f32.mrb[0].mxu0
      %v4760 = vadd.f32 0.0, %v4759
      %v4761 = vpop.f32.mrb[0].mxu0
      %v4762 = vpop.f32.mrb[0].mxu0
      %v4763 = vadd.f32 0.0, %v4762
      %v4764 = vpop.f32.mrb[0].mxu0
      %4765 = vmatprep.mubr.bf16.mxu0 0
      %4766 = vmatmul.mubr.bf16.gmra.mrb[0].mxu0 %v4598
      %v4767 = vpop.f32.mrb[0].mxu0
      %v4768 = vadd.f32 0.0, %v4767
      %v4769 = vpop.f32.mrb[0].mxu0
      %v4770 = vpop.f32.mrb[0].mxu0
      %v4771 = vadd.f32 0.0, %v4770
      %v4772 = vpop.f32.mrb[0].mxu0
      %4773 = vmatprep.mubr.bf16.mxu0 0
      %4774 = vmatmul.mubr.bf16.gmra.mrb[0].mxu0 %v4601
      %v4775 = vpop.f32.mrb[0].mxu0
      %v4776 = vadd.f32 0.0, %v4775
      %v4777 = vpop.f32.mrb[0].mxu0
      %v4778 = vpop.f32.mrb[0].mxu0
      %v4779 = vadd.f32 0.0, %v4778
      %v4780 = vpop.f32.mrb[0].mxu0
      %4781 = vmatprep.mubr.bf16.mxu0 0
      %4782 = vmatmul.mubr.bf16.gmra.mrb[0].mxu0 %v4604
      %v4783 = vpop.f32.mrb[0].mxu0
      %v4784 = vadd.f32 0.0, %v4783
      %v4785 = vpop.f32.mrb[0].mxu0
      %v4786 = vpop.f32.mrb[0].mxu0
      %v4787 = vadd.f32 0.0, %v4786
      %v4788 = vpop.f32.mrb[0].mxu0
      %4789 = vmatprep.mubr.bf16.mxu0 0
      %4790 = vmatmul.mubr.bf16.gmra.mrb[0].mxu0 %v4607
      %v4791 = vpop.f32.mrb[0].mxu0
      %v4792 = vadd.f32 0.0, %v4791
      %v4793 = vpop.f32.mrb[0].mxu0
      %v4794 = vpop.f32.mrb[0].mxu0
      %v4795 = vadd.f32 0.0, %v4794
      %v4796 = vpop.f32.mrb[0].mxu0
      %4797 = vmatprep.mubr.bf16.mxu0 0
      %4798 = vmatmul.mubr.bf16.gmra.mrb[0].mxu0 %v4610
      %v4799 = vpop.f32.mrb[0].mxu0
      %v4800 = vadd.f32 0.0, %v4799
      %v4801 = vpop.f32.mrb[0].mxu0
      %v4802 = vpop.f32.mrb[0].mxu0
      %v4803 = vadd.f32 0.0, %v4802
      %v4804 = vpop.f32.mrb[0].mxu0
      %4805 = vmatprep.mubr.bf16.mxu0 0
      %4806 = vmatmul.mubr.bf16.gmra.mrb[0].mxu0 %v4613
      %v4807 = vpop.f32.mrb[0].mxu0
      %v4808 = vadd.f32 0.0, %v4807
      %v4809 = vpop.f32.mrb[0].mxu0
      %v4810 = vpop.f32.mrb[0].mxu0
      %v4811 = vadd.f32 0.0, %v4810
      %v4812 = vpop.f32.mrb[0].mxu0
      %4813 = vmatprep.mubr.bf16.mxu0 0
      %4814 = vmatmul.mubr.bf16.gmra.mrb[0].mxu0 %v4616
      %v4815 = vpop.f32.mrb[0].mxu0
      %v4816 = vadd.f32 0.0, %v4815
      %v4817 = vpop.f32.mrb[0].mxu0
      %v4818 = vpop.f32.mrb[0].mxu0
      %v4819 = vadd.f32 0.0, %v4818
      %v4820 = vpop.f32.mrb[0].mxu0
      %4821 = vmatprep.mubr.bf16.mxu0 0
      %4822 = vmatmul.mubr.bf16.gmra.mrb[0].mxu0 %v4619
      %v4823 = vpop.f32.mrb[0].mxu0
      %v4824 = vadd.f32 0.0, %v4823
      %v4825 = vpop.f32.mrb[0].mxu0
      %v4826 = vpop.f32.mrb[0].mxu0
      %v4827 = vadd.f32 0.0, %v4826
      %v4828 = vpop.f32.mrb[0].mxu0
      %4829 = vdwg.mxu0
      %v4830 = vadd.f32 %v4428, %v4656
      %v4831 = vadd.f32 %v4429, %v4659
      %v4832 = vadd.f32 %v4430, %v4664
      %v4833 = vadd.f32 %v4431, %v4667
      %v4834 = vadd.f32 %v4432, %v4672
      %v4835 = vadd.f32 %v4433, %v4675
      %v4836 = vadd.f32 %v4434, %v4680
      %v4837 = vadd.f32 %v4435, %v4683
      %v4838 = vadd.f32 %v4436, %v4688
      %v4839 = vadd.f32 %v4437, %v4691
      %v4840 = vadd.f32 %v4438, %v4696
      %v4841 = vadd.f32 %v4439, %v4699
      %v4842 = vadd.f32 %v4440, %v4704
      %v4843 = vadd.f32 %v4441, %v4707
      %v4844 = vadd.f32 %v4442, %v4712
      %v4845 = vadd.f32 %v4443, %v4715
      %v4846 = vadd.f32 %v4444, %v4720
      %v4847 = vadd.f32 %v4445, %v4723
      %v4848 = vadd.f32 %v4446, %v4728
      %v4849 = vadd.f32 %v4447, %v4731
      %v4850 = vadd.f32 %v4448, %v4736
      %v4851 = vadd.f32 %v4449, %v4739
      %v4852 = vadd.f32 %v4450, %v4744
      %v4853 = vadd.f32 %v4451, %v4747
      %v4854 = vadd.f32 %v4452, %v4752
      %v4855 = vadd.f32 %v4453, %v4755
      %v4856 = vadd.f32 %v4454, %v4760
      %v4857 = vadd.f32 %v4455, %v4763
      %v4858 = vadd.f32 %v4456, %v4768
      %v4859 = vadd.f32 %v4457, %v4771
      %v4860 = vadd.f32 %v4458, %v4776
      %v4861 = vadd.f32 %v4459, %v4779
      %v4862 = vadd.f32 %v4460, %v4784
      %v4863 = vadd.f32 %v4461, %v4787
      %v4864 = vadd.f32 %v4462, %v4792
      %v4865 = vadd.f32 %v4463, %v4795
      %v4866 = vadd.f32 %v4464, %v4800
      %v4867 = vadd.f32 %v4465, %v4803
      %v4868 = vadd.f32 %v4466, %v4808
      %v4869 = vadd.f32 %v4467, %v4811
      %v4870 = vadd.f32 %v4468, %v4816
      %v4871 = vadd.f32 %v4469, %v4819
      %v4872 = vadd.f32 %v4470, %v4824
      %v4873 = vadd.f32 %v4471, %v4827
      %v4874 = vld [vmem:[%s5] sm:$0x1]
      %v4876 = vlaneseq
      %v4877 = vshrl.u32 %v4876, 7
      %v4878 = vsub.s32 0, %v4877
      %v4879 = vrot.slane %v4874, %v4878
      %v4881 = vmul.f32 %v4830, %v4879
      %v4882 = vmul.f32 %v4831, %v4879
      %v4883 = vmul.f32 %v4832, %v4879
      %v4884 = vmul.f32 %v4833, %v4879
      %v4885 = vmul.f32 %v4834, %v4879
      %v4886 = vmul.f32 %v4835, %v4879
      %v4887 = vmul.f32 %v4836, %v4879
      %v4888 = vmul.f32 %v4837, %v4879
      %v4889 = vmul.f32 %v4838, %v4879
      %v4890 = vmul.f32 %v4839, %v4879
      %v4891 = vmul.f32 %v4840, %v4879
      %v4892 = vmul.f32 %v4841, %v4879
      %v4893 = vmul.f32 %v4842, %v4879
      %v4894 = vmul.f32 %v4843, %v4879
      %v4895 = vmul.f32 %v4844, %v4879
      %v4896 = vmul.f32 %v4845, %v4879
      %v4897 = vmul.f32 %v4846, %v4879
      %v4898 = vmul.f32 %v4847, %v4879
      %v4899 = vmul.f32 %v4848, %v4879
      %v4900 = vmul.f32 %v4849, %v4879
      %v4901 = vmul.f32 %v4850, %v4879
      %v4902 = vmul.f32 %v4851, %v4879
      %v4903 = vmul.f32 %v4852, %v4879
      %v4904 = vmul.f32 %v4853, %v4879
      %v4905 = vmul.f32 %v4854, %v4879
      %v4906 = vmul.f32 %v4855, %v4879
      %v4907 = vmul.f32 %v4856, %v4879
      %v4908 = vmul.f32 %v4857, %v4879
      %v4909 = vmul.f32 %v4858, %v4879
      %v4910 = vmul.f32 %v4859, %v4879
      %v4911 = vmul.f32 %v4860, %v4879
      %v4912 = vmul.f32 %v4861, %v4879
      %v4913 = vmul.f32 %v4862, %v4879
      %v4914 = vmul.f32 %v4863, %v4879
      %v4915 = vmul.f32 %v4864, %v4879
      %v4916 = vmul.f32 %v4865, %v4879
      %v4917 = vmul.f32 %v4866, %v4879
      %v4918 = vmul.f32 %v4867, %v4879
      %v4919 = vmul.f32 %v4868, %v4879
      %v4920 = vmul.f32 %v4869, %v4879
      %v4921 = vmul.f32 %v4870, %v4879
      %v4922 = vmul.f32 %v4871, %v4879
      %v4923 = vmul.f32 %v4872, %v4879
      %v4924 = vmul.f32 %v4873, %v4879
      %v4925 = vld [vmem:[%s6] sm:$0x1]
      %v4927 = vlaneseq
      %v4928 = vshrl.u32 %v4927, 7
      %v4929 = vsub.s32 0, %v4928
      %v4930 = vrot.slane %v4925, %v4929
      %v4932 = vadd.f32 %v4881, %v4930
      %v4933 = vadd.f32 %v4882, %v4930
      %v4934 = vadd.f32 %v4883, %v4930
      %v4935 = vadd.f32 %v4884, %v4930
      %v4936 = vadd.f32 %v4885, %v4930
      %v4937 = vadd.f32 %v4886, %v4930
      %v4938 = vadd.f32 %v4887, %v4930
      %v4939 = vadd.f32 %v4888, %v4930
      %v4940 = vadd.f32 %v4889, %v4930
      %v4941 = vadd.f32 %v4890, %v4930
      %v4942 = vadd.f32 %v4891, %v4930
      %v4943 = vadd.f32 %v4892, %v4930
      %v4944 = vadd.f32 %v4893, %v4930
      %v4945 = vadd.f32 %v4894, %v4930
      %v4946 = vadd.f32 %v4895, %v4930
      %v4947 = vadd.f32 %v4896, %v4930
      %v4948 = vadd.f32 %v4897, %v4930
      %v4949 = vadd.f32 %v4898, %v4930
      %v4950 = vadd.f32 %v4899, %v4930
      %v4951 = vadd.f32 %v4900, %v4930
      %v4952 = vadd.f32 %v4901, %v4930
      %v4953 = vadd.f32 %v4902, %v4930
      %v4954 = vadd.f32 %v4903, %v4930
      %v4955 = vadd.f32 %v4904, %v4930
      %v4956 = vadd.f32 %v4905, %v4930
      %v4957 = vadd.f32 %v4906, %v4930
      %v4958 = vadd.f32 %v4907, %v4930
      %v4959 = vadd.f32 %v4908, %v4930
      %v4960 = vadd.f32 %v4909, %v4930
      %v4961 = vadd.f32 %v4910, %v4930
      %v4962 = vadd.f32 %v4911, %v4930
      %v4963 = vadd.f32 %v4912, %v4930
      %v4964 = vadd.f32 %v4913, %v4930
      %v4965 = vadd.f32 %v4914, %v4930
      %v4966 = vadd.f32 %v4915, %v4930
      %v4967 = vadd.f32 %v4916, %v4930
      %v4968 = vadd.f32 %v4917, %v4930
      %v4969 = vadd.f32 %v4918, %v4930
      %v4970 = vadd.f32 %v4919, %v4930
      %v4971 = vadd.f32 %v4920, %v4930
      %v4972 = vadd.f32 %v4921, %v4930
      %v4973 = vadd.f32 %v4922, %v4930
      %v4974 = vadd.f32 %v4923, %v4930
      %v4975 = vadd.f32 %v4924, %v4930
      %vm4976 = vcmp.gt.f32.partialorder %v4932, 0.0
      %vm4977 = vcmp.gt.f32.partialorder %v4933, 0.0
      %vm4978 = vcmp.gt.f32.partialorder %v4934, 0.0
      %vm4979 = vcmp.gt.f32.partialorder %v4935, 0.0
      %vm4980 = vcmp.gt.f32.partialorder %v4936, 0.0
      %vm4981 = vcmp.gt.f32.partialorder %v4937, 0.0
      %vm4982 = vcmp.gt.f32.partialorder %v4938, 0.0
      %vm4983 = vcmp.gt.f32.partialorder %v4939, 0.0
      %vm4984 = vcmp.gt.f32.partialorder %v4940, 0.0
      %vm4985 = vcmp.gt.f32.partialorder %v4941, 0.0
      %vm4986 = vcmp.gt.f32.partialorder %v4942, 0.0
      %vm4987 = vcmp.gt.f32.partialorder %v4943, 0.0
      %vm4988 = vcmp.gt.f32.partialorder %v4944, 0.0
      %vm4989 = vcmp.gt.f32.partialorder %v4945, 0.0
      %vm4990 = vcmp.gt.f32.partialorder %v4946, 0.0
      %vm4991 = vcmp.gt.f32.partialorder %v4947, 0.0
      %vm4992 = vcmp.gt.f32.partialorder %v4948, 0.0
      %vm4993 = vcmp.gt.f32.partialorder %v4949, 0.0
      %vm4994 = vcmp.gt.f32.partialorder %v4950, 0.0
      %vm4995 = vcmp.gt.f32.partialorder %v4951, 0.0
      %vm4996 = vcmp.gt.f32.partialorder %v4952, 0.0
      %vm4997 = vcmp.gt.f32.partialorder %v4953, 0.0
      %vm4998 = vcmp.gt.f32.partialorder %v4954, 0.0
      %vm4999 = vcmp.gt.f32.partialorder %v4955, 0.0
      %vm5000 = vcmp.gt.f32.partialorder %v4956, 0.0
      %vm5001 = vcmp.gt.f32.partialorder %v4957, 0.0
      %vm5002 = vcmp.gt.f32.partialorder %v4958, 0.0
      %vm5003 = vcmp.gt.f32.partialorder %v4959, 0.0
      %vm5004 = vcmp.gt.f32.partialorder %v4960, 0.0
      %vm5005 = vcmp.gt.f32.partialorder %v4961, 0.0
      %vm5006 = vcmp.gt.f32.partialorder %v4962, 0.0
      %vm5007 = vcmp.gt.f32.partialorder %v4963, 0.0
      %vm5008 = vcmp.gt.f32.partialorder %v4964, 0.0
      %vm5009 = vcmp.gt.f32.partialorder %v4965, 0.0
      %vm5010 = vcmp.gt.f32.partialorder %v4966, 0.0
      %vm5011 = vcmp.gt.f32.partialorder %v4967, 0.0
      %vm5012 = vcmp.gt.f32.partialorder %v4968, 0.0
      %vm5013 = vcmp.gt.f32.partialorder %v4969, 0.0
      %vm5014 = vcmp.gt.f32.partialorder %v4970, 0.0
      %vm5015 = vcmp.gt.f32.partialorder %v4971, 0.0
      %vm5016 = vcmp.gt.f32.partialorder %v4972, 0.0
      %vm5017 = vcmp.gt.f32.partialorder %v4973, 0.0
      %vm5018 = vcmp.gt.f32.partialorder %v4974, 0.0
      %vm5019 = vcmp.gt.f32.partialorder %v4975, 0.0
      %v5020 = vmul.f32 %v4932, 0.1
      %v5021 = vmul.f32 %v4933, 0.1
      %v5022 = vmul.f32 %v4934, 0.1
      %v5023 = vmul.f32 %v4935, 0.1
      %v5024 = vmul.f32 %v4936, 0.1
      %v5025 = vmul.f32 %v4937, 0.1
      %v5026 = vmul.f32 %v4938, 0.1
      %v5027 = vmul.f32 %v4939, 0.1
      %v5028 = vmul.f32 %v4940, 0.1
      %v5029 = vmul.f32 %v4941, 0.1
      %v5030 = vmul.f32 %v4942, 0.1
      %v5031 = vmul.f32 %v4943, 0.1
      %v5032 = vmul.f32 %v4944, 0.1
      %v5033 = vmul.f32 %v4945, 0.1
      %v5034 = vmul.f32 %v4946, 0.1
      %v5035 = vmul.f32 %v4947, 0.1
      %v5036 = vmul.f32 %v4948, 0.1
      %v5037 = vmul.f32 %v4949, 0.1
      %v5038 = vmul.f32 %v4950, 0.1
      %v5039 = vmul.f32 %v4951, 0.1
      %v5040 = vmul.f32 %v4952, 0.1
      %v5041 = vmul.f32 %v4953, 0.1
      %v5042 = vmul.f32 %v4954, 0.1
      %v5043 = vmul.f32 %v4955, 0.1
      %v5044 = vmul.f32 %v4956, 0.1
      %v5045 = vmul.f32 %v4957, 0.1
      %v5046 = vmul.f32 %v4958, 0.1
      %v5047 = vmul.f32 %v4959, 0.1
      %v5048 = vmul.f32 %v4960, 0.1
      %v5049 = vmul.f32 %v4961, 0.1
      %v5050 = vmul.f32 %v4962, 0.1
      %v5051 = vmul.f32 %v4963, 0.1
      %v5052 = vmul.f32 %v4964, 0.1
      %v5053 = vmul.f32 %v4965, 0.1
      %v5054 = vmul.f32 %v4966, 0.1
      %v5055 = vmul.f32 %v4967, 0.1
      %v5056 = vmul.f32 %v4968, 0.1
      %v5057 = vmul.f32 %v4969, 0.1
      %v5058 = vmul.f32 %v4970, 0.1
      %v5059 = vmul.f32 %v4971, 0.1
      %v5060 = vmul.f32 %v4972, 0.1
      %v5061 = vmul.f32 %v4973, 0.1
      %v5062 = vmul.f32 %v4974, 0.1
      %v5063 = vmul.f32 %v4975, 0.1
      %v5064 = vsel %vm4976, %v4932, %v5020
      %v5065 = vsel %vm4977, %v4933, %v5021
      %v5066 = vsel %vm4978, %v4934, %v5022
      %v5067 = vsel %vm4979, %v4935, %v5023
      %v5068 = vsel %vm4980, %v4936, %v5024
      %v5069 = vsel %vm4981, %v4937, %v5025
      %v5070 = vsel %vm4982, %v4938, %v5026
      %v5071 = vsel %vm4983, %v4939, %v5027
      %v5072 = vsel %vm4984, %v4940, %v5028
      %v5073 = vsel %vm4985, %v4941, %v5029
      %v5074 = vsel %vm4986, %v4942, %v5030
      %v5075 = vsel %vm4987, %v4943, %v5031
      %v5076 = vsel %vm4988, %v4944, %v5032
      %v5077 = vsel %vm4989, %v4945, %v5033
      %v5078 = vsel %vm4990, %v4946, %v5034
      %v5079 = vsel %vm4991, %v4947, %v5035
      %v5080 = vsel %vm4992, %v4948, %v5036
      %v5081 = vsel %vm4993, %v4949, %v5037
      %v5082 = vsel %vm4994, %v4950, %v5038
      %v5083 = vsel %vm4995, %v4951, %v5039
      %v5084 = vsel %vm4996, %v4952, %v5040
      %v5085 = vsel %vm4997, %v4953, %v5041
      %v5086 = vsel %vm4998, %v4954, %v5042
      %v5087 = vsel %vm4999, %v4955, %v5043
      %v5088 = vsel %vm5000, %v4956, %v5044
      %v5089 = vsel %vm5001, %v4957, %v5045
      %v5090 = vsel %vm5002, %v4958, %v5046
      %v5091 = vsel %vm5003, %v4959, %v5047
      %v5092 = vsel %vm5004, %v4960, %v5048
      %v5093 = vsel %vm5005, %v4961, %v5049
      %v5094 = vsel %vm5006, %v4962, %v5050
      %v5095 = vsel %vm5007, %v4963, %v5051
      %v5096 = vsel %vm5008, %v4964, %v5052
      %v5097 = vsel %vm5009, %v4965, %v5053
      %v5098 = vsel %vm5010, %v4966, %v5054
      %v5099 = vsel %vm5011, %v4967, %v5055
      %v5100 = vsel %vm5012, %v4968, %v5056
      %v5101 = vsel %vm5013, %v4969, %v5057
      %v5102 = vsel %vm5014, %v4970, %v5058
      %v5103 = vsel %vm5015, %v4971, %v5059
      %v5104 = vsel %vm5016, %v4972, %v5060
      %v5105 = vsel %vm5017, %v4973, %v5061
      %v5106 = vsel %vm5018, %v4974, %v5062
      %v5107 = vsel %vm5019, %v4975, %v5063
      %5108 = vst.msk [vmem:[#allocation3] sm:$0xff] %vm456, %v5064
      %5109 = vst.msk [vmem:[#allocation3 + $0x8] sm:$0xff] %vm456, %v5065
      %5110 = vst.msk [vmem:[#allocation3 + $0x10] sm:$0xff] %vm456, %v5066
      %5111 = vst.msk [vmem:[#allocation3 + $0x18] sm:$0xff] %vm456, %v5067
      %5112 = vst.msk [vmem:[#allocation3 + $0x20] sm:$0xff] %vm456, %v5068
      %5113 = vst.msk [vmem:[#allocation3 + $0x28] sm:$0xff] %vm456, %v5069
      %5114 = vst.msk [vmem:[#allocation3 + $0x30] sm:$0xff] %vm456, %v5070
      %5115 = vst.msk [vmem:[#allocation3 + $0x38] sm:$0xff] %vm456, %v5071
      %5116 = vst.msk [vmem:[#allocation3 + $0x40] sm:$0xff] %vm456, %v5072
      %5117 = vst.msk [vmem:[#allocation3 + $0x48] sm:$0xff] %vm456, %v5073
      %5118 = vst.msk [vmem:[#allocation3 + $0x50] sm:$0xff] %vm456, %v5074
      %5119 = vst.msk [vmem:[#allocation3 + $0x58] sm:$0xff] %vm456, %v5075
      %5120 = vst.msk [vmem:[#allocation3 + $0x60] sm:$0xff] %vm456, %v5076
      %5121 = vst.msk [vmem:[#allocation3 + $0x68] sm:$0xff] %vm456, %v5077
      %5122 = vst.msk [vmem:[#allocation3 + $0x70] sm:$0xff] %vm456, %v5078
      %5123 = vst.msk [vmem:[#allocation3 + $0x78] sm:$0xff] %vm456, %v5079
      %5124 = vst.msk [vmem:[#allocation3 + $0x80] sm:$0xff] %vm456, %v5080
      %5125 = vst.msk [vmem:[#allocation3 + $0x88] sm:$0xff] %vm456, %v5081
      %5126 = vst.msk [vmem:[#allocation3 + $0x90] sm:$0xff] %vm456, %v5082
      %5127 = vst.msk [vmem:[#allocation3 + $0x98] sm:$0xff] %vm456, %v5083
      %5128 = vst.msk [vmem:[#allocation3 + $0xa0] sm:$0xff] %vm456, %v5084
      %5129 = vst.msk [vmem:[#allocation3 + $0xa8] sm:$0xff] %vm456, %v5085
      %5130 = vst.msk [vmem:[#allocation3 + $0xb0] sm:$0xff] %vm456, %v5086
      %5131 = vst.msk [vmem:[#allocation3 + $0xb8] sm:$0xff] %vm456, %v5087
      %5132 = vst.msk [vmem:[#allocation3 + $0xc0] sm:$0xff] %vm456, %v5088
      %5133 = vst.msk [vmem:[#allocation3 + $0xc8] sm:$0xff] %vm456, %v5089
      %5134 = vst.msk [vmem:[#allocation3 + $0xd0] sm:$0xff] %vm456, %v5090
      %5135 = vst.msk [vmem:[#allocation3 + $0xd8] sm:$0xff] %vm456, %v5091
      %5136 = vst.msk [vmem:[#allocation3 + $0xe0] sm:$0xff] %vm456, %v5092
      %5137 = vst.msk [vmem:[#allocation3 + $0xe8] sm:$0xff] %vm456, %v5093
      %5138 = vst.msk [vmem:[#allocation3 + $0xf0] sm:$0xff] %vm456, %v5094
      %5139 = vst.msk [vmem:[#allocation3 + $0xf8] sm:$0xff] %vm456, %v5095
      %5140 = vst.msk [vmem:[#allocation3 + $0x100] sm:$0xff] %vm456, %v5096
      %5141 = vst.msk [vmem:[#allocation3 + $0x108] sm:$0xff] %vm456, %v5097
      %5142 = vst.msk [vmem:[#allocation3 + $0x110] sm:$0xff] %vm456, %v5098
      %5143 = vst.msk [vmem:[#allocation3 + $0x118] sm:$0xff] %vm456, %v5099
      %5144 = vst.msk [vmem:[#allocation3 + $0x120] sm:$0xff] %vm456, %v5100
      %5145 = vst.msk [vmem:[#allocation3 + $0x128] sm:$0xff] %vm456, %v5101
      %5146 = vst.msk [vmem:[#allocation3 + $0x130] sm:$0xff] %vm456, %v5102
      %5147 = vst.msk [vmem:[#allocation3 + $0x138] sm:$0xff] %vm456, %v5103
      %5148 = vst.msk [vmem:[#allocation3 + $0x140] sm:$0xff] %vm456, %v5104
      %5149 = vst.msk [vmem:[#allocation3 + $0x148] sm:$0xff] %vm456, %v5105
      %5150 = vst.msk [vmem:[#allocation3 + $0x150] sm:$0xff] %vm456, %v5106
      %5151 = vst.msk [vmem:[#allocation3 + $0x158] sm:$0xff] %vm456, %v5107
      %v5152 = vld [vmem:[#allocation3] sm:$0xff]
      %v5153 = vld [vmem:[#allocation3 + $0x8] sm:$0xff]
      %v5154 = vld [vmem:[#allocation3 + $0x10] sm:$0xff]
      %v5155 = vld [vmem:[#allocation3 + $0x18] sm:$0xff]
      %v5156 = vld [vmem:[#allocation3 + $0x20] sm:$0xff]
      %v5157 = vld [vmem:[#allocation3 + $0x28] sm:$0xff]
      %v5158 = vld [vmem:[#allocation3 + $0x30] sm:$0xff]
      %v5159 = vld [vmem:[#allocation3 + $0x38] sm:$0xff]
      %v5160 = vld [vmem:[#allocation3 + $0x40] sm:$0xff]
      %v5161 = vld [vmem:[#allocation3 + $0x48] sm:$0xff]
      %v5162 = vld [vmem:[#allocation3 + $0x50] sm:$0xff]
      %v5163 = vld [vmem:[#allocation3 + $0x58] sm:$0xff]
      %v5164 = vld [vmem:[#allocation3 + $0x60] sm:$0xff]
      %v5165 = vld [vmem:[#allocation3 + $0x68] sm:$0xff]
      %v5166 = vld [vmem:[#allocation3 + $0x70] sm:$0xff]
      %v5167 = vld [vmem:[#allocation3 + $0x78] sm:$0xff]
      %v5168 = vld [vmem:[#allocation3 + $0x80] sm:$0xff]
      %v5169 = vld [vmem:[#allocation3 + $0x88] sm:$0xff]
      %v5170 = vld [vmem:[#allocation3 + $0x90] sm:$0xff]
      %v5171 = vld [vmem:[#allocation3 + $0x98] sm:$0xff]
      %v5172 = vld [vmem:[#allocation3 + $0xa0] sm:$0xff]
      %v5173 = vld [vmem:[#allocation3 + $0xa8] sm:$0xff]
      %v5174 = vld [vmem:[#allocation3 + $0xb0] sm:$0xff]
      %v5175 = vld [vmem:[#allocation3 + $0xb8] sm:$0xff]
      %v5176 = vld [vmem:[#allocation3 + $0xc0] sm:$0xff]
      %v5177 = vld [vmem:[#allocation3 + $0xc8] sm:$0xff]
      %v5178 = vld [vmem:[#allocation3 + $0xd0] sm:$0xff]
      %v5179 = vld [vmem:[#allocation3 + $0xd8] sm:$0xff]
      %v5180 = vld [vmem:[#allocation3 + $0xe0] sm:$0xff]
      %v5181 = vld [vmem:[#allocation3 + $0xe8] sm:$0xff]
      %v5182 = vld [vmem:[#allocation3 + $0xf0] sm:$0xff]
      %v5183 = vld [vmem:[#allocation3 + $0xf8] sm:$0xff]
      %v5184 = vld [vmem:[#allocation3 + $0x100] sm:$0xff]
      %v5185 = vld [vmem:[#allocation3 + $0x108] sm:$0xff]
      %v5186 = vld [vmem:[#allocation3 + $0x110] sm:$0xff]
      %v5187 = vld [vmem:[#allocation3 + $0x118] sm:$0xff]
      %v5188 = vld [vmem:[#allocation3 + $0x120] sm:$0xff]
      %v5189 = vld [vmem:[#allocation3 + $0x128] sm:$0xff]
      %v5190 = vld [vmem:[#allocation3 + $0x130] sm:$0xff]
      %v5191 = vld [vmem:[#allocation3 + $0x138] sm:$0xff]
      %v5192 = vld [vmem:[#allocation3 + $0x140] sm:$0xff]
      %v5193 = vld [vmem:[#allocation3 + $0x148] sm:$0xff]
      %v5194 = vld [vmem:[#allocation3 + $0xe] sm:$0xff]
      %v5195 = vld [vmem:[#allocation3 + $0x16] sm:$0xff]
      %v5196 = vld [vmem:[#allocation3 + $0x1e] sm:$0xff]
      %v5197 = vld [vmem:[#allocation3 + $0x26] sm:$0xff]
      %v5198 = vld [vmem:[#allocation3 + $0x2e] sm:$0xff]
      %v5199 = vld [vmem:[#allocation3 + $0x36] sm:$0xff]
      %v5200 = vld [vmem:[#allocation3 + $0x3e] sm:$0xff]
      %v5201 = vld [vmem:[#allocation3 + $0x46] sm:$0xff]
      %v5202 = vld [vmem:[#allocation3 + $0x4e] sm:$0xff]
      %v5203 = vld [vmem:[#allocation3 + $0x56] sm:$0xff]
      %v5204 = vld [vmem:[#allocation3 + $0x5e] sm:$0xff]
      %v5205 = vld [vmem:[#allocation3 + $0x66] sm:$0xff]
      %v5206 = vld [vmem:[#allocation3 + $0x6e] sm:$0xff]
      %v5207 = vld [vmem:[#allocation3 + $0x76] sm:$0xff]
      %v5208 = vld [vmem:[#allocation3 + $0x7e] sm:$0xff]
      %v5209 = vld [vmem:[#allocation3 + $0x86] sm:$0xff]
      %v5210 = vld [vmem:[#allocation3 + $0x8e] sm:$0xff]
      %v5211 = vld [vmem:[#allocation3 + $0x96] sm:$0xff]
      %v5212 = vld [vmem:[#allocation3 + $0x9e] sm:$0xff]
      %v5213 = vld [vmem:[#allocation3 + $0xa6] sm:$0xff]
      %v5214 = vld [vmem:[#allocation3 + $0xae] sm:$0xff]
      %v5215 = vld [vmem:[#allocation3 + $0xb6] sm:$0xff]
      %v5216 = vld [vmem:[#allocation3 + $0xbe] sm:$0xff]
      %v5217 = vld [vmem:[#allocation3 + $0xc6] sm:$0xff]
      %v5218 = vld [vmem:[#allocation3 + $0xce] sm:$0xff]
      %v5219 = vld [vmem:[#allocation3 + $0xd6] sm:$0xff]
      %v5220 = vld [vmem:[#allocation3 + $0xde] sm:$0xff]
      %v5221 = vld [vmem:[#allocation3 + $0xe6] sm:$0xff]
      %v5222 = vld [vmem:[#allocation3 + $0xee] sm:$0xff]
      %v5223 = vld [vmem:[#allocation3 + $0xf6] sm:$0xff]
      %v5224 = vld [vmem:[#allocation3 + $0xfe] sm:$0xff]
      %v5225 = vld [vmem:[#allocation3 + $0x106] sm:$0xff]
      %v5226 = vld [vmem:[#allocation3 + $0x10e] sm:$0xff]
      %v5227 = vld [vmem:[#allocation3 + $0x116] sm:$0xff]
      %v5228 = vld [vmem:[#allocation3 + $0x11e] sm:$0xff]
      %v5229 = vld [vmem:[#allocation3 + $0x126] sm:$0xff]
      %v5230 = vld [vmem:[#allocation3 + $0x12e] sm:$0xff]
      %v5231 = vld [vmem:[#allocation3 + $0x136] sm:$0xff]
      %v5232 = vld [vmem:[#allocation3 + $0x13e] sm:$0xff]
      %v5233 = vld [vmem:[#allocation3 + $0x146] sm:$0xff]
      %v5234 = vld [vmem:[#allocation3 + $0x14e] sm:$0xff]
      %v5235 = vld [vmem:[#allocation3 + $0x156] sm:$0xff]
      %v5236 = vmax.f32 %v5152, %v5194
      %v5237 = vmax.f32 %v5153, %v5195
      %v5238 = vmax.f32 %v5154, %v5196
      %v5239 = vmax.f32 %v5155, %v5197
      %v5240 = vmax.f32 %v5156, %v5198
      %v5241 = vmax.f32 %v5157, %v5199
      %v5242 = vmax.f32 %v5158, %v5200
      %v5243 = vmax.f32 %v5159, %v5201
      %v5244 = vmax.f32 %v5160, %v5202
      %v5245 = vmax.f32 %v5161, %v5203
      %v5246 = vmax.f32 %v5162, %v5204
      %v5247 = vmax.f32 %v5163, %v5205
      %v5248 = vmax.f32 %v5164, %v5206
      %v5249 = vmax.f32 %v5165, %v5207
      %v5250 = vmax.f32 %v5166, %v5208
      %v5251 = vmax.f32 %v5167, %v5209
      %v5252 = vmax.f32 %v5168, %v5210
      %v5253 = vmax.f32 %v5169, %v5211
      %v5254 = vmax.f32 %v5170, %v5212
      %v5255 = vmax.f32 %v5171, %v5213
      %v5256 = vmax.f32 %v5172, %v5214
      %v5257 = vmax.f32 %v5173, %v5215
      %v5258 = vmax.f32 %v5174, %v5216
      %v5259 = vmax.f32 %v5175, %v5217
      %v5260 = vmax.f32 %v5176, %v5218
      %v5261 = vmax.f32 %v5177, %v5219
      %v5262 = vmax.f32 %v5178, %v5220
      %v5263 = vmax.f32 %v5179, %v5221
      %v5264 = vmax.f32 %v5180, %v5222
      %v5265 = vmax.f32 %v5181, %v5223
      %v5266 = vmax.f32 %v5182, %v5224
      %v5267 = vmax.f32 %v5183, %v5225
      %v5268 = vmax.f32 %v5184, %v5226
      %v5269 = vmax.f32 %v5185, %v5227
      %v5270 = vmax.f32 %v5186, %v5228
      %v5271 = vmax.f32 %v5187, %v5229
      %v5272 = vmax.f32 %v5188, %v5230
      %v5273 = vmax.f32 %v5189, %v5231
      %v5274 = vmax.f32 %v5190, %v5232
      %v5275 = vmax.f32 %v5191, %v5233
      %v5276 = vmax.f32 %v5192, %v5234
      %v5277 = vmax.f32 %v5193, %v5235
      %v5278 = vpack.c.bf16 %v5237, %v5236
      %v5279 = vpack.c.bf16 %v5239, %v5238
      %v5280 = vpack.c.bf16 %v5241, %v5240
      %v5281 = vpack.c.bf16 %v5243, %v5242
      %v5282 = vpack.c.bf16 %v5245, %v5244
      %v5283 = vpack.c.bf16 %v5247, %v5246
      %v5284 = vpack.c.bf16 %v5249, %v5248
      %v5285 = vpack.c.bf16 %v5251, %v5250
      %v5286 = vpack.c.bf16 %v5253, %v5252
      %v5287 = vpack.c.bf16 %v5255, %v5254
      %v5288 = vpack.c.bf16 %v5257, %v5256
      %v5289 = vpack.c.bf16 %v5259, %v5258
      %v5290 = vpack.c.bf16 %v5261, %v5260
      %v5291 = vpack.c.bf16 %v5263, %v5262
      %v5292 = vpack.c.bf16 %v5265, %v5264
      %v5293 = vpack.c.bf16 %v5267, %v5266
      %v5294 = vpack.c.bf16 %v5269, %v5268
      %v5295 = vpack.c.bf16 %v5271, %v5270
      %v5296 = vpack.c.bf16 %v5273, %v5272
      %v5297 = vpack.c.bf16 %v5275, %v5274
      %v5298 = vpack.c.bf16 %v5277, %v5276
      %v5320 = vunpack.c.l.b16 %v5278
      %v5321 = vunpack.c.h.b16 %v5278
      %v5322 = vunpack.c.l.b16 %v5279
      %v5323 = vunpack.c.h.b16 %v5279
      %v5324 = vunpack.c.l.b16 %v5280
      %v5325 = vunpack.c.h.b16 %v5280
      %v5326 = vunpack.c.l.b16 %v5281
      %v5327 = vunpack.c.h.b16 %v5281
      %v5328 = vunpack.c.l.b16 %v5282
      %v5329 = vunpack.c.h.b16 %v5282
      %v5330 = vunpack.c.l.b16 %v5283
      %v5331 = vunpack.c.h.b16 %v5283
      %v5332 = vunpack.c.l.b16 %v5284
      %v5333 = vunpack.c.h.b16 %v5284
      %v5334 = vunpack.c.l.b16 %v5285
      %v5335 = vunpack.c.h.b16 %v5285
      %v5336 = vunpack.c.l.b16 %v5286
      %v5337 = vunpack.c.h.b16 %v5286
      %v5338 = vunpack.c.l.b16 %v5287
      %v5339 = vunpack.c.h.b16 %v5287
      %v5340 = vunpack.c.l.b16 %v5288
      %v5341 = vunpack.c.h.b16 %v5288
      %v5342 = vunpack.c.l.b16 %v5289
      %v5343 = vunpack.c.h.b16 %v5289
      %v5344 = vunpack.c.l.b16 %v5290
      %v5345 = vunpack.c.h.b16 %v5290
      %v5346 = vunpack.c.l.b16 %v5291
      %v5347 = vunpack.c.h.b16 %v5291
      %v5348 = vunpack.c.l.b16 %v5292
      %v5349 = vunpack.c.h.b16 %v5292
      %v5350 = vunpack.c.l.b16 %v5293
      %v5351 = vunpack.c.h.b16 %v5293
      %v5352 = vunpack.c.l.b16 %v5294
      %v5353 = vunpack.c.h.b16 %v5294
      %v5354 = vunpack.c.l.b16 %v5295
      %v5355 = vunpack.c.h.b16 %v5295
      %v5356 = vunpack.c.l.b16 %v5296
      %v5357 = vunpack.c.h.b16 %v5296
      %v5358 = vunpack.c.l.b16 %v5297
      %v5359 = vunpack.c.h.b16 %v5297
      %v5360 = vunpack.c.l.b16 %v5298
      %v5361 = vunpack.c.h.b16 %v5298
      %v5362 = vpack.c.b16 %v5320, %v5320
      %v5363 = vpack.c.b16 %v5321, %v5321
      %v5364 = vpack.c.b16 %v5322, %v5322
      %v5365 = vpack.c.b16 %v5323, %v5323
      %v5366 = vpack.c.b16 %v5324, %v5324
      %v5367 = vpack.c.b16 %v5325, %v5325
      %v5368 = vpack.c.b16 %v5326, %v5326
      %v5369 = vpack.c.b16 %v5327, %v5327
      %v5370 = vpack.c.b16 %v5328, %v5328
      %v5371 = vpack.c.b16 %v5329, %v5329
      %v5372 = vpack.c.b16 %v5330, %v5330
      %v5373 = vpack.c.b16 %v5331, %v5331
      %v5374 = vpack.c.b16 %v5332, %v5332
      %v5375 = vpack.c.b16 %v5333, %v5333
      %v5376 = vpack.c.b16 %v5334, %v5334
      %v5377 = vpack.c.b16 %v5335, %v5335
      %v5378 = vpack.c.b16 %v5336, %v5336
      %v5379 = vpack.c.b16 %v5337, %v5337
      %v5380 = vpack.c.b16 %v5338, %v5338
      %v5381 = vpack.c.b16 %v5339, %v5339
      %v5382 = vpack.c.b16 %v5340, %v5340
      %v5383 = vpack.c.b16 %v5341, %v5341
      %v5384 = vpack.c.b16 %v5342, %v5342
      %v5385 = vpack.c.b16 %v5343, %v5343
      %v5386 = vpack.c.b16 %v5344, %v5344
      %v5387 = vpack.c.b16 %v5345, %v5345
      %v5388 = vpack.c.b16 %v5346, %v5346
      %v5389 = vpack.c.b16 %v5347, %v5347
      %v5390 = vpack.c.b16 %v5348, %v5348
      %v5391 = vpack.c.b16 %v5349, %v5349
      %v5392 = vpack.c.b16 %v5350, %v5350
      %v5393 = vpack.c.b16 %v5351, %v5351
      %v5394 = vpack.c.b16 %v5352, %v5352
      %v5395 = vpack.c.b16 %v5353, %v5353
      %v5396 = vpack.c.b16 %v5354, %v5354
      %v5397 = vpack.c.b16 %v5355, %v5355
      %v5398 = vpack.c.b16 %v5356, %v5356
      %v5399 = vpack.c.b16 %v5357, %v5357
      %v5400 = vpack.c.b16 %v5358, %v5358
      %v5401 = vpack.c.b16 %v5359, %v5359
      %v5402 = vpack.c.b16 %v5360, %v5360
      %v5403 = vpack.c.b16 %v5361, %v5361
      %vm5446 = vcmask 125952
      %5447 = vst.msk [vmem:[%s278] sm:$0xf] %vm5446, %v5362
      %5448 = vst.msk [vmem:[%s278 + $0x4] sm:$0xf] %vm5446, %v5363
      %5449 = vst.msk [vmem:[%s278 + $0x8] sm:$0xf] %vm5446, %v5364
      %5450 = vst.msk [vmem:[%s278 + $0xc] sm:$0xf] %vm5446, %v5365
      %5451 = vst.msk [vmem:[%s278 + $0x10] sm:$0xf] %vm5446, %v5366
      %5452 = vst.msk [vmem:[%s278 + $0x14] sm:$0xf] %vm5446, %v5367
      %5453 = vst.msk [vmem:[%s278 + $0x18] sm:$0xf] %vm5446, %v5368
      %5454 = vst.msk [vmem:[%s278 + $0x1c] sm:$0xf] %vm5446, %v5369
      %5455 = vst.msk [vmem:[%s278 + $0x20] sm:$0xf] %vm5446, %v5370
      %5456 = vst.msk [vmem:[%s278 + $0x24] sm:$0xf] %vm5446, %v5371
      %5457 = vst.msk [vmem:[%s278 + $0x28] sm:$0xf] %vm5446, %v5372
      %5458 = vst.msk [vmem:[%s278 + $0x2c] sm:$0xf] %vm5446, %v5373
      %5459 = vst.msk [vmem:[%s278 + $0x30] sm:$0xf] %vm5446, %v5374
      %5460 = vst.msk [vmem:[%s278 + $0x34] sm:$0xf] %vm5446, %v5375
      %5461 = vst.msk [vmem:[%s278 + $0x38] sm:$0xf] %vm5446, %v5376
      %5462 = vst.msk [vmem:[%s278 + $0x3c] sm:$0xf] %vm5446, %v5377
      %5463 = vst.msk [vmem:[%s278 + $0x40] sm:$0xf] %vm5446, %v5378
      %5464 = vst.msk [vmem:[%s278 + $0x44] sm:$0xf] %vm5446, %v5379
      %5465 = vst.msk [vmem:[%s278 + $0x48] sm:$0xf] %vm5446, %v5380
      %5466 = vst.msk [vmem:[%s278 + $0x4c] sm:$0xf] %vm5446, %v5381
      %5467 = vst.msk [vmem:[%s278 + $0x50] sm:$0xf] %vm5446, %v5382
      %5468 = vst.msk [vmem:[%s278 + $0x54] sm:$0xf] %vm5446, %v5383
      %5469 = vst.msk [vmem:[%s278 + $0x58] sm:$0xf] %vm5446, %v5384
      %5470 = vst.msk [vmem:[%s278 + $0x5c] sm:$0xf] %vm5446, %v5385
      %5471 = vst.msk [vmem:[%s278 + $0x60] sm:$0xf] %vm5446, %v5386
      %5472 = vst.msk [vmem:[%s278 + $0x64] sm:$0xf] %vm5446, %v5387
      %5473 = vst.msk [vmem:[%s278 + $0x68] sm:$0xf] %vm5446, %v5388
      %5474 = vst.msk [vmem:[%s278 + $0x6c] sm:$0xf] %vm5446, %v5389
      %5475 = vst.msk [vmem:[%s278 + $0x70] sm:$0xf] %vm5446, %v5390
      %5476 = vst.msk [vmem:[%s278 + $0x74] sm:$0xf] %vm5446, %v5391
      %5477 = vst.msk [vmem:[%s278 + $0x78] sm:$0xf] %vm5446, %v5392
      %5478 = vst.msk [vmem:[%s278 + $0x7c] sm:$0xf] %vm5446, %v5393
      %5479 = vst.msk [vmem:[%s278 + $0x80] sm:$0xf] %vm5446, %v5394
      %5480 = vst.msk [vmem:[%s278 + $0x84] sm:$0xf] %vm5446, %v5395
      %5481 = vst.msk [vmem:[%s278 + $0x88] sm:$0xf] %vm5446, %v5396
      %5482 = vst.msk [vmem:[%s278 + $0x8c] sm:$0xf] %vm5446, %v5397
      %5483 = vst.msk [vmem:[%s278 + $0x90] sm:$0xf] %vm5446, %v5398
      %5484 = vst.msk [vmem:[%s278 + $0x94] sm:$0xf] %vm5446, %v5399
      %5485 = vst.msk [vmem:[%s278 + $0x98] sm:$0xf] %vm5446, %v5400
      %5486 = vst.msk [vmem:[%s278 + $0x9c] sm:$0xf] %vm5446, %v5401
      %5487 = vst.msk [vmem:[%s278 + $0xa0] sm:$0xf] %vm5446, %v5402
      %5488 = vst.msk [vmem:[%s278 + $0xa4] sm:$0xf] %vm5446, %v5403
      %p5489 = scmp.lt.s32.totalorder %s18, 1
      %s5490 = scalar_select %p5489, %s18, 1
      %s5491 = smul.addr %s5490, 42
      %s5492 = smul.addr %s5491, 4
      %s5493 = scalar_lea.vmem %s7, %s5492
      // Predicated region
      $region49: #{discriminator_forward.2} parent=47 // pred_check
        %p5494 = pneg %p188
      $region50: #{discriminator_forward.2} parent=47 // pred_check_branch
        %5496 = sbr.rel (%p5494) target = $region52
      $region51: #{discriminator_forward.2} parent=47 // pred_region
        _
      $region52: #{discriminator_forward.2} parent=47 // pred_fallthru
        _
    $region48: #{discriminator_forward.2} parent=5 // pred_fallthru
      _
    %p5497 = scmp.le.s32.totalorder 2, %s13
    // Predicated region
    $region53: #{discriminator_forward.2} parent=5 // pred_check
      %p5498 = pneg %p5497
    $region54: #{discriminator_forward.2} parent=5 // pred_check_branch
      %5500 = sbr.rel (%p5498) target = $region56
    $region55: #{discriminator_forward.2} parent=5 // pred_region
      %s5501 = ssub.s32 %s13, 2
      // Predicated region
      $region57: #{discriminator_forward.2} parent=55 // pred_check
        %p5502 = pneg %p194
      $region58: #{discriminator_forward.2} parent=55 // pred_check_branch
        %5504 = sbr.rel (%p5502) target = $region60
      $region59: #{discriminator_forward.2} parent=55 // pred_region
        %p5505 = scmp.lt.s32.totalorder %s19, 1
        %s5506 = scalar_select %p5505, %s19, 1
        %s5507 = smul.addr %s5506, 42
        %s5508 = smul.addr %s5507, 4
        %s5509 = scalar_lea.vmem %s7, %s5508
      $region60: #{discriminator_forward.2} parent=55 // pred_fallthru
        _
    $region56: #{discriminator_forward.2} parent=5 // pred_fallthru
      _
  $region6: #{discriminator_forward.2} parent=0 // loop_footer
    %s17 = sadd.s32 1, %s13
  $region7: #{discriminator_forward.2} parent=0 // loop_footer_branch
    %12 = sbr.rel target = $region3
  $region8: #{discriminator_forward.2} parent=0 // loop_exit
    _

// kernel: discriminator_forward.3
$region0: #{discriminator_forward.3}
  #allocation0 [shape = 'u32[]', space=smem, size = 0x4, offset = 0x4, fixed_abs, tag = 'smem constant byte address 0x4 - core index']
  #allocation1 [shape = 'u32[144,128]{1,0:T(1,128)}', space=vmem, size = 0x12000, scoped, tag = 'internal scratch']
  %s0 = inlined_call_operand.vmem [shape: bf16[16,2304], index: 0, kind: input, shape index: {}]
  %s1 = inlined_call_operand.vmem [shape: bf16[16,16], index: 1, kind: input, shape index: {}]
  %s2 = inlined_call_operand.vmem [shape: bf16[2304,128], index: 2, kind: input, shape index: {}]
  %s3 = inlined_call_operand.vmem [shape: bf16[16,128], index: 3, kind: input, shape index: {}]
  %s4 = inlined_call_operand.vmem [shape: f32[1,128], index: 4, kind: input, shape index: {}]
  %s5 = inlined_call_operand.vmem [shape: f32[1,128], index: 5, kind: input, shape index: {}]
  %s6 = inlined_call_operand.vmem [shape: bf16[128,128], index: 6, kind: input, shape index: {}]
  %s7 = inlined_call_operand.vmem [shape: f32[1,128], index: 7, kind: input, shape index: {}]
  %s8 = inlined_call_operand.vmem [shape: f32[1,128], index: 8, kind: input, shape index: {}]
  %s9 = inlined_call_operand.vmem [shape: bf16[128,128], index: 9, kind: input, shape index: {}]
  %s10 = inlined_call_operand.vmem [shape: f32[1,128], index: 10, kind: input, shape index: {}]
  %s11 = inlined_call_operand.vmem [shape: f32[16,128], index: 11, kind: output, shape index: {}]
  %s12 = sld [smem:[#allocation0]]
  $region54: #{discriminator_forward.3} parent=0
    _
  %s14 = ssub.s32 1, %s12
  %s15 = scalar_select 0, %s14, %s12
  // Predicated region
  $region2: #{discriminator_forward.3} parent=0 // pred_check
    _
  $region3: #{discriminator_forward.3} parent=0 // pred_check_branch
    %17 = sbr.rel (0) target = $region5
  $region4: #{discriminator_forward.3} parent=0 // pred_region
    _
  $region5: #{discriminator_forward.3} parent=0 // pred_fallthru
    _
  // Predicated region
  $region6: #{discriminator_forward.3} parent=0 // pred_check
    _
  $region7: #{discriminator_forward.3} parent=0 // pred_check_branch
    %19 = sbr.rel (0) target = $region9
  $region8: #{discriminator_forward.3} parent=0 // pred_region
    _
  $region9: #{discriminator_forward.3} parent=0 // pred_fallthru
    _
  // Predicated region
  $region10: #{discriminator_forward.3} parent=0 // pred_check
    _
  $region11: #{discriminator_forward.3} parent=0 // pred_check_branch
    %21 = sbr.rel (0) target = $region13
  $region12: #{discriminator_forward.3} parent=0 // pred_region
    _
  $region13: #{discriminator_forward.3} parent=0 // pred_fallthru
    _
  // Predicated region
  $region14: #{discriminator_forward.3} parent=0 // pred_check
    _
  $region15: #{discriminator_forward.3} parent=0 // pred_check_branch
    %23 = sbr.rel (0) target = $region17
  $region16: #{discriminator_forward.3} parent=0 // pred_region
    _
  $region17: #{discriminator_forward.3} parent=0 // pred_fallthru
    _
  // Predicated region
  $region18: #{discriminator_forward.3} parent=0 // pred_check
    _
  $region19: #{discriminator_forward.3} parent=0 // pred_check_branch
    %25 = sbr.rel (0) target = $region21
  $region20: #{discriminator_forward.3} parent=0 // pred_region
    _
  $region21: #{discriminator_forward.3} parent=0 // pred_fallthru
    _
  // Predicated region
  $region22: #{discriminator_forward.3} parent=0 // pred_check
    _
  $region23: #{discriminator_forward.3} parent=0 // pred_check_branch
    %27 = sbr.rel (0) target = $region25
  $region24: #{discriminator_forward.3} parent=0 // pred_region
    _
  $region25: #{discriminator_forward.3} parent=0 // pred_fallthru
    _
  // Predicated region
  $region26: #{discriminator_forward.3} parent=0 // pred_check
    _
  $region27: #{discriminator_forward.3} parent=0 // pred_check_branch
    %29 = sbr.rel (0) target = $region29
  $region28: #{discriminator_forward.3} parent=0 // pred_region
    _
  $region29: #{discriminator_forward.3} parent=0 // pred_fallthru
    _
  // Predicated region
  $region30: #{discriminator_forward.3} parent=0 // pred_check
    _
  $region31: #{discriminator_forward.3} parent=0 // pred_check_branch
    %31 = sbr.rel (0) target = $region33
  $region32: #{discriminator_forward.3} parent=0 // pred_region
    _
  $region33: #{discriminator_forward.3} parent=0 // pred_fallthru
    _
  // Predicated region
  $region34: #{discriminator_forward.3} parent=0 // pred_check
    _
  $region35: #{discriminator_forward.3} parent=0 // pred_check_branch
    %33 = sbr.rel (0) target = $region37
  $region36: #{discriminator_forward.3} parent=0 // pred_region
    _
  $region37: #{discriminator_forward.3} parent=0 // pred_fallthru
    _
  // Predicated region
  $region38: #{discriminator_forward.3} parent=0 // pred_check
    _
  $region39: #{discriminator_forward.3} parent=0 // pred_check_branch
    %35 = sbr.rel (0) target = $region41
  $region40: #{discriminator_forward.3} parent=0 // pred_region
    _
  $region41: #{discriminator_forward.3} parent=0 // pred_fallthru
    _
  // Predicated region
  $region42: #{discriminator_forward.3} parent=0 // pred_check
    _
  $region43: #{discriminator_forward.3} parent=0 // pred_check_branch
    %37 = sbr.rel (0) target = $region45
  $region44: #{discriminator_forward.3} parent=0 // pred_region
    _
  $region45: #{discriminator_forward.3} parent=0 // pred_fallthru
    _
  %v39 = vld [vmem:[%s0] sm:$0xff]
  %v40 = vld [vmem:[%s0 + $0x8] sm:$0xff]
  %v41 = vld [vmem:[%s0 + $0x10] sm:$0xff]
  %v42 = vld [vmem:[%s0 + $0x18] sm:$0xff]
  %v43 = vld [vmem:[%s0 + $0x20] sm:$0xff]
  %v44 = vld [vmem:[%s0 + $0x28] sm:$0xff]
  %v45 = vld [vmem:[%s0 + $0x30] sm:$0xff]
  %v46 = vld [vmem:[%s0 + $0x38] sm:$0xff]
  %v47 = vld [vmem:[%s0 + $0x40] sm:$0xff]
  %v48 = vld [vmem:[%s0 + $0x48] sm:$0xff]
  %v49 = vld [vmem:[%s0 + $0x50] sm:$0xff]
  %v50 = vld [vmem:[%s0 + $0x58] sm:$0xff]
  %v51 = vld [vmem:[%s0 + $0x60] sm:$0xff]
  %v52 = vld [vmem:[%s0 + $0x68] sm:$0xff]
  %v53 = vld [vmem:[%s0 + $0x70] sm:$0xff]
  %v54 = vld [vmem:[%s0 + $0x78] sm:$0xff]
  %v55 = vld [vmem:[%s0 + $0x80] sm:$0xff]
  %v56 = vld [vmem:[%s0 + $0x88] sm:$0xff]
  %v57 = vld [vmem:[%s2] sm:$0xf]
  %v58 = vld [vmem:[%s2 + $0x4] sm:$0xf]
  %v59 = vld [vmem:[%s2 + $0x8] sm:$0xf]
  %v60 = vld [vmem:[%s2 + $0xc] sm:$0xf]
  %v61 = vld [vmem:[%s2 + $0x10] sm:$0xf]
  %v62 = vld [vmem:[%s2 + $0x14] sm:$0xf]
  %v63 = vld [vmem:[%s2 + $0x18] sm:$0xf]
  %v64 = vld [vmem:[%s2 + $0x1c] sm:$0xf]
  %v65 = vld [vmem:[%s2 + $0x20] sm:$0xf]
  %v66 = vld [vmem:[%s2 + $0x24] sm:$0xf]
  %v67 = vld [vmem:[%s2 + $0x28] sm:$0xf]
  %v68 = vld [vmem:[%s2 + $0x2c] sm:$0xf]
  %v69 = vld [vmem:[%s2 + $0x30] sm:$0xf]
  %v70 = vld [vmem:[%s2 + $0x34] sm:$0xf]
  %v71 = vld [vmem:[%s2 + $0x38] sm:$0xf]
  %v72 = vld [vmem:[%s2 + $0x3c] sm:$0xf]
  %v73 = vld [vmem:[%s2 + $0x40] sm:$0xf]
  %v74 = vld [vmem:[%s2 + $0x44] sm:$0xf]
  %v75 = vld [vmem:[%s2 + $0x48] sm:$0xf]
  %v76 = vld [vmem:[%s2 + $0x4c] sm:$0xf]
  %v77 = vld [vmem:[%s2 + $0x50] sm:$0xf]
  %v78 = vld [vmem:[%s2 + $0x54] sm:$0xf]
  %v79 = vld [vmem:[%s2 + $0x58] sm:$0xf]
  %v80 = vld [vmem:[%s2 + $0x5c] sm:$0xf]
  %v81 = vld [vmem:[%s2 + $0x60] sm:$0xf]
  %v82 = vld [vmem:[%s2 + $0x64] sm:$0xf]
  %v83 = vld [vmem:[%s2 + $0x68] sm:$0xf]
  %v84 = vld [vmem:[%s2 + $0x6c] sm:$0xf]
  %v85 = vld [vmem:[%s2 + $0x70] sm:$0xf]
  %v86 = vld [vmem:[%s2 + $0x74] sm:$0xf]
  %v87 = vld [vmem:[%s2 + $0x78] sm:$0xf]
  %v88 = vld [vmem:[%s2 + $0x7c] sm:$0xf]
  %v89 = vld [vmem:[%s2 + $0x80] sm:$0xf]
  %v90 = vld [vmem:[%s2 + $0x84] sm:$0xf]
  %v91 = vld [vmem:[%s2 + $0x88] sm:$0xf]
  %v92 = vld [vmem:[%s2 + $0x8c] sm:$0xf]
  %v93 = vld [vmem:[%s2 + $0x90] sm:$0xf]
  %v94 = vld [vmem:[%s2 + $0x94] sm:$0xf]
  %v95 = vld [vmem:[%s2 + $0x98] sm:$0xf]
  %v96 = vld [vmem:[%s2 + $0x9c] sm:$0xf]
  %v97 = vld [vmem:[%s2 + $0xa0] sm:$0xf]
  %v98 = vld [vmem:[%s2 + $0xa4] sm:$0xf]
  %v99 = vld [vmem:[%s2 + $0xa8] sm:$0xf]
  %v100 = vld [vmem:[%s2 + $0xac] sm:$0xf]
  %v101 = vld [vmem:[%s2 + $0xb0] sm:$0xf]
  %v102 = vld [vmem:[%s2 + $0xb4] sm:$0xf]
  %v103 = vld [vmem:[%s2 + $0xb8] sm:$0xf]
  %v104 = vld [vmem:[%s2 + $0xbc] sm:$0xf]
  %v105 = vld [vmem:[%s2 + $0xc0] sm:$0xf]
  %v106 = vld [vmem:[%s2 + $0xc4] sm:$0xf]
  %v107 = vld [vmem:[%s2 + $0xc8] sm:$0xf]
  %v108 = vld [vmem:[%s2 + $0xcc] sm:$0xf]
  %v109 = vld [vmem:[%s2 + $0xd0] sm:$0xf]
  %v110 = vld [vmem:[%s2 + $0xd4] sm:$0xf]
  %v111 = vld [vmem:[%s2 + $0xd8] sm:$0xf]
  %v112 = vld [vmem:[%s2 + $0xdc] sm:$0xf]
  %v113 = vld [vmem:[%s2 + $0xe0] sm:$0xf]
  %v114 = vld [vmem:[%s2 + $0xe4] sm:$0xf]
  %v115 = vld [vmem:[%s2 + $0xe8] sm:$0xf]
  %v116 = vld [vmem:[%s2 + $0xec] sm:$0xf]
  %v117 = vld [vmem:[%s2 + $0xf0] sm:$0xf]
  %v118 = vld [vmem:[%s2 + $0xf4] sm:$0xf]
  %v119 = vld [vmem:[%s2 + $0xf8] sm:$0xf]
  %v120 = vld [vmem:[%s2 + $0xfc] sm:$0xf]
  %v121 = vld [vmem:[%s2 + $0x100] sm:$0xf]
  %v122 = vld [vmem:[%s2 + $0x104] sm:$0xf]
  %v123 = vld [vmem:[%s2 + $0x108] sm:$0xf]
  %v124 = vld [vmem:[%s2 + $0x10c] sm:$0xf]
  %v125 = vld [vmem:[%s2 + $0x110] sm:$0xf]
  %v126 = vld [vmem:[%s2 + $0x114] sm:$0xf]
  %v127 = vld [vmem:[%s2 + $0x118] sm:$0xf]
  %v128 = vld [vmem:[%s2 + $0x11c] sm:$0xf]
  %v129 = vld [vmem:[%s2 + $0x120] sm:$0xf]
  %v130 = vld [vmem:[%s2 + $0x124] sm:$0xf]
  %v131 = vld [vmem:[%s2 + $0x128] sm:$0xf]
  %v132 = vld [vmem:[%s2 + $0x12c] sm:$0xf]
  %v133 = vld [vmem:[%s2 + $0x130] sm:$0xf]
  %v134 = vld [vmem:[%s2 + $0x134] sm:$0xf]
  %v135 = vld [vmem:[%s2 + $0x138] sm:$0xf]
  %v136 = vld [vmem:[%s2 + $0x13c] sm:$0xf]
  %v137 = vld [vmem:[%s2 + $0x140] sm:$0xf]
  %v138 = vld [vmem:[%s2 + $0x144] sm:$0xf]
  %v139 = vld [vmem:[%s2 + $0x148] sm:$0xf]
  %v140 = vld [vmem:[%s2 + $0x14c] sm:$0xf]
  %v141 = vld [vmem:[%s2 + $0x150] sm:$0xf]
  %v142 = vld [vmem:[%s2 + $0x154] sm:$0xf]
  %v143 = vld [vmem:[%s2 + $0x158] sm:$0xf]
  %v144 = vld [vmem:[%s2 + $0x15c] sm:$0xf]
  %v145 = vld [vmem:[%s2 + $0x160] sm:$0xf]
  %v146 = vld [vmem:[%s2 + $0x164] sm:$0xf]
  %v147 = vld [vmem:[%s2 + $0x168] sm:$0xf]
  %v148 = vld [vmem:[%s2 + $0x16c] sm:$0xf]
  %v149 = vld [vmem:[%s2 + $0x170] sm:$0xf]
  %v150 = vld [vmem:[%s2 + $0x174] sm:$0xf]
  %v151 = vld [vmem:[%s2 + $0x178] sm:$0xf]
  %v152 = vld [vmem:[%s2 + $0x17c] sm:$0xf]
  %v153 = vld [vmem:[%s2 + $0x180] sm:$0xf]
  %v154 = vld [vmem:[%s2 + $0x184] sm:$0xf]
  %v155 = vld [vmem:[%s2 + $0x188] sm:$0xf]
  %v156 = vld [vmem:[%s2 + $0x18c] sm:$0xf]
  %v157 = vld [vmem:[%s2 + $0x190] sm:$0xf]
  %v158 = vld [vmem:[%s2 + $0x194] sm:$0xf]
  %v159 = vld [vmem:[%s2 + $0x198] sm:$0xf]
  %v160 = vld [vmem:[%s2 + $0x19c] sm:$0xf]
  %v161 = vld [vmem:[%s2 + $0x1a0] sm:$0xf]
  %v162 = vld [vmem:[%s2 + $0x1a4] sm:$0xf]
  %v163 = vld [vmem:[%s2 + $0x1a8] sm:$0xf]
  %v164 = vld [vmem:[%s2 + $0x1ac] sm:$0xf]
  %v165 = vld [vmem:[%s2 + $0x1b0] sm:$0xf]
  %v166 = vld [vmem:[%s2 + $0x1b4] sm:$0xf]
  %v167 = vld [vmem:[%s2 + $0x1b8] sm:$0xf]
  %v168 = vld [vmem:[%s2 + $0x1bc] sm:$0xf]
  %v169 = vld [vmem:[%s2 + $0x1c0] sm:$0xf]
  %v170 = vld [vmem:[%s2 + $0x1c4] sm:$0xf]
  %v171 = vld [vmem:[%s2 + $0x1c8] sm:$0xf]
  %v172 = vld [vmem:[%s2 + $0x1cc] sm:$0xf]
  %v173 = vld [vmem:[%s2 + $0x1d0] sm:$0xf]
  %v174 = vld [vmem:[%s2 + $0x1d4] sm:$0xf]
  %v175 = vld [vmem:[%s2 + $0x1d8] sm:$0xf]
  %v176 = vld [vmem:[%s2 + $0x1dc] sm:$0xf]
  %v177 = vld [vmem:[%s2 + $0x1e0] sm:$0xf]
  %v178 = vld [vmem:[%s2 + $0x1e4] sm:$0xf]
  %v179 = vld [vmem:[%s2 + $0x1e8] sm:$0xf]
  %v180 = vld [vmem:[%s2 + $0x1ec] sm:$0xf]
  %v181 = vld [vmem:[%s2 + $0x1f0] sm:$0xf]
  %v182 = vld [vmem:[%s2 + $0x1f4] sm:$0xf]
  %v183 = vld [vmem:[%s2 + $0x1f8] sm:$0xf]
  %v184 = vld [vmem:[%s2 + $0x1fc] sm:$0xf]
  %v185 = vld [vmem:[%s2 + $0x200] sm:$0xf]
  %v186 = vld [vmem:[%s2 + $0x204] sm:$0xf]
  %v187 = vld [vmem:[%s2 + $0x208] sm:$0xf]
  %v188 = vld [vmem:[%s2 + $0x20c] sm:$0xf]
  %v189 = vld [vmem:[%s2 + $0x210] sm:$0xf]
  %v190 = vld [vmem:[%s2 + $0x214] sm:$0xf]
  %v191 = vld [vmem:[%s2 + $0x218] sm:$0xf]
  %v192 = vld [vmem:[%s2 + $0x21c] sm:$0xf]
  %v193 = vld [vmem:[%s2 + $0x220] sm:$0xf]
  %v194 = vld [vmem:[%s2 + $0x224] sm:$0xf]
  %v195 = vld [vmem:[%s2 + $0x228] sm:$0xf]
  %v196 = vld [vmem:[%s2 + $0x22c] sm:$0xf]
  %v197 = vld [vmem:[%s2 + $0x230] sm:$0xf]
  %v198 = vld [vmem:[%s2 + $0x234] sm:$0xf]
  %v199 = vld [vmem:[%s2 + $0x238] sm:$0xf]
  %v200 = vld [vmem:[%s2 + $0x23c] sm:$0xf]
  %v201 = vld [vmem:[%s2 + $0x240] sm:$0xf]
  %v202 = vld [vmem:[%s2 + $0x244] sm:$0xf]
  %v203 = vld [vmem:[%s2 + $0x248] sm:$0xf]
  %v204 = vld [vmem:[%s2 + $0x24c] sm:$0xf]
  %v205 = vld [vmem:[%s2 + $0x250] sm:$0xf]
  %v206 = vld [vmem:[%s2 + $0x254] sm:$0xf]
  %v207 = vld [vmem:[%s2 + $0x258] sm:$0xf]
  %v208 = vld [vmem:[%s2 + $0x25c] sm:$0xf]
  %v209 = vld [vmem:[%s2 + $0x260] sm:$0xf]
  %v210 = vld [vmem:[%s2 + $0x264] sm:$0xf]
  %v211 = vld [vmem:[%s2 + $0x268] sm:$0xf]
  %v212 = vld [vmem:[%s2 + $0x26c] sm:$0xf]
  %v213 = vld [vmem:[%s2 + $0x270] sm:$0xf]
  %v214 = vld [vmem:[%s2 + $0x274] sm:$0xf]
  %v215 = vld [vmem:[%s2 + $0x278] sm:$0xf]
  %v216 = vld [vmem:[%s2 + $0x27c] sm:$0xf]
  %v217 = vld [vmem:[%s2 + $0x280] sm:$0xf]
  %v218 = vld [vmem:[%s2 + $0x284] sm:$0xf]
  %v219 = vld [vmem:[%s2 + $0x288] sm:$0xf]
  %v220 = vld [vmem:[%s2 + $0x28c] sm:$0xf]
  %v221 = vld [vmem:[%s2 + $0x290] sm:$0xf]
  %v222 = vld [vmem:[%s2 + $0x294] sm:$0xf]
  %v223 = vld [vmem:[%s2 + $0x298] sm:$0xf]
  %v224 = vld [vmem:[%s2 + $0x29c] sm:$0xf]
  %v225 = vld [vmem:[%s2 + $0x2a0] sm:$0xf]
  %v226 = vld [vmem:[%s2 + $0x2a4] sm:$0xf]
  %v227 = vld [vmem:[%s2 + $0x2a8] sm:$0xf]
  %v228 = vld [vmem:[%s2 + $0x2ac] sm:$0xf]
  %v229 = vld [vmem:[%s2 + $0x2b0] sm:$0xf]
  %v230 = vld [vmem:[%s2 + $0x2b4] sm:$0xf]
  %v231 = vld [vmem:[%s2 + $0x2b8] sm:$0xf]
  %v232 = vld [vmem:[%s2 + $0x2bc] sm:$0xf]
  %v233 = vld [vmem:[%s2 + $0x2c0] sm:$0xf]
  %v234 = vld [vmem:[%s2 + $0x2c4] sm:$0xf]
  %v235 = vld [vmem:[%s2 + $0x2c8] sm:$0xf]
  %v236 = vld [vmem:[%s2 + $0x2cc] sm:$0xf]
  %v237 = vld [vmem:[%s2 + $0x2d0] sm:$0xf]
  %v238 = vld [vmem:[%s2 + $0x2d4] sm:$0xf]
  %v239 = vld [vmem:[%s2 + $0x2d8] sm:$0xf]
  %v240 = vld [vmem:[%s2 + $0x2dc] sm:$0xf]
  %v241 = vld [vmem:[%s2 + $0x2e0] sm:$0xf]
  %v242 = vld [vmem:[%s2 + $0x2e4] sm:$0xf]
  %v243 = vld [vmem:[%s2 + $0x2e8] sm:$0xf]
  %v244 = vld [vmem:[%s2 + $0x2ec] sm:$0xf]
  %v245 = vld [vmem:[%s2 + $0x2f0] sm:$0xf]
  %v246 = vld [vmem:[%s2 + $0x2f4] sm:$0xf]
  %v247 = vld [vmem:[%s2 + $0x2f8] sm:$0xf]
  %v248 = vld [vmem:[%s2 + $0x2fc] sm:$0xf]
  %v249 = vld [vmem:[%s2 + $0x300] sm:$0xf]
  %v250 = vld [vmem:[%s2 + $0x304] sm:$0xf]
  %v251 = vld [vmem:[%s2 + $0x308] sm:$0xf]
  %v252 = vld [vmem:[%s2 + $0x30c] sm:$0xf]
  %v253 = vld [vmem:[%s2 + $0x310] sm:$0xf]
  %v254 = vld [vmem:[%s2 + $0x314] sm:$0xf]
  %v255 = vld [vmem:[%s2 + $0x318] sm:$0xf]
  %v256 = vld [vmem:[%s2 + $0x31c] sm:$0xf]
  %v257 = vld [vmem:[%s2 + $0x320] sm:$0xf]
  %v258 = vld [vmem:[%s2 + $0x324] sm:$0xf]
  %v259 = vld [vmem:[%s2 + $0x328] sm:$0xf]
  %v260 = vld [vmem:[%s2 + $0x32c] sm:$0xf]
  %v261 = vld [vmem:[%s2 + $0x330] sm:$0xf]
  %v262 = vld [vmem:[%s2 + $0x334] sm:$0xf]
  %v263 = vld [vmem:[%s2 + $0x338] sm:$0xf]
  %v264 = vld [vmem:[%s2 + $0x33c] sm:$0xf]
  %v265 = vld [vmem:[%s2 + $0x340] sm:$0xf]
  %v266 = vld [vmem:[%s2 + $0x344] sm:$0xf]
  %v267 = vld [vmem:[%s2 + $0x348] sm:$0xf]
  %v268 = vld [vmem:[%s2 + $0x34c] sm:$0xf]
  %v269 = vld [vmem:[%s2 + $0x350] sm:$0xf]
  %v270 = vld [vmem:[%s2 + $0x354] sm:$0xf]
  %v271 = vld [vmem:[%s2 + $0x358] sm:$0xf]
  %v272 = vld [vmem:[%s2 + $0x35c] sm:$0xf]
  %v273 = vld [vmem:[%s2 + $0x360] sm:$0xf]
  %v274 = vld [vmem:[%s2 + $0x364] sm:$0xf]
  %v275 = vld [vmem:[%s2 + $0x368] sm:$0xf]
  %v276 = vld [vmem:[%s2 + $0x36c] sm:$0xf]
  %v277 = vld [vmem:[%s2 + $0x370] sm:$0xf]
  %v278 = vld [vmem:[%s2 + $0x374] sm:$0xf]
  %v279 = vld [vmem:[%s2 + $0x378] sm:$0xf]
  %v280 = vld [vmem:[%s2 + $0x37c] sm:$0xf]
  %v281 = vld [vmem:[%s2 + $0x380] sm:$0xf]
  %v282 = vld [vmem:[%s2 + $0x384] sm:$0xf]
  %v283 = vld [vmem:[%s2 + $0x388] sm:$0xf]
  %v284 = vld [vmem:[%s2 + $0x38c] sm:$0xf]
  %v285 = vld [vmem:[%s2 + $0x390] sm:$0xf]
  %v286 = vld [vmem:[%s2 + $0x394] sm:$0xf]
  %v287 = vld [vmem:[%s2 + $0x398] sm:$0xf]
  %v288 = vld [vmem:[%s2 + $0x39c] sm:$0xf]
  %v289 = vld [vmem:[%s2 + $0x3a0] sm:$0xf]
  %v290 = vld [vmem:[%s2 + $0x3a4] sm:$0xf]
  %v291 = vld [vmem:[%s2 + $0x3a8] sm:$0xf]
  %v292 = vld [vmem:[%s2 + $0x3ac] sm:$0xf]
  %v293 = vld [vmem:[%s2 + $0x3b0] sm:$0xf]
  %v294 = vld [vmem:[%s2 + $0x3b4] sm:$0xf]
  %v295 = vld [vmem:[%s2 + $0x3b8] sm:$0xf]
  %v296 = vld [vmem:[%s2 + $0x3bc] sm:$0xf]
  %v297 = vld [vmem:[%s2 + $0x3c0] sm:$0xf]
  %v298 = vld [vmem:[%s2 + $0x3c4] sm:$0xf]
  %v299 = vld [vmem:[%s2 + $0x3c8] sm:$0xf]
  %v300 = vld [vmem:[%s2 + $0x3cc] sm:$0xf]
  %v301 = vld [vmem:[%s2 + $0x3d0] sm:$0xf]
  %v302 = vld [vmem:[%s2 + $0x3d4] sm:$0xf]
  %v303 = vld [vmem:[%s2 + $0x3d8] sm:$0xf]
  %v304 = vld [vmem:[%s2 + $0x3dc] sm:$0xf]
  %v305 = vld [vmem:[%s2 + $0x3e0] sm:$0xf]
  %v306 = vld [vmem:[%s2 + $0x3e4] sm:$0xf]
  %v307 = vld [vmem:[%s2 + $0x3e8] sm:$0xf]
  %v308 = vld [vmem:[%s2 + $0x3ec] sm:$0xf]
  %v309 = vld [vmem:[%s2 + $0x3f0] sm:$0xf]
  %v310 = vld [vmem:[%s2 + $0x3f4] sm:$0xf]
  %v311 = vld [vmem:[%s2 + $0x3f8] sm:$0xf]
  %v312 = vld [vmem:[%s2 + $0x3fc] sm:$0xf]
  %v313 = vld [vmem:[%s2 + $0x400] sm:$0xf]
  %v314 = vld [vmem:[%s2 + $0x404] sm:$0xf]
  %v315 = vld [vmem:[%s2 + $0x408] sm:$0xf]
  %v316 = vld [vmem:[%s2 + $0x40c] sm:$0xf]
  %v317 = vld [vmem:[%s2 + $0x410] sm:$0xf]
  %v318 = vld [vmem:[%s2 + $0x414] sm:$0xf]
  %v319 = vld [vmem:[%s2 + $0x418] sm:$0xf]
  %v320 = vld [vmem:[%s2 + $0x41c] sm:$0xf]
  %v321 = vld [vmem:[%s2 + $0x420] sm:$0xf]
  %v322 = vld [vmem:[%s2 + $0x424] sm:$0xf]
  %v323 = vld [vmem:[%s2 + $0x428] sm:$0xf]
  %v324 = vld [vmem:[%s2 + $0x42c] sm:$0xf]
  %v325 = vld [vmem:[%s2 + $0x430] sm:$0xf]
  %v326 = vld [vmem:[%s2 + $0x434] sm:$0xf]
  %v327 = vld [vmem:[%s2 + $0x438] sm:$0xf]
  %v328 = vld [vmem:[%s2 + $0x43c] sm:$0xf]
  %v329 = vld [vmem:[%s2 + $0x440] sm:$0xf]
  %v330 = vld [vmem:[%s2 + $0x444] sm:$0xf]
  %v331 = vld [vmem:[%s2 + $0x448] sm:$0xf]
  %v332 = vld [vmem:[%s2 + $0x44c] sm:$0xf]
  %v333 = vld [vmem:[%s2 + $0x450] sm:$0xf]
  %v334 = vld [vmem:[%s2 + $0x454] sm:$0xf]
  %v335 = vld [vmem:[%s2 + $0x458] sm:$0xf]
  %v336 = vld [vmem:[%s2 + $0x45c] sm:$0xf]
  %v337 = vld [vmem:[%s2 + $0x460] sm:$0xf]
  %v338 = vld [vmem:[%s2 + $0x464] sm:$0xf]
  %v339 = vld [vmem:[%s2 + $0x468] sm:$0xf]
  %v340 = vld [vmem:[%s2 + $0x46c] sm:$0xf]
  %v341 = vld [vmem:[%s2 + $0x470] sm:$0xf]
  %v342 = vld [vmem:[%s2 + $0x474] sm:$0xf]
  %v343 = vld [vmem:[%s2 + $0x478] sm:$0xf]
  %v344 = vld [vmem:[%s2 + $0x47c] sm:$0xf]
  %v345 = vld [vmem:[%s1] sm:$0xf]
  %v346 = vld [vmem:[%s1 + $0x4] sm:$0xf]
  %v347 = vld [vmem:[%s3] sm:$0xf]
  %v348 = vld [vmem:[%s3 + $0x4] sm:$0xf]
  %v351 = vunpack.c.l.b16 %v345
  %v352 = vunpack.c.l.b16 %v346
  %v353 = vpack.c.b16 %v352, %v351
  %v356 = vunpack.c.l.b16 %v347
  %v357 = vunpack.c.l.b16 %v348
  %v358 = vpack.c.b16 %v357, %v356
  %vm360 = vcmask 130048
  %v362 = vsel %vm360, %v353, 0
  %364 = vmatprep.subr.bf16.mxu0 0
  %365 = vmatpush1.bf16.msra.mxu0 %v358
  %366 = vmatprep.subr.bf16.mxu0 0
  %367 = vmatpush1.bf16.msra.mxu0 0
  %368 = vmatprep.subr.bf16.mxu0 0
  %369 = vmatpush1.bf16.msra.mxu0 0
  %370 = vmatprep.subr.bf16.mxu0 0
  %371 = vmatpush1.bf16.msra.mxu0 0
  %372 = vmatprep.subr.bf16.mxu0 0
  %373 = vmatpush1.bf16.msra.mxu0 0
  %374 = vmatprep.subr.bf16.mxu0 0
  %375 = vmatpush1.bf16.msra.mxu0 0
  %376 = vmatprep.subr.bf16.mxu0 0
  %377 = vmatpush1.bf16.msra.mxu0 0
  %378 = vmatprep.subr.bf16.mxu0 0
  %379 = vmatpush1.bf16.msra.mxu0 0
  %380 = vmatprep.subr.bf16.mxu0 0
  %381 = vmatpush1.bf16.msra.mxu0 0
  %382 = vmatprep.subr.bf16.mxu0 0
  %383 = vmatpush1.bf16.msra.mxu0 0
  %384 = vmatprep.subr.bf16.mxu0 0
  %385 = vmatpush1.bf16.msra.mxu0 0
  %386 = vmatprep.subr.bf16.mxu0 0
  %387 = vmatpush1.bf16.msra.mxu0 0
  %388 = vmatprep.subr.bf16.mxu0 0
  %389 = vmatpush1.bf16.msra.mxu0 0
  %390 = vmatprep.subr.bf16.mxu0 0
  %391 = vmatpush1.bf16.msra.mxu0 0
  %392 = vmatprep.subr.bf16.mxu0 0
  %393 = vmatpush1.bf16.msra.mxu0 0
  %394 = vmatprep.subr.bf16.mxu0 0
  %395 = vmatpush1.bf16.msra.mxu0 0
  %396 = vmatprep.mubr.bf16.mxu0 0
  %397 = vmatmul.mubr.bf16.gmra.mrb[0].mxu0 %v362
  %v398 = vpop.f32.mrb[0].mxu0
  %v399 = vadd.f32 0.0, %v398
  %v400 = vpop.f32.mrb[0].mxu0
  %v401 = vpop.f32.mrb[0].mxu0
  %v402 = vadd.f32 0.0, %v401
  %v403 = vpop.f32.mrb[0].mxu0
  %404 = vdwg.mxu0
  %v423 = vunpack.c.l.b16 %v39
  %v424 = vunpack.c.h.b16 %v39
  %v425 = vunpack.c.l.b16 %v40
  %v426 = vunpack.c.h.b16 %v40
  %v427 = vunpack.c.l.b16 %v41
  %v428 = vunpack.c.h.b16 %v41
  %v429 = vunpack.c.l.b16 %v42
  %v430 = vunpack.c.h.b16 %v42
  %v431 = vunpack.c.l.b16 %v43
  %v432 = vunpack.c.h.b16 %v43
  %v433 = vunpack.c.l.b16 %v44
  %v434 = vunpack.c.h.b16 %v44
  %v435 = vunpack.c.l.b16 %v45
  %v436 = vunpack.c.h.b16 %v45
  %v437 = vunpack.c.l.b16 %v46
  %v438 = vunpack.c.h.b16 %v46
  %v439 = vunpack.c.l.b16 %v47
  %v440 = vunpack.c.h.b16 %v47
  %v441 = vunpack.c.l.b16 %v48
  %v442 = vunpack.c.h.b16 %v48
  %v443 = vunpack.c.l.b16 %v49
  %v444 = vunpack.c.h.b16 %v49
  %v445 = vunpack.c.l.b16 %v50
  %v446 = vunpack.c.h.b16 %v50
  %v447 = vunpack.c.l.b16 %v51
  %v448 = vunpack.c.h.b16 %v51
  %v449 = vunpack.c.l.b16 %v52
  %v450 = vunpack.c.h.b16 %v52
  %v451 = vunpack.c.l.b16 %v53
  %v452 = vunpack.c.h.b16 %v53
  %v453 = vunpack.c.l.b16 %v54
  %v454 = vunpack.c.h.b16 %v54
  %v455 = vunpack.c.l.b16 %v55
  %v456 = vunpack.c.h.b16 %v55
  %v457 = vunpack.c.l.b16 %v56
  %v458 = vunpack.c.h.b16 %v56
  %v459 = vpack.c.b16 %v441, %v423
  %v460 = vpack.c.b16 %v442, %v424
  %v461 = vpack.c.b16 %v443, %v425
  %v462 = vpack.c.b16 %v444, %v426
  %v463 = vpack.c.b16 %v445, %v427
  %v464 = vpack.c.b16 %v446, %v428
  %v465 = vpack.c.b16 %v447, %v429
  %v466 = vpack.c.b16 %v448, %v430
  %v467 = vpack.c.b16 %v449, %v431
  %v468 = vpack.c.b16 %v450, %v432
  %v469 = vpack.c.b16 %v451, %v433
  %v470 = vpack.c.b16 %v452, %v434
  %v471 = vpack.c.b16 %v453, %v435
  %v472 = vpack.c.b16 %v454, %v436
  %v473 = vpack.c.b16 %v455, %v437
  %v474 = vpack.c.b16 %v456, %v438
  %v475 = vpack.c.b16 %v457, %v439
  %v476 = vpack.c.b16 %v458, %v440
  %v783 = vunpack.c.l.b16 %v57
  %v784 = vunpack.c.l.b16 %v58
  %v785 = vunpack.c.l.b16 %v59
  %v786 = vunpack.c.l.b16 %v60
  %v787 = vunpack.c.l.b16 %v61
  %v788 = vunpack.c.l.b16 %v62
  %v789 = vunpack.c.l.b16 %v63
  %v790 = vunpack.c.l.b16 %v64
  %v791 = vunpack.c.l.b16 %v65
  %v792 = vunpack.c.l.b16 %v66
  %v793 = vunpack.c.l.b16 %v67
  %v794 = vunpack.c.l.b16 %v68
  %v795 = vunpack.c.l.b16 %v69
  %v796 = vunpack.c.l.b16 %v70
  %v797 = vunpack.c.l.b16 %v71
  %v798 = vunpack.c.l.b16 %v72
  %v799 = vunpack.c.l.b16 %v73
  %v800 = vunpack.c.l.b16 %v74
  %v801 = vunpack.c.l.b16 %v75
  %v802 = vunpack.c.l.b16 %v76
  %v803 = vunpack.c.l.b16 %v77
  %v804 = vunpack.c.l.b16 %v78
  %v805 = vunpack.c.l.b16 %v79
  %v806 = vunpack.c.l.b16 %v80
  %v807 = vunpack.c.l.b16 %v81
  %v808 = vunpack.c.l.b16 %v82
  %v809 = vunpack.c.l.b16 %v83
  %v810 = vunpack.c.l.b16 %v84
  %v811 = vunpack.c.l.b16 %v85
  %v812 = vunpack.c.l.b16 %v86
  %v813 = vunpack.c.l.b16 %v87
  %v814 = vunpack.c.l.b16 %v88
  %v815 = vunpack.c.l.b16 %v89
  %v816 = vunpack.c.l.b16 %v90
  %v817 = vunpack.c.l.b16 %v91
  %v818 = vunpack.c.l.b16 %v92
  %v819 = vunpack.c.l.b16 %v93
  %v820 = vunpack.c.l.b16 %v94
  %v821 = vunpack.c.l.b16 %v95
  %v822 = vunpack.c.l.b16 %v96
  %v823 = vunpack.c.l.b16 %v97
  %v824 = vunpack.c.l.b16 %v98
  %v825 = vunpack.c.l.b16 %v99
  %v826 = vunpack.c.l.b16 %v100
  %v827 = vunpack.c.l.b16 %v101
  %v828 = vunpack.c.l.b16 %v102
  %v829 = vunpack.c.l.b16 %v103
  %v830 = vunpack.c.l.b16 %v104
  %v831 = vunpack.c.l.b16 %v105
  %v832 = vunpack.c.l.b16 %v106
  %v833 = vunpack.c.l.b16 %v107
  %v834 = vunpack.c.l.b16 %v108
  %v835 = vunpack.c.l.b16 %v109
  %v836 = vunpack.c.l.b16 %v110
  %v837 = vunpack.c.l.b16 %v111
  %v838 = vunpack.c.l.b16 %v112
  %v839 = vunpack.c.l.b16 %v113
  %v840 = vunpack.c.l.b16 %v114
  %v841 = vunpack.c.l.b16 %v115
  %v842 = vunpack.c.l.b16 %v116
  %v843 = vunpack.c.l.b16 %v117
  %v844 = vunpack.c.l.b16 %v118
  %v845 = vunpack.c.l.b16 %v119
  %v846 = vunpack.c.l.b16 %v120
  %v847 = vunpack.c.l.b16 %v121
  %v848 = vunpack.c.l.b16 %v122
  %v849 = vunpack.c.l.b16 %v123
  %v850 = vunpack.c.l.b16 %v124
  %v851 = vunpack.c.l.b16 %v125
  %v852 = vunpack.c.l.b16 %v126
  %v853 = vunpack.c.l.b16 %v127
  %v854 = vunpack.c.l.b16 %v128
  %v855 = vunpack.c.l.b16 %v129
  %v856 = vunpack.c.l.b16 %v130
  %v857 = vunpack.c.l.b16 %v131
  %v858 = vunpack.c.l.b16 %v132
  %v859 = vunpack.c.l.b16 %v133
  %v860 = vunpack.c.l.b16 %v134
  %v861 = vunpack.c.l.b16 %v135
  %v862 = vunpack.c.l.b16 %v136
  %v863 = vunpack.c.l.b16 %v137
  %v864 = vunpack.c.l.b16 %v138
  %v865 = vunpack.c.l.b16 %v139
  %v866 = vunpack.c.l.b16 %v140
  %v867 = vunpack.c.l.b16 %v141
  %v868 = vunpack.c.l.b16 %v142
  %v869 = vunpack.c.l.b16 %v143
  %v870 = vunpack.c.l.b16 %v144
  %v871 = vunpack.c.l.b16 %v145
  %v872 = vunpack.c.l.b16 %v146
  %v873 = vunpack.c.l.b16 %v147
  %v874 = vunpack.c.l.b16 %v148
  %v875 = vunpack.c.l.b16 %v149
  %v876 = vunpack.c.l.b16 %v150
  %v877 = vunpack.c.l.b16 %v151
  %v878 = vunpack.c.l.b16 %v152
  %v879 = vunpack.c.l.b16 %v153
  %v880 = vunpack.c.l.b16 %v154
  %v881 = vunpack.c.l.b16 %v155
  %v882 = vunpack.c.l.b16 %v156
  %v883 = vunpack.c.l.b16 %v157
  %v884 = vunpack.c.l.b16 %v158
  %v885 = vunpack.c.l.b16 %v159
  %v886 = vunpack.c.l.b16 %v160
  %v887 = vunpack.c.l.b16 %v161
  %v888 = vunpack.c.l.b16 %v162
  %v889 = vunpack.c.l.b16 %v163
  %v890 = vunpack.c.l.b16 %v164
  %v891 = vunpack.c.l.b16 %v165
  %v892 = vunpack.c.l.b16 %v166
  %v893 = vunpack.c.l.b16 %v167
  %v894 = vunpack.c.l.b16 %v168
  %v895 = vunpack.c.l.b16 %v169
  %v896 = vunpack.c.l.b16 %v170
  %v897 = vunpack.c.l.b16 %v171
  %v898 = vunpack.c.l.b16 %v172
  %v899 = vunpack.c.l.b16 %v173
  %v900 = vunpack.c.l.b16 %v174
  %v901 = vunpack.c.l.b16 %v175
  %v902 = vunpack.c.l.b16 %v176
  %v903 = vunpack.c.l.b16 %v177
  %v904 = vunpack.c.l.b16 %v178
  %v905 = vunpack.c.l.b16 %v179
  %v906 = vunpack.c.l.b16 %v180
  %v907 = vunpack.c.l.b16 %v181
  %v908 = vunpack.c.l.b16 %v182
  %v909 = vunpack.c.l.b16 %v183
  %v910 = vunpack.c.l.b16 %v184
  %v911 = vunpack.c.l.b16 %v185
  %v912 = vunpack.c.l.b16 %v186
  %v913 = vunpack.c.l.b16 %v187
  %v914 = vunpack.c.l.b16 %v188
  %v915 = vunpack.c.l.b16 %v189
  %v916 = vunpack.c.l.b16 %v190
  %v917 = vunpack.c.l.b16 %v191
  %v918 = vunpack.c.l.b16 %v192
  %v919 = vunpack.c.l.b16 %v193
  %v920 = vunpack.c.l.b16 %v194
  %v921 = vunpack.c.l.b16 %v195
  %v922 = vunpack.c.l.b16 %v196
  %v923 = vunpack.c.l.b16 %v197
  %v924 = vunpack.c.l.b16 %v198
  %v925 = vunpack.c.l.b16 %v199
  %v926 = vunpack.c.l.b16 %v200
  %v927 = vunpack.c.l.b16 %v201
  %v928 = vunpack.c.l.b16 %v202
  %v929 = vunpack.c.l.b16 %v203
  %v930 = vunpack.c.l.b16 %v204
  %v931 = vunpack.c.l.b16 %v205
  %v932 = vunpack.c.l.b16 %v206
  %v933 = vunpack.c.l.b16 %v207
  %v934 = vunpack.c.l.b16 %v208
  %v935 = vunpack.c.l.b16 %v209
  %v936 = vunpack.c.l.b16 %v210
  %v937 = vunpack.c.l.b16 %v211
  %v938 = vunpack.c.l.b16 %v212
  %v939 = vunpack.c.l.b16 %v213
  %v940 = vunpack.c.l.b16 %v214
  %v941 = vunpack.c.l.b16 %v215
  %v942 = vunpack.c.l.b16 %v216
  %v943 = vunpack.c.l.b16 %v217
  %v944 = vunpack.c.l.b16 %v218
  %v945 = vunpack.c.l.b16 %v219
  %v946 = vunpack.c.l.b16 %v220
  %v947 = vunpack.c.l.b16 %v221
  %v948 = vunpack.c.l.b16 %v222
  %v949 = vunpack.c.l.b16 %v223
  %v950 = vunpack.c.l.b16 %v224
  %v951 = vunpack.c.l.b16 %v225
  %v952 = vunpack.c.l.b16 %v226
  %v953 = vunpack.c.l.b16 %v227
  %v954 = vunpack.c.l.b16 %v228
  %v955 = vunpack.c.l.b16 %v229
  %v956 = vunpack.c.l.b16 %v230
  %v957 = vunpack.c.l.b16 %v231
  %v958 = vunpack.c.l.b16 %v232
  %v959 = vunpack.c.l.b16 %v233
  %v960 = vunpack.c.l.b16 %v234
  %v961 = vunpack.c.l.b16 %v235
  %v962 = vunpack.c.l.b16 %v236
  %v963 = vunpack.c.l.b16 %v237
  %v964 = vunpack.c.l.b16 %v238
  %v965 = vunpack.c.l.b16 %v239
  %v966 = vunpack.c.l.b16 %v240
  %v967 = vunpack.c.l.b16 %v241
  %v968 = vunpack.c.l.b16 %v242
  %v969 = vunpack.c.l.b16 %v243
  %v970 = vunpack.c.l.b16 %v244
  %v971 = vunpack.c.l.b16 %v245
  %v972 = vunpack.c.l.b16 %v246
  %v973 = vunpack.c.l.b16 %v247
  %v974 = vunpack.c.l.b16 %v248
  %v975 = vunpack.c.l.b16 %v249
  %v976 = vunpack.c.l.b16 %v250
  %v977 = vunpack.c.l.b16 %v251
  %v978 = vunpack.c.l.b16 %v252
  %v979 = vunpack.c.l.b16 %v253
  %v980 = vunpack.c.l.b16 %v254
  %v981 = vunpack.c.l.b16 %v255
  %v982 = vunpack.c.l.b16 %v256
  %v983 = vunpack.c.l.b16 %v257
  %v984 = vunpack.c.l.b16 %v258
  %v985 = vunpack.c.l.b16 %v259
  %v986 = vunpack.c.l.b16 %v260
  %v987 = vunpack.c.l.b16 %v261
  %v988 = vunpack.c.l.b16 %v262
  %v989 = vunpack.c.l.b16 %v263
  %v990 = vunpack.c.l.b16 %v264
  %v991 = vunpack.c.l.b16 %v265
  %v992 = vunpack.c.l.b16 %v266
  %v993 = vunpack.c.l.b16 %v267
  %v994 = vunpack.c.l.b16 %v268
  %v995 = vunpack.c.l.b16 %v269
  %v996 = vunpack.c.l.b16 %v270
  %v997 = vunpack.c.l.b16 %v271
  %v998 = vunpack.c.l.b16 %v272
  %v999 = vunpack.c.l.b16 %v273
  %v1000 = vunpack.c.l.b16 %v274
  %v1001 = vunpack.c.l.b16 %v275
  %v1002 = vunpack.c.l.b16 %v276
  %v1003 = vunpack.c.l.b16 %v277
  %v1004 = vunpack.c.l.b16 %v278
  %v1005 = vunpack.c.l.b16 %v279
  %v1006 = vunpack.c.l.b16 %v280
  %v1007 = vunpack.c.l.b16 %v281
  %v1008 = vunpack.c.l.b16 %v282
  %v1009 = vunpack.c.l.b16 %v283
  %v1010 = vunpack.c.l.b16 %v284
  %v1011 = vunpack.c.l.b16 %v285
  %v1012 = vunpack.c.l.b16 %v286
  %v1013 = vunpack.c.l.b16 %v287
  %v1014 = vunpack.c.l.b16 %v288
  %v1015 = vunpack.c.l.b16 %v289
  %v1016 = vunpack.c.l.b16 %v290
  %v1017 = vunpack.c.l.b16 %v291
  %v1018 = vunpack.c.l.b16 %v292
  %v1019 = vunpack.c.l.b16 %v293
  %v1020 = vunpack.c.l.b16 %v294
  %v1021 = vunpack.c.l.b16 %v295
  %v1022 = vunpack.c.l.b16 %v296
  %v1023 = vunpack.c.l.b16 %v297
  %v1024 = vunpack.c.l.b16 %v298
  %v1025 = vunpack.c.l.b16 %v299
  %v1026 = vunpack.c.l.b16 %v300
  %v1027 = vunpack.c.l.b16 %v301
  %v1028 = vunpack.c.l.b16 %v302
  %v1029 = vunpack.c.l.b16 %v303
  %v1030 = vunpack.c.l.b16 %v304
  %v1031 = vunpack.c.l.b16 %v305
  %v1032 = vunpack.c.l.b16 %v306
  %v1033 = vunpack.c.l.b16 %v307
  %v1034 = vunpack.c.l.b16 %v308
  %v1035 = vunpack.c.l.b16 %v309
  %v1036 = vunpack.c.l.b16 %v310
  %v1037 = vunpack.c.l.b16 %v311
  %v1038 = vunpack.c.l.b16 %v312
  %v1039 = vunpack.c.l.b16 %v313
  %v1040 = vunpack.c.l.b16 %v314
  %v1041 = vunpack.c.l.b16 %v315
  %v1042 = vunpack.c.l.b16 %v316
  %v1043 = vunpack.c.l.b16 %v317
  %v1044 = vunpack.c.l.b16 %v318
  %v1045 = vunpack.c.l.b16 %v319
  %v1046 = vunpack.c.l.b16 %v320
  %v1047 = vunpack.c.l.b16 %v321
  %v1048 = vunpack.c.l.b16 %v322
  %v1049 = vunpack.c.l.b16 %v323
  %v1050 = vunpack.c.l.b16 %v324
  %v1051 = vunpack.c.l.b16 %v325
  %v1052 = vunpack.c.l.b16 %v326
  %v1053 = vunpack.c.l.b16 %v327
  %v1054 = vunpack.c.l.b16 %v328
  %v1055 = vunpack.c.l.b16 %v329
  %v1056 = vunpack.c.l.b16 %v330
  %v1057 = vunpack.c.l.b16 %v331
  %v1058 = vunpack.c.l.b16 %v332
  %v1059 = vunpack.c.l.b16 %v333
  %v1060 = vunpack.c.l.b16 %v334
  %v1061 = vunpack.c.l.b16 %v335
  %v1062 = vunpack.c.l.b16 %v336
  %v1063 = vunpack.c.l.b16 %v337
  %v1064 = vunpack.c.l.b16 %v338
  %v1065 = vunpack.c.l.b16 %v339
  %v1066 = vunpack.c.l.b16 %v340
  %v1067 = vunpack.c.l.b16 %v341
  %v1068 = vunpack.c.l.b16 %v342
  %v1069 = vunpack.c.l.b16 %v343
  %v1070 = vunpack.c.l.b16 %v344
  %v1071 = vpack.c.b16 %v784, %v783
  %v1072 = vpack.c.b16 %v786, %v785
  %v1073 = vpack.c.b16 %v788, %v787
  %v1074 = vpack.c.b16 %v790, %v789
  %v1075 = vpack.c.b16 %v792, %v791
  %v1076 = vpack.c.b16 %v794, %v793
  %v1077 = vpack.c.b16 %v796, %v795
  %v1078 = vpack.c.b16 %v798, %v797
  %v1079 = vpack.c.b16 %v800, %v799
  %v1080 = vpack.c.b16 %v802, %v801
  %v1081 = vpack.c.b16 %v804, %v803
  %v1082 = vpack.c.b16 %v806, %v805
  %v1083 = vpack.c.b16 %v808, %v807
  %v1084 = vpack.c.b16 %v810, %v809
  %v1085 = vpack.c.b16 %v812, %v811
  %v1086 = vpack.c.b16 %v814, %v813
  %v1087 = vpack.c.b16 %v816, %v815
  %v1088 = vpack.c.b16 %v818, %v817
  %v1089 = vpack.c.b16 %v820, %v819
  %v1090 = vpack.c.b16 %v822, %v821
  %v1091 = vpack.c.b16 %v824, %v823
  %v1092 = vpack.c.b16 %v826, %v825
  %v1093 = vpack.c.b16 %v828, %v827
  %v1094 = vpack.c.b16 %v830, %v829
  %v1095 = vpack.c.b16 %v832, %v831
  %v1096 = vpack.c.b16 %v834, %v833
  %v1097 = vpack.c.b16 %v836, %v835
  %v1098 = vpack.c.b16 %v838, %v837
  %v1099 = vpack.c.b16 %v840, %v839
  %v1100 = vpack.c.b16 %v842, %v841
  %v1101 = vpack.c.b16 %v844, %v843
  %v1102 = vpack.c.b16 %v846, %v845
  %v1103 = vpack.c.b16 %v848, %v847
  %v1104 = vpack.c.b16 %v850, %v849
  %v1105 = vpack.c.b16 %v852, %v851
  %v1106 = vpack.c.b16 %v854, %v853
  %v1107 = vpack.c.b16 %v856, %v855
  %v1108 = vpack.c.b16 %v858, %v857
  %v1109 = vpack.c.b16 %v860, %v859
  %v1110 = vpack.c.b16 %v862, %v861
  %v1111 = vpack.c.b16 %v864, %v863
  %v1112 = vpack.c.b16 %v866, %v865
  %v1113 = vpack.c.b16 %v868, %v867
  %v1114 = vpack.c.b16 %v870, %v869
  %v1115 = vpack.c.b16 %v872, %v871
  %v1116 = vpack.c.b16 %v874, %v873
  %v1117 = vpack.c.b16 %v876, %v875
  %v1118 = vpack.c.b16 %v878, %v877
  %v1119 = vpack.c.b16 %v880, %v879
  %v1120 = vpack.c.b16 %v882, %v881
  %v1121 = vpack.c.b16 %v884, %v883
  %v1122 = vpack.c.b16 %v886, %v885
  %v1123 = vpack.c.b16 %v888, %v887
  %v1124 = vpack.c.b16 %v890, %v889
  %v1125 = vpack.c.b16 %v892, %v891
  %v1126 = vpack.c.b16 %v894, %v893
  %v1127 = vpack.c.b16 %v896, %v895
  %v1128 = vpack.c.b16 %v898, %v897
  %v1129 = vpack.c.b16 %v900, %v899
  %v1130 = vpack.c.b16 %v902, %v901
  %v1131 = vpack.c.b16 %v904, %v903
  %v1132 = vpack.c.b16 %v906, %v905
  %v1133 = vpack.c.b16 %v908, %v907
  %v1134 = vpack.c.b16 %v910, %v909
  %v1135 = vpack.c.b16 %v912, %v911
  %v1136 = vpack.c.b16 %v914, %v913
  %v1137 = vpack.c.b16 %v916, %v915
  %v1138 = vpack.c.b16 %v918, %v917
  %v1139 = vpack.c.b16 %v920, %v919
  %v1140 = vpack.c.b16 %v922, %v921
  %v1141 = vpack.c.b16 %v924, %v923
  %v1142 = vpack.c.b16 %v926, %v925
  %v1143 = vpack.c.b16 %v928, %v927
  %v1144 = vpack.c.b16 %v930, %v929
  %v1145 = vpack.c.b16 %v932, %v931
  %v1146 = vpack.c.b16 %v934, %v933
  %v1147 = vpack.c.b16 %v936, %v935
  %v1148 = vpack.c.b16 %v938, %v937
  %v1149 = vpack.c.b16 %v940, %v939
  %v1150 = vpack.c.b16 %v942, %v941
  %v1151 = vpack.c.b16 %v944, %v943
  %v1152 = vpack.c.b16 %v946, %v945
  %v1153 = vpack.c.b16 %v948, %v947
  %v1154 = vpack.c.b16 %v950, %v949
  %v1155 = vpack.c.b16 %v952, %v951
  %v1156 = vpack.c.b16 %v954, %v953
  %v1157 = vpack.c.b16 %v956, %v955
  %v1158 = vpack.c.b16 %v958, %v957
  %v1159 = vpack.c.b16 %v960, %v959
  %v1160 = vpack.c.b16 %v962, %v961
  %v1161 = vpack.c.b16 %v964, %v963
  %v1162 = vpack.c.b16 %v966, %v965
  %v1163 = vpack.c.b16 %v968, %v967
  %v1164 = vpack.c.b16 %v970, %v969
  %v1165 = vpack.c.b16 %v972, %v971
  %v1166 = vpack.c.b16 %v974, %v973
  %v1167 = vpack.c.b16 %v976, %v975
  %v1168 = vpack.c.b16 %v978, %v977
  %v1169 = vpack.c.b16 %v980, %v979
  %v1170 = vpack.c.b16 %v982, %v981
  %v1171 = vpack.c.b16 %v984, %v983
  %v1172 = vpack.c.b16 %v986, %v985
  %v1173 = vpack.c.b16 %v988, %v987
  %v1174 = vpack.c.b16 %v990, %v989
  %v1175 = vpack.c.b16 %v992, %v991
  %v1176 = vpack.c.b16 %v994, %v993
  %v1177 = vpack.c.b16 %v996, %v995
  %v1178 = vpack.c.b16 %v998, %v997
  %v1179 = vpack.c.b16 %v1000, %v999
  %v1180 = vpack.c.b16 %v1002, %v1001
  %v1181 = vpack.c.b16 %v1004, %v1003
  %v1182 = vpack.c.b16 %v1006, %v1005
  %v1183 = vpack.c.b16 %v1008, %v1007
  %v1184 = vpack.c.b16 %v1010, %v1009
  %v1185 = vpack.c.b16 %v1012, %v1011
  %v1186 = vpack.c.b16 %v1014, %v1013
  %v1187 = vpack.c.b16 %v1016, %v1015
  %v1188 = vpack.c.b16 %v1018, %v1017
  %v1189 = vpack.c.b16 %v1020, %v1019
  %v1190 = vpack.c.b16 %v1022, %v1021
  %v1191 = vpack.c.b16 %v1024, %v1023
  %v1192 = vpack.c.b16 %v1026, %v1025
  %v1193 = vpack.c.b16 %v1028, %v1027
  %v1194 = vpack.c.b16 %v1030, %v1029
  %v1195 = vpack.c.b16 %v1032, %v1031
  %v1196 = vpack.c.b16 %v1034, %v1033
  %v1197 = vpack.c.b16 %v1036, %v1035
  %v1198 = vpack.c.b16 %v1038, %v1037
  %v1199 = vpack.c.b16 %v1040, %v1039
  %v1200 = vpack.c.b16 %v1042, %v1041
  %v1201 = vpack.c.b16 %v1044, %v1043
  %v1202 = vpack.c.b16 %v1046, %v1045
  %v1203 = vpack.c.b16 %v1048, %v1047
  %v1204 = vpack.c.b16 %v1050, %v1049
  %v1205 = vpack.c.b16 %v1052, %v1051
  %v1206 = vpack.c.b16 %v1054, %v1053
  %v1207 = vpack.c.b16 %v1056, %v1055
  %v1208 = vpack.c.b16 %v1058, %v1057
  %v1209 = vpack.c.b16 %v1060, %v1059
  %v1210 = vpack.c.b16 %v1062, %v1061
  %v1211 = vpack.c.b16 %v1064, %v1063
  %v1212 = vpack.c.b16 %v1066, %v1065
  %v1213 = vpack.c.b16 %v1068, %v1067
  %v1214 = vpack.c.b16 %v1070, %v1069
  %1359 = vmatprep.subr.bf16.mxu0 0
  %1360 = vmatpush1.bf16.msra.mxu0 %v1071
  %1361 = vmatprep.subr.bf16.mxu0 0
  %1362 = vmatpush1.bf16.msra.mxu0 %v1072
  %1363 = vmatprep.subr.bf16.mxu0 0
  %1364 = vmatpush1.bf16.msra.mxu0 %v1073
  %1365 = vmatprep.subr.bf16.mxu0 0
  %1366 = vmatpush1.bf16.msra.mxu0 %v1074
  %1367 = vmatprep.subr.bf16.mxu0 0
  %1368 = vmatpush1.bf16.msra.mxu0 %v1075
  %1369 = vmatprep.subr.bf16.mxu0 0
  %1370 = vmatpush1.bf16.msra.mxu0 %v1076
  %1371 = vmatprep.subr.bf16.mxu0 0
  %1372 = vmatpush1.bf16.msra.mxu0 %v1077
  %1373 = vmatprep.subr.bf16.mxu0 0
  %1374 = vmatpush1.bf16.msra.mxu0 %v1078
  %1375 = vmatprep.subr.bf16.mxu0 0
  %1376 = vmatpush1.bf16.msra.mxu0 %v1079
  %1377 = vmatprep.subr.bf16.mxu0 0
  %1378 = vmatpush1.bf16.msra.mxu0 %v1080
  %1379 = vmatprep.subr.bf16.mxu0 0
  %1380 = vmatpush1.bf16.msra.mxu0 %v1081
  %1381 = vmatprep.subr.bf16.mxu0 0
  %1382 = vmatpush1.bf16.msra.mxu0 %v1082
  %1383 = vmatprep.subr.bf16.mxu0 0
  %1384 = vmatpush1.bf16.msra.mxu0 %v1083
  %1385 = vmatprep.subr.bf16.mxu0 0
  %1386 = vmatpush1.bf16.msra.mxu0 %v1084
  %1387 = vmatprep.subr.bf16.mxu0 0
  %1388 = vmatpush1.bf16.msra.mxu0 %v1085
  %1389 = vmatprep.subr.bf16.mxu0 0
  %1390 = vmatpush1.bf16.msra.mxu0 %v1086
  %1391 = vmatprep.mubr.bf16.mxu0 %v460
  %1392 = vmatmul.mubr.bf16.gmra.mrb[0].mxu0 %v459
  %v1393 = vpop.f32.mrb[0].mxu0
  %v1394 = vadd.f32 %v399, %v1393
  %v1395 = vpop.f32.mrb[0].mxu0
  %v1396 = vpop.f32.mrb[0].mxu0
  %v1397 = vadd.f32 %v402, %v1396
  %v1398 = vpop.f32.mrb[0].mxu0
  %1399 = vdwg.mxu0
  %1400 = vmatprep.subr.bf16.mxu0 0
  %1401 = vmatpush1.bf16.msra.mxu0 %v1087
  %1402 = vmatprep.subr.bf16.mxu0 0
  %1403 = vmatpush1.bf16.msra.mxu0 %v1088
  %1404 = vmatprep.subr.bf16.mxu0 0
  %1405 = vmatpush1.bf16.msra.mxu0 %v1089
  %1406 = vmatprep.subr.bf16.mxu0 0
  %1407 = vmatpush1.bf16.msra.mxu0 %v1090
  %1408 = vmatprep.subr.bf16.mxu0 0
  %1409 = vmatpush1.bf16.msra.mxu0 %v1091
  %1410 = vmatprep.subr.bf16.mxu0 0
  %1411 = vmatpush1.bf16.msra.mxu0 %v1092
  %1412 = vmatprep.subr.bf16.mxu0 0
  %1413 = vmatpush1.bf16.msra.mxu0 %v1093
  %1414 = vmatprep.subr.bf16.mxu0 0
  %1415 = vmatpush1.bf16.msra.mxu0 %v1094
  %1416 = vmatprep.subr.bf16.mxu0 0
  %1417 = vmatpush1.bf16.msra.mxu0 %v1095
  %1418 = vmatprep.subr.bf16.mxu0 0
  %1419 = vmatpush1.bf16.msra.mxu0 %v1096
  %1420 = vmatprep.subr.bf16.mxu0 0
  %1421 = vmatpush1.bf16.msra.mxu0 %v1097
  %1422 = vmatprep.subr.bf16.mxu0 0
  %1423 = vmatpush1.bf16.msra.mxu0 %v1098
  %1424 = vmatprep.subr.bf16.mxu0 0
  %1425 = vmatpush1.bf16.msra.mxu0 %v1099
  %1426 = vmatprep.subr.bf16.mxu0 0
  %1427 = vmatpush1.bf16.msra.mxu0 %v1100
  %1428 = vmatprep.subr.bf16.mxu0 0
  %1429 = vmatpush1.bf16.msra.mxu0 %v1101
  %1430 = vmatprep.subr.bf16.mxu0 0
  %1431 = vmatpush1.bf16.msra.mxu0 %v1102
  %1432 = vmatprep.mubr.bf16.mxu0 %v462
  %1433 = vmatmul.mubr.bf16.gmra.mrb[0].mxu0 %v461
  %v1434 = vpop.f32.mrb[0].mxu0
  %v1435 = vadd.f32 %v1394, %v1434
  %v1436 = vpop.f32.mrb[0].mxu0
  %v1437 = vpop.f32.mrb[0].mxu0
  %v1438 = vadd.f32 %v1397, %v1437
  %v1439 = vpop.f32.mrb[0].mxu0
  %1440 = vdwg.mxu0
  %1441 = vmatprep.subr.bf16.mxu0 0
  %1442 = vmatpush1.bf16.msra.mxu0 %v1103
  %1443 = vmatprep.subr.bf16.mxu0 0
  %1444 = vmatpush1.bf16.msra.mxu0 %v1104
  %1445 = vmatprep.subr.bf16.mxu0 0
  %1446 = vmatpush1.bf16.msra.mxu0 %v1105
  %1447 = vmatprep.subr.bf16.mxu0 0
  %1448 = vmatpush1.bf16.msra.mxu0 %v1106
  %1449 = vmatprep.subr.bf16.mxu0 0
  %1450 = vmatpush1.bf16.msra.mxu0 %v1107
  %1451 = vmatprep.subr.bf16.mxu0 0
  %1452 = vmatpush1.bf16.msra.mxu0 %v1108
  %1453 = vmatprep.subr.bf16.mxu0 0
  %1454 = vmatpush1.bf16.msra.mxu0 %v1109
  %1455 = vmatprep.subr.bf16.mxu0 0
  %1456 = vmatpush1.bf16.msra.mxu0 %v1110
  %1457 = vmatprep.subr.bf16.mxu0 0
  %1458 = vmatpush1.bf16.msra.mxu0 %v1111
  %1459 = vmatprep.subr.bf16.mxu0 0
  %1460 = vmatpush1.bf16.msra.mxu0 %v1112
  %1461 = vmatprep.subr.bf16.mxu0 0
  %1462 = vmatpush1.bf16.msra.mxu0 %v1113
  %1463 = vmatprep.subr.bf16.mxu0 0
  %1464 = vmatpush1.bf16.msra.mxu0 %v1114
  %1465 = vmatprep.subr.bf16.mxu0 0
  %1466 = vmatpush1.bf16.msra.mxu0 %v1115
  %1467 = vmatprep.subr.bf16.mxu0 0
  %1468 = vmatpush1.bf16.msra.mxu0 %v1116
  %1469 = vmatprep.subr.bf16.mxu0 0
  %1470 = vmatpush1.bf16.msra.mxu0 %v1117
  %1471 = vmatprep.subr.bf16.mxu0 0
  %1472 = vmatpush1.bf16.msra.mxu0 %v1118
  %1473 = vmatprep.mubr.bf16.mxu0 %v464
  %1474 = vmatmul.mubr.bf16.gmra.mrb[0].mxu0 %v463
  %v1475 = vpop.f32.mrb[0].mxu0
  %v1476 = vadd.f32 %v1435, %v1475
  %v1477 = vpop.f32.mrb[0].mxu0
  %v1478 = vpop.f32.mrb[0].mxu0
  %v1479 = vadd.f32 %v1438, %v1478
  %v1480 = vpop.f32.mrb[0].mxu0
  %1481 = vdwg.mxu0
  %1482 = vmatprep.subr.bf16.mxu0 0
  %1483 = vmatpush1.bf16.msra.mxu0 %v1119
  %1484 = vmatprep.subr.bf16.mxu0 0
  %1485 = vmatpush1.bf16.msra.mxu0 %v1120
  %1486 = vmatprep.subr.bf16.mxu0 0
  %1487 = vmatpush1.bf16.msra.mxu0 %v1121
  %1488 = vmatprep.subr.bf16.mxu0 0
  %1489 = vmatpush1.bf16.msra.mxu0 %v1122
  %1490 = vmatprep.subr.bf16.mxu0 0
  %1491 = vmatpush1.bf16.msra.mxu0 %v1123
  %1492 = vmatprep.subr.bf16.mxu0 0
  %1493 = vmatpush1.bf16.msra.mxu0 %v1124
  %1494 = vmatprep.subr.bf16.mxu0 0
  %1495 = vmatpush1.bf16.msra.mxu0 %v1125
  %1496 = vmatprep.subr.bf16.mxu0 0
  %1497 = vmatpush1.bf16.msra.mxu0 %v1126
  %1498 = vmatprep.subr.bf16.mxu0 0
  %1499 = vmatpush1.bf16.msra.mxu0 %v1127
  %1500 = vmatprep.subr.bf16.mxu0 0
  %1501 = vmatpush1.bf16.msra.mxu0 %v1128
  %1502 = vmatprep.subr.bf16.mxu0 0
  %1503 = vmatpush1.bf16.msra.mxu0 %v1129
  %1504 = vmatprep.subr.bf16.mxu0 0
  %1505 = vmatpush1.bf16.msra.mxu0 %v1130
  %1506 = vmatprep.subr.bf16.mxu0 0
  %1507 = vmatpush1.bf16.msra.mxu0 %v1131
  %1508 = vmatprep.subr.bf16.mxu0 0
  %1509 = vmatpush1.bf16.msra.mxu0 %v1132
  %1510 = vmatprep.subr.bf16.mxu0 0
  %1511 = vmatpush1.bf16.msra.mxu0 %v1133
  %1512 = vmatprep.subr.bf16.mxu0 0
  %1513 = vmatpush1.bf16.msra.mxu0 %v1134
  %1514 = vmatprep.mubr.bf16.mxu0 %v466
  %1515 = vmatmul.mubr.bf16.gmra.mrb[0].mxu0 %v465
  %v1516 = vpop.f32.mrb[0].mxu0
  %v1517 = vadd.f32 %v1476, %v1516
  %v1518 = vpop.f32.mrb[0].mxu0
  %v1519 = vpop.f32.mrb[0].mxu0
  %v1520 = vadd.f32 %v1479, %v1519
  %v1521 = vpop.f32.mrb[0].mxu0
  %1522 = vdwg.mxu0
  %1523 = vmatprep.subr.bf16.mxu0 0
  %1524 = vmatpush1.bf16.msra.mxu0 %v1135
  %1525 = vmatprep.subr.bf16.mxu0 0
  %1526 = vmatpush1.bf16.msra.mxu0 %v1136
  %1527 = vmatprep.subr.bf16.mxu0 0
  %1528 = vmatpush1.bf16.msra.mxu0 %v1137
  %1529 = vmatprep.subr.bf16.mxu0 0
  %1530 = vmatpush1.bf16.msra.mxu0 %v1138
  %1531 = vmatprep.subr.bf16.mxu0 0
  %1532 = vmatpush1.bf16.msra.mxu0 %v1139
  %1533 = vmatprep.subr.bf16.mxu0 0
  %1534 = vmatpush1.bf16.msra.mxu0 %v1140
  %1535 = vmatprep.subr.bf16.mxu0 0
  %1536 = vmatpush1.bf16.msra.mxu0 %v1141
  %1537 = vmatprep.subr.bf16.mxu0 0
  %1538 = vmatpush1.bf16.msra.mxu0 %v1142
  %1539 = vmatprep.subr.bf16.mxu0 0
  %1540 = vmatpush1.bf16.msra.mxu0 %v1143
  %1541 = vmatprep.subr.bf16.mxu0 0
  %1542 = vmatpush1.bf16.msra.mxu0 %v1144
  %1543 = vmatprep.subr.bf16.mxu0 0
  %1544 = vmatpush1.bf16.msra.mxu0 %v1145
  %1545 = vmatprep.subr.bf16.mxu0 0
  %1546 = vmatpush1.bf16.msra.mxu0 %v1146
  %1547 = vmatprep.subr.bf16.mxu0 0
  %1548 = vmatpush1.bf16.msra.mxu0 %v1147
  %1549 = vmatprep.subr.bf16.mxu0 0
  %1550 = vmatpush1.bf16.msra.mxu0 %v1148
  %1551 = vmatprep.subr.bf16.mxu0 0
  %1552 = vmatpush1.bf16.msra.mxu0 %v1149
  %1553 = vmatprep.subr.bf16.mxu0 0
  %1554 = vmatpush1.bf16.msra.mxu0 %v1150
  %1555 = vmatprep.mubr.bf16.mxu0 %v468
  %1556 = vmatmul.mubr.bf16.gmra.mrb[0].mxu0 %v467
  %v1557 = vpop.f32.mrb[0].mxu0
  %v1558 = vadd.f32 %v1517, %v1557
  %v1559 = vpop.f32.mrb[0].mxu0
  %v1560 = vpop.f32.mrb[0].mxu0
  %v1561 = vadd.f32 %v1520, %v1560
  %v1562 = vpop.f32.mrb[0].mxu0
  %1563 = vdwg.mxu0
  %1564 = vmatprep.subr.bf16.mxu0 0
  %1565 = vmatpush1.bf16.msra.mxu0 %v1151
  %1566 = vmatprep.subr.bf16.mxu0 0
  %1567 = vmatpush1.bf16.msra.mxu0 %v1152
  %1568 = vmatprep.subr.bf16.mxu0 0
  %1569 = vmatpush1.bf16.msra.mxu0 %v1153
  %1570 = vmatprep.subr.bf16.mxu0 0
  %1571 = vmatpush1.bf16.msra.mxu0 %v1154
  %1572 = vmatprep.subr.bf16.mxu0 0
  %1573 = vmatpush1.bf16.msra.mxu0 %v1155
  %1574 = vmatprep.subr.bf16.mxu0 0
  %1575 = vmatpush1.bf16.msra.mxu0 %v1156
  %1576 = vmatprep.subr.bf16.mxu0 0
  %1577 = vmatpush1.bf16.msra.mxu0 %v1157
  %1578 = vmatprep.subr.bf16.mxu0 0
  %1579 = vmatpush1.bf16.msra.mxu0 %v1158
  %1580 = vmatprep.subr.bf16.mxu0 0
  %1581 = vmatpush1.bf16.msra.mxu0 %v1159
  %1582 = vmatprep.subr.bf16.mxu0 0
  %1583 = vmatpush1.bf16.msra.mxu0 %v1160
  %1584 = vmatprep.subr.bf16.mxu0 0
  %1585 = vmatpush1.bf16.msra.mxu0 %v1161
  %1586 = vmatprep.subr.bf16.mxu0 0
  %1587 = vmatpush1.bf16.msra.mxu0 %v1162
  %1588 = vmatprep.subr.bf16.mxu0 0
  %1589 = vmatpush1.bf16.msra.mxu0 %v1163
  %1590 = vmatprep.subr.bf16.mxu0 0
  %1591 = vmatpush1.bf16.msra.mxu0 %v1164
  %1592 = vmatprep.subr.bf16.mxu0 0
  %1593 = vmatpush1.bf16.msra.mxu0 %v1165
  %1594 = vmatprep.subr.bf16.mxu0 0
  %1595 = vmatpush1.bf16.msra.mxu0 %v1166
  %1596 = vmatprep.mubr.bf16.mxu0 %v470
  %1597 = vmatmul.mubr.bf16.gmra.mrb[0].mxu0 %v469
  %v1598 = vpop.f32.mrb[0].mxu0
  %v1599 = vadd.f32 %v1558, %v1598
  %v1600 = vpop.f32.mrb[0].mxu0
  %v1601 = vpop.f32.mrb[0].mxu0
  %v1602 = vadd.f32 %v1561, %v1601
  %v1603 = vpop.f32.mrb[0].mxu0
  %1604 = vdwg.mxu0
  %1605 = vmatprep.subr.bf16.mxu0 0
  %1606 = vmatpush1.bf16.msra.mxu0 %v1167
  %1607 = vmatprep.subr.bf16.mxu0 0
  %1608 = vmatpush1.bf16.msra.mxu0 %v1168
  %1609 = vmatprep.subr.bf16.mxu0 0
  %1610 = vmatpush1.bf16.msra.mxu0 %v1169
  %1611 = vmatprep.subr.bf16.mxu0 0
  %1612 = vmatpush1.bf16.msra.mxu0 %v1170
  %1613 = vmatprep.subr.bf16.mxu0 0
  %1614 = vmatpush1.bf16.msra.mxu0 %v1171
  %1615 = vmatprep.subr.bf16.mxu0 0
  %1616 = vmatpush1.bf16.msra.mxu0 %v1172
  %1617 = vmatprep.subr.bf16.mxu0 0
  %1618 = vmatpush1.bf16.msra.mxu0 %v1173
  %1619 = vmatprep.subr.bf16.mxu0 0
  %1620 = vmatpush1.bf16.msra.mxu0 %v1174
  %1621 = vmatprep.subr.bf16.mxu0 0
  %1622 = vmatpush1.bf16.msra.mxu0 %v1175
  %1623 = vmatprep.subr.bf16.mxu0 0
  %1624 = vmatpush1.bf16.msra.mxu0 %v1176
  %1625 = vmatprep.subr.bf16.mxu0 0
  %1626 = vmatpush1.bf16.msra.mxu0 %v1177
  %1627 = vmatprep.subr.bf16.mxu0 0
  %1628 = vmatpush1.bf16.msra.mxu0 %v1178
  %1629 = vmatprep.subr.bf16.mxu0 0
  %1630 = vmatpush1.bf16.msra.mxu0 %v1179
  %1631 = vmatprep.subr.bf16.mxu0 0
  %1632 = vmatpush1.bf16.msra.mxu0 %v1180
  %1633 = vmatprep.subr.bf16.mxu0 0
  %1634 = vmatpush1.bf16.msra.mxu0 %v1181
  %1635 = vmatprep.subr.bf16.mxu0 0
  %1636 = vmatpush1.bf16.msra.mxu0 %v1182
  %1637 = vmatprep.mubr.bf16.mxu0 %v472
  %1638 = vmatmul.mubr.bf16.gmra.mrb[0].mxu0 %v471
  %v1639 = vpop.f32.mrb[0].mxu0
  %v1640 = vadd.f32 %v1599, %v1639
  %v1641 = vpop.f32.mrb[0].mxu0
  %v1642 = vpop.f32.mrb[0].mxu0
  %v1643 = vadd.f32 %v1602, %v1642
  %v1644 = vpop.f32.mrb[0].mxu0
  %1645 = vdwg.mxu0
  %1646 = vmatprep.subr.bf16.mxu0 0
  %1647 = vmatpush1.bf16.msra.mxu0 %v1183
  %1648 = vmatprep.subr.bf16.mxu0 0
  %1649 = vmatpush1.bf16.msra.mxu0 %v1184
  %1650 = vmatprep.subr.bf16.mxu0 0
  %1651 = vmatpush1.bf16.msra.mxu0 %v1185
  %1652 = vmatprep.subr.bf16.mxu0 0
  %1653 = vmatpush1.bf16.msra.mxu0 %v1186
  %1654 = vmatprep.subr.bf16.mxu0 0
  %1655 = vmatpush1.bf16.msra.mxu0 %v1187
  %1656 = vmatprep.subr.bf16.mxu0 0
  %1657 = vmatpush1.bf16.msra.mxu0 %v1188
  %1658 = vmatprep.subr.bf16.mxu0 0
  %1659 = vmatpush1.bf16.msra.mxu0 %v1189
  %1660 = vmatprep.subr.bf16.mxu0 0
  %1661 = vmatpush1.bf16.msra.mxu0 %v1190
  %1662 = vmatprep.subr.bf16.mxu0 0
  %1663 = vmatpush1.bf16.msra.mxu0 %v1191
  %1664 = vmatprep.subr.bf16.mxu0 0
  %1665 = vmatpush1.bf16.msra.mxu0 %v1192
  %1666 = vmatprep.subr.bf16.mxu0 0
  %1667 = vmatpush1.bf16.msra.mxu0 %v1193
  %1668 = vmatprep.subr.bf16.mxu0 0
  %1669 = vmatpush1.bf16.msra.mxu0 %v1194
  %1670 = vmatprep.subr.bf16.mxu0 0
  %1671 = vmatpush1.bf16.msra.mxu0 %v1195
  %1672 = vmatprep.subr.bf16.mxu0 0
  %1673 = vmatpush1.bf16.msra.mxu0 %v1196
  %1674 = vmatprep.subr.bf16.mxu0 0
  %1675 = vmatpush1.bf16.msra.mxu0 %v1197
  %1676 = vmatprep.subr.bf16.mxu0 0
  %1677 = vmatpush1.bf16.msra.mxu0 %v1198
  %1678 = vmatprep.mubr.bf16.mxu0 %v474
  %1679 = vmatmul.mubr.bf16.gmra.mrb[0].mxu0 %v473
  %v1680 = vpop.f32.mrb[0].mxu0
  %v1681 = vadd.f32 %v1640, %v1680
  %v1682 = vpop.f32.mrb[0].mxu0
  %v1683 = vpop.f32.mrb[0].mxu0
  %v1684 = vadd.f32 %v1643, %v1683
  %v1685 = vpop.f32.mrb[0].mxu0
  %1686 = vdwg.mxu0
  %1687 = vmatprep.subr.bf16.mxu0 0
  %1688 = vmatpush1.bf16.msra.mxu0 %v1199
  %1689 = vmatprep.subr.bf16.mxu0 0
  %1690 = vmatpush1.bf16.msra.mxu0 %v1200
  %1691 = vmatprep.subr.bf16.mxu0 0
  %1692 = vmatpush1.bf16.msra.mxu0 %v1201
  %1693 = vmatprep.subr.bf16.mxu0 0
  %1694 = vmatpush1.bf16.msra.mxu0 %v1202
  %1695 = vmatprep.subr.bf16.mxu0 0
  %1696 = vmatpush1.bf16.msra.mxu0 %v1203
  %1697 = vmatprep.subr.bf16.mxu0 0
  %1698 = vmatpush1.bf16.msra.mxu0 %v1204
  %1699 = vmatprep.subr.bf16.mxu0 0
  %1700 = vmatpush1.bf16.msra.mxu0 %v1205
  %1701 = vmatprep.subr.bf16.mxu0 0
  %1702 = vmatpush1.bf16.msra.mxu0 %v1206
  %1703 = vmatprep.subr.bf16.mxu0 0
  %1704 = vmatpush1.bf16.msra.mxu0 %v1207
  %1705 = vmatprep.subr.bf16.mxu0 0
  %1706 = vmatpush1.bf16.msra.mxu0 %v1208
  %1707 = vmatprep.subr.bf16.mxu0 0
  %1708 = vmatpush1.bf16.msra.mxu0 %v1209
  %1709 = vmatprep.subr.bf16.mxu0 0
  %1710 = vmatpush1.bf16.msra.mxu0 %v1210
  %1711 = vmatprep.subr.bf16.mxu0 0
  %1712 = vmatpush1.bf16.msra.mxu0 %v1211
  %1713 = vmatprep.subr.bf16.mxu0 0
  %1714 = vmatpush1.bf16.msra.mxu0 %v1212
  %1715 = vmatprep.subr.bf16.mxu0 0
  %1716 = vmatpush1.bf16.msra.mxu0 %v1213
  %1717 = vmatprep.subr.bf16.mxu0 0
  %1718 = vmatpush1.bf16.msra.mxu0 %v1214
  %1719 = vmatprep.mubr.bf16.mxu0 %v476
  %1720 = vmatmul.mubr.bf16.gmra.mrb[0].mxu0 %v475
  %v1721 = vpop.f32.mrb[0].mxu0
  %v1722 = vadd.f32 %v1681, %v1721
  %v1723 = vpop.f32.mrb[0].mxu0
  %v1724 = vpop.f32.mrb[0].mxu0
  %v1725 = vadd.f32 %v1684, %v1724
  %v1726 = vpop.f32.mrb[0].mxu0
  %1727 = vdwg.mxu0
  %v1728 = vld [vmem:[%s4] sm:$0x1]
  %v1730 = vlaneseq
  %v1731 = vshrl.u32 %v1730, 7
  %v1732 = vsub.s32 0, %v1731
  %v1733 = vrot.slane %v1728, %v1732
  %v1735 = vmul.f32 %v1722, %v1733
  %v1736 = vmul.f32 %v1725, %v1733
  %v1737 = vld [vmem:[%s5] sm:$0x1]
  %v1739 = vlaneseq
  %v1740 = vshrl.u32 %v1739, 7
  %v1741 = vsub.s32 0, %v1740
  %v1742 = vrot.slane %v1737, %v1741
  %v1744 = vadd.f32 %v1735, %v1742
  %v1745 = vadd.f32 %v1736, %v1742
  %vm1746 = vcmp.gt.f32.partialorder %v1744, 0.0
  %vm1747 = vcmp.gt.f32.partialorder %v1745, 0.0
  %v1748 = vmul.f32 %v1744, 0.1
  %v1749 = vmul.f32 %v1745, 0.1
  %v1750 = vsel %vm1746, %v1744, %v1748
  %v1751 = vsel %vm1747, %v1745, %v1749
  %v1752 = vpack.c.bf16 %v1751, %v1750
  %v1753 = vld [vmem:[%s6] sm:$0xf]
  %v1754 = vld [vmem:[%s6 + $0x4] sm:$0xf]
  %v1755 = vld [vmem:[%s6 + $0x8] sm:$0xf]
  %v1756 = vld [vmem:[%s6 + $0xc] sm:$0xf]
  %v1757 = vld [vmem:[%s6 + $0x10] sm:$0xf]
  %v1758 = vld [vmem:[%s6 + $0x14] sm:$0xf]
  %v1759 = vld [vmem:[%s6 + $0x18] sm:$0xf]
  %v1760 = vld [vmem:[%s6 + $0x1c] sm:$0xf]
  %v1761 = vld [vmem:[%s6 + $0x20] sm:$0xf]
  %v1762 = vld [vmem:[%s6 + $0x24] sm:$0xf]
  %v1763 = vld [vmem:[%s6 + $0x28] sm:$0xf]
  %v1764 = vld [vmem:[%s6 + $0x2c] sm:$0xf]
  %v1765 = vld [vmem:[%s6 + $0x30] sm:$0xf]
  %v1766 = vld [vmem:[%s6 + $0x34] sm:$0xf]
  %v1767 = vld [vmem:[%s6 + $0x38] sm:$0xf]
  %v1768 = vld [vmem:[%s6 + $0x3c] sm:$0xf]
  %v1785 = vunpack.c.l.b16 %v1753
  %v1786 = vunpack.c.l.b16 %v1754
  %v1787 = vunpack.c.l.b16 %v1755
  %v1788 = vunpack.c.l.b16 %v1756
  %v1789 = vunpack.c.l.b16 %v1757
  %v1790 = vunpack.c.l.b16 %v1758
  %v1791 = vunpack.c.l.b16 %v1759
  %v1792 = vunpack.c.l.b16 %v1760
  %v1793 = vunpack.c.l.b16 %v1761
  %v1794 = vunpack.c.l.b16 %v1762
  %v1795 = vunpack.c.l.b16 %v1763
  %v1796 = vunpack.c.l.b16 %v1764
  %v1797 = vunpack.c.l.b16 %v1765
  %v1798 = vunpack.c.l.b16 %v1766
  %v1799 = vunpack.c.l.b16 %v1767
  %v1800 = vunpack.c.l.b16 %v1768
  %v1801 = vpack.c.b16 %v1786, %v1785
  %v1802 = vpack.c.b16 %v1788, %v1787
  %v1803 = vpack.c.b16 %v1790, %v1789
  %v1804 = vpack.c.b16 %v1792, %v1791
  %v1805 = vpack.c.b16 %v1794, %v1793
  %v1806 = vpack.c.b16 %v1796, %v1795
  %v1807 = vpack.c.b16 %v1798, %v1797
  %v1808 = vpack.c.b16 %v1800, %v1799
  %1817 = vmatprep.subr.bf16.mxu0 0
  %1818 = vmatpush1.bf16.msra.mxu0 %v1801
  %1819 = vmatprep.subr.bf16.mxu0 0
  %1820 = vmatpush1.bf16.msra.mxu0 %v1802
  %1821 = vmatprep.subr.bf16.mxu0 0
  %1822 = vmatpush1.bf16.msra.mxu0 %v1803
  %1823 = vmatprep.subr.bf16.mxu0 0
  %1824 = vmatpush1.bf16.msra.mxu0 %v1804
  %1825 = vmatprep.subr.bf16.mxu0 0
  %1826 = vmatpush1.bf16.msra.mxu0 %v1805
  %1827 = vmatprep.subr.bf16.mxu0 0
  %1828 = vmatpush1.bf16.msra.mxu0 %v1806
  %1829 = vmatprep.subr.bf16.mxu0 0
  %1830 = vmatpush1.bf16.msra.mxu0 %v1807
  %1831 = vmatprep.subr.bf16.mxu0 0
  %1832 = vmatpush1.bf16.msra.mxu0 %v1808
  %1833 = vmatprep.subr.bf16.mxu0 0
  %1834 = vmatpush1.bf16.msra.mxu0 0
  %1835 = vmatprep.subr.bf16.mxu0 0
  %1836 = vmatpush1.bf16.msra.mxu0 0
  %1837 = vmatprep.subr.bf16.mxu0 0
  %1838 = vmatpush1.bf16.msra.mxu0 0
  %1839 = vmatprep.subr.bf16.mxu0 0
  %1840 = vmatpush1.bf16.msra.mxu0 0
  %1841 = vmatprep.subr.bf16.mxu0 0
  %1842 = vmatpush1.bf16.msra.mxu0 0
  %1843 = vmatprep.subr.bf16.mxu0 0
  %1844 = vmatpush1.bf16.msra.mxu0 0
  %1845 = vmatprep.subr.bf16.mxu0 0
  %1846 = vmatpush1.bf16.msra.mxu0 0
  %1847 = vmatprep.subr.bf16.mxu0 0
  %1848 = vmatpush1.bf16.msra.mxu0 0
  %1849 = vmatprep.mubr.bf16.mxu0 0
  %1850 = vmatmul.mubr.bf16.gmra.mrb[0].mxu0 %v1752
  %v1851 = vpop.f32.mrb[0].mxu0
  %v1852 = vadd.f32 0.0, %v1851
  %v1853 = vpop.f32.mrb[0].mxu0
  %v1854 = vpop.f32.mrb[0].mxu0
  %v1855 = vadd.f32 0.0, %v1854
  %v1856 = vpop.f32.mrb[0].mxu0
  %1857 = vdwg.mxu0
  %v1858 = vld [vmem:[%s7] sm:$0x1]
  %v1860 = vlaneseq
  %v1861 = vshrl.u32 %v1860, 7
  %v1862 = vsub.s32 0, %v1861
  %v1863 = vrot.slane %v1858, %v1862
  %v1865 = vmul.f32 %v1852, %v1863
  %v1866 = vmul.f32 %v1855, %v1863
  %v1867 = vld [vmem:[%s8] sm:$0x1]
  %v1869 = vlaneseq
  %v1870 = vshrl.u32 %v1869, 7
  %v1871 = vsub.s32 0, %v1870
  %v1872 = vrot.slane %v1867, %v1871
  %v1874 = vadd.f32 %v1865, %v1872
  %v1875 = vadd.f32 %v1866, %v1872
  %vm1876 = vcmp.gt.f32.partialorder %v1874, 0.0
  %vm1877 = vcmp.gt.f32.partialorder %v1875, 0.0
  %v1878 = vmul.f32 %v1874, 0.1
  %v1879 = vmul.f32 %v1875, 0.1
  %v1880 = vsel %vm1876, %v1874, %v1878
  %v1881 = vsel %vm1877, %v1875, %v1879
  %v1882 = vpack.c.bf16 %v1881, %v1880
  %v1883 = vld [vmem:[%s9] sm:$0xf]
  %v1884 = vld [vmem:[%s9 + $0x4] sm:$0xf]
  %v1885 = vld [vmem:[%s9 + $0x8] sm:$0xf]
  %v1886 = vld [vmem:[%s9 + $0xc] sm:$0xf]
  %v1887 = vld [vmem:[%s9 + $0x10] sm:$0xf]
  %v1888 = vld [vmem:[%s9 + $0x14] sm:$0xf]
  %v1889 = vld [vmem:[%s9 + $0x18] sm:$0xf]
  %v1890 = vld [vmem:[%s9 + $0x1c] sm:$0xf]
  %v1891 = vld [vmem:[%s9 + $0x20] sm:$0xf]
  %v1892 = vld [vmem:[%s9 + $0x24] sm:$0xf]
  %v1893 = vld [vmem:[%s9 + $0x28] sm:$0xf]
  %v1894 = vld [vmem:[%s9 + $0x2c] sm:$0xf]
  %v1895 = vld [vmem:[%s9 + $0x30] sm:$0xf]
  %v1896 = vld [vmem:[%s9 + $0x34] sm:$0xf]
  %v1897 = vld [vmem:[%s9 + $0x38] sm:$0xf]
  %v1898 = vld [vmem:[%s9 + $0x3c] sm:$0xf]
  %v1899 = vld [vmem:[%s10] sm:$0x1]
  %v1901 = vlaneseq
  %v1902 = vshrl.u32 %v1901, 7
  %v1903 = vsub.s32 0, %v1902
  %v1904 = vrot.slane %v1899, %v1903
  %v1922 = vunpack.c.l.b16 %v1883
  %v1923 = vunpack.c.l.b16 %v1884
  %v1924 = vunpack.c.l.b16 %v1885
  %v1925 = vunpack.c.l.b16 %v1886
  %v1926 = vunpack.c.l.b16 %v1887
  %v1927 = vunpack.c.l.b16 %v1888
  %v1928 = vunpack.c.l.b16 %v1889
  %v1929 = vunpack.c.l.b16 %v1890
  %v1930 = vunpack.c.l.b16 %v1891
  %v1931 = vunpack.c.l.b16 %v1892
  %v1932 = vunpack.c.l.b16 %v1893
  %v1933 = vunpack.c.l.b16 %v1894
  %v1934 = vunpack.c.l.b16 %v1895
  %v1935 = vunpack.c.l.b16 %v1896
  %v1936 = vunpack.c.l.b16 %v1897
  %v1937 = vunpack.c.l.b16 %v1898
  %v1938 = vpack.c.b16 %v1923, %v1922
  %v1939 = vpack.c.b16 %v1925, %v1924
  %v1940 = vpack.c.b16 %v1927, %v1926
  %v1941 = vpack.c.b16 %v1929, %v1928
  %v1942 = vpack.c.b16 %v1931, %v1930
  %v1943 = vpack.c.b16 %v1933, %v1932
  %v1944 = vpack.c.b16 %v1935, %v1934
  %v1945 = vpack.c.b16 %v1937, %v1936
  %1954 = vmatprep.subr.bf16.mxu0 0
  %1955 = vmatpush1.bf16.msra.mxu0 %v1938
  %1956 = vmatprep.subr.bf16.mxu0 0
  %1957 = vmatpush1.bf16.msra.mxu0 %v1939
  %1958 = vmatprep.subr.bf16.mxu0 0
  %1959 = vmatpush1.bf16.msra.mxu0 %v1940
  %1960 = vmatprep.subr.bf16.mxu0 0
  %1961 = vmatpush1.bf16.msra.mxu0 %v1941
  %1962 = vmatprep.subr.bf16.mxu0 0
  %1963 = vmatpush1.bf16.msra.mxu0 %v1942
  %1964 = vmatprep.subr.bf16.mxu0 0
  %1965 = vmatpush1.bf16.msra.mxu0 %v1943
  %1966 = vmatprep.subr.bf16.mxu0 0
  %1967 = vmatpush1.bf16.msra.mxu0 %v1944
  %1968 = vmatprep.subr.bf16.mxu0 0
  %1969 = vmatpush1.bf16.msra.mxu0 %v1945
  %1970 = vmatprep.subr.bf16.mxu0 0
  %1971 = vmatpush1.bf16.msra.mxu0 0
  %1972 = vmatprep.subr.bf16.mxu0 0
  %1973 = vmatpush1.bf16.msra.mxu0 0
  %1974 = vmatprep.subr.bf16.mxu0 0
  %1975 = vmatpush1.bf16.msra.mxu0 0
  %1976 = vmatprep.subr.bf16.mxu0 0
  %1977 = vmatpush1.bf16.msra.mxu0 0
  %1978 = vmatprep.subr.bf16.mxu0 0
  %1979 = vmatpush1.bf16.msra.mxu0 0
  %1980 = vmatprep.subr.bf16.mxu0 0
  %1981 = vmatpush1.bf16.msra.mxu0 0
  %1982 = vmatprep.subr.bf16.mxu0 0
  %1983 = vmatpush1.bf16.msra.mxu0 0
  %1984 = vmatprep.subr.bf16.mxu0 0
  %1985 = vmatpush1.bf16.msra.mxu0 0
  %1986 = vmatprep.mubr.bf16.mxu0 0
  %1987 = vmatmul.mubr.bf16.gmra.mrb[0].mxu0 %v1882
  %v1988 = vpop.f32.mrb[0].mxu0
  %v1989 = vadd.f32 %v1904, %v1988
  %v1990 = vpop.f32.mrb[0].mxu0
  %v1991 = vpop.f32.mrb[0].mxu0
  %v1992 = vadd.f32 %v1904, %v1991
  %v1993 = vpop.f32.mrb[0].mxu0
  %1994 = vdwg.mxu0
  %v1995 = vsub.f32 0.0, %v1989
  %v1996 = vsub.f32 0.0, %v1992
  %v1997 = vmul.f32 %v1995, 1.442695
  %v1998 = vpow.pop %v1997
  %v1999 = vmul.f32 %v1996, 1.442695
  %v2000 = vpow.pop %v1999
  %v2001 = vadd.f32 %v1998, 1.0
  %v2002 = vadd.f32 %v2000, 1.0
  %v2003 = vrcp.pop %v2001
  %v2004 = vmul.f32 1.0, %v2003
  %v2005 = vrcp.pop %v2002
  %v2006 = vmul.f32 1.0, %v2005
  %v2007 = vlaneseq
  %v2008 = vand.u32 %v2007, 127
  %vm2009 = vcmp.lt.s32.totalorder %v2008, 64
  %v2010 = vsel %vm2009, %v1880, %v2004
  %v2011 = vsel %vm2009, %v1881, %v2006
  %2012 = vst [vmem:[%s11] sm:$0xff] %v2010
  %2013 = vst [vmem:[%s11 + $0x8] sm:$0xff] %v2011
  // Predicated region
  $region46: #{discriminator_forward.3} parent=0 // pred_check
    _
  $region47: #{discriminator_forward.3} parent=0 // pred_check_branch
    %2015 = sbr.rel (0) target = $region49
  $region48: #{discriminator_forward.3} parent=0 // pred_region
    _
  $region49: #{discriminator_forward.3} parent=0 // pred_fallthru
    _
  // Predicated region
  $region50: #{discriminator_forward.3} parent=0 // pred_check
    _
  $region51: #{discriminator_forward.3} parent=0 // pred_check_branch
    %2017 = sbr.rel (0) target = $region53
  $region52: #{discriminator_forward.3} parent=0 // pred_region
    _
  $region53: #{discriminator_forward.3} parent=0 // pred_fallthru
    _

</llo_original>
